<compile_context>
chip_gen: v7x
topology: tpu7x:2x2x1
jax: 0.10.0
libtpu: 0.0.40
codegen_flags: <defaults>
</compile_context>

<pallas_src>
import functools
import math

import jax
import jax.numpy as jnp
from jax import lax
from jax.experimental import pallas as pl
from jax.experimental.pallas import tpu as pltpu

BF16 = jnp.bfloat16
F32 = jnp.float32


# ----------------------------------------------------------------------------
# Kernel 1: single-step matmul + per-channel scale/bias + ReLU (1x1 conv + BN).
# Whole K in one grid step (no accumulator scratch / predication); grid over
# (M tiles, N tiles), both "parallel" so v7x's second TC gets the other N half
# with a disjoint weight DMA.
# ----------------------------------------------------------------------------
def _matmul_bn_relu_kernel(x_ref, w_ref, scale_ref, bias_ref, o_ref):
    acc = jnp.dot(x_ref[...], w_ref[...], preferred_element_type=jnp.float32)
    y = acc * scale_ref[...] + bias_ref[...]
    o_ref[...] = jnp.maximum(y, 0.0).astype(o_ref.dtype)


def matmul_bn_relu(x, w, scale, bias, *, out_dtype=BF16):
    """x: [M,K] bf16, w: [K,N] bf16, scale/bias: [N] f32 -> relu((x@w)*s+b)."""
    M, K = x.shape
    N = w.shape[1]
    tm = M
    for cand in (512, 256, 128):
        if M % cand == 0:
            tm = cand
            break
    # Split N when possible so the grid has two parallel steps (v7x megacore).
    tn = N // 2 if (N >= 512 and (N // 2) % 128 == 0) else N
    grid = (M // tm, N // tn)
    return pl.pallas_call(
        _matmul_bn_relu_kernel,
        out_shape=jax.ShapeDtypeStruct((M, N), out_dtype),
        grid_spec=pltpu.PrefetchScalarGridSpec(
            num_scalar_prefetch=0,
            grid=grid,
            in_specs=[
                pl.BlockSpec((tm, K), lambda i, j: (i, 0)),
                pl.BlockSpec((K, tn), lambda i, j: (0, j)),
                pl.BlockSpec((1, tn), lambda i, j: (0, j)),
                pl.BlockSpec((1, tn), lambda i, j: (0, j)),
            ],
            out_specs=pl.BlockSpec((tm, tn), lambda i, j: (i, j)),
        ),
        compiler_params=pltpu.CompilerParams(
            dimension_semantics=("parallel", "parallel")),
    )(x, w, scale.reshape(1, N).astype(F32), bias.reshape(1, N).astype(F32))


# ----------------------------------------------------------------------------
# Kernel 2: dilated 3x3 conv + BN + ReLU, one batch per grid step.
# The im2col for the ACTIVE taps is assembled inside the kernel into a VMEM
# scratch (zero-fill supplies PyTorch's zero padding), so neither the padded
# tensor nor the im2col matrix ever round-trips through HBM.  A single
# (L, T*Cin) x (T*Cin, N) MXU pass follows.
# ----------------------------------------------------------------------------
def _dilated_conv_kernel(x_ref, w_ref, scale_ref, bias_ref, o_ref, cols_ref,
                         *, H, W, d, taps):
    Cin = x_ref.shape[2]
    cols_ref[...] = jnp.zeros_like(cols_ref)          # == zero padding
    for t, (ky, kx) in enumerate(taps):
        dy, dx = (ky - 1) * d, (kx - 1) * d
        h_lo, h_hi = max(0, -dy), min(H, H - dy)       # valid output rows
        w_lo, w_hi = max(0, -dx), min(W, W - dx)       # valid output cols
        ww = w_hi - w_lo
        c0 = t * Cin
        if dx == 0:
            # Full-width rows are contiguous in the flat [L, Cin] layout:
            # one copy per tap instead of one per output row.
            n = (h_hi - h_lo) * W
            s0 = (h_lo + dy) * W
            cols_ref[h_lo * W:h_lo * W + n, c0:c0 + Cin] = x_ref[0, s0:s0 + n, :]
        else:
            for h in range(h_lo, h_hi):
                src = (h + dy) * W + (w_lo + dx)
                dst = h * W + w_lo
                cols_ref[dst:dst + ww, c0:c0 + Cin] = x_ref[0, src:src + ww, :]
    acc = jnp.dot(cols_ref[...], w_ref[...], preferred_element_type=jnp.float32)
    y = acc * scale_ref[...] + bias_ref[...]
    o_ref[0] = jnp.maximum(y, 0.0).astype(o_ref.dtype)


def dilated_conv_bn_relu(x_blc, w_taps, scale, bias, *, H, W, d, taps,
                         out_dtype=BF16):
    """x_blc: [B, H*W, Cin] bf16 ; w_taps: [T*Cin, N] bf16 (active taps, tap-major)."""
    B, L, Cin = x_blc.shape
    N = w_taps.shape[1]
    T = len(taps)
    return pl.pallas_call(
        functools.partial(_dilated_conv_kernel, H=H, W=W, d=d, taps=taps),
        out_shape=jax.ShapeDtypeStruct((B, L, N), out_dtype),
        grid_spec=pltpu.PrefetchScalarGridSpec(
            num_scalar_prefetch=0,
            grid=(B,),
            in_specs=[
                pl.BlockSpec((1, L, Cin), lambda b: (b, 0, 0)),
                pl.BlockSpec((T * Cin, N), lambda b: (0, 0)),
                pl.BlockSpec((1, N), lambda b: (0, 0)),
                pl.BlockSpec((1, N), lambda b: (0, 0)),
            ],
            out_specs=pl.BlockSpec((1, L, N), lambda b: (b, 0, 0)),
            scratch_shapes=[pltpu.VMEM((L, T * Cin), BF16)],
        ),
        compiler_params=pltpu.CompilerParams(
            dimension_semantics=("parallel",)),
    )(x_blc, w_taps, scale.reshape(1, N).astype(F32),
      bias.reshape(1, N).astype(F32))


# ----------------------------------------------------------------------------
# Kernel 3: fused head, gridded over batch ("parallel"):
#   feat = relu(bn1(xa@Wa + xb@Wb + pooled_bias))             (== conv1)
#   q|k  = feat @ Wqk + b  (one MXU pass, bf16 right after the bias add)
#   attn = softmax(q @ k^T, axis=-1)  (bf16, approx-reciprocal denominator)
#   v    = feat @ Wv + b   (projected AFTER the softmax -> smaller live set)
#   y    = relu(bn(gamma * (attn @ v) + feat))
# ----------------------------------------------------------------------------
def _head_kernel(xa_ref, xb_ref, bias5_ref, wa_ref, wb_ref,
                 bn1_s_ref, bn1_b_ref, wqk_ref, wv_ref, qkb_ref, vb_ref,
                 gamma_ref, att_s_ref, att_b_ref, o_ref):
    f32 = jnp.float32
    bf16 = jnp.bfloat16
    dq = wqk_ref.shape[1] // 2

    # conv1 over the (virtual) channel concat of the five branches; the pooled
    # branch contribution is a per-batch constant row (bias5).
    conv = jnp.dot(xa_ref[0], wa_ref[...], preferred_element_type=f32)
    conv += jnp.dot(xb_ref[0], wb_ref[...], preferred_element_type=f32)
    conv += bias5_ref[0]
    feat = jnp.maximum(conv * bn1_s_ref[...] + bn1_b_ref[...], 0.0)   # (L, C) f32
    featb = feat.astype(bf16)

    # fused q|k projection: one 2*dq-wide MXU pass; bf16 immediately.
    qk = (jnp.dot(featb, wqk_ref[...], preferred_element_type=f32)
          + qkb_ref[...]).astype(bf16)                                # (L, 2*dq)
    q = qk[:, :dq]
    k = qk[:, dq:]

    # attention: softmax over keys, unscaled Q.K^T (matches the reference)
    energy = lax.dot_general(q, k, (((1,), (1,)), ((), ())),
                             preferred_element_type=f32)              # (L, L)
    m = jnp.max(energy, axis=-1, keepdims=True)
    p = jnp.exp(energy - m)
    attn = (p * pl.reciprocal(jnp.sum(p, axis=-1, keepdims=True),
                              approx=True)).astype(bf16)
    # TODO(synk): for large L (e.g. H=W=65 -> L=4225) block the softmax over
    # keys (flash-style online softmax); the LxL f32 energy would not fit VMEM.

    # value projection after the softmax (keeps the (L,C) value out of the
    # live set during the attention math)
    v = (jnp.dot(featb, wv_ref[...], preferred_element_type=f32)
         + vb_ref[...]).astype(bf16)                                  # (L, C)
    out = jnp.dot(attn, v, preferred_element_type=f32)                # (L, C)

    # residual + BN + ReLU
    y = gamma_ref[0, 0] * out + feat
    y = y * att_s_ref[...] + att_b_ref[...]
    o_ref[0] = jnp.maximum(y, 0.0).astype(o_ref.dtype)


def attention_head_fused(xa, xb, bias5, w_a, w_b, bn1_scale, bn1_bias,
                         wqk, wv, qk_bias, v_bias, gamma, att_scale, att_bias,
                         *, out_dtype=F32):
    """xa: [B,L,Ca] bf16, xb: [B,L,Cb] bf16, bias5: [B,1,C] f32 -> [B,L,C]."""
    B, L, Ca = xa.shape
    Cb = xb.shape[2]
    C = w_a.shape[1]
    dq2 = wqk.shape[1]

    def const2(shape):
        return pl.BlockSpec(shape, lambda b: (0, 0))

    return pl.pallas_call(
        _head_kernel,
        out_shape=jax.ShapeDtypeStruct((B, L, C), out_dtype),
        grid_spec=pltpu.PrefetchScalarGridSpec(
            num_scalar_prefetch=0,
            grid=(B,),
            in_specs=[
                pl.BlockSpec((1, L, Ca), lambda b: (b, 0, 0)),    # xa
                pl.BlockSpec((1, L, Cb), lambda b: (b, 0, 0)),    # xb
                pl.BlockSpec((1, 1, C), lambda b: (b, 0, 0)),     # bias5
                const2((Ca, C)), const2((Cb, C)),                 # conv1 blocks
                const2((1, C)), const2((1, C)),                   # bn1 scale/bias
                const2((C, dq2)), const2((C, C)),                 # Wq|Wk, Wv
                const2((1, dq2)), const2((1, C)),                 # q|k bias, v bias
                const2((1, 1)),                                   # gamma
                const2((1, C)), const2((1, C)),                   # attention BN
            ],
            out_specs=pl.BlockSpec((1, L, C), lambda b: (b, 0, 0)),
        ),
        compiler_params=pltpu.CompilerParams(
            dimension_semantics=("parallel",)),
    )(xa, xb, bias5,
      w_a, w_b,
      bn1_scale.reshape(1, C).astype(F32), bn1_bias.reshape(1, C).astype(F32),
      wqk, wv,
      qk_bias.reshape(1, dq2).astype(F32), v_bias.reshape(1, C).astype(F32),
      gamma.reshape(1, 1).astype(F32),
      att_scale.reshape(1, C).astype(F32), att_bias.reshape(1, C).astype(F32))


# ----------------------------------------------------------------------------
# Dead-tap analysis for the dilated 3x3 convs: a tap (ky, kx) whose receptive
# window lies entirely in the zero padding contributes nothing (PyTorch zero
# padding).  If only the center tap survives, the conv is exactly a 1x1.
# ----------------------------------------------------------------------------
def _active_taps(H, W, d):
    taps = []
    for ky in range(3):
        dy = (ky - 1) * d
        if dy <= -H or dy >= H:
            continue
        for kx in range(3):
            dx = (kx - 1) * d
            if dx <= -W or dx >= W:
                continue
            taps.append((ky, kx))
    return taps


# ----------------------------------------------------------------------------
# Parameters (deterministic synthetic init mirroring the module's shapes).
# Matmul weights are stored in bf16; BN scale/bias and conv biases in f32.
# ----------------------------------------------------------------------------
def init_params(key, inplanes, planes=256):
    eps = 1e-5
    bn_scale_val = 1.0 / math.sqrt(1.0 + eps)   # eval BN: mean=0, var=1, w=1, b=0
    keys = jax.random.split(key, 12)

    def kaiming(k, shape, fan_in):
        w = jax.random.normal(k, shape, jnp.float32) * math.sqrt(2.0 / fan_in)
        return w.astype(BF16)

    dq = planes // 8
    p = {}
    p['aspp1_w'] = kaiming(keys[0], (inplanes, planes), inplanes)
    # dilated 3x3 weights stored tap-major: [9 (ky*3+kx), Cin, planes]
    p['aspp2_w'] = kaiming(keys[1], (9, inplanes, planes), 9 * inplanes)
    p['aspp3_w'] = kaiming(keys[2], (9, inplanes, planes), 9 * inplanes)
    p['aspp4_w'] = kaiming(keys[3], (9, inplanes, planes), 9 * inplanes)
    p['pool_w'] = kaiming(keys[4], (inplanes, planes), inplanes)
    p['conv1_w'] = kaiming(keys[5], (5 * planes, planes), 5 * planes)
    p['q_w'] = kaiming(keys[6], (planes, dq), planes)
    p['k_w'] = kaiming(keys[7], (planes, dq), planes)
    p['v_w'] = kaiming(keys[8], (planes, planes), planes)
    bnd = 1.0 / math.sqrt(planes)
    p['q_b'] = jax.random.uniform(keys[9], (dq,), jnp.float32, -bnd, bnd)
    p['k_b'] = jax.random.uniform(keys[10], (dq,), jnp.float32, -bnd, bnd)
    p['v_b'] = jax.random.uniform(keys[11], (planes,), jnp.float32, -bnd, bnd)
    p['gamma'] = jnp.zeros((1, 1), jnp.float32)            # torch.zeros(1)

    for name in ('aspp1', 'aspp2', 'aspp3', 'aspp4', 'pool', 'bn1', 'att_bn'):
        p[f'{name}_scale'] = jnp.full((planes,), bn_scale_val, jnp.float32)
        p[f'{name}_bias'] = jnp.zeros((planes,), jnp.float32)
    return p


# ----------------------------------------------------------------------------
# Full forward
# ----------------------------------------------------------------------------
def self_attention_aspp_forward(x_nchw, params, dilations=(1, 6, 12, 18),
                                planes=256):
    B, Cin, H, W = x_nchw.shape
    L = H * W

    x_nhwc = jnp.transpose(x_nchw, (0, 2, 3, 1)).astype(BF16)   # NHWC bf16
    xf = x_nhwc.reshape(B * L, Cin)
    x_blc = x_nhwc.reshape(B, L, Cin)

    # ---- classify ASPP branches: 1x1 group vs. true dilated-conv group ------
    one_w = [params['aspp1_w']]
    one_scale = [params['aspp1_scale']]
    one_bias = [params['aspp1_bias']]
    one_idx = [0]
    conv_branches = []
    for bi, d in zip((1, 2, 3), dilations[1:]):
        taps = _active_taps(H, W, d)
        w9 = params[f'aspp{bi + 1}_w']
        if taps == [(1, 1)]:                     # dilation >= H,W: exact 1x1
            one_w.append(w9[4])
            one_scale.append(params[f'aspp{bi + 1}_scale'])
            one_bias.append(params[f'aspp{bi + 1}_bias'])
            one_idx.append(bi)
        else:
            conv_branches.append((bi, d, taps))

    # ---- all 1x1 branches in ONE lane-dense matmul (weights concat along N) --
    w_one = jnp.concatenate(one_w, axis=1)                   # [Cin, na*planes]
    xa = matmul_bn_relu(xf, w_one,
                        jnp.concatenate(one_scale), jnp.concatenate(one_bias))
    xa = xa.reshape(B, L, len(one_idx) * planes)

    # ---- dilated branches (in-kernel im2col, no HBM materialization) ---------
    assert conv_branches, (
        "TODO(synk): every dilated branch degenerated to 1x1; routing that "
        "case through the 1x1-only head is not wired up")
    xb_list, conv_idx = [], []
    for bi, d, taps in conv_branches:
        w9 = params[f'aspp{bi + 1}_w']
        w_taps = (w9.reshape(9 * Cin, planes) if len(taps) == 9 else
                  jnp.concatenate([w9[ky * 3 + kx] for ky, kx in taps], axis=0))
        xb_list.append(dilated_conv_bn_relu(
            x_blc, w_taps, params[f'aspp{bi + 1}_scale'],
            params[f'aspp{bi + 1}_bias'], H=H, W=W, d=d, taps=taps))
        conv_idx.append(bi)
    xb = xb_list[0] if len(xb_list) == 1 else jnp.concatenate(xb_list, axis=-1)

    # ---- conv1 weight re-blocked to [1x1 group | conv group | pool] order ----
    cw = params['conv1_w']
    blocks = [cw[i * planes:(i + 1) * planes] for i in range(5)]
    w_a = (blocks[one_idx[0]] if len(one_idx) == 1 else
           jnp.concatenate([blocks[i] for i in one_idx], axis=0))
    w_b = (blocks[conv_idx[0]] if len(conv_idx) == 1 else
           jnp.concatenate([blocks[i] for i in conv_idx], axis=0))

    # ---- pooled branch: 2-row matmuls are pure launch overhead as pallas_calls,
    # so run them as plain XLA ops and fold into conv1 as a per-batch bias
    # (bilinear upsample of a 1x1 map with align_corners=True == broadcast).
    xm = jnp.mean(x_nchw.astype(F32), axis=(2, 3))                      # [B, Cin]
    x5 = jnp.maximum((xm @ params['pool_w'].astype(F32)) * params['pool_scale']
                     + params['pool_bias'], 0.0)                        # [B, planes]
    bias5 = (x5 @ blocks[4].astype(F32)).reshape(B, 1, planes)          # [B,1,planes]

    # ---- fused head: conv1 + bn1 + relu + self-attention + residual + BN + ReLU
    wqk = jnp.concatenate([params['q_w'], params['k_w']], axis=1)       # [planes, 2*dq]
    qk_b = jnp.concatenate([params['q_b'], params['k_b']])
    out = attention_head_fused(xa, xb, bias5, w_a, w_b,
                               params['bn1_scale'], params['bn1_bias'],
                               wqk, params['v_w'], qk_b, params['v_b'],
                               params['gamma'],
                               params['att_bn_scale'], params['att_bn_bias'])

    # dropout(0.5) is identity at inference
    return jnp.transpose(out.reshape(B, H, W, planes), (0, 3, 1, 2))    # NCHW f32


if __name__ == "__main__":
    # backbone='drn' -> inplanes=512 ; output_stride=16 -> dilations [1, 6, 12, 18]
    B, Cin, H, W = 2, 512, 8, 8
    key = jax.random.PRNGKey(0)
    kx_, kp = jax.random.split(key)
    x = jax.random.normal(kx_, (B, Cin, H, W), jnp.float32)
    params = init_params(kp, inplanes=Cin, planes=256)

    fwd = jax.jit(functools.partial(self_attention_aspp_forward,
                                    dilations=(1, 6, 12, 18), planes=256))
    y = fwd(x, params)
    jax.block_until_ready(y)
    assert y.shape == (B, 256, H, W), y.shape
    assert bool(jnp.all(jnp.isfinite(y)))
    print("KERNEL_OK")
</pallas_src>

<mosaic_0001>
module attributes {stable_mosaic.version = 11 : i64} {
  func.func @_matmul_bn_relu_kernel(%arg0: i32, %arg1: i32, %arg2: memref<128x512xbf16, #tpu.memory_space<vmem>>, %arg3: memref<512x384xbf16, #tpu.memory_space<vmem>>, %arg4: memref<1x384xf32, #tpu.memory_space<vmem>>, %arg5: memref<1x384xf32, #tpu.memory_space<vmem>>, %arg6: memref<128x384xbf16, #tpu.memory_space<vmem>>) attributes {dimension_semantics = [#tpu.dimension_semantics<parallel>, #tpu.dimension_semantics<parallel>], iteration_bounds = array<i64: 1, 2>, scalar_prefetch = 0 : i64, scratch_operands = 0 : i64, tpu.core_type = #tpu.core_type<tc>, window_params = [{transform_indices = @transform_0, window_bounds = array<i64: 128, 512>}, {transform_indices = @transform_1, window_bounds = array<i64: 512, 384>}, {transform_indices = @transform_2, window_bounds = array<i64: 1, 384>}, {transform_indices = @transform_3, window_bounds = array<i64: 1, 384>}, {transform_indices = @transform_4, window_bounds = array<i64: 128, 384>}]} {
    %c0 = arith.constant 0 : index
    %c0_0 = arith.constant 0 : index
    %0 = vector.load %arg2[%c0, %c0_0] : memref<128x512xbf16, #tpu.memory_space<vmem>>, vector<128x512xbf16>
    %c0_1 = arith.constant 0 : index
    %c0_2 = arith.constant 0 : index
    %1 = vector.load %arg3[%c0_1, %c0_2] : memref<512x384xbf16, #tpu.memory_space<vmem>>, vector<512x384xbf16>
    %cst = arith.constant dense<0.000000e+00> : vector<128x384xf32>
    %2 = tpu.matmul %0, %1, %cst {dimension_numbers = #tpu.dot_dimension_numbers<[1], [0], [0], [1], [0, 0, 1, 1], [], []>} : vector<128x512xbf16>, vector<512x384xbf16>, vector<128x384xf32> -> vector<128x384xf32>
    %c0_3 = arith.constant 0 : index
    %c0_4 = arith.constant 0 : index
    %3 = vector.load %arg4[%c0_3, %c0_4] : memref<1x384xf32, #tpu.memory_space<vmem>>, vector<1x384xf32>
    %4 = vector.broadcast %3 : vector<1x384xf32> to vector<128x384xf32>
    %5 = arith.mulf %2, %4 : vector<128x384xf32>
    %c0_5 = arith.constant 0 : index
    %c0_6 = arith.constant 0 : index
    %6 = vector.load %arg5[%c0_5, %c0_6] : memref<1x384xf32, #tpu.memory_space<vmem>>, vector<1x384xf32>
    %7 = vector.broadcast %6 : vector<1x384xf32> to vector<128x384xf32>
    %8 = arith.addf %5, %7 : vector<128x384xf32>
    %cst_7 = arith.constant 0.000000e+00 : f32
    %9 = vector.broadcast %cst_7 : f32 to vector<128x384xf32>
    %10 = arith.maximumf %8, %9 : vector<128x384xf32>
    %11 = arith.truncf %10 : vector<128x384xf32> to vector<128x384xbf16>
    %c0_8 = arith.constant 0 : index
    %c0_9 = arith.constant 0 : index
    %12 = vector.load %arg6[%c0_8, %c0_9] : memref<128x384xbf16, #tpu.memory_space<vmem>>, vector<128x384xbf16>
    tpu.vector_store %arg6[%c0_8, %c0_9], %11 {strides = array<i32>} : memref<128x384xbf16, #tpu.memory_space<vmem>>, vector<128x384xbf16>,
    return
  }
  func.func @transform_0(%arg0: i32, %arg1: i32) -> (i32, i32) {
    %c0_i32 = arith.constant 0 : i32
    %c0_i32_0 = arith.constant 0 : i32
    return %arg0, %c0_i32 : i32, i32
  }
  func.func @transform_1(%arg0: i32, %arg1: i32) -> (i32, i32) {
    %c0_i32 = arith.constant 0 : i32
    %c0_i32_0 = arith.constant 0 : i32
    return %c0_i32, %arg1 : i32, i32
  }
  func.func @transform_2(%arg0: i32, %arg1: i32) -> (i32, i32) {
    %c0_i32 = arith.constant 0 : i32
    %c0_i32_0 = arith.constant 0 : i32
    return %c0_i32, %arg1 : i32, i32
  }
  func.func @transform_3(%arg0: i32, %arg1: i32) -> (i32, i32) {
    %c0_i32 = arith.constant 0 : i32
    %c0_i32_0 = arith.constant 0 : i32
    return %c0_i32, %arg1 : i32, i32
  }
  func.func @transform_4(%arg0: i32, %arg1: i32) -> (i32, i32) {
    %c0_i32 = arith.constant 0 : i32
    return %arg0, %arg1 : i32, i32
  }
}

module attributes {stable_mosaic.version = 11 : i64} {
  func.func @_dilated_conv_kernel(%arg0: i32, %arg1: memref<1x64x512xbf16, #tpu.memory_space<vmem>>, %arg2: memref<4608x256xbf16, #tpu.memory_space<vmem>>, %arg3: memref<1x256xf32, #tpu.memory_space<vmem>>, %arg4: memref<1x256xf32, #tpu.memory_space<vmem>>, %arg5: memref<1x64x256xbf16, #tpu.memory_space<vmem>>, %arg6: memref<64x4608xbf16, #tpu.memory_space<vmem>>) attributes {dimension_semantics = [#tpu.dimension_semantics<parallel>], iteration_bounds = array<i64: 2>, scalar_prefetch = 0 : i64, scratch_operands = 1 : i64, tpu.core_type = #tpu.core_type<tc>, window_params = [{transform_indices = @transform_0, window_bounds = array<i64: 1, 64, 512>}, {pipeline_mode = #tpu.pipeline_mode<synchronous>, transform_indices = @transform_1, window_bounds = array<i64: 4608, 256>}, {pipeline_mode = #tpu.pipeline_mode<synchronous>, transform_indices = @transform_2, window_bounds = array<i64: 1, 256>}, {pipeline_mode = #tpu.pipeline_mode<synchronous>, transform_indices = @transform_3, window_bounds = array<i64: 1, 256>}, {transform_indices = @transform_4, window_bounds = array<i64: 1, 64, 256>}]} {
    %cst = arith.constant 0.000000e+00 : bf16
    %0 = vector.broadcast %cst : bf16 to vector<64x4608xbf16>
    %c0 = arith.constant 0 : index
    %c0_0 = arith.constant 0 : index
    %1 = vector.load %arg6[%c0, %c0_0] : memref<64x4608xbf16, #tpu.memory_space<vmem>>, vector<64x4608xbf16>
    tpu.vector_store %arg6[%c0, %c0_0], %0 {strides = array<i32>} : memref<64x4608xbf16, #tpu.memory_space<vmem>>, vector<64x4608xbf16>,
    %c0_1 = arith.constant 0 : index
    %c0_2 = arith.constant 0 : index
    %c0_3 = arith.constant 0 : index
    %2 = vector.load %arg1[%c0_1, %c0_2, %c0_3] : memref<1x64x512xbf16, #tpu.memory_space<vmem>>, vector<1x2x512xbf16>
    %3 = vector.shape_cast %2 : vector<1x2x512xbf16> to vector<2x512xbf16>
    %c54 = arith.constant 54 : index
    %c0_4 = arith.constant 0 : index
    %4 = vector.load %arg6[%c54, %c0_4] : memref<64x4608xbf16, #tpu.memory_space<vmem>>, vector<2x512xbf16>
    tpu.vector_store %arg6[%c54, %c0_4], %3 {strides = array<i32>} : memref<64x4608xbf16, #tpu.memory_space<vmem>>, vector<2x512xbf16>,
    %c0_5 = arith.constant 0 : index
    %c8 = arith.constant 8 : index
    %c0_6 = arith.constant 0 : index
    %5 = vector.load %arg1[%c0_5, %c8, %c0_6] : memref<1x64x512xbf16, #tpu.memory_space<vmem>>, vector<1x2x512xbf16>
    %6 = vector.shape_cast %5 : vector<1x2x512xbf16> to vector<2x512xbf16>
    %c62 = arith.constant 62 : index
    %c0_7 = arith.constant 0 : index
    %7 = vector.load %arg6[%c62, %c0_7] : memref<64x4608xbf16, #tpu.memory_space<vmem>>, vector<2x512xbf16>
    tpu.vector_store %arg6[%c62, %c0_7], %6 {strides = array<i32>} : memref<64x4608xbf16, #tpu.memory_space<vmem>>, vector<2x512xbf16>,
    %c0_8 = arith.constant 0 : index
    %c0_9 = arith.constant 0 : index
    %c0_10 = arith.constant 0 : index
    %8 = vector.load %arg1[%c0_8, %c0_9, %c0_10] : memref<1x64x512xbf16, #tpu.memory_space<vmem>>, vector<1x16x512xbf16>
    %9 = vector.shape_cast %8 : vector<1x16x512xbf16> to vector<16x512xbf16>
    %c48 = arith.constant 48 : index
    %c512 = arith.constant 512 : index
    %10 = vector.load %arg6[%c48, %c512] : memref<64x4608xbf16, #tpu.memory_space<vmem>>, vector<16x512xbf16>
    tpu.vector_store %arg6[%c48, %c512], %9 {strides = array<i32>} : memref<64x4608xbf16, #tpu.memory_space<vmem>>, vector<16x512xbf16>,
    %c0_11 = arith.constant 0 : index
    %c6 = arith.constant 6 : index
    %c0_12 = arith.constant 0 : index
    %11 = vector.load %arg1[%c0_11, %c6, %c0_12] : memref<1x64x512xbf16, #tpu.memory_space<vmem>>, vector<1x2x512xbf16>
    %12 = vector.shape_cast %11 : vector<1x2x512xbf16> to vector<2x512xbf16>
    %c48_13 = arith.constant 48 : index
    %c1024 = arith.constant 1024 : index
    %13 = vector.load %arg6[%c48_13, %c1024] : memref<64x4608xbf16, #tpu.memory_space<vmem>>, vector<2x512xbf16>
    tpu.vector_store %arg6[%c48_13, %c1024], %12 {strides = array<i32>} : memref<64x4608xbf16, #tpu.memory_space<vmem>>, vector<2x512xbf16>,
    %c0_14 = arith.constant 0 : index
    %c14 = arith.constant 14 : index
    %c0_15 = arith.constant 0 : index
    %14 = vector.load %arg1[%c0_14, %c14, %c0_15] : memref<1x64x512xbf16, #tpu.memory_space<vmem>>, vector<1x2x512xbf16>
    %15 = vector.shape_cast %14 : vector<1x2x512xbf16> to vector<2x512xbf16>
    %c56 = arith.constant 56 : index
    %c1024_16 = arith.constant 1024 : index
    %16 = vector.load %arg6[%c56, %c1024_16] : memref<64x4608xbf16, #tpu.memory_space<vmem>>, vector<2x512xbf16>
    tpu.vector_store %arg6[%c56, %c1024_16], %15 {strides = array<i32>} : memref<64x4608xbf16, #tpu.memory_space<vmem>>, vector<2x512xbf16>,
    %c0_17 = arith.constant 0 : index
    %c0_18 = arith.constant 0 : index
    %c0_19 = arith.constant 0 : index
    %17 = vector.load %arg1[%c0_17, %c0_18, %c0_19] : memref<1x64x512xbf16, #tpu.memory_space<vmem>>, vector<1x2x512xbf16>
    %18 = vector.shape_cast %17 : vector<1x2x512xbf16> to vector<2x512xbf16>
    %c6_20 = arith.constant 6 : index
    %c1536 = arith.constant 1536 : index
    %19 = vector.load %arg6[%c6_20, %c1536] : memref<64x4608xbf16, #tpu.memory_space<vmem>>, vector<2x512xbf16>
    tpu.vector_store %arg6[%c6_20, %c1536], %18 {strides = array<i32>} : memref<64x4608xbf16, #tpu.memory_space<vmem>>, vector<2x512xbf16>,
    %c0_21 = arith.constant 0 : index
    %c8_22 = arith.constant 8 : index
    %c0_23 = arith.constant 0 : index
    %20 = vector.load %arg1[%c0_21, %c8_22, %c0_23] : memref<1x64x512xbf16, #tpu.memory_space<vmem>>, vector<1x2x512xbf16>
    %21 = vector.shape_cast %20 : vector<1x2x512xbf16> to vector<2x512xbf16>
    %c14_24 = arith.constant 14 : index
    %c1536_25 = arith.constant 1536 : index
    %22 = vector.load %arg6[%c14_24, %c1536_25] : memref<64x4608xbf16, #tpu.memory_space<vmem>>, vector<2x512xbf16>
    tpu.vector_store %arg6[%c14_24, %c1536_25], %21 {strides = array<i32>} : memref<64x4608xbf16, #tpu.memory_space<vmem>>, vector<2x512xbf16>,
    %c0_26 = arith.constant 0 : index
    %c16 = arith.constant 16 : index
    %c0_27 = arith.constant 0 : index
    %23 = vector.load %arg1[%c0_26, %c16, %c0_27] : memref<1x64x512xbf16, #tpu.memory_space<vmem>>, vector<1x2x512xbf16>
    %24 = vector.shape_cast %23 : vector<1x2x512xbf16> to vector<2x512xbf16>
    %c22 = arith.constant 22 : index
    %c1536_28 = arith.constant 1536 : index
    %25 = vector.load %arg6[%c22, %c1536_28] : memref<64x4608xbf16, #tpu.memory_space<vmem>>, vector<2x512xbf16>
    tpu.vector_store %arg6[%c22, %c1536_28], %24 {strides = array<i32>} : memref<64x4608xbf16, #tpu.memory_space<vmem>>, vector<2x512xbf16>,
    %c0_29 = arith.constant 0 : index
    %c24 = arith.constant 24 : index
    %c0_30 = arith.constant 0 : index
    %26 = vector.load %arg1[%c0_29, %c24, %c0_30] : memref<1x64x512xbf16, #tpu.memory_space<vmem>>, vector<1x2x512xbf16>
    %27 = vector.shape_cast %26 : vector<1x2x512xbf16> to vector<2x512xbf16>
    %c30 = arith.constant 30 : index
    %c1536_31 = arith.constant 1536 : index
    %28 = vector.load %arg6[%c30, %c1536_31] : memref<64x4608xbf16, #tpu.memory_space<vmem>>, vector<2x512xbf16>
    tpu.vector_store %arg6[%c30, %c1536_31], %27 {strides = array<i32>} : memref<64x4608xbf16, #tpu.memory_space<vmem>>, vector<2x512xbf16>,
    %c0_32 = arith.constant 0 : index
    %c32 = arith.constant 32 : index
    %c0_33 = arith.constant 0 : index
    %29 = vector.load %arg1[%c0_32, %c32, %c0_33] : memref<1x64x512xbf16, #tpu.memory_space<vmem>>, vector<1x2x512xbf16>
    %30 = vector.shape_cast %29 : vector<1x2x512xbf16> to vector<2x512xbf16>
    %c38 = arith.constant 38 : index
    %c1536_34 = arith.constant 1536 : index
    %31 = vector.load %arg6[%c38, %c1536_34] : memref<64x4608xbf16, #tpu.memory_space<vmem>>, vector<2x512xbf16>
    tpu.vector_store %arg6[%c38, %c1536_34], %30 {strides = array<i32>} : memref<64x4608xbf16, #tpu.memory_space<vmem>>, vector<2x512xbf16>,
    %c0_35 = arith.constant 0 : index
    %c40 = arith.constant 40 : index
    %c0_36 = arith.constant 0 : index
    %32 = vector.load %arg1[%c0_35, %c40, %c0_36] : memref<1x64x512xbf16, #tpu.memory_space<vmem>>, vector<1x2x512xbf16>
    %33 = vector.shape_cast %32 : vector<1x2x512xbf16> to vector<2x512xbf16>
    %c46 = arith.constant 46 : index
    %c1536_37 = arith.constant 1536 : index
    %34 = vector.load %arg6[%c46, %c1536_37] : memref<64x4608xbf16, #tpu.memory_space<vmem>>, vector<2x512xbf16>
    tpu.vector_store %arg6[%c46, %c1536_37], %33 {strides = array<i32>} : memref<64x4608xbf16, #tpu.memory_space<vmem>>, vector<2x512xbf16>,
    %c0_38 = arith.constant 0 : index
    %c48_39 = arith.constant 48 : index
    %c0_40 = arith.constant 0 : index
    %35 = vector.load %arg1[%c0_38, %c48_39, %c0_40] : memref<1x64x512xbf16, #tpu.memory_space<vmem>>, vector<1x2x512xbf16>
    %36 = vector.shape_cast %35 : vector<1x2x512xbf16> to vector<2x512xbf16>
    %c54_41 = arith.constant 54 : index
    %c1536_42 = arith.constant 1536 : index
    %37 = vector.load %arg6[%c54_41, %c1536_42] : memref<64x4608xbf16, #tpu.memory_space<vmem>>, vector<2x512xbf16>
    tpu.vector_store %arg6[%c54_41, %c1536_42], %36 {strides = array<i32>} : memref<64x4608xbf16, #tpu.memory_space<vmem>>, vector<2x512xbf16>,
    %c0_43 = arith.constant 0 : index
    %c56_44 = arith.constant 56 : index
    %c0_45 = arith.constant 0 : index
    %38 = vector.load %arg1[%c0_43, %c56_44, %c0_45] : memref<1x64x512xbf16, #tpu.memory_space<vmem>>, vector<1x2x512xbf16>
    %39 = vector.shape_cast %38 : vector<1x2x512xbf16> to vector<2x512xbf16>
    %c62_46 = arith.constant 62 : index
    %c1536_47 = arith.constant 1536 : index
    %40 = vector.load %arg6[%c62_46, %c1536_47] : memref<64x4608xbf16, #tpu.memory_space<vmem>>, vector<2x512xbf16>
    tpu.vector_store %arg6[%c62_46, %c1536_47], %39 {strides = array<i32>} : memref<64x4608xbf16, #tpu.memory_space<vmem>>, vector<2x512xbf16>,
    %c0_48 = arith.constant 0 : index
    %c0_49 = arith.constant 0 : index
    %c0_50 = arith.constant 0 : index
    %41 = vector.load %arg1[%c0_48, %c0_49, %c0_50] : memref<1x64x512xbf16, #tpu.memory_space<vmem>>, vector<1x64x512xbf16>
    %42 = vector.shape_cast %41 : vector<1x64x512xbf16> to vector<64x512xbf16>
    %c0_51 = arith.constant 0 : index
    %c2048 = arith.constant 2048 : index
    %43 = vector.load %arg6[%c0_51, %c2048] : memref<64x4608xbf16, #tpu.memory_space<vmem>>, vector<64x512xbf16>
    tpu.vector_store %arg6[%c0_51, %c2048], %42 {strides = array<i32>} : memref<64x4608xbf16, #tpu.memory_space<vmem>>, vector<64x512xbf16>,
    %c0_52 = arith.constant 0 : index
    %c6_53 = arith.constant 6 : index
    %c0_54 = arith.constant 0 : index
    %44 = vector.load %arg1[%c0_52, %c6_53, %c0_54] : memref<1x64x512xbf16, #tpu.memory_space<vmem>>, vector<1x2x512xbf16>
    %45 = vector.shape_cast %44 : vector<1x2x512xbf16> to vector<2x512xbf16>
    %c0_55 = arith.constant 0 : index
    %c2560 = arith.constant 2560 : index
    %46 = vector.load %arg6[%c0_55, %c2560] : memref<64x4608xbf16, #tpu.memory_space<vmem>>, vector<2x512xbf16>
    tpu.vector_store %arg6[%c0_55, %c2560], %45 {strides = array<i32>} : memref<64x4608xbf16, #tpu.memory_space<vmem>>, vector<2x512xbf16>,
    %c0_56 = arith.constant 0 : index
    %c14_57 = arith.constant 14 : index
    %c0_58 = arith.constant 0 : index
    %47 = vector.load %arg1[%c0_56, %c14_57, %c0_58] : memref<1x64x512xbf16, #tpu.memory_space<vmem>>, vector<1x2x512xbf16>
    %48 = vector.shape_cast %47 : vector<1x2x512xbf16> to vector<2x512xbf16>
    %c8_59 = arith.constant 8 : index
    %c2560_60 = arith.constant 2560 : index
    %49 = vector.load %arg6[%c8_59, %c2560_60] : memref<64x4608xbf16, #tpu.memory_space<vmem>>, vector<2x512xbf16>
    tpu.vector_store %arg6[%c8_59, %c2560_60], %48 {strides = array<i32>} : memref<64x4608xbf16, #tpu.memory_space<vmem>>, vector<2x512xbf16>,
    %c0_61 = arith.constant 0 : index
    %c22_62 = arith.constant 22 : index
    %c0_63 = arith.constant 0 : index
    %50 = vector.load %arg1[%c0_61, %c22_62, %c0_63] : memref<1x64x512xbf16, #tpu.memory_space<vmem>>, vector<1x2x512xbf16>
    %51 = vector.shape_cast %50 : vector<1x2x512xbf16> to vector<2x512xbf16>
    %c16_64 = arith.constant 16 : index
    %c2560_65 = arith.constant 2560 : index
    %52 = vector.load %arg6[%c16_64, %c2560_65] : memref<64x4608xbf16, #tpu.memory_space<vmem>>, vector<2x512xbf16>
    tpu.vector_store %arg6[%c16_64, %c2560_65], %51 {strides = array<i32>} : memref<64x4608xbf16, #tpu.memory_space<vmem>>, vector<2x512xbf16>,
    %c0_66 = arith.constant 0 : index
    %c30_67 = arith.constant 30 : index
    %c0_68 = arith.constant 0 : index
    %53 = vector.load %arg1[%c0_66, %c30_67, %c0_68] : memref<1x64x512xbf16, #tpu.memory_space<vmem>>, vector<1x2x512xbf16>
    %54 = vector.shape_cast %53 : vector<1x2x512xbf16> to vector<2x512xbf16>
    %c24_69 = arith.constant 24 : index
    %c2560_70 = arith.constant 2560 : index
    %55 = vector.load %arg6[%c24_69, %c2560_70] : memref<64x4608xbf16, #tpu.memory_space<vmem>>, vector<2x512xbf16>
    tpu.vector_store %arg6[%c24_69, %c2560_70], %54 {strides = array<i32>} : memref<64x4608xbf16, #tpu.memory_space<vmem>>, vector<2x512xbf16>,
    %c0_71 = arith.constant 0 : index
    %c38_72 = arith.constant 38 : index
    %c0_73 = arith.constant 0 : index
    %56 = vector.load %arg1[%c0_71, %c38_72, %c0_73] : memref<1x64x512xbf16, #tpu.memory_space<vmem>>, vector<1x2x512xbf16>
    %57 = vector.shape_cast %56 : vector<1x2x512xbf16> to vector<2x512xbf16>
    %c32_74 = arith.constant 32 : index
    %c2560_75 = arith.constant 2560 : index
    %58 = vector.load %arg6[%c32_74, %c2560_75] : memref<64x4608xbf16, #tpu.memory_space<vmem>>, vector<2x512xbf16>
    tpu.vector_store %arg6[%c32_74, %c2560_75], %57 {strides = array<i32>} : memref<64x4608xbf16, #tpu.memory_space<vmem>>, vector<2x512xbf16>,
    %c0_76 = arith.constant 0 : index
    %c46_77 = arith.constant 46 : index
    %c0_78 = arith.constant 0 : index
    %59 = vector.load %arg1[%c0_76, %c46_77, %c0_78] : memref<1x64x512xbf16, #tpu.memory_space<vmem>>, vector<1x2x512xbf16>
    %60 = vector.shape_cast %59 : vector<1x2x512xbf16> to vector<2x512xbf16>
    %c40_79 = arith.constant 40 : index
    %c2560_80 = arith.constant 2560 : index
    %61 = vector.load %arg6[%c40_79, %c2560_80] : memref<64x4608xbf16, #tpu.memory_space<vmem>>, vector<2x512xbf16>
    tpu.vector_store %arg6[%c40_79, %c2560_80], %60 {strides = array<i32>} : memref<64x4608xbf16, #tpu.memory_space<vmem>>, vector<2x512xbf16>,
    %c0_81 = arith.constant 0 : index
    %c54_82 = arith.constant 54 : index
    %c0_83 = arith.constant 0 : index
    %62 = vector.load %arg1[%c0_81, %c54_82, %c0_83] : memref<1x64x512xbf16, #tpu.memory_space<vmem>>, vector<1x2x512xbf16>
    %63 = vector.shape_cast %62 : vector<1x2x512xbf16> to vector<2x512xbf16>
    %c48_84 = arith.constant 48 : index
    %c2560_85 = arith.constant 2560 : index
    %64 = vector.load %arg6[%c48_84, %c2560_85] : memref<64x4608xbf16, #tpu.memory_space<vmem>>, vector<2x512xbf16>
    tpu.vector_store %arg6[%c48_84, %c2560_85], %63 {strides = array<i32>} : memref<64x4608xbf16, #tpu.memory_space<vmem>>, vector<2x512xbf16>,
    %c0_86 = arith.constant 0 : index
    %c62_87 = arith.constant 62 : index
    %c0_88 = arith.constant 0 : index
    %65 = vector.load %arg1[%c0_86, %c62_87, %c0_88] : memref<1x64x512xbf16, #tpu.memory_space<vmem>>, vector<1x2x512xbf16>
    %66 = vector.shape_cast %65 : vector<1x2x512xbf16> to vector<2x512xbf16>
    %c56_89 = arith.constant 56 : index
    %c2560_90 = arith.constant 2560 : index
    %67 = vector.load %arg6[%c56_89, %c2560_90] : memref<64x4608xbf16, #tpu.memory_space<vmem>>, vector<2x512xbf16>
    tpu.vector_store %arg6[%c56_89, %c2560_90], %66 {strides = array<i32>} : memref<64x4608xbf16, #tpu.memory_space<vmem>>, vector<2x512xbf16>,
    %c0_91 = arith.constant 0 : index
    %c48_92 = arith.constant 48 : index
    %c0_93 = arith.constant 0 : index
    %68 = vector.load %arg1[%c0_91, %c48_92, %c0_93] : memref<1x64x512xbf16, #tpu.memory_space<vmem>>, vector<1x2x512xbf16>
    %69 = vector.shape_cast %68 : vector<1x2x512xbf16> to vector<2x512xbf16>
    %c6_94 = arith.constant 6 : index
    %c3072 = arith.constant 3072 : index
    %70 = vector.load %arg6[%c6_94, %c3072] : memref<64x4608xbf16, #tpu.memory_space<vmem>>, vector<2x512xbf16>
    tpu.vector_store %arg6[%c6_94, %c3072], %69 {strides = array<i32>} : memref<64x4608xbf16, #tpu.memory_space<vmem>>, vector<2x512xbf16>,
    %c0_95 = arith.constant 0 : index
    %c56_96 = arith.constant 56 : index
    %c0_97 = arith.constant 0 : index
    %71 = vector.load %arg1[%c0_95, %c56_96, %c0_97] : memref<1x64x512xbf16, #tpu.memory_space<vmem>>, vector<1x2x512xbf16>
    %72 = vector.shape_cast %71 : vector<1x2x512xbf16> to vector<2x512xbf16>
    %c14_98 = arith.constant 14 : index
    %c3072_99 = arith.constant 3072 : index
    %73 = vector.load %arg6[%c14_98, %c3072_99] : memref<64x4608xbf16, #tpu.memory_space<vmem>>, vector<2x512xbf16>
    tpu.vector_store %arg6[%c14_98, %c3072_99], %72 {strides = array<i32>} : memref<64x4608xbf16, #tpu.memory_space<vmem>>, vector<2x512xbf16>,
    %c0_100 = arith.constant 0 : index
    %c48_101 = arith.constant 48 : index
    %c0_102 = arith.constant 0 : index
    %74 = vector.load %arg1[%c0_100, %c48_101, %c0_102] : memref<1x64x512xbf16, #tpu.memory_space<vmem>>, vector<1x16x512xbf16>
    %75 = vector.shape_cast %74 : vector<1x16x512xbf16> to vector<16x512xbf16>
    %c0_103 = arith.constant 0 : index
    %c3584 = arith.constant 3584 : index
    %76 = vector.load %arg6[%c0_103, %c3584] : memref<64x4608xbf16, #tpu.memory_space<vmem>>, vector<16x512xbf16>
    tpu.vector_store %arg6[%c0_103, %c3584], %75 {strides = array<i32>} : memref<64x4608xbf16, #tpu.memory_space<vmem>>, vector<16x512xbf16>,
    %c0_104 = arith.constant 0 : index
    %c54_105 = arith.constant 54 : index
    %c0_106 = arith.constant 0 : index
    %77 = vector.load %arg1[%c0_104, %c54_105, %c0_106] : memref<1x64x512xbf16, #tpu.memory_space<vmem>>, vector<1x2x512xbf16>
    %78 = vector.shape_cast %77 : vector<1x2x512xbf16> to vector<2x512xbf16>
    %c0_107 = arith.constant 0 : index
    %c4096 = arith.constant 4096 : index
    %79 = vector.load %arg6[%c0_107, %c4096] : memref<64x4608xbf16, #tpu.memory_space<vmem>>, vector<2x512xbf16>
    tpu.vector_store %arg6[%c0_107, %c4096], %78 {strides = array<i32>} : memref<64x4608xbf16, #tpu.memory_space<vmem>>, vector<2x512xbf16>,
    %c0_108 = arith.constant 0 : index
    %c62_109 = arith.constant 62 : index
    %c0_110 = arith.constant 0 : index
    %80 = vector.load %arg1[%c0_108, %c62_109, %c0_110] : memref<1x64x512xbf16, #tpu.memory_space<vmem>>, vector<1x2x512xbf16>
    %81 = vector.shape_cast %80 : vector<1x2x512xbf16> to vector<2x512xbf16>
    %c8_111 = arith.constant 8 : index
    %c4096_112 = arith.constant 4096 : index
    %82 = vector.load %arg6[%c8_111, %c4096_112] : memref<64x4608xbf16, #tpu.memory_space<vmem>>, vector<2x512xbf16>
    tpu.vector_store %arg6[%c8_111, %c4096_112], %81 {strides = array<i32>} : memref<64x4608xbf16, #tpu.memory_space<vmem>>, vector<2x512xbf16>,
    %c0_113 = arith.constant 0 : index
    %c0_114 = arith.constant 0 : index
    %83 = vector.load %arg6[%c0_113, %c0_114] : memref<64x4608xbf16, #tpu.memory_space<vmem>>, vector<64x4608xbf16>
    %c0_115 = arith.constant 0 : index
    %c0_116 = arith.constant 0 : index
    %84 = vector.load %arg2[%c0_115, %c0_116] : memref<4608x256xbf16, #tpu.memory_space<vmem>>, vector<4608x256xbf16>
    %cst_117 = arith.constant dense<0.000000e+00> : vector<64x256xf32>
    %85 = tpu.matmul %83, %84, %cst_117 {dimension_numbers = #tpu.dot_dimension_numbers<[1], [0], [0], [1], [0, 0, 1, 1], [], []>} : vector<64x4608xbf16>, vector<4608x256xbf16>, vector<64x256xf32> -> vector<64x256xf32>
    %c0_118 = arith.constant 0 : index
    %c0_119 = arith.constant 0 : index
    %86 = vector.load %arg3[%c0_118, %c0_119] : memref<1x256xf32, #tpu.memory_space<vmem>>, vector<1x256xf32>
    %87 = vector.broadcast %86 : vector<1x256xf32> to vector<64x256xf32>
    %88 = arith.mulf %85, %87 : vector<64x256xf32>
    %c0_120 = arith.constant 0 : index
    %c0_121 = arith.constant 0 : index
    %89 = vector.load %arg4[%c0_120, %c0_121] : memref<1x256xf32, #tpu.memory_space<vmem>>, vector<1x256xf32>
    %90 = vector.broadcast %89 : vector<1x256xf32> to vector<64x256xf32>
    %91 = arith.addf %88, %90 : vector<64x256xf32>
    %cst_122 = arith.constant 0.000000e+00 : f32
    %92 = vector.broadcast %cst_122 : f32 to vector<64x256xf32>
    %93 = arith.maximumf %91, %92 : vector<64x256xf32>
    %94 = arith.truncf %93 : vector<64x256xf32> to vector<64x256xbf16>
    %c0_123 = arith.constant 0 : index
    %c0_124 = arith.constant 0 : index
    %c0_125 = arith.constant 0 : index
    %95 = vector.load %arg5[%c0_123, %c0_124, %c0_125] : memref<1x64x256xbf16, #tpu.memory_space<vmem>>, vector<1x64x256xbf16>
    %96 = vector.shape_cast %95 : vector<1x64x256xbf16> to vector<64x256xbf16>
    %97 = vector.shape_cast %94 : vector<64x256xbf16> to vector<1x64x256xbf16>
    tpu.vector_store %arg5[%c0_123, %c0_124, %c0_125], %97 {strides = array<i32>} : memref<1x64x256xbf16, #tpu.memory_space<vmem>>, vector<1x64x256xbf16>,
    return
  }
  func.func @transform_0(%arg0: i32) -> (i32, i32, i32) {
    %c0_i32 = arith.constant 0 : i32
    %c0_i32_0 = arith.constant 0 : i32
    %c0_i32_1 = arith.constant 0 : i32
    return %arg0, %c0_i32, %c0_i32_0 : i32, i32, i32
  }
  func.func @transform_1(%arg0: i32) -> (i32, i32) {
    %c0_i32 = arith.constant 0 : i32
    %c0_i32_0 = arith.constant 0 : i32
    %c0_i32_1 = arith.constant 0 : i32
    return %c0_i32, %c0_i32_0 : i32, i32
  }
  func.func @transform_2(%arg0: i32) -> (i32, i32) {
    %c0_i32 = arith.constant 0 : i32
    %c0_i32_0 = arith.constant 0 : i32
    %c0_i32_1 = arith.constant 0 : i32
    return %c0_i32, %c0_i32_0 : i32, i32
  }
  func.func @transform_3(%arg0: i32) -> (i32, i32) {
    %c0_i32 = arith.constant 0 : i32
    %c0_i32_0 = arith.constant 0 : i32
    %c0_i32_1 = arith.constant 0 : i32
    return %c0_i32, %c0_i32_0 : i32, i32
  }
  func.func @transform_4(%arg0: i32) -> (i32, i32, i32) {
    %c0_i32 = arith.constant 0 : i32
    %c0_i32_0 = arith.constant 0 : i32
    %c0_i32_1 = arith.constant 0 : i32
    return %arg0, %c0_i32, %c0_i32_0 : i32, i32, i32
  }
}

module attributes {stable_mosaic.version = 11 : i64} {
  func.func @_head_kernel(%arg0: i32, %arg1: memref<1x64x768xbf16, #tpu.memory_space<vmem>>, %arg2: memref<1x64x256xbf16, #tpu.memory_space<vmem>>, %arg3: memref<1x1x256xf32, #tpu.memory_space<vmem>>, %arg4: memref<768x256xbf16, #tpu.memory_space<vmem>>, %arg5: memref<256x256xbf16, #tpu.memory_space<vmem>>, %arg6: memref<1x256xf32, #tpu.memory_space<vmem>>, %arg7: memref<1x256xf32, #tpu.memory_space<vmem>>, %arg8: memref<256x64xbf16, #tpu.memory_space<vmem>>, %arg9: memref<256x256xbf16, #tpu.memory_space<vmem>>, %arg10: memref<1x64xf32, #tpu.memory_space<vmem>>, %arg11: memref<1x256xf32, #tpu.memory_space<vmem>>, %arg12: memref<1x1xf32, #tpu.memory_space<vmem>>, %arg13: memref<1x256xf32, #tpu.memory_space<vmem>>, %arg14: memref<1x256xf32, #tpu.memory_space<vmem>>, %arg15: memref<1x64x256xf32, #tpu.memory_space<vmem>>) attributes {dimension_semantics = [#tpu.dimension_semantics<parallel>], iteration_bounds = array<i64: 2>, scalar_prefetch = 0 : i64, scratch_operands = 0 : i64, tpu.core_type = #tpu.core_type<tc>, window_params = [{transform_indices = @transform_0, window_bounds = array<i64: 1, 64, 768>}, {transform_indices = @transform_1, window_bounds = array<i64: 1, 64, 256>}, {transform_indices = @transform_2, window_bounds = array<i64: 1, 1, 256>}, {pipeline_mode = #tpu.pipeline_mode<synchronous>, transform_indices = @transform_3, window_bounds = array<i64: 768, 256>}, {pipeline_mode = #tpu.pipeline_mode<synchronous>, transform_indices = @transform_4, window_bounds = array<i64: 256, 256>}, {pipeline_mode = #tpu.pipeline_mode<synchronous>, transform_indices = @transform_5, window_bounds = array<i64: 1, 256>}, {pipeline_mode = #tpu.pipeline_mode<synchronous>, transform_indices = @transform_6, window_bounds = array<i64: 1, 256>}, {pipeline_mode = #tpu.pipeline_mode<synchronous>, transform_indices = @transform_7, window_bounds = array<i64: 256, 64>}, {pipeline_mode = #tpu.pipeline_mode<synchronous>, transform_indices = @transform_8, window_bounds = array<i64: 256, 256>}, {pipeline_mode = #tpu.pipeline_mode<synchronous>, transform_indices = @transform_9, window_bounds = array<i64: 1, 64>}, {pipeline_mode = #tpu.pipeline_mode<synchronous>, transform_indices = @transform_10, window_bounds = array<i64: 1, 256>}, {pipeline_mode = #tpu.pipeline_mode<synchronous>, transform_indices = @transform_11, window_bounds = array<i64: 1, 1>}, {pipeline_mode = #tpu.pipeline_mode<synchronous>, transform_indices = @transform_12, window_bounds = array<i64: 1, 256>}, {pipeline_mode = #tpu.pipeline_mode<synchronous>, transform_indices = @transform_13, window_bounds = array<i64: 1, 256>}, {transform_indices = @transform_14, window_bounds = array<i64: 1, 64, 256>}]} {
    %c0 = arith.constant 0 : index
    %c0_0 = arith.constant 0 : index
    %c0_1 = arith.constant 0 : index
    %0 = vector.load %arg1[%c0, %c0_0, %c0_1] : memref<1x64x768xbf16, #tpu.memory_space<vmem>>, vector<1x64x768xbf16>
    %1 = vector.shape_cast %0 : vector<1x64x768xbf16> to vector<64x768xbf16>
    %c0_2 = arith.constant 0 : index
    %c0_3 = arith.constant 0 : index
    %2 = vector.load %arg4[%c0_2, %c0_3] : memref<768x256xbf16, #tpu.memory_space<vmem>>, vector<768x256xbf16>
    %cst = arith.constant dense<0.000000e+00> : vector<64x256xf32>
    %3 = tpu.matmul %1, %2, %cst {dimension_numbers = #tpu.dot_dimension_numbers<[1], [0], [0], [1], [0, 0, 1, 1], [], []>} : vector<64x768xbf16>, vector<768x256xbf16>, vector<64x256xf32> -> vector<64x256xf32>
    %c0_4 = arith.constant 0 : index
    %c0_5 = arith.constant 0 : index
    %c0_6 = arith.constant 0 : index
    %4 = vector.load %arg2[%c0_4, %c0_5, %c0_6] : memref<1x64x256xbf16, #tpu.memory_space<vmem>>, vector<1x64x256xbf16>
    %5 = vector.shape_cast %4 : vector<1x64x256xbf16> to vector<64x256xbf16>
    %c0_7 = arith.constant 0 : index
    %c0_8 = arith.constant 0 : index
    %6 = vector.load %arg5[%c0_7, %c0_8] : memref<256x256xbf16, #tpu.memory_space<vmem>>, vector<256x256xbf16>
    %cst_9 = arith.constant dense<0.000000e+00> : vector<64x256xf32>
    %7 = tpu.matmul %5, %6, %cst_9 {dimension_numbers = #tpu.dot_dimension_numbers<[1], [0], [0], [1], [0, 0, 1, 1], [], []>} : vector<64x256xbf16>, vector<256x256xbf16>, vector<64x256xf32> -> vector<64x256xf32>
    %8 = arith.addf %3, %7 : vector<64x256xf32>
    %c0_10 = arith.constant 0 : index
    %c0_11 = arith.constant 0 : index
    %c0_12 = arith.constant 0 : index
    %9 = vector.load %arg3[%c0_10, %c0_11, %c0_12] : memref<1x1x256xf32, #tpu.memory_space<vmem>>, vector<1x1x256xf32>
    %10 = vector.shape_cast %9 : vector<1x1x256xf32> to vector<1x256xf32>
    %11 = vector.broadcast %10 : vector<1x256xf32> to vector<64x256xf32>
    %12 = arith.addf %8, %11 : vector<64x256xf32>
    %c0_13 = arith.constant 0 : index
    %c0_14 = arith.constant 0 : index
    %13 = vector.load %arg6[%c0_13, %c0_14] : memref<1x256xf32, #tpu.memory_space<vmem>>, vector<1x256xf32>
    %14 = vector.broadcast %13 : vector<1x256xf32> to vector<64x256xf32>
    %15 = arith.mulf %12, %14 : vector<64x256xf32>
    %c0_15 = arith.constant 0 : index
    %c0_16 = arith.constant 0 : index
    %16 = vector.load %arg7[%c0_15, %c0_16] : memref<1x256xf32, #tpu.memory_space<vmem>>, vector<1x256xf32>
    %17 = vector.broadcast %16 : vector<1x256xf32> to vector<64x256xf32>
    %18 = arith.addf %15, %17 : vector<64x256xf32>
    %cst_17 = arith.constant 0.000000e+00 : f32
    %19 = vector.broadcast %cst_17 : f32 to vector<64x256xf32>
    %20 = arith.maximumf %18, %19 : vector<64x256xf32>
    %21 = arith.truncf %20 : vector<64x256xf32> to vector<64x256xbf16>
    %c0_18 = arith.constant 0 : index
    %c0_19 = arith.constant 0 : index
    %22 = vector.load %arg8[%c0_18, %c0_19] : memref<256x64xbf16, #tpu.memory_space<vmem>>, vector<256x64xbf16>
    %cst_20 = arith.constant dense<0.000000e+00> : vector<64x64xf32>
    %23 = tpu.matmul %21, %22, %cst_20 {dimension_numbers = #tpu.dot_dimension_numbers<[1], [0], [0], [1], [0, 0, 1, 1], [], []>} : vector<64x256xbf16>, vector<256x64xbf16>, vector<64x64xf32> -> vector<64x64xf32>
    %c0_21 = arith.constant 0 : index
    %c0_22 = arith.constant 0 : index
    %24 = vector.load %arg10[%c0_21, %c0_22] : memref<1x64xf32, #tpu.memory_space<vmem>>, vector<1x64xf32>
    %25 = vector.broadcast %24 : vector<1x64xf32> to vector<64x64xf32>
    %26 = arith.addf %23, %25 : vector<64x64xf32>
    %27 = arith.truncf %26 : vector<64x64xf32> to vector<64x64xbf16>
    %28 = vector.extract_strided_slice %27 {offsets = [0, 0], sizes = [64, 32], strides = [1, 1]} : vector<64x64xbf16> to vector<64x32xbf16>
    %29 = vector.extract_strided_slice %27 {offsets = [0, 32], sizes = [64, 32], strides = [1, 1]} : vector<64x64xbf16> to vector<64x32xbf16>
    %cst_23 = arith.constant dense<0.000000e+00> : vector<64x64xf32>
    %30 = tpu.matmul %28, %29, %cst_23 {dimension_numbers = #tpu.dot_dimension_numbers<[1], [1], [0], [0], [0, 0, 1, 0], [], []>} : vector<64x32xbf16>, vector<64x32xbf16>, vector<64x64xf32> -> vector<64x64xf32>
    %cst_24 = arith.constant dense<0xFF800000> : vector<64xf32>
    %31 = vector.multi_reduction <maximumf>, %30, %cst_24 [1] : vector<64x64xf32> to vector<64xf32>
    %32 = vector.shape_cast %31 : vector<64xf32> to vector<64x1xf32>
    %33 = vector.broadcast %32 : vector<64x1xf32> to vector<64x64xf32>
    %34 = arith.subf %30, %33 : vector<64x64xf32>
    %35 = math.exp %34 : vector<64x64xf32>
    %cst_25 = arith.constant dense<0.000000e+00> : vector<64xf32>
    %36 = vector.multi_reduction <add>, %35, %cst_25 [1] : vector<64x64xf32> to vector<64xf32>
    %37 = vector.shape_cast %36 : vector<64xf32> to vector<64x1xf32>
    %38 = tpu.reciprocal %37 {approx = true} : vector<64x1xf32> -> vector<64x1xf32>
    %39 = vector.broadcast %38 : vector<64x1xf32> to vector<64x64xf32>
    %40 = arith.mulf %35, %39 : vector<64x64xf32>
    %41 = arith.truncf %40 : vector<64x64xf32> to vector<64x64xbf16>
    %c0_26 = arith.constant 0 : index
    %c0_27 = arith.constant 0 : index
    %42 = vector.load %arg9[%c0_26, %c0_27] : memref<256x256xbf16, #tpu.memory_space<vmem>>, vector<256x256xbf16>
    %cst_28 = arith.constant dense<0.000000e+00> : vector<64x256xf32>
    %43 = tpu.matmul %21, %42, %cst_28 {dimension_numbers = #tpu.dot_dimension_numbers<[1], [0], [0], [1], [0, 0, 1, 1], [], []>} : vector<64x256xbf16>, vector<256x256xbf16>, vector<64x256xf32> -> vector<64x256xf32>
    %c0_29 = arith.constant 0 : index
    %c0_30 = arith.constant 0 : index
    %44 = vector.load %arg11[%c0_29, %c0_30] : memref<1x256xf32, #tpu.memory_space<vmem>>, vector<1x256xf32>
    %45 = vector.broadcast %44 : vector<1x256xf32> to vector<64x256xf32>
    %46 = arith.addf %43, %45 : vector<64x256xf32>
    %47 = arith.truncf %46 : vector<64x256xf32> to vector<64x256xbf16>
    %cst_31 = arith.constant dense<0.000000e+00> : vector<64x256xf32>
    %48 = tpu.matmul %41, %47, %cst_31 {dimension_numbers = #tpu.dot_dimension_numbers<[1], [0], [0], [1], [0, 0, 1, 1], [], []>} : vector<64x64xbf16>, vector<64x256xbf16>, vector<64x256xf32> -> vector<64x256xf32>
    %c0_32 = arith.constant 0 : index
    %c0_33 = arith.constant 0 : index
    %49 = vector.load %arg12[%c0_32, %c0_33] : memref<1x1xf32, #tpu.memory_space<vmem>>, vector<1x1xf32>
    %50 = vector.extract %49[0, 0] : f32 from vector<1x1xf32>
    %51 = vector.broadcast %50 : f32 to vector<64x256xf32>
    %52 = arith.mulf %51, %48 : vector<64x256xf32>
    %53 = arith.addf %52, %20 : vector<64x256xf32>
    %c0_34 = arith.constant 0 : index
    %c0_35 = arith.constant 0 : index
    %54 = vector.load %arg13[%c0_34, %c0_35] : memref<1x256xf32, #tpu.memory_space<vmem>>, vector<1x256xf32>
    %55 = vector.broadcast %54 : vector<1x256xf32> to vector<64x256xf32>
    %56 = arith.mulf %53, %55 : vector<64x256xf32>
    %c0_36 = arith.constant 0 : index
    %c0_37 = arith.constant 0 : index
    %57 = vector.load %arg14[%c0_36, %c0_37] : memref<1x256xf32, #tpu.memory_space<vmem>>, vector<1x256xf32>
    %58 = vector.broadcast %57 : vector<1x256xf32> to vector<64x256xf32>
    %59 = arith.addf %56, %58 : vector<64x256xf32>
    %cst_38 = arith.constant 0.000000e+00 : f32
    %60 = vector.broadcast %cst_38 : f32 to vector<64x256xf32>
    %61 = arith.maximumf %59, %60 : vector<64x256xf32>
    %c0_39 = arith.constant 0 : index
    %c0_40 = arith.constant 0 : index
    %c0_41 = arith.constant 0 : index
    %62 = vector.load %arg15[%c0_39, %c0_40, %c0_41] : memref<1x64x256xf32, #tpu.memory_space<vmem>>, vector<1x64x256xf32>
    %63 = vector.shape_cast %62 : vector<1x64x256xf32> to vector<64x256xf32>
    %64 = vector.shape_cast %61 : vector<64x256xf32> to vector<1x64x256xf32>
    tpu.vector_store %arg15[%c0_39, %c0_40, %c0_41], %64 {strides = array<i32>} : memref<1x64x256xf32, #tpu.memory_space<vmem>>, vector<1x64x256xf32>,
    return
  }
  func.func @transform_0(%arg0: i32) -> (i32, i32, i32) {
    %c0_i32 = arith.constant 0 : i32
    %c0_i32_0 = arith.constant 0 : i32
    %c0_i32_1 = arith.constant 0 : i32
    return %arg0, %c0_i32, %c0_i32_0 : i32, i32, i32
  }
  func.func @transform_1(%arg0: i32) -> (i32, i32, i32) {
    %c0_i32 = arith.constant 0 : i32
    %c0_i32_0 = arith.constant 0 : i32
    %c0_i32_1 = arith.constant 0 : i32
    return %arg0, %c0_i32, %c0_i32_0 : i32, i32, i32
  }
  func.func @transform_2(%arg0: i32) -> (i32, i32, i32) {
    %c0_i32 = arith.constant 0 : i32
    %c0_i32_0 = arith.constant 0 : i32
    %c0_i32_1 = arith.constant 0 : i32
    return %arg0, %c0_i32, %c0_i32_0 : i32, i32, i32
  }
  func.func @transform_3(%arg0: i32) -> (i32, i32) {
    %c0_i32 = arith.constant 0 : i32
    %c0_i32_0 = arith.constant 0 : i32
    %c0_i32_1 = arith.constant 0 : i32
    return %c0_i32, %c0_i32_0 : i32, i32
  }
  func.func @transform_4(%arg0: i32) -> (i32, i32) {
    %c0_i32 = arith.constant 0 : i32
    %c0_i32_0 = arith.constant 0 : i32
    %c0_i32_1 = arith.constant 0 : i32
    return %c0_i32, %c0_i32_0 : i32, i32
  }
  func.func @transform_5(%arg0: i32) -> (i32, i32) {
    %c0_i32 = arith.constant 0 : i32
    %c0_i32_0 = arith.constant 0 : i32
    %c0_i32_1 = arith.constant 0 : i32
    return %c0_i32, %c0_i32_0 : i32, i32
  }
  func.func @transform_6(%arg0: i32) -> (i32, i32) {
    %c0_i32 = arith.constant 0 : i32
    %c0_i32_0 = arith.constant 0 : i32
    %c0_i32_1 = arith.constant 0 : i32
    return %c0_i32, %c0_i32_0 : i32, i32
  }
  func.func @transform_7(%arg0: i32) -> (i32, i32) {
    %c0_i32 = arith.constant 0 : i32
    %c0_i32_0 = arith.constant 0 : i32
    %c0_i32_1 = arith.constant 0 : i32
    return %c0_i32, %c0_i32_0 : i32, i32
  }
  func.func @transform_8(%arg0: i32) -> (i32, i32) {
    %c0_i32 = arith.constant 0 : i32
    %c0_i32_0 = arith.constant 0 : i32
    %c0_i32_1 = arith.constant 0 : i32
    return %c0_i32, %c0_i32_0 : i32, i32
  }
  func.func @transform_9(%arg0: i32) -> (i32, i32) {
    %c0_i32 = arith.constant 0 : i32
    %c0_i32_0 = arith.constant 0 : i32
    %c0_i32_1 = arith.constant 0 : i32
    return %c0_i32, %c0_i32_0 : i32, i32
  }
  func.func @transform_10(%arg0: i32) -> (i32, i32) {
    %c0_i32 = arith.constant 0 : i32
    %c0_i32_0 = arith.constant 0 : i32
    %c0_i32_1 = arith.constant 0 : i32
    return %c0_i32, %c0_i32_0 : i32, i32
  }
  func.func @transform_11(%arg0: i32) -> (i32, i32) {
    %c0_i32 = arith.constant 0 : i32
    %c0_i32_0 = arith.constant 0 : i32
    %c0_i32_1 = arith.constant 0 : i32
    return %c0_i32, %c0_i32_0 : i32, i32
  }
  func.func @transform_12(%arg0: i32) -> (i32, i32) {
    %c0_i32 = arith.constant 0 : i32
    %c0_i32_0 = arith.constant 0 : i32
    %c0_i32_1 = arith.constant 0 : i32
    return %c0_i32, %c0_i32_0 : i32, i32
  }
  func.func @transform_13(%arg0: i32) -> (i32, i32) {
    %c0_i32 = arith.constant 0 : i32
    %c0_i32_0 = arith.constant 0 : i32
    %c0_i32_1 = arith.constant 0 : i32
    return %c0_i32, %c0_i32_0 : i32, i32
  }
  func.func @transform_14(%arg0: i32) -> (i32, i32, i32) {
    %c0_i32 = arith.constant 0 : i32
    %c0_i32_0 = arith.constant 0 : i32
    %c0_i32_1 = arith.constant 0 : i32
    return %arg0, %c0_i32, %c0_i32_0 : i32, i32, i32
  }
}

</mosaic_0001>

<llo_original>
// kernel: self_attention_aspp_forward.3
$region0: #{self_attention_aspp_forward.3}
  #allocation0 [shape = 'u32[]', space=smem, size = 0x4, offset = 0x4, fixed_abs, tag = 'smem constant byte address 0x4 - core index']
  #allocation1 [shape = 'u32[144,128]{1,0:T(1,128)}', space=vmem, size = 0x12000, scoped, tag = 'internal scratch']
  %s0 = inlined_call_operand.vmem [shape: bf16[128,512], index: 0, kind: input, shape index: {}]
  %s1 = inlined_call_operand.vmem [shape: bf16[512,768], index: 1, kind: input, shape index: {}]
  %s2 = inlined_call_operand.vmem [shape: f32[1,768], index: 2, kind: input, shape index: {}]
  %s3 = inlined_call_operand.vmem [shape: f32[1,768], index: 3, kind: input, shape index: {}]
  %s4 = inlined_call_operand.vmem [shape: bf16[128,768], index: 4, kind: output, shape index: {}]
  %s5 = sld [smem:[#allocation0]]
  $region97: #{self_attention_aspp_forward.3} parent=0
    _
  %s7 = ssub.s32 1, %s5
  %s8 = scalar_select 0, %s7, %s5
  $region1: #{self_attention_aspp_forward.3} parent=0
    #allocation2 [shape = 'u8[786432]{0}', space=vmem, size = 0xc0000, scoped, tag = 'input window, operand 1']
    #allocation3 [shape = 'u8[196608]{0}', space=vmem, size = 0x30000, scoped, tag = 'output window, operand 0']
    loop: start=0, step=1, limit=4
    $region2: #{self_attention_aspp_forward.3} parent=1 // loop_pre_header
      _
    $region3: #{self_attention_aspp_forward.3} parent=1 // loop_header
      %s10 = sphi 0, %s14
      %p11 = scmp.ge.s32.totalorder %s10, 4
      %s17 = sphi 0, %s29
      %s18 = sphi 0, %s25
      %s19 = sphi 0, %s17
      %s20 = sphi 0, %s18
      %s21 = sphi 0, %s19
      %s22 = sphi 0, %s20
      %s32 = sphi 0, %s34
      %s35 = sphi 0, %s32
      %s36 = sphi 0, %s35
      %s52 = sphi 0, %s36
      %s58 = sphi 0, %s60
      %s61 = sphi 0, %s58
      %s62 = sphi 0, %s61
      %s78 = sphi 0, %s62
      %s84 = sphi 0, %s86
      %s87 = sphi 0, %s84
      %s88 = sphi 0, %s87
      %s104 = sphi 0, %s88
      %s110 = sphi 0, %s112
      %s113 = sphi 0, %s110
      %s114 = sphi 0, %s113
      %s130 = sphi 0, %s114
      %s138 = sphi 0, %s140
      %s141 = sphi 0, %s138
      %s142 = sphi 0, %s141
      %s158 = sphi 0, %s142
    $region4: #{self_attention_aspp_forward.3} parent=1 // loop_header_branch
      %13 = sbr.rel (%p11) target = $region8
    $region5: #{self_attention_aspp_forward.3} parent=1 // loop_body
      %s15 = ssub.s32 %s10, 1
      %s16 = ssub.s32 %s10, 2
      %s23 = sadd.s32 1, %s18
      %p24 = scmp.ge.s32.totalorder %s23, 2
      %s25 = scalar_select %p24, 0, %s23
      %s26 = sadd.s32 1, %s17
      %s27 = scalar_select %p24, %s26, %s17
      %p28 = scmp.ge.s32.totalorder %s27, 1
      %s29 = scalar_select %p28, 0, %s27
      %s30 = ssub.s32 %s17, %s29
      %p31 = scmp.eq.s32.totalorder %s30, 0
      %s33 = sadd.s32 %s32, 1
      %s34 = scalar_select %p31, %s32, %s33
      %p37 = pneg %p31
      %p38 = scmp.eq.s32.totalorder %s10, 1
      %p39 = por %p37, %p38
      %p40 = scmp.ne.s32.totalorder %s32, %s35
      %p41 = scmp.eq.s32.totalorder %s10, 0
      %p42 = por %p40, %p41
      %p43 = scmp.ne.s32.totalorder %s32, %s35
      %p44 = scmp.eq.s32.totalorder %s15, 1
      %p45 = por %p43, %p44
      %p46 = scmp.ne.s32.totalorder %s35, %s36
      %p47 = scmp.eq.s32.totalorder %s15, 0
      %p48 = por %p46, %p47
      %p49 = scmp.ne.s32.totalorder %s35, %s36
      %p50 = scmp.eq.s32.totalorder %s16, 1
      %p51 = por %p49, %p50
      %p53 = scmp.ne.s32.totalorder %s36, %s52
      %p54 = scmp.eq.s32.totalorder %s16, 0
      %p55 = por %p53, %p54
      %s56 = ssub.s32 %s18, %s25
      %p57 = scmp.eq.s32.totalorder %s56, 0
      %s59 = sadd.s32 %s58, 1
      %s60 = scalar_select %p57, %s58, %s59
      %p63 = pneg %p57
      %p64 = scmp.eq.s32.totalorder %s10, 1
      %p65 = por %p63, %p64
      %p66 = scmp.ne.s32.totalorder %s58, %s61
      %p67 = scmp.eq.s32.totalorder %s10, 0
      %p68 = por %p66, %p67
      %p69 = scmp.ne.s32.totalorder %s58, %s61
      %p70 = scmp.eq.s32.totalorder %s15, 1
      %p71 = por %p69, %p70
      %p72 = scmp.ne.s32.totalorder %s61, %s62
      %p73 = scmp.eq.s32.totalorder %s15, 0
      %p74 = por %p72, %p73
      %p75 = scmp.ne.s32.totalorder %s61, %s62
      %p76 = scmp.eq.s32.totalorder %s16, 1
      %p77 = por %p75, %p76
      %p79 = scmp.ne.s32.totalorder %s62, %s78
      %p80 = scmp.eq.s32.totalorder %s16, 0
      %p81 = por %p79, %p80
      %s82 = ssub.s32 %s18, %s25
      %p83 = scmp.eq.s32.totalorder %s82, 0
      %s85 = sadd.s32 %s84, 1
      %s86 = scalar_select %p83, %s84, %s85
      %p89 = pneg %p83
      %p90 = scmp.eq.s32.totalorder %s10, 1
      %p91 = por %p89, %p90
      %p92 = scmp.ne.s32.totalorder %s84, %s87
      %p93 = scmp.eq.s32.totalorder %s10, 0
      %p94 = por %p92, %p93
      %p95 = scmp.ne.s32.totalorder %s84, %s87
      %p96 = scmp.eq.s32.totalorder %s15, 1
      %p97 = por %p95, %p96
      %p98 = scmp.ne.s32.totalorder %s87, %s88
      %p99 = scmp.eq.s32.totalorder %s15, 0
      %p100 = por %p98, %p99
      %p101 = scmp.ne.s32.totalorder %s87, %s88
      %p102 = scmp.eq.s32.totalorder %s16, 1
      %p103 = por %p101, %p102
      %p105 = scmp.ne.s32.totalorder %s88, %s104
      %p106 = scmp.eq.s32.totalorder %s16, 0
      %p107 = por %p105, %p106
      %s108 = ssub.s32 %s18, %s25
      %p109 = scmp.eq.s32.totalorder %s108, 0
      %s111 = sadd.s32 %s110, 1
      %s112 = scalar_select %p109, %s110, %s111
      %p115 = pneg %p109
      %p116 = scmp.eq.s32.totalorder %s10, 1
      %p117 = por %p115, %p116
      %p118 = scmp.ne.s32.totalorder %s110, %s113
      %p119 = scmp.eq.s32.totalorder %s10, 0
      %p120 = por %p118, %p119
      %p121 = scmp.ne.s32.totalorder %s110, %s113
      %p122 = scmp.eq.s32.totalorder %s15, 1
      %p123 = por %p121, %p122
      %p124 = scmp.ne.s32.totalorder %s113, %s114
      %p125 = scmp.eq.s32.totalorder %s15, 0
      %p126 = por %p124, %p125
      %p127 = scmp.ne.s32.totalorder %s113, %s114
      %p128 = scmp.eq.s32.totalorder %s16, 1
      %p129 = por %p127, %p128
      %p131 = scmp.ne.s32.totalorder %s114, %s130
      %p132 = scmp.eq.s32.totalorder %s16, 0
      %p133 = por %p131, %p132
      %s134 = ssub.s32 %s17, %s29
      %s135 = ssub.s32 %s18, %s25
      %s136 = sor.u32 %s134, %s135
      %p137 = scmp.eq.s32.totalorder %s136, 0
      %s139 = sadd.s32 %s138, 1
      %s140 = scalar_select %p137, %s138, %s139
      %p143 = pneg %p137
      %p144 = scmp.eq.s32.totalorder %s10, 1
      %p145 = por %p143, %p144
      %p146 = scmp.ne.s32.totalorder %s138, %s141
      %p147 = scmp.eq.s32.totalorder %s10, 0
      %p148 = por %p146, %p147
      %p149 = scmp.ne.s32.totalorder %s138, %s141
      %p150 = scmp.eq.s32.totalorder %s15, 1
      %p151 = por %p149, %p150
      %p152 = scmp.ne.s32.totalorder %s141, %s142
      %p153 = scmp.eq.s32.totalorder %s15, 0
      %p154 = por %p152, %p153
      %p155 = scmp.ne.s32.totalorder %s141, %s142
      %p156 = scmp.eq.s32.totalorder %s16, 1
      %p157 = por %p155, %p156
      %p159 = scmp.ne.s32.totalorder %s142, %s158
      %p160 = scmp.eq.s32.totalorder %s16, 0
      %p161 = por %p159, %p160
      %p162 = scmp.le.s32.totalorder 1, %s10
      %p163 = scmp.lt.s32.totalorder %s10, 3
      %p164 = pnand %p162, %p163
      %p165 = pneg %p164
      // Predicated region
      $region9: #{self_attention_aspp_forward.3} parent=5 // pred_check
        _
      $region10: #{self_attention_aspp_forward.3} parent=5 // pred_check_branch
        %167 = sbr.rel (%p164) target = $region12
      $region11: #{self_attention_aspp_forward.3} parent=5 // pred_region
        %s168 = ssub.s32 %s10, 1
        // Predicated region
        $region13: #{self_attention_aspp_forward.3} parent=11 // pred_check
          %p169 = pneg %p48
        $region14: #{self_attention_aspp_forward.3} parent=11 // pred_check_branch
          %171 = sbr.rel (%p169) target = $region16
        $region15: #{self_attention_aspp_forward.3} parent=11 // pred_region
          %s172 = smul.u32 16, %s19
          %p173 = scmp.lt.s32.totalorder %s172, 15
          %s174 = scalar_select %p173, %s172, 15
          %s175 = smul.addr %s174, 4
          %s176 = smul.addr %s175, 4
          %s177 = scalar_lea.vmem %s0, %s176
          %s178 = smul.u32 16, %s19
        $region16: #{self_attention_aspp_forward.3} parent=11 // pred_fallthru
          _
      $region12: #{self_attention_aspp_forward.3} parent=5 // pred_fallthru
        _
      %p179 = scmp.lt.s32.totalorder %s10, 2
      // Predicated region
      $region17: #{self_attention_aspp_forward.3} parent=5 // pred_check
        %p180 = pneg %p179
      $region18: #{self_attention_aspp_forward.3} parent=5 // pred_check_branch
        %182 = sbr.rel (%p180) target = $region20
      $region19: #{self_attention_aspp_forward.3} parent=5 // pred_region
        // Predicated region
        $region21: #{self_attention_aspp_forward.3} parent=19 // pred_check
          %p183 = pneg %p68
        $region22: #{self_attention_aspp_forward.3} parent=19 // pred_check_branch
          %185 = sbr.rel (%p183) target = $region24
        $region23: #{self_attention_aspp_forward.3} parent=19 // pred_region
          %s186 = sand.u32 %s58, 1
          %s187 = sand.u32 %s58, 1
          %s188 = smul.addr %s187, 768
          %s189 = scalar_lea.vmem [#allocation2], %s188
          %s190 = smul.u32 3, %s18
          %s191 = smul.addr %s190, 4
          %s192 = scalar_lea.vmem %s1, %s191
          // Predicated region
          $region25: #{self_attention_aspp_forward.3} parent=23 // pred_check
            _
          $region26: #{self_attention_aspp_forward.3} parent=23 // pred_check_branch
            %194 = sbr.rel (0) target = $region28
          $region27: #{self_attention_aspp_forward.3} parent=23 // pred_region
            // Predicated region
            $region29: #{self_attention_aspp_forward.3} parent=27 // pred_check
              _
            $region30: #{self_attention_aspp_forward.3} parent=27 // pred_check_branch
              %196 = sbr.rel (0) target = $region32
            $region31: #{self_attention_aspp_forward.3} parent=27 // pred_region
              %s197 = scalar_lea.vmem %s192, 8
              %s198 = scalar_lea.vmem %s189, 8 [#allocation2]
              loop: start=0, step=1, limit=1
              $region33: #{self_attention_aspp_forward.3} parent=31 // loop_pre_header
                _
              $region34: #{self_attention_aspp_forward.3} parent=31 // loop_header
                %s200 = sphi 0, %s204
                %p201 = scmp.ge.s32.totalorder %s200, 1
                %s205 = sphi %s192, %s192
                %s206 = sphi %s189, %s189
              $region35: #{self_attention_aspp_forward.3} parent=31 // loop_header_branch
                %203 = sbr.rel (%p201) target = $region39
              $region36: #{self_attention_aspp_forward.3} parent=31 // loop_body
                %v207 = vld [vmem:[%s205] sm:$0xff]
                %208 = vst [vmem:[%s206] sm:$0xff] %v207
                %v209 = vld [vmem:[%s205 + $0x18] sm:$0xff]
                %210 = vst [vmem:[%s206 + $0xc] sm:$0xff] %v209
                %v211 = vld [vmem:[%s205 + $0x30] sm:$0xff]
                %212 = vst [vmem:[%s206 + $0x18] sm:$0xff] %v211
                %v213 = vld [vmem:[%s205 + $0x48] sm:$0xff]
                %214 = vst [vmem:[%s206 + $0x24] sm:$0xff] %v213
                %v215 = vld [vmem:[%s205 + $0x60] sm:$0xff]
                %216 = vst [vmem:[%s206 + $0x30] sm:$0xff] %v215
                %v217 = vld [vmem:[%s205 + $0x78] sm:$0xff]
                %218 = vst [vmem:[%s206 + $0x3c] sm:$0xff] %v217
                %v219 = vld [vmem:[%s205 + $0x90] sm:$0xff]
                %220 = vst [vmem:[%s206 + $0x48] sm:$0xff] %v219
                %v221 = vld [vmem:[%s205 + $0xa8] sm:$0xff]
                %222 = vst [vmem:[%s206 + $0x54] sm:$0xff] %v221
                %v223 = vld [vmem:[%s205 + $0xc0] sm:$0xff]
                %224 = vst [vmem:[%s206 + $0x60] sm:$0xff] %v223
                %v225 = vld [vmem:[%s205 + $0xd8] sm:$0xff]
                %226 = vst [vmem:[%s206 + $0x6c] sm:$0xff] %v225
                %v227 = vld [vmem:[%s205 + $0xf0] sm:$0xff]
                %228 = vst [vmem:[%s206 + $0x78] sm:$0xff] %v227
                %v229 = vld [vmem:[%s205 + $0x108] sm:$0xff]
                %230 = vst [vmem:[%s206 + $0x84] sm:$0xff] %v229
                %v231 = vld [vmem:[%s205 + $0x120] sm:$0xff]
                %232 = vst [vmem:[%s206 + $0x90] sm:$0xff] %v231
                %v233 = vld [vmem:[%s205 + $0x138] sm:$0xff]
                %234 = vst [vmem:[%s206 + $0x9c] sm:$0xff] %v233
                %v235 = vld [vmem:[%s205 + $0x150] sm:$0xff]
                %236 = vst [vmem:[%s206 + $0xa8] sm:$0xff] %v235
                %v237 = vld [vmem:[%s205 + $0x168] sm:$0xff]
                %238 = vst [vmem:[%s206 + $0xb4] sm:$0xff] %v237
                %v239 = vld [vmem:[%s205 + $0x180] sm:$0xff]
                %240 = vst [vmem:[%s206 + $0xc0] sm:$0xff] %v239
                %v241 = vld [vmem:[%s205 + $0x198] sm:$0xff]
                %242 = vst [vmem:[%s206 + $0xcc] sm:$0xff] %v241
                %v243 = vld [vmem:[%s205 + $0x1b0] sm:$0xff]
                %244 = vst [vmem:[%s206 + $0xd8] sm:$0xff] %v243
                %v245 = vld [vmem:[%s205 + $0x1c8] sm:$0xff]
                %246 = vst [vmem:[%s206 + $0xe4] sm:$0xff] %v245
                %v247 = vld [vmem:[%s205 + $0x1e0] sm:$0xff]
                %248 = vst [vmem:[%s206 + $0xf0] sm:$0xff] %v247
                %v249 = vld [vmem:[%s205 + $0x1f8] sm:$0xff]
                %250 = vst [vmem:[%s206 + $0xfc] sm:$0xff] %v249
                %v251 = vld [vmem:[%s205 + $0x210] sm:$0xff]
                %252 = vst [vmem:[%s206 + $0x108] sm:$0xff] %v251
                %v253 = vld [vmem:[%s205 + $0x228] sm:$0xff]
                %254 = vst [vmem:[%s206 + $0x114] sm:$0xff] %v253
                %v255 = vld [vmem:[%s205 + $0x240] sm:$0xff]
                %256 = vst [vmem:[%s206 + $0x120] sm:$0xff] %v255
                %v257 = vld [vmem:[%s205 + $0x258] sm:$0xff]
                %258 = vst [vmem:[%s206 + $0x12c] sm:$0xff] %v257
                %v259 = vld [vmem:[%s205 + $0x270] sm:$0xff]
                %260 = vst [vmem:[%s206 + $0x138] sm:$0xff] %v259
                %v261 = vld [vmem:[%s205 + $0x288] sm:$0xff]
                %262 = vst [vmem:[%s206 + $0x144] sm:$0xff] %v261
                %v263 = vld [vmem:[%s205 + $0x2a0] sm:$0xff]
                %264 = vst [vmem:[%s206 + $0x150] sm:$0xff] %v263
                %v265 = vld [vmem:[%s205 + $0x2b8] sm:$0xff]
                %266 = vst [vmem:[%s206 + $0x15c] sm:$0xff] %v265
                %v267 = vld [vmem:[%s205 + $0x2d0] sm:$0xff]
                %268 = vst [vmem:[%s206 + $0x168] sm:$0xff] %v267
                %v269 = vld [vmem:[%s205 + $0x2e8] sm:$0xff]
                %270 = vst [vmem:[%s206 + $0x174] sm:$0xff] %v269
                %v271 = vld [vmem:[%s205 + $0x300] sm:$0xff]
                %272 = vst [vmem:[%s206 + $0x180] sm:$0xff] %v271
                %v273 = vld [vmem:[%s205 + $0x318] sm:$0xff]
                %274 = vst [vmem:[%s206 + $0x18c] sm:$0xff] %v273
                %v275 = vld [vmem:[%s205 + $0x330] sm:$0xff]
                %276 = vst [vmem:[%s206 + $0x198] sm:$0xff] %v275
                %v277 = vld [vmem:[%s205 + $0x348] sm:$0xff]
                %278 = vst [vmem:[%s206 + $0x1a4] sm:$0xff] %v277
                %v279 = vld [vmem:[%s205 + $0x360] sm:$0xff]
                %280 = vst [vmem:[%s206 + $0x1b0] sm:$0xff] %v279
                %v281 = vld [vmem:[%s205 + $0x378] sm:$0xff]
                %282 = vst [vmem:[%s206 + $0x1bc] sm:$0xff] %v281
                %v283 = vld [vmem:[%s205 + $0x390] sm:$0xff]
                %284 = vst [vmem:[%s206 + $0x1c8] sm:$0xff] %v283
                %v285 = vld [vmem:[%s205 + $0x3a8] sm:$0xff]
                %286 = vst [vmem:[%s206 + $0x1d4] sm:$0xff] %v285
                %v287 = vld [vmem:[%s205 + $0x3c0] sm:$0xff]
                %288 = vst [vmem:[%s206 + $0x1e0] sm:$0xff] %v287
                %v289 = vld [vmem:[%s205 + $0x3d8] sm:$0xff]
                %290 = vst [vmem:[%s206 + $0x1ec] sm:$0xff] %v289
                %v291 = vld [vmem:[%s205 + $0x3f0] sm:$0xff]
                %292 = vst [vmem:[%s206 + $0x1f8] sm:$0xff] %v291
                %v293 = vld [vmem:[%s205 + $0x408] sm:$0xff]
                %294 = vst [vmem:[%s206 + $0x204] sm:$0xff] %v293
                %v295 = vld [vmem:[%s205 + $0x420] sm:$0xff]
                %296 = vst [vmem:[%s206 + $0x210] sm:$0xff] %v295
                %v297 = vld [vmem:[%s205 + $0x438] sm:$0xff]
                %298 = vst [vmem:[%s206 + $0x21c] sm:$0xff] %v297
                %v299 = vld [vmem:[%s205 + $0x450] sm:$0xff]
                %300 = vst [vmem:[%s206 + $0x228] sm:$0xff] %v299
                %v301 = vld [vmem:[%s205 + $0x468] sm:$0xff]
                %302 = vst [vmem:[%s206 + $0x234] sm:$0xff] %v301
                %v303 = vld [vmem:[%s205 + $0x480] sm:$0xff]
                %304 = vst [vmem:[%s206 + $0x240] sm:$0xff] %v303
                %v305 = vld [vmem:[%s205 + $0x498] sm:$0xff]
                %306 = vst [vmem:[%s206 + $0x24c] sm:$0xff] %v305
                %v307 = vld [vmem:[%s205 + $0x4b0] sm:$0xff]
                %308 = vst [vmem:[%s206 + $0x258] sm:$0xff] %v307
                %v309 = vld [vmem:[%s205 + $0x4c8] sm:$0xff]
                %310 = vst [vmem:[%s206 + $0x264] sm:$0xff] %v309
                %v311 = vld [vmem:[%s205 + $0x4e0] sm:$0xff]
                %312 = vst [vmem:[%s206 + $0x270] sm:$0xff] %v311
                %v313 = vld [vmem:[%s205 + $0x4f8] sm:$0xff]
                %314 = vst [vmem:[%s206 + $0x27c] sm:$0xff] %v313
                %v315 = vld [vmem:[%s205 + $0x510] sm:$0xff]
                %316 = vst [vmem:[%s206 + $0x288] sm:$0xff] %v315
                %v317 = vld [vmem:[%s205 + $0x528] sm:$0xff]
                %318 = vst [vmem:[%s206 + $0x294] sm:$0xff] %v317
                %v319 = vld [vmem:[%s205 + $0x540] sm:$0xff]
                %320 = vst [vmem:[%s206 + $0x2a0] sm:$0xff] %v319
                %v321 = vld [vmem:[%s205 + $0x558] sm:$0xff]
                %322 = vst [vmem:[%s206 + $0x2ac] sm:$0xff] %v321
                %v323 = vld [vmem:[%s205 + $0x570] sm:$0xff]
                %324 = vst [vmem:[%s206 + $0x2b8] sm:$0xff] %v323
                %v325 = vld [vmem:[%s205 + $0x588] sm:$0xff]
                %326 = vst [vmem:[%s206 + $0x2c4] sm:$0xff] %v325
                %v327 = vld [vmem:[%s205 + $0x5a0] sm:$0xff]
                %328 = vst [vmem:[%s206 + $0x2d0] sm:$0xff] %v327
                %v329 = vld [vmem:[%s205 + $0x5b8] sm:$0xff]
                %330 = vst [vmem:[%s206 + $0x2dc] sm:$0xff] %v329
                %v331 = vld [vmem:[%s205 + $0x5d0] sm:$0xff]
                %332 = vst [vmem:[%s206 + $0x2e8] sm:$0xff] %v331
                %v333 = vld [vmem:[%s205 + $0x5e8] sm:$0xff]
                %334 = vst [vmem:[%s206 + $0x2f4] sm:$0xff] %v333
              $region37: #{self_attention_aspp_forward.3} parent=31 // loop_footer
                %s204 = sadd.s32 1, %s200
              $region38: #{self_attention_aspp_forward.3} parent=31 // loop_footer_branch
                %199 = sbr.rel target = $region34
              $region39: #{self_attention_aspp_forward.3} parent=31 // loop_exit
                _
              loop: start=0, step=1, limit=1
              $region40: #{self_attention_aspp_forward.3} parent=31 // loop_pre_header
                _
              $region41: #{self_attention_aspp_forward.3} parent=31 // loop_header
                %s337 = sphi 0, %s341
                %p338 = scmp.ge.s32.totalorder %s337, 1
                %s342 = sphi %s197, %s197
                %s343 = sphi %s198, %s198
              $region42: #{self_attention_aspp_forward.3} parent=31 // loop_header_branch
                %340 = sbr.rel (%p338) target = $region46
              $region43: #{self_attention_aspp_forward.3} parent=31 // loop_body
                %v344 = vld [vmem:[%s342] sm:$0xf]
                %345 = vst [vmem:[%s343] sm:$0xf] %v344
                %v346 = vld [vmem:[%s342 + $0x18] sm:$0xf]
                %347 = vst [vmem:[%s343 + $0xc] sm:$0xf] %v346
                %v348 = vld [vmem:[%s342 + $0x30] sm:$0xf]
                %349 = vst [vmem:[%s343 + $0x18] sm:$0xf] %v348
                %v350 = vld [vmem:[%s342 + $0x48] sm:$0xf]
                %351 = vst [vmem:[%s343 + $0x24] sm:$0xf] %v350
                %v352 = vld [vmem:[%s342 + $0x60] sm:$0xf]
                %353 = vst [vmem:[%s343 + $0x30] sm:$0xf] %v352
                %v354 = vld [vmem:[%s342 + $0x78] sm:$0xf]
                %355 = vst [vmem:[%s343 + $0x3c] sm:$0xf] %v354
                %v356 = vld [vmem:[%s342 + $0x90] sm:$0xf]
                %357 = vst [vmem:[%s343 + $0x48] sm:$0xf] %v356
                %v358 = vld [vmem:[%s342 + $0xa8] sm:$0xf]
                %359 = vst [vmem:[%s343 + $0x54] sm:$0xf] %v358
                %v360 = vld [vmem:[%s342 + $0xc0] sm:$0xf]
                %361 = vst [vmem:[%s343 + $0x60] sm:$0xf] %v360
                %v362 = vld [vmem:[%s342 + $0xd8] sm:$0xf]
                %363 = vst [vmem:[%s343 + $0x6c] sm:$0xf] %v362
                %v364 = vld [vmem:[%s342 + $0xf0] sm:$0xf]
                %365 = vst [vmem:[%s343 + $0x78] sm:$0xf] %v364
                %v366 = vld [vmem:[%s342 + $0x108] sm:$0xf]
                %367 = vst [vmem:[%s343 + $0x84] sm:$0xf] %v366
                %v368 = vld [vmem:[%s342 + $0x120] sm:$0xf]
                %369 = vst [vmem:[%s343 + $0x90] sm:$0xf] %v368
                %v370 = vld [vmem:[%s342 + $0x138] sm:$0xf]
                %371 = vst [vmem:[%s343 + $0x9c] sm:$0xf] %v370
                %v372 = vld [vmem:[%s342 + $0x150] sm:$0xf]
                %373 = vst [vmem:[%s343 + $0xa8] sm:$0xf] %v372
                %v374 = vld [vmem:[%s342 + $0x168] sm:$0xf]
                %375 = vst [vmem:[%s343 + $0xb4] sm:$0xf] %v374
                %v376 = vld [vmem:[%s342 + $0x180] sm:$0xf]
                %377 = vst [vmem:[%s343 + $0xc0] sm:$0xf] %v376
                %v378 = vld [vmem:[%s342 + $0x198] sm:$0xf]
                %379 = vst [vmem:[%s343 + $0xcc] sm:$0xf] %v378
                %v380 = vld [vmem:[%s342 + $0x1b0] sm:$0xf]
                %381 = vst [vmem:[%s343 + $0xd8] sm:$0xf] %v380
                %v382 = vld [vmem:[%s342 + $0x1c8] sm:$0xf]
                %383 = vst [vmem:[%s343 + $0xe4] sm:$0xf] %v382
                %v384 = vld [vmem:[%s342 + $0x1e0] sm:$0xf]
                %385 = vst [vmem:[%s343 + $0xf0] sm:$0xf] %v384
                %v386 = vld [vmem:[%s342 + $0x1f8] sm:$0xf]
                %387 = vst [vmem:[%s343 + $0xfc] sm:$0xf] %v386
                %v388 = vld [vmem:[%s342 + $0x210] sm:$0xf]
                %389 = vst [vmem:[%s343 + $0x108] sm:$0xf] %v388
                %v390 = vld [vmem:[%s342 + $0x228] sm:$0xf]
                %391 = vst [vmem:[%s343 + $0x114] sm:$0xf] %v390
                %v392 = vld [vmem:[%s342 + $0x240] sm:$0xf]
                %393 = vst [vmem:[%s343 + $0x120] sm:$0xf] %v392
                %v394 = vld [vmem:[%s342 + $0x258] sm:$0xf]
                %395 = vst [vmem:[%s343 + $0x12c] sm:$0xf] %v394
                %v396 = vld [vmem:[%s342 + $0x270] sm:$0xf]
                %397 = vst [vmem:[%s343 + $0x138] sm:$0xf] %v396
                %v398 = vld [vmem:[%s342 + $0x288] sm:$0xf]
                %399 = vst [vmem:[%s343 + $0x144] sm:$0xf] %v398
                %v400 = vld [vmem:[%s342 + $0x2a0] sm:$0xf]
                %401 = vst [vmem:[%s343 + $0x150] sm:$0xf] %v400
                %v402 = vld [vmem:[%s342 + $0x2b8] sm:$0xf]
                %403 = vst [vmem:[%s343 + $0x15c] sm:$0xf] %v402
                %v404 = vld [vmem:[%s342 + $0x2d0] sm:$0xf]
                %405 = vst [vmem:[%s343 + $0x168] sm:$0xf] %v404
                %v406 = vld [vmem:[%s342 + $0x2e8] sm:$0xf]
                %407 = vst [vmem:[%s343 + $0x174] sm:$0xf] %v406
                %v408 = vld [vmem:[%s342 + $0x300] sm:$0xf]
                %409 = vst [vmem:[%s343 + $0x180] sm:$0xf] %v408
                %v410 = vld [vmem:[%s342 + $0x318] sm:$0xf]
                %411 = vst [vmem:[%s343 + $0x18c] sm:$0xf] %v410
                %v412 = vld [vmem:[%s342 + $0x330] sm:$0xf]
                %413 = vst [vmem:[%s343 + $0x198] sm:$0xf] %v412
                %v414 = vld [vmem:[%s342 + $0x348] sm:$0xf]
                %415 = vst [vmem:[%s343 + $0x1a4] sm:$0xf] %v414
                %v416 = vld [vmem:[%s342 + $0x360] sm:$0xf]
                %417 = vst [vmem:[%s343 + $0x1b0] sm:$0xf] %v416
                %v418 = vld [vmem:[%s342 + $0x378] sm:$0xf]
                %419 = vst [vmem:[%s343 + $0x1bc] sm:$0xf] %v418
                %v420 = vld [vmem:[%s342 + $0x390] sm:$0xf]
                %421 = vst [vmem:[%s343 + $0x1c8] sm:$0xf] %v420
                %v422 = vld [vmem:[%s342 + $0x3a8] sm:$0xf]
                %423 = vst [vmem:[%s343 + $0x1d4] sm:$0xf] %v422
                %v424 = vld [vmem:[%s342 + $0x3c0] sm:$0xf]
                %425 = vst [vmem:[%s343 + $0x1e0] sm:$0xf] %v424
                %v426 = vld [vmem:[%s342 + $0x3d8] sm:$0xf]
                %427 = vst [vmem:[%s343 + $0x1ec] sm:$0xf] %v426
                %v428 = vld [vmem:[%s342 + $0x3f0] sm:$0xf]
                %429 = vst [vmem:[%s343 + $0x1f8] sm:$0xf] %v428
                %v430 = vld [vmem:[%s342 + $0x408] sm:$0xf]
                %431 = vst [vmem:[%s343 + $0x204] sm:$0xf] %v430
                %v432 = vld [vmem:[%s342 + $0x420] sm:$0xf]
                %433 = vst [vmem:[%s343 + $0x210] sm:$0xf] %v432
                %v434 = vld [vmem:[%s342 + $0x438] sm:$0xf]
                %435 = vst [vmem:[%s343 + $0x21c] sm:$0xf] %v434
                %v436 = vld [vmem:[%s342 + $0x450] sm:$0xf]
                %437 = vst [vmem:[%s343 + $0x228] sm:$0xf] %v436
                %v438 = vld [vmem:[%s342 + $0x468] sm:$0xf]
                %439 = vst [vmem:[%s343 + $0x234] sm:$0xf] %v438
                %v440 = vld [vmem:[%s342 + $0x480] sm:$0xf]
                %441 = vst [vmem:[%s343 + $0x240] sm:$0xf] %v440
                %v442 = vld [vmem:[%s342 + $0x498] sm:$0xf]
                %443 = vst [vmem:[%s343 + $0x24c] sm:$0xf] %v442
                %v444 = vld [vmem:[%s342 + $0x4b0] sm:$0xf]
                %445 = vst [vmem:[%s343 + $0x258] sm:$0xf] %v444
                %v446 = vld [vmem:[%s342 + $0x4c8] sm:$0xf]
                %447 = vst [vmem:[%s343 + $0x264] sm:$0xf] %v446
                %v448 = vld [vmem:[%s342 + $0x4e0] sm:$0xf]
                %449 = vst [vmem:[%s343 + $0x270] sm:$0xf] %v448
                %v450 = vld [vmem:[%s342 + $0x4f8] sm:$0xf]
                %451 = vst [vmem:[%s343 + $0x27c] sm:$0xf] %v450
                %v452 = vld [vmem:[%s342 + $0x510] sm:$0xf]
                %453 = vst [vmem:[%s343 + $0x288] sm:$0xf] %v452
                %v454 = vld [vmem:[%s342 + $0x528] sm:$0xf]
                %455 = vst [vmem:[%s343 + $0x294] sm:$0xf] %v454
                %v456 = vld [vmem:[%s342 + $0x540] sm:$0xf]
                %457 = vst [vmem:[%s343 + $0x2a0] sm:$0xf] %v456
                %v458 = vld [vmem:[%s342 + $0x558] sm:$0xf]
                %459 = vst [vmem:[%s343 + $0x2ac] sm:$0xf] %v458
                %v460 = vld [vmem:[%s342 + $0x570] sm:$0xf]
                %461 = vst [vmem:[%s343 + $0x2b8] sm:$0xf] %v460
                %v462 = vld [vmem:[%s342 + $0x588] sm:$0xf]
                %463 = vst [vmem:[%s343 + $0x2c4] sm:$0xf] %v462
                %v464 = vld [vmem:[%s342 + $0x5a0] sm:$0xf]
                %465 = vst [vmem:[%s343 + $0x2d0] sm:$0xf] %v464
                %v466 = vld [vmem:[%s342 + $0x5b8] sm:$0xf]
                %467 = vst [vmem:[%s343 + $0x2dc] sm:$0xf] %v466
                %v468 = vld [vmem:[%s342 + $0x5d0] sm:$0xf]
                %469 = vst [vmem:[%s343 + $0x2e8] sm:$0xf] %v468
                %v470 = vld [vmem:[%s342 + $0x5e8] sm:$0xf]
                %471 = vst [vmem:[%s343 + $0x2f4] sm:$0xf] %v470
              $region44: #{self_attention_aspp_forward.3} parent=31 // loop_footer
                %s341 = sadd.s32 1, %s337
              $region45: #{self_attention_aspp_forward.3} parent=31 // loop_footer_branch
                %336 = sbr.rel target = $region41
              $region46: #{self_attention_aspp_forward.3} parent=31 // loop_exit
                _
            $region32: #{self_attention_aspp_forward.3} parent=27 // pred_fallthru
              _
          $region28: #{self_attention_aspp_forward.3} parent=23 // pred_fallthru
            _
          %472 = vnop
        $region24: #{self_attention_aspp_forward.3} parent=19 // pred_fallthru
          _
        // Predicated region
        $region47: #{self_attention_aspp_forward.3} parent=19 // pred_check
          %p473 = pneg %p94
        $region48: #{self_attention_aspp_forward.3} parent=19 // pred_check_branch
          %475 = sbr.rel (%p473) target = $region50
        $region49: #{self_attention_aspp_forward.3} parent=19 // pred_region
          %s476 = smul.u32 3, %s18
          %p477 = scmp.lt.s32.totalorder %s476, 5
          %s478 = scalar_select %p477, %s476, 5
          %s479 = scalar_lea.vmem %s2, %s478
          %s480 = smul.u32 3, %s18
        $region50: #{self_attention_aspp_forward.3} parent=19 // pred_fallthru
          _
        // Predicated region
        $region51: #{self_attention_aspp_forward.3} parent=19 // pred_check
          %p481 = pneg %p120
        $region52: #{self_attention_aspp_forward.3} parent=19 // pred_check_branch
          %483 = sbr.rel (%p481) target = $region54
        $region53: #{self_attention_aspp_forward.3} parent=19 // pred_region
          %s484 = smul.u32 3, %s18
          %p485 = scmp.lt.s32.totalorder %s484, 5
          %s486 = scalar_select %p485, %s484, 5
          %s487 = scalar_lea.vmem %s3, %s486
          %s488 = smul.u32 3, %s18
        $region54: #{self_attention_aspp_forward.3} parent=19 // pred_fallthru
          _
      $region20: #{self_attention_aspp_forward.3} parent=5 // pred_fallthru
        _
      %p489 = scmp.le.s32.totalorder 1, %s10
      %p490 = scmp.lt.s32.totalorder %s10, 3
      %p491 = pnand %p489, %p490
      %p492 = pneg %p491
      // Predicated region
      $region55: #{self_attention_aspp_forward.3} parent=5 // pred_check
        _
      $region56: #{self_attention_aspp_forward.3} parent=5 // pred_check_branch
        %494 = sbr.rel (%p491) target = $region58
      $region57: #{self_attention_aspp_forward.3} parent=5 // pred_region
        %s495 = ssub.s32 %s10, 1
        %s496 = sand.u32 %s61, 1
        %s497 = sand.u32 %s61, 1
        %s498 = smul.addr %s497, 768
        %s499 = scalar_lea.vmem [#allocation2], %s498
        // Predicated region
        $region59: #{self_attention_aspp_forward.3} parent=57 // pred_check
          %p500 = pneg %p74
        $region60: #{self_attention_aspp_forward.3} parent=57 // pred_check_branch
          %502 = sbr.rel (%p500) target = $region62
        $region61: #{self_attention_aspp_forward.3} parent=57 // pred_region
          _
        $region62: #{self_attention_aspp_forward.3} parent=57 // pred_fallthru
          _
        %s503 = smul.u32 16, %s19
        %p504 = scmp.lt.s32.totalorder %s503, 15
        %s505 = scalar_select %p504, %s503, 15
        %s506 = smul.addr %s505, 4
        %s507 = smul.addr %s506, 4
        %s508 = scalar_lea.vmem %s0, %s507
        %p509 = pneg %p48
        %p510 = pneg %p45
        %s511 = sand.u32 %s61, 1
        %s512 = sand.u32 %s61, 1
        %s513 = smul.addr %s512, 768
        %s514 = scalar_lea.vmem [#allocation2], %s513
        %p515 = pneg %p74
        %p516 = pneg %p71
        %s517 = smul.u32 3, %s20
        %p518 = scmp.lt.s32.totalorder %s517, 5
        %s519 = scalar_select %p518, %s517, 5
        %s520 = scalar_lea.vmem %s2, %s519
        %p521 = pneg %p100
        %p522 = pneg %p97
        %s523 = smul.u32 3, %s20
        %p524 = scmp.lt.s32.totalorder %s523, 5
        %s525 = scalar_select %p524, %s523, 5
        %s526 = scalar_lea.vmem %s3, %s525
        %p527 = pneg %p126
        %p528 = pneg %p123
        %p529 = pneg %p154
        %p530 = pneg %p151
        %s531 = sand.u32 %s141, 1
        %s532 = sand.u32 %s141, 1
        %s533 = smul.addr %s532, 192
        %s534 = scalar_lea.vmem [#allocation3], %s533
        %s535 = smul.u32 16, %s19
        %p536 = scmp.lt.s32.totalorder %s535, 15
        %s537 = scalar_select %p536, %s535, 15
        %s538 = smul.addr %s537, 4
        %s539 = smul.addr %s538, 4
        %s540 = scalar_lea.vmem %s0, %s539
        %s541 = smul.u32 16, %s19
        %s542 = smul.u32 3, %s20
        %s543 = smul.u32 3, %s20
        %p544 = scmp.lt.s32.totalorder %s543, 5
        %s545 = scalar_select %p544, %s543, 5
        %s546 = scalar_lea.vmem %s2, %s545
        %s547 = smul.u32 3, %s20
        %s548 = smul.u32 3, %s20
        %p549 = scmp.lt.s32.totalorder %s548, 5
        %s550 = scalar_select %p549, %s548, 5
        %s551 = scalar_lea.vmem %s3, %s550
        %s552 = smul.u32 3, %s20
        %s553 = smul.u32 16, %s19
        %s554 = smul.u32 3, %s20
        %v556 = vld [vmem:[%s540] sm:$0xff]
        %v557 = vld [vmem:[%s540 + $0x8] sm:$0xff]
        %v558 = vld [vmem:[%s540 + $0x10] sm:$0xff]
        %v559 = vld [vmem:[%s540 + $0x18] sm:$0xff]
        %v560 = vld [vmem:[%s540 + $0x20] sm:$0xff]
        %v561 = vld [vmem:[%s540 + $0x28] sm:$0xff]
        %v562 = vld [vmem:[%s540 + $0x30] sm:$0xff]
        %v563 = vld [vmem:[%s540 + $0x38] sm:$0xff]
        %v564 = vld [vmem:[%s540 + $0x40] sm:$0xff]
        %v565 = vld [vmem:[%s540 + $0x48] sm:$0xff]
        %v566 = vld [vmem:[%s540 + $0x50] sm:$0xff]
        %v567 = vld [vmem:[%s540 + $0x58] sm:$0xff]
        %v568 = vld [vmem:[%s540 + $0x60] sm:$0xff]
        %v569 = vld [vmem:[%s540 + $0x68] sm:$0xff]
        %v570 = vld [vmem:[%s540 + $0x70] sm:$0xff]
        %v571 = vld [vmem:[%s540 + $0x78] sm:$0xff]
        %v572 = vld [vmem:[%s540 + $0x80] sm:$0xff]
        %v573 = vld [vmem:[%s540 + $0x88] sm:$0xff]
        %v574 = vld [vmem:[%s540 + $0x90] sm:$0xff]
        %v575 = vld [vmem:[%s540 + $0x98] sm:$0xff]
        %v576 = vld [vmem:[%s540 + $0xa0] sm:$0xff]
        %v577 = vld [vmem:[%s540 + $0xa8] sm:$0xff]
        %v578 = vld [vmem:[%s540 + $0xb0] sm:$0xff]
        %v579 = vld [vmem:[%s540 + $0xb8] sm:$0xff]
        %v580 = vld [vmem:[%s540 + $0xc0] sm:$0xff]
        %v581 = vld [vmem:[%s540 + $0xc8] sm:$0xff]
        %v582 = vld [vmem:[%s540 + $0xd0] sm:$0xff]
        %v583 = vld [vmem:[%s540 + $0xd8] sm:$0xff]
        %v584 = vld [vmem:[%s540 + $0xe0] sm:$0xff]
        %v585 = vld [vmem:[%s540 + $0xe8] sm:$0xff]
        %v586 = vld [vmem:[%s540 + $0xf0] sm:$0xff]
        %v587 = vld [vmem:[%s540 + $0xf8] sm:$0xff]
        %v588 = vld [vmem:[%s499] sm:$0xff]
        %v589 = vld [vmem:[%s499 + $0x8] sm:$0xf]
        %v590 = vld [vmem:[%s499 + $0xc] sm:$0xff]
        %v591 = vld [vmem:[%s499 + $0x14] sm:$0xf]
        %v592 = vld [vmem:[%s499 + $0x18] sm:$0xff]
        %v593 = vld [vmem:[%s499 + $0x20] sm:$0xf]
        %v594 = vld [vmem:[%s499 + $0x24] sm:$0xff]
        %v595 = vld [vmem:[%s499 + $0x2c] sm:$0xf]
        %v596 = vld [vmem:[%s499 + $0x30] sm:$0xff]
        %v597 = vld [vmem:[%s499 + $0x38] sm:$0xf]
        %v598 = vld [vmem:[%s499 + $0x3c] sm:$0xff]
        %v599 = vld [vmem:[%s499 + $0x44] sm:$0xf]
        %v600 = vld [vmem:[%s499 + $0x48] sm:$0xff]
        %v601 = vld [vmem:[%s499 + $0x50] sm:$0xf]
        %v602 = vld [vmem:[%s499 + $0x54] sm:$0xff]
        %v603 = vld [vmem:[%s499 + $0x5c] sm:$0xf]
        %v604 = vld [vmem:[%s499 + $0x60] sm:$0xff]
        %v605 = vld [vmem:[%s499 + $0x68] sm:$0xf]
        %v606 = vld [vmem:[%s499 + $0x6c] sm:$0xff]
        %v607 = vld [vmem:[%s499 + $0x74] sm:$0xf]
        %v608 = vld [vmem:[%s499 + $0x78] sm:$0xff]
        %v609 = vld [vmem:[%s499 + $0x80] sm:$0xf]
        %v610 = vld [vmem:[%s499 + $0x84] sm:$0xff]
        %v611 = vld [vmem:[%s499 + $0x8c] sm:$0xf]
        %v612 = vld [vmem:[%s499 + $0x90] sm:$0xff]
        %v613 = vld [vmem:[%s499 + $0x98] sm:$0xf]
        %v614 = vld [vmem:[%s499 + $0x9c] sm:$0xff]
        %v615 = vld [vmem:[%s499 + $0xa4] sm:$0xf]
        %v616 = vld [vmem:[%s499 + $0xa8] sm:$0xff]
        %v617 = vld [vmem:[%s499 + $0xb0] sm:$0xf]
        %v618 = vld [vmem:[%s499 + $0xb4] sm:$0xff]
        %v619 = vld [vmem:[%s499 + $0xbc] sm:$0xf]
        %v620 = vld [vmem:[%s499 + $0xc0] sm:$0xff]
        %v621 = vld [vmem:[%s499 + $0xc8] sm:$0xf]
        %v622 = vld [vmem:[%s499 + $0xcc] sm:$0xff]
        %v623 = vld [vmem:[%s499 + $0xd4] sm:$0xf]
        %v624 = vld [vmem:[%s499 + $0xd8] sm:$0xff]
        %v625 = vld [vmem:[%s499 + $0xe0] sm:$0xf]
        %v626 = vld [vmem:[%s499 + $0xe4] sm:$0xff]
        %v627 = vld [vmem:[%s499 + $0xec] sm:$0xf]
        %v628 = vld [vmem:[%s499 + $0xf0] sm:$0xff]
        %v629 = vld [vmem:[%s499 + $0xf8] sm:$0xf]
        %v630 = vld [vmem:[%s499 + $0xfc] sm:$0xff]
        %v631 = vld [vmem:[%s499 + $0x104] sm:$0xf]
        %v632 = vld [vmem:[%s499 + $0x108] sm:$0xff]
        %v633 = vld [vmem:[%s499 + $0x110] sm:$0xf]
        %v634 = vld [vmem:[%s499 + $0x114] sm:$0xff]
        %v635 = vld [vmem:[%s499 + $0x11c] sm:$0xf]
        %v636 = vld [vmem:[%s499 + $0x120] sm:$0xff]
        %v637 = vld [vmem:[%s499 + $0x128] sm:$0xf]
        %v638 = vld [vmem:[%s499 + $0x12c] sm:$0xff]
        %v639 = vld [vmem:[%s499 + $0x134] sm:$0xf]
        %v640 = vld [vmem:[%s499 + $0x138] sm:$0xff]
        %v641 = vld [vmem:[%s499 + $0x140] sm:$0xf]
        %v642 = vld [vmem:[%s499 + $0x144] sm:$0xff]
        %v643 = vld [vmem:[%s499 + $0x14c] sm:$0xf]
        %v644 = vld [vmem:[%s499 + $0x150] sm:$0xff]
        %v645 = vld [vmem:[%s499 + $0x158] sm:$0xf]
        %v646 = vld [vmem:[%s499 + $0x15c] sm:$0xff]
        %v647 = vld [vmem:[%s499 + $0x164] sm:$0xf]
        %v648 = vld [vmem:[%s499 + $0x168] sm:$0xff]
        %v649 = vld [vmem:[%s499 + $0x170] sm:$0xf]
        %v650 = vld [vmem:[%s499 + $0x174] sm:$0xff]
        %v651 = vld [vmem:[%s499 + $0x17c] sm:$0xf]
        %v652 = vld [vmem:[%s499 + $0x180] sm:$0xff]
        %v653 = vld [vmem:[%s499 + $0x188] sm:$0xf]
        %v654 = vld [vmem:[%s499 + $0x18c] sm:$0xff]
        %v655 = vld [vmem:[%s499 + $0x194] sm:$0xf]
        %v656 = vld [vmem:[%s499 + $0x198] sm:$0xff]
        %v657 = vld [vmem:[%s499 + $0x1a0] sm:$0xf]
        %v658 = vld [vmem:[%s499 + $0x1a4] sm:$0xff]
        %v659 = vld [vmem:[%s499 + $0x1ac] sm:$0xf]
        %v660 = vld [vmem:[%s499 + $0x1b0] sm:$0xff]
        %v661 = vld [vmem:[%s499 + $0x1b8] sm:$0xf]
        %v662 = vld [vmem:[%s499 + $0x1bc] sm:$0xff]
        %v663 = vld [vmem:[%s499 + $0x1c4] sm:$0xf]
        %v664 = vld [vmem:[%s499 + $0x1c8] sm:$0xff]
        %v665 = vld [vmem:[%s499 + $0x1d0] sm:$0xf]
        %v666 = vld [vmem:[%s499 + $0x1d4] sm:$0xff]
        %v667 = vld [vmem:[%s499 + $0x1dc] sm:$0xf]
        %v668 = vld [vmem:[%s499 + $0x1e0] sm:$0xff]
        %v669 = vld [vmem:[%s499 + $0x1e8] sm:$0xf]
        %v670 = vld [vmem:[%s499 + $0x1ec] sm:$0xff]
        %v671 = vld [vmem:[%s499 + $0x1f4] sm:$0xf]
        %v672 = vld [vmem:[%s499 + $0x1f8] sm:$0xff]
        %v673 = vld [vmem:[%s499 + $0x200] sm:$0xf]
        %v674 = vld [vmem:[%s499 + $0x204] sm:$0xff]
        %v675 = vld [vmem:[%s499 + $0x20c] sm:$0xf]
        %v676 = vld [vmem:[%s499 + $0x210] sm:$0xff]
        %v677 = vld [vmem:[%s499 + $0x218] sm:$0xf]
        %v678 = vld [vmem:[%s499 + $0x21c] sm:$0xff]
        %v679 = vld [vmem:[%s499 + $0x224] sm:$0xf]
        %v680 = vld [vmem:[%s499 + $0x228] sm:$0xff]
        %v681 = vld [vmem:[%s499 + $0x230] sm:$0xf]
        %v682 = vld [vmem:[%s499 + $0x234] sm:$0xff]
        %v683 = vld [vmem:[%s499 + $0x23c] sm:$0xf]
        %v684 = vld [vmem:[%s499 + $0x240] sm:$0xff]
        %v685 = vld [vmem:[%s499 + $0x248] sm:$0xf]
        %v686 = vld [vmem:[%s499 + $0x24c] sm:$0xff]
        %v687 = vld [vmem:[%s499 + $0x254] sm:$0xf]
        %v688 = vld [vmem:[%s499 + $0x258] sm:$0xff]
        %v689 = vld [vmem:[%s499 + $0x260] sm:$0xf]
        %v690 = vld [vmem:[%s499 + $0x264] sm:$0xff]
        %v691 = vld [vmem:[%s499 + $0x26c] sm:$0xf]
        %v692 = vld [vmem:[%s499 + $0x270] sm:$0xff]
        %v693 = vld [vmem:[%s499 + $0x278] sm:$0xf]
        %v694 = vld [vmem:[%s499 + $0x27c] sm:$0xff]
        %v695 = vld [vmem:[%s499 + $0x284] sm:$0xf]
        %v696 = vld [vmem:[%s499 + $0x288] sm:$0xff]
        %v697 = vld [vmem:[%s499 + $0x290] sm:$0xf]
        %v698 = vld [vmem:[%s499 + $0x294] sm:$0xff]
        %v699 = vld [vmem:[%s499 + $0x29c] sm:$0xf]
        %v700 = vld [vmem:[%s499 + $0x2a0] sm:$0xff]
        %v701 = vld [vmem:[%s499 + $0x2a8] sm:$0xf]
        %v702 = vld [vmem:[%s499 + $0x2ac] sm:$0xff]
        %v703 = vld [vmem:[%s499 + $0x2b4] sm:$0xf]
        %v704 = vld [vmem:[%s499 + $0x2b8] sm:$0xff]
        %v705 = vld [vmem:[%s499 + $0x2c0] sm:$0xf]
        %v706 = vld [vmem:[%s499 + $0x2c4] sm:$0xff]
        %v707 = vld [vmem:[%s499 + $0x2cc] sm:$0xf]
        %v708 = vld [vmem:[%s499 + $0x2d0] sm:$0xff]
        %v709 = vld [vmem:[%s499 + $0x2d8] sm:$0xf]
        %v710 = vld [vmem:[%s499 + $0x2dc] sm:$0xff]
        %v711 = vld [vmem:[%s499 + $0x2e4] sm:$0xf]
        %v712 = vld [vmem:[%s499 + $0x2e8] sm:$0xff]
        %v713 = vld [vmem:[%s499 + $0x2f0] sm:$0xf]
        %v714 = vld [vmem:[%s499 + $0x2f4] sm:$0xff]
        %v715 = vld [vmem:[%s499 + $0x2fc] sm:$0xf]
        %v748 = vunpack.c.l.b16 %v556
        %v749 = vunpack.c.h.b16 %v556
        %v750 = vunpack.c.l.b16 %v557
        %v751 = vunpack.c.h.b16 %v557
        %v752 = vunpack.c.l.b16 %v558
        %v753 = vunpack.c.h.b16 %v558
        %v754 = vunpack.c.l.b16 %v559
        %v755 = vunpack.c.h.b16 %v559
        %v756 = vunpack.c.l.b16 %v560
        %v757 = vunpack.c.h.b16 %v560
        %v758 = vunpack.c.l.b16 %v561
        %v759 = vunpack.c.h.b16 %v561
        %v760 = vunpack.c.l.b16 %v562
        %v761 = vunpack.c.h.b16 %v562
        %v762 = vunpack.c.l.b16 %v563
        %v763 = vunpack.c.h.b16 %v563
        %v764 = vunpack.c.l.b16 %v564
        %v765 = vunpack.c.h.b16 %v564
        %v766 = vunpack.c.l.b16 %v565
        %v767 = vunpack.c.h.b16 %v565
        %v768 = vunpack.c.l.b16 %v566
        %v769 = vunpack.c.h.b16 %v566
        %v770 = vunpack.c.l.b16 %v567
        %v771 = vunpack.c.h.b16 %v567
        %v772 = vunpack.c.l.b16 %v568
        %v773 = vunpack.c.h.b16 %v568
        %v774 = vunpack.c.l.b16 %v569
        %v775 = vunpack.c.h.b16 %v569
        %v776 = vunpack.c.l.b16 %v570
        %v777 = vunpack.c.h.b16 %v570
        %v778 = vunpack.c.l.b16 %v571
        %v779 = vunpack.c.h.b16 %v571
        %v780 = vunpack.c.l.b16 %v572
        %v781 = vunpack.c.h.b16 %v572
        %v782 = vunpack.c.l.b16 %v573
        %v783 = vunpack.c.h.b16 %v573
        %v784 = vunpack.c.l.b16 %v574
        %v785 = vunpack.c.h.b16 %v574
        %v786 = vunpack.c.l.b16 %v575
        %v787 = vunpack.c.h.b16 %v575
        %v788 = vunpack.c.l.b16 %v576
        %v789 = vunpack.c.h.b16 %v576
        %v790 = vunpack.c.l.b16 %v577
        %v791 = vunpack.c.h.b16 %v577
        %v792 = vunpack.c.l.b16 %v578
        %v793 = vunpack.c.h.b16 %v578
        %v794 = vunpack.c.l.b16 %v579
        %v795 = vunpack.c.h.b16 %v579
        %v796 = vunpack.c.l.b16 %v580
        %v797 = vunpack.c.h.b16 %v580
        %v798 = vunpack.c.l.b16 %v581
        %v799 = vunpack.c.h.b16 %v581
        %v800 = vunpack.c.l.b16 %v582
        %v801 = vunpack.c.h.b16 %v582
        %v802 = vunpack.c.l.b16 %v583
        %v803 = vunpack.c.h.b16 %v583
        %v804 = vunpack.c.l.b16 %v584
        %v805 = vunpack.c.h.b16 %v584
        %v806 = vunpack.c.l.b16 %v585
        %v807 = vunpack.c.h.b16 %v585
        %v808 = vunpack.c.l.b16 %v586
        %v809 = vunpack.c.h.b16 %v586
        %v810 = vunpack.c.l.b16 %v587
        %v811 = vunpack.c.h.b16 %v587
        %v812 = vpack.c.b16 %v752, %v748
        %v813 = vpack.c.b16 %v753, %v749
        %v814 = vpack.c.b16 %v754, %v750
        %v815 = vpack.c.b16 %v755, %v751
        %v816 = vpack.c.b16 %v760, %v756
        %v817 = vpack.c.b16 %v761, %v757
        %v818 = vpack.c.b16 %v762, %v758
        %v819 = vpack.c.b16 %v763, %v759
        %v820 = vpack.c.b16 %v768, %v764
        %v821 = vpack.c.b16 %v769, %v765
        %v822 = vpack.c.b16 %v770, %v766
        %v823 = vpack.c.b16 %v771, %v767
        %v824 = vpack.c.b16 %v776, %v772
        %v825 = vpack.c.b16 %v777, %v773
        %v826 = vpack.c.b16 %v778, %v774
        %v827 = vpack.c.b16 %v779, %v775
        %v828 = vpack.c.b16 %v784, %v780
        %v829 = vpack.c.b16 %v785, %v781
        %v830 = vpack.c.b16 %v786, %v782
        %v831 = vpack.c.b16 %v787, %v783
        %v832 = vpack.c.b16 %v792, %v788
        %v833 = vpack.c.b16 %v793, %v789
        %v834 = vpack.c.b16 %v794, %v790
        %v835 = vpack.c.b16 %v795, %v791
        %v836 = vpack.c.b16 %v800, %v796
        %v837 = vpack.c.b16 %v801, %v797
        %v838 = vpack.c.b16 %v802, %v798
        %v839 = vpack.c.b16 %v803, %v799
        %v840 = vpack.c.b16 %v808, %v804
        %v841 = vpack.c.b16 %v809, %v805
        %v842 = vpack.c.b16 %v810, %v806
        %v843 = vpack.c.b16 %v811, %v807
        %v1004 = vunpack.c.l.b16 %v588
        %v1005 = vunpack.c.h.b16 %v588
        %v1006 = vunpack.c.l.b16 %v589
        %v1007 = vunpack.c.l.b16 %v590
        %v1008 = vunpack.c.h.b16 %v590
        %v1009 = vunpack.c.l.b16 %v591
        %v1010 = vunpack.c.l.b16 %v592
        %v1011 = vunpack.c.h.b16 %v592
        %v1012 = vunpack.c.l.b16 %v593
        %v1013 = vunpack.c.l.b16 %v594
        %v1014 = vunpack.c.h.b16 %v594
        %v1015 = vunpack.c.l.b16 %v595
        %v1016 = vunpack.c.l.b16 %v596
        %v1017 = vunpack.c.h.b16 %v596
        %v1018 = vunpack.c.l.b16 %v597
        %v1019 = vunpack.c.l.b16 %v598
        %v1020 = vunpack.c.h.b16 %v598
        %v1021 = vunpack.c.l.b16 %v599
        %v1022 = vunpack.c.l.b16 %v600
        %v1023 = vunpack.c.h.b16 %v600
        %v1024 = vunpack.c.l.b16 %v601
        %v1025 = vunpack.c.l.b16 %v602
        %v1026 = vunpack.c.h.b16 %v602
        %v1027 = vunpack.c.l.b16 %v603
        %v1028 = vunpack.c.l.b16 %v604
        %v1029 = vunpack.c.h.b16 %v604
        %v1030 = vunpack.c.l.b16 %v605
        %v1031 = vunpack.c.l.b16 %v606
        %v1032 = vunpack.c.h.b16 %v606
        %v1033 = vunpack.c.l.b16 %v607
        %v1034 = vunpack.c.l.b16 %v608
        %v1035 = vunpack.c.h.b16 %v608
        %v1036 = vunpack.c.l.b16 %v609
        %v1037 = vunpack.c.l.b16 %v610
        %v1038 = vunpack.c.h.b16 %v610
        %v1039 = vunpack.c.l.b16 %v611
        %v1040 = vunpack.c.l.b16 %v612
        %v1041 = vunpack.c.h.b16 %v612
        %v1042 = vunpack.c.l.b16 %v613
        %v1043 = vunpack.c.l.b16 %v614
        %v1044 = vunpack.c.h.b16 %v614
        %v1045 = vunpack.c.l.b16 %v615
        %v1046 = vunpack.c.l.b16 %v616
        %v1047 = vunpack.c.h.b16 %v616
        %v1048 = vunpack.c.l.b16 %v617
        %v1049 = vunpack.c.l.b16 %v618
        %v1050 = vunpack.c.h.b16 %v618
        %v1051 = vunpack.c.l.b16 %v619
        %v1052 = vunpack.c.l.b16 %v620
        %v1053 = vunpack.c.h.b16 %v620
        %v1054 = vunpack.c.l.b16 %v621
        %v1055 = vunpack.c.l.b16 %v622
        %v1056 = vunpack.c.h.b16 %v622
        %v1057 = vunpack.c.l.b16 %v623
        %v1058 = vunpack.c.l.b16 %v624
        %v1059 = vunpack.c.h.b16 %v624
        %v1060 = vunpack.c.l.b16 %v625
        %v1061 = vunpack.c.l.b16 %v626
        %v1062 = vunpack.c.h.b16 %v626
        %v1063 = vunpack.c.l.b16 %v627
        %v1064 = vunpack.c.l.b16 %v628
        %v1065 = vunpack.c.h.b16 %v628
        %v1066 = vunpack.c.l.b16 %v629
        %v1067 = vunpack.c.l.b16 %v630
        %v1068 = vunpack.c.h.b16 %v630
        %v1069 = vunpack.c.l.b16 %v631
        %v1070 = vunpack.c.l.b16 %v632
        %v1071 = vunpack.c.h.b16 %v632
        %v1072 = vunpack.c.l.b16 %v633
        %v1073 = vunpack.c.l.b16 %v634
        %v1074 = vunpack.c.h.b16 %v634
        %v1075 = vunpack.c.l.b16 %v635
        %v1076 = vunpack.c.l.b16 %v636
        %v1077 = vunpack.c.h.b16 %v636
        %v1078 = vunpack.c.l.b16 %v637
        %v1079 = vunpack.c.l.b16 %v638
        %v1080 = vunpack.c.h.b16 %v638
        %v1081 = vunpack.c.l.b16 %v639
        %v1082 = vunpack.c.l.b16 %v640
        %v1083 = vunpack.c.h.b16 %v640
        %v1084 = vunpack.c.l.b16 %v641
        %v1085 = vunpack.c.l.b16 %v642
        %v1086 = vunpack.c.h.b16 %v642
        %v1087 = vunpack.c.l.b16 %v643
        %v1088 = vunpack.c.l.b16 %v644
        %v1089 = vunpack.c.h.b16 %v644
        %v1090 = vunpack.c.l.b16 %v645
        %v1091 = vunpack.c.l.b16 %v646
        %v1092 = vunpack.c.h.b16 %v646
        %v1093 = vunpack.c.l.b16 %v647
        %v1094 = vunpack.c.l.b16 %v648
        %v1095 = vunpack.c.h.b16 %v648
        %v1096 = vunpack.c.l.b16 %v649
        %v1097 = vunpack.c.l.b16 %v650
        %v1098 = vunpack.c.h.b16 %v650
        %v1099 = vunpack.c.l.b16 %v651
        %v1100 = vunpack.c.l.b16 %v652
        %v1101 = vunpack.c.h.b16 %v652
        %v1102 = vunpack.c.l.b16 %v653
        %v1103 = vunpack.c.l.b16 %v654
        %v1104 = vunpack.c.h.b16 %v654
        %v1105 = vunpack.c.l.b16 %v655
        %v1106 = vunpack.c.l.b16 %v656
        %v1107 = vunpack.c.h.b16 %v656
        %v1108 = vunpack.c.l.b16 %v657
        %v1109 = vunpack.c.l.b16 %v658
        %v1110 = vunpack.c.h.b16 %v658
        %v1111 = vunpack.c.l.b16 %v659
        %v1112 = vunpack.c.l.b16 %v660
        %v1113 = vunpack.c.h.b16 %v660
        %v1114 = vunpack.c.l.b16 %v661
        %v1115 = vunpack.c.l.b16 %v662
        %v1116 = vunpack.c.h.b16 %v662
        %v1117 = vunpack.c.l.b16 %v663
        %v1118 = vunpack.c.l.b16 %v664
        %v1119 = vunpack.c.h.b16 %v664
        %v1120 = vunpack.c.l.b16 %v665
        %v1121 = vunpack.c.l.b16 %v666
        %v1122 = vunpack.c.h.b16 %v666
        %v1123 = vunpack.c.l.b16 %v667
        %v1124 = vunpack.c.l.b16 %v668
        %v1125 = vunpack.c.h.b16 %v668
        %v1126 = vunpack.c.l.b16 %v669
        %v1127 = vunpack.c.l.b16 %v670
        %v1128 = vunpack.c.h.b16 %v670
        %v1129 = vunpack.c.l.b16 %v671
        %v1130 = vunpack.c.l.b16 %v672
        %v1131 = vunpack.c.h.b16 %v672
        %v1132 = vunpack.c.l.b16 %v673
        %v1133 = vunpack.c.l.b16 %v674
        %v1134 = vunpack.c.h.b16 %v674
        %v1135 = vunpack.c.l.b16 %v675
        %v1136 = vunpack.c.l.b16 %v676
        %v1137 = vunpack.c.h.b16 %v676
        %v1138 = vunpack.c.l.b16 %v677
        %v1139 = vunpack.c.l.b16 %v678
        %v1140 = vunpack.c.h.b16 %v678
        %v1141 = vunpack.c.l.b16 %v679
        %v1142 = vunpack.c.l.b16 %v680
        %v1143 = vunpack.c.h.b16 %v680
        %v1144 = vunpack.c.l.b16 %v681
        %v1145 = vunpack.c.l.b16 %v682
        %v1146 = vunpack.c.h.b16 %v682
        %v1147 = vunpack.c.l.b16 %v683
        %v1148 = vunpack.c.l.b16 %v684
        %v1149 = vunpack.c.h.b16 %v684
        %v1150 = vunpack.c.l.b16 %v685
        %v1151 = vunpack.c.l.b16 %v686
        %v1152 = vunpack.c.h.b16 %v686
        %v1153 = vunpack.c.l.b16 %v687
        %v1154 = vunpack.c.l.b16 %v688
        %v1155 = vunpack.c.h.b16 %v688
        %v1156 = vunpack.c.l.b16 %v689
        %v1157 = vunpack.c.l.b16 %v690
        %v1158 = vunpack.c.h.b16 %v690
        %v1159 = vunpack.c.l.b16 %v691
        %v1160 = vunpack.c.l.b16 %v692
        %v1161 = vunpack.c.h.b16 %v692
        %v1162 = vunpack.c.l.b16 %v693
        %v1163 = vunpack.c.l.b16 %v694
        %v1164 = vunpack.c.h.b16 %v694
        %v1165 = vunpack.c.l.b16 %v695
        %v1166 = vunpack.c.l.b16 %v696
        %v1167 = vunpack.c.h.b16 %v696
        %v1168 = vunpack.c.l.b16 %v697
        %v1169 = vunpack.c.l.b16 %v698
        %v1170 = vunpack.c.h.b16 %v698
        %v1171 = vunpack.c.l.b16 %v699
        %v1172 = vunpack.c.l.b16 %v700
        %v1173 = vunpack.c.h.b16 %v700
        %v1174 = vunpack.c.l.b16 %v701
        %v1175 = vunpack.c.l.b16 %v702
        %v1176 = vunpack.c.h.b16 %v702
        %v1177 = vunpack.c.l.b16 %v703
        %v1178 = vunpack.c.l.b16 %v704
        %v1179 = vunpack.c.h.b16 %v704
        %v1180 = vunpack.c.l.b16 %v705
        %v1181 = vunpack.c.l.b16 %v706
        %v1182 = vunpack.c.h.b16 %v706
        %v1183 = vunpack.c.l.b16 %v707
        %v1184 = vunpack.c.l.b16 %v708
        %v1185 = vunpack.c.h.b16 %v708
        %v1186 = vunpack.c.l.b16 %v709
        %v1187 = vunpack.c.l.b16 %v710
        %v1188 = vunpack.c.h.b16 %v710
        %v1189 = vunpack.c.l.b16 %v711
        %v1190 = vunpack.c.l.b16 %v712
        %v1191 = vunpack.c.h.b16 %v712
        %v1192 = vunpack.c.l.b16 %v713
        %v1193 = vunpack.c.l.b16 %v714
        %v1194 = vunpack.c.h.b16 %v714
        %v1195 = vunpack.c.l.b16 %v715
        %v1196 = vpack.c.b16 %v1007, %v1004
        %v1197 = vpack.c.b16 %v1008, %v1005
        %v1198 = vpack.c.b16 %v1009, %v1006
        %v1199 = vpack.c.b16 %v1013, %v1010
        %v1200 = vpack.c.b16 %v1014, %v1011
        %v1201 = vpack.c.b16 %v1015, %v1012
        %v1202 = vpack.c.b16 %v1019, %v1016
        %v1203 = vpack.c.b16 %v1020, %v1017
        %v1204 = vpack.c.b16 %v1021, %v1018
        %v1205 = vpack.c.b16 %v1025, %v1022
        %v1206 = vpack.c.b16 %v1026, %v1023
        %v1207 = vpack.c.b16 %v1027, %v1024
        %v1208 = vpack.c.b16 %v1031, %v1028
        %v1209 = vpack.c.b16 %v1032, %v1029
        %v1210 = vpack.c.b16 %v1033, %v1030
        %v1211 = vpack.c.b16 %v1037, %v1034
        %v1212 = vpack.c.b16 %v1038, %v1035
        %v1213 = vpack.c.b16 %v1039, %v1036
        %v1214 = vpack.c.b16 %v1043, %v1040
        %v1215 = vpack.c.b16 %v1044, %v1041
        %v1216 = vpack.c.b16 %v1045, %v1042
        %v1217 = vpack.c.b16 %v1049, %v1046
        %v1218 = vpack.c.b16 %v1050, %v1047
        %v1219 = vpack.c.b16 %v1051, %v1048
        %v1220 = vpack.c.b16 %v1055, %v1052
        %v1221 = vpack.c.b16 %v1056, %v1053
        %v1222 = vpack.c.b16 %v1057, %v1054
        %v1223 = vpack.c.b16 %v1061, %v1058
        %v1224 = vpack.c.b16 %v1062, %v1059
        %v1225 = vpack.c.b16 %v1063, %v1060
        %v1226 = vpack.c.b16 %v1067, %v1064
        %v1227 = vpack.c.b16 %v1068, %v1065
        %v1228 = vpack.c.b16 %v1069, %v1066
        %v1229 = vpack.c.b16 %v1073, %v1070
        %v1230 = vpack.c.b16 %v1074, %v1071
        %v1231 = vpack.c.b16 %v1075, %v1072
        %v1232 = vpack.c.b16 %v1079, %v1076
        %v1233 = vpack.c.b16 %v1080, %v1077
        %v1234 = vpack.c.b16 %v1081, %v1078
        %v1235 = vpack.c.b16 %v1085, %v1082
        %v1236 = vpack.c.b16 %v1086, %v1083
        %v1237 = vpack.c.b16 %v1087, %v1084
        %v1238 = vpack.c.b16 %v1091, %v1088
        %v1239 = vpack.c.b16 %v1092, %v1089
        %v1240 = vpack.c.b16 %v1093, %v1090
        %v1241 = vpack.c.b16 %v1097, %v1094
        %v1242 = vpack.c.b16 %v1098, %v1095
        %v1243 = vpack.c.b16 %v1099, %v1096
        %v1244 = vpack.c.b16 %v1103, %v1100
        %v1245 = vpack.c.b16 %v1104, %v1101
        %v1246 = vpack.c.b16 %v1105, %v1102
        %v1247 = vpack.c.b16 %v1109, %v1106
        %v1248 = vpack.c.b16 %v1110, %v1107
        %v1249 = vpack.c.b16 %v1111, %v1108
        %v1250 = vpack.c.b16 %v1115, %v1112
        %v1251 = vpack.c.b16 %v1116, %v1113
        %v1252 = vpack.c.b16 %v1117, %v1114
        %v1253 = vpack.c.b16 %v1121, %v1118
        %v1254 = vpack.c.b16 %v1122, %v1119
        %v1255 = vpack.c.b16 %v1123, %v1120
        %v1256 = vpack.c.b16 %v1127, %v1124
        %v1257 = vpack.c.b16 %v1128, %v1125
        %v1258 = vpack.c.b16 %v1129, %v1126
        %v1259 = vpack.c.b16 %v1133, %v1130
        %v1260 = vpack.c.b16 %v1134, %v1131
        %v1261 = vpack.c.b16 %v1135, %v1132
        %v1262 = vpack.c.b16 %v1139, %v1136
        %v1263 = vpack.c.b16 %v1140, %v1137
        %v1264 = vpack.c.b16 %v1141, %v1138
        %v1265 = vpack.c.b16 %v1145, %v1142
        %v1266 = vpack.c.b16 %v1146, %v1143
        %v1267 = vpack.c.b16 %v1147, %v1144
        %v1268 = vpack.c.b16 %v1151, %v1148
        %v1269 = vpack.c.b16 %v1152, %v1149
        %v1270 = vpack.c.b16 %v1153, %v1150
        %v1271 = vpack.c.b16 %v1157, %v1154
        %v1272 = vpack.c.b16 %v1158, %v1155
        %v1273 = vpack.c.b16 %v1159, %v1156
        %v1274 = vpack.c.b16 %v1163, %v1160
        %v1275 = vpack.c.b16 %v1164, %v1161
        %v1276 = vpack.c.b16 %v1165, %v1162
        %v1277 = vpack.c.b16 %v1169, %v1166
        %v1278 = vpack.c.b16 %v1170, %v1167
        %v1279 = vpack.c.b16 %v1171, %v1168
        %v1280 = vpack.c.b16 %v1175, %v1172
        %v1281 = vpack.c.b16 %v1176, %v1173
        %v1282 = vpack.c.b16 %v1177, %v1174
        %v1283 = vpack.c.b16 %v1181, %v1178
        %v1284 = vpack.c.b16 %v1182, %v1179
        %v1285 = vpack.c.b16 %v1183, %v1180
        %v1286 = vpack.c.b16 %v1187, %v1184
        %v1287 = vpack.c.b16 %v1188, %v1185
        %v1288 = vpack.c.b16 %v1189, %v1186
        %v1289 = vpack.c.b16 %v1193, %v1190
        %v1290 = vpack.c.b16 %v1194, %v1191
        %v1291 = vpack.c.b16 %v1195, %v1192
        %1388 = vmatprep.subr.bf16.mxu0 %v1197
        %1389 = vmatpush1.bf16.msra.mxu0 %v1196
        %1390 = vmatprep.subr.bf16.mxu0 %v1200
        %1391 = vmatpush1.bf16.msra.mxu0 %v1199
        %1392 = vmatprep.subr.bf16.mxu0 %v1203
        %1393 = vmatpush1.bf16.msra.mxu0 %v1202
        %1394 = vmatprep.subr.bf16.mxu0 %v1206
        %1395 = vmatpush1.bf16.msra.mxu0 %v1205
        %1396 = vmatprep.subr.bf16.mxu0 %v1209
        %1397 = vmatpush1.bf16.msra.mxu0 %v1208
        %1398 = vmatprep.subr.bf16.mxu0 %v1212
        %1399 = vmatpush1.bf16.msra.mxu0 %v1211
        %1400 = vmatprep.subr.bf16.mxu0 %v1215
        %1401 = vmatpush1.bf16.msra.mxu0 %v1214
        %1402 = vmatprep.subr.bf16.mxu0 %v1218
        %1403 = vmatpush1.bf16.msra.mxu0 %v1217
        %1404 = vmatprep.subr.bf16.mxu0 %v1221
        %1405 = vmatpush1.bf16.msra.mxu0 %v1220
        %1406 = vmatprep.subr.bf16.mxu0 %v1224
        %1407 = vmatpush1.bf16.msra.mxu0 %v1223
        %1408 = vmatprep.subr.bf16.mxu0 %v1227
        %1409 = vmatpush1.bf16.msra.mxu0 %v1226
        %1410 = vmatprep.subr.bf16.mxu0 %v1230
        %1411 = vmatpush1.bf16.msra.mxu0 %v1229
        %1412 = vmatprep.subr.bf16.mxu0 %v1233
        %1413 = vmatpush1.bf16.msra.mxu0 %v1232
        %1414 = vmatprep.subr.bf16.mxu0 %v1236
        %1415 = vmatpush1.bf16.msra.mxu0 %v1235
        %1416 = vmatprep.subr.bf16.mxu0 %v1239
        %1417 = vmatpush1.bf16.msra.mxu0 %v1238
        %1418 = vmatprep.subr.bf16.mxu0 %v1242
        %1419 = vmatpush1.bf16.msra.mxu0 %v1241
        %1420 = vmatprep.mubr.bf16.mxu0 %v813
        %1421 = vmatmul.mubr.bf16.gmra.mrb[0].mxu0 %v812
        %v1422 = vpop.f32.mrb[0].mxu0
        %v1423 = vadd.f32 0.0, %v1422
        %v1424 = vpop.f32.mrb[0].mxu0
        %v1425 = vadd.f32 0.0, %v1424
        %v1426 = vpop.f32.mrb[0].mxu0
        %v1427 = vadd.f32 0.0, %v1426
        %v1428 = vpop.f32.mrb[0].mxu0
        %v1429 = vadd.f32 0.0, %v1428
        %1430 = vmatprep.mubr.bf16.mxu0 %v817
        %1431 = vmatmul.mubr.bf16.gmra.mrb[0].mxu0 %v816
        %v1432 = vpop.f32.mrb[0].mxu0
        %v1433 = vadd.f32 0.0, %v1432
        %v1434 = vpop.f32.mrb[0].mxu0
        %v1435 = vadd.f32 0.0, %v1434
        %v1436 = vpop.f32.mrb[0].mxu0
        %v1437 = vadd.f32 0.0, %v1436
        %v1438 = vpop.f32.mrb[0].mxu0
        %v1439 = vadd.f32 0.0, %v1438
        %1440 = vmatprep.mubr.bf16.mxu0 %v821
        %1441 = vmatmul.mubr.bf16.gmra.mrb[0].mxu0 %v820
        %v1442 = vpop.f32.mrb[0].mxu0
        %v1443 = vadd.f32 0.0, %v1442
        %v1444 = vpop.f32.mrb[0].mxu0
        %v1445 = vadd.f32 0.0, %v1444
        %v1446 = vpop.f32.mrb[0].mxu0
        %v1447 = vadd.f32 0.0, %v1446
        %v1448 = vpop.f32.mrb[0].mxu0
        %v1449 = vadd.f32 0.0, %v1448
        %1450 = vmatprep.mubr.bf16.mxu0 %v825
        %1451 = vmatmul.mubr.bf16.gmra.mrb[0].mxu0 %v824
        %v1452 = vpop.f32.mrb[0].mxu0
        %v1453 = vadd.f32 0.0, %v1452
        %v1454 = vpop.f32.mrb[0].mxu0
        %v1455 = vadd.f32 0.0, %v1454
        %v1456 = vpop.f32.mrb[0].mxu0
        %v1457 = vadd.f32 0.0, %v1456
        %v1458 = vpop.f32.mrb[0].mxu0
        %v1459 = vadd.f32 0.0, %v1458
        %1460 = vmatprep.mubr.bf16.mxu0 %v829
        %1461 = vmatmul.mubr.bf16.gmra.mrb[0].mxu0 %v828
        %v1462 = vpop.f32.mrb[0].mxu0
        %v1463 = vadd.f32 0.0, %v1462
        %v1464 = vpop.f32.mrb[0].mxu0
        %v1465 = vadd.f32 0.0, %v1464
        %v1466 = vpop.f32.mrb[0].mxu0
        %v1467 = vadd.f32 0.0, %v1466
        %v1468 = vpop.f32.mrb[0].mxu0
        %v1469 = vadd.f32 0.0, %v1468
        %1470 = vmatprep.mubr.bf16.mxu0 %v833
        %1471 = vmatmul.mubr.bf16.gmra.mrb[0].mxu0 %v832
        %v1472 = vpop.f32.mrb[0].mxu0
        %v1473 = vadd.f32 0.0, %v1472
        %v1474 = vpop.f32.mrb[0].mxu0
        %v1475 = vadd.f32 0.0, %v1474
        %v1476 = vpop.f32.mrb[0].mxu0
        %v1477 = vadd.f32 0.0, %v1476
        %v1478 = vpop.f32.mrb[0].mxu0
        %v1479 = vadd.f32 0.0, %v1478
        %1480 = vmatprep.mubr.bf16.mxu0 %v837
        %1481 = vmatmul.mubr.bf16.gmra.mrb[0].mxu0 %v836
        %v1482 = vpop.f32.mrb[0].mxu0
        %v1483 = vadd.f32 0.0, %v1482
        %v1484 = vpop.f32.mrb[0].mxu0
        %v1485 = vadd.f32 0.0, %v1484
        %v1486 = vpop.f32.mrb[0].mxu0
        %v1487 = vadd.f32 0.0, %v1486
        %v1488 = vpop.f32.mrb[0].mxu0
        %v1489 = vadd.f32 0.0, %v1488
        %1490 = vmatprep.mubr.bf16.mxu0 %v841
        %1491 = vmatmul.mubr.bf16.gmra.mrb[0].mxu0 %v840
        %v1492 = vpop.f32.mrb[0].mxu0
        %v1493 = vadd.f32 0.0, %v1492
        %v1494 = vpop.f32.mrb[0].mxu0
        %v1495 = vadd.f32 0.0, %v1494
        %v1496 = vpop.f32.mrb[0].mxu0
        %v1497 = vadd.f32 0.0, %v1496
        %v1498 = vpop.f32.mrb[0].mxu0
        %v1499 = vadd.f32 0.0, %v1498
        %1500 = vdwg.mxu0
        %1501 = vmatprep.subr.bf16.mxu0 %v1245
        %1502 = vmatpush1.bf16.msra.mxu0 %v1244
        %1503 = vmatprep.subr.bf16.mxu0 %v1248
        %1504 = vmatpush1.bf16.msra.mxu0 %v1247
        %1505 = vmatprep.subr.bf16.mxu0 %v1251
        %1506 = vmatpush1.bf16.msra.mxu0 %v1250
        %1507 = vmatprep.subr.bf16.mxu0 %v1254
        %1508 = vmatpush1.bf16.msra.mxu0 %v1253
        %1509 = vmatprep.subr.bf16.mxu0 %v1257
        %1510 = vmatpush1.bf16.msra.mxu0 %v1256
        %1511 = vmatprep.subr.bf16.mxu0 %v1260
        %1512 = vmatpush1.bf16.msra.mxu0 %v1259
        %1513 = vmatprep.subr.bf16.mxu0 %v1263
        %1514 = vmatpush1.bf16.msra.mxu0 %v1262
        %1515 = vmatprep.subr.bf16.mxu0 %v1266
        %1516 = vmatpush1.bf16.msra.mxu0 %v1265
        %1517 = vmatprep.subr.bf16.mxu0 %v1269
        %1518 = vmatpush1.bf16.msra.mxu0 %v1268
        %1519 = vmatprep.subr.bf16.mxu0 %v1272
        %1520 = vmatpush1.bf16.msra.mxu0 %v1271
        %1521 = vmatprep.subr.bf16.mxu0 %v1275
        %1522 = vmatpush1.bf16.msra.mxu0 %v1274
        %1523 = vmatprep.subr.bf16.mxu0 %v1278
        %1524 = vmatpush1.bf16.msra.mxu0 %v1277
        %1525 = vmatprep.subr.bf16.mxu0 %v1281
        %1526 = vmatpush1.bf16.msra.mxu0 %v1280
        %1527 = vmatprep.subr.bf16.mxu0 %v1284
        %1528 = vmatpush1.bf16.msra.mxu0 %v1283
        %1529 = vmatprep.subr.bf16.mxu0 %v1287
        %1530 = vmatpush1.bf16.msra.mxu0 %v1286
        %1531 = vmatprep.subr.bf16.mxu0 %v1290
        %1532 = vmatpush1.bf16.msra.mxu0 %v1289
        %1533 = vmatprep.mubr.bf16.mxu0 %v815
        %1534 = vmatmul.mubr.bf16.gmra.mrb[0].mxu0 %v814
        %v1535 = vpop.f32.mrb[0].mxu0
        %v1536 = vadd.f32 %v1423, %v1535
        %v1537 = vpop.f32.mrb[0].mxu0
        %v1538 = vadd.f32 %v1425, %v1537
        %v1539 = vpop.f32.mrb[0].mxu0
        %v1540 = vadd.f32 %v1427, %v1539
        %v1541 = vpop.f32.mrb[0].mxu0
        %v1542 = vadd.f32 %v1429, %v1541
        %1543 = vmatprep.mubr.bf16.mxu0 %v819
        %1544 = vmatmul.mubr.bf16.gmra.mrb[0].mxu0 %v818
        %v1545 = vpop.f32.mrb[0].mxu0
        %v1546 = vadd.f32 %v1433, %v1545
        %v1547 = vpop.f32.mrb[0].mxu0
        %v1548 = vadd.f32 %v1435, %v1547
        %v1549 = vpop.f32.mrb[0].mxu0
        %v1550 = vadd.f32 %v1437, %v1549
        %v1551 = vpop.f32.mrb[0].mxu0
        %v1552 = vadd.f32 %v1439, %v1551
        %1553 = vmatprep.mubr.bf16.mxu0 %v823
        %1554 = vmatmul.mubr.bf16.gmra.mrb[0].mxu0 %v822
        %v1555 = vpop.f32.mrb[0].mxu0
        %v1556 = vadd.f32 %v1443, %v1555
        %v1557 = vpop.f32.mrb[0].mxu0
        %v1558 = vadd.f32 %v1445, %v1557
        %v1559 = vpop.f32.mrb[0].mxu0
        %v1560 = vadd.f32 %v1447, %v1559
        %v1561 = vpop.f32.mrb[0].mxu0
        %v1562 = vadd.f32 %v1449, %v1561
        %1563 = vmatprep.mubr.bf16.mxu0 %v827
        %1564 = vmatmul.mubr.bf16.gmra.mrb[0].mxu0 %v826
        %v1565 = vpop.f32.mrb[0].mxu0
        %v1566 = vadd.f32 %v1453, %v1565
        %v1567 = vpop.f32.mrb[0].mxu0
        %v1568 = vadd.f32 %v1455, %v1567
        %v1569 = vpop.f32.mrb[0].mxu0
        %v1570 = vadd.f32 %v1457, %v1569
        %v1571 = vpop.f32.mrb[0].mxu0
        %v1572 = vadd.f32 %v1459, %v1571
        %1573 = vmatprep.mubr.bf16.mxu0 %v831
        %1574 = vmatmul.mubr.bf16.gmra.mrb[0].mxu0 %v830
        %v1575 = vpop.f32.mrb[0].mxu0
        %v1576 = vadd.f32 %v1463, %v1575
        %v1577 = vpop.f32.mrb[0].mxu0
        %v1578 = vadd.f32 %v1465, %v1577
        %v1579 = vpop.f32.mrb[0].mxu0
        %v1580 = vadd.f32 %v1467, %v1579
        %v1581 = vpop.f32.mrb[0].mxu0
        %v1582 = vadd.f32 %v1469, %v1581
        %1583 = vmatprep.mubr.bf16.mxu0 %v835
        %1584 = vmatmul.mubr.bf16.gmra.mrb[0].mxu0 %v834
        %v1585 = vpop.f32.mrb[0].mxu0
        %v1586 = vadd.f32 %v1473, %v1585
        %v1587 = vpop.f32.mrb[0].mxu0
        %v1588 = vadd.f32 %v1475, %v1587
        %v1589 = vpop.f32.mrb[0].mxu0
        %v1590 = vadd.f32 %v1477, %v1589
        %v1591 = vpop.f32.mrb[0].mxu0
        %v1592 = vadd.f32 %v1479, %v1591
        %1593 = vmatprep.mubr.bf16.mxu0 %v839
        %1594 = vmatmul.mubr.bf16.gmra.mrb[0].mxu0 %v838
        %v1595 = vpop.f32.mrb[0].mxu0
        %v1596 = vadd.f32 %v1483, %v1595
        %v1597 = vpop.f32.mrb[0].mxu0
        %v1598 = vadd.f32 %v1485, %v1597
        %v1599 = vpop.f32.mrb[0].mxu0
        %v1600 = vadd.f32 %v1487, %v1599
        %v1601 = vpop.f32.mrb[0].mxu0
        %v1602 = vadd.f32 %v1489, %v1601
        %1603 = vmatprep.mubr.bf16.mxu0 %v843
        %1604 = vmatmul.mubr.bf16.gmra.mrb[0].mxu0 %v842
        %v1605 = vpop.f32.mrb[0].mxu0
        %v1606 = vadd.f32 %v1493, %v1605
        %v1607 = vpop.f32.mrb[0].mxu0
        %v1608 = vadd.f32 %v1495, %v1607
        %v1609 = vpop.f32.mrb[0].mxu0
        %v1610 = vadd.f32 %v1497, %v1609
        %v1611 = vpop.f32.mrb[0].mxu0
        %v1612 = vadd.f32 %v1499, %v1611
        %1613 = vdwg.mxu0
        %1614 = vmatprep.subr.bf16.mxu0 0
        %1615 = vmatpush1.bf16.msra.mxu0 %v1198
        %1616 = vmatprep.subr.bf16.mxu0 0
        %1617 = vmatpush1.bf16.msra.mxu0 %v1201
        %1618 = vmatprep.subr.bf16.mxu0 0
        %1619 = vmatpush1.bf16.msra.mxu0 %v1204
        %1620 = vmatprep.subr.bf16.mxu0 0
        %1621 = vmatpush1.bf16.msra.mxu0 %v1207
        %1622 = vmatprep.subr.bf16.mxu0 0
        %1623 = vmatpush1.bf16.msra.mxu0 %v1210
        %1624 = vmatprep.subr.bf16.mxu0 0
        %1625 = vmatpush1.bf16.msra.mxu0 %v1213
        %1626 = vmatprep.subr.bf16.mxu0 0
        %1627 = vmatpush1.bf16.msra.mxu0 %v1216
        %1628 = vmatprep.subr.bf16.mxu0 0
        %1629 = vmatpush1.bf16.msra.mxu0 %v1219
        %1630 = vmatprep.subr.bf16.mxu0 0
        %1631 = vmatpush1.bf16.msra.mxu0 %v1222
        %1632 = vmatprep.subr.bf16.mxu0 0
        %1633 = vmatpush1.bf16.msra.mxu0 %v1225
        %1634 = vmatprep.subr.bf16.mxu0 0
        %1635 = vmatpush1.bf16.msra.mxu0 %v1228
        %1636 = vmatprep.subr.bf16.mxu0 0
        %1637 = vmatpush1.bf16.msra.mxu0 %v1231
        %1638 = vmatprep.subr.bf16.mxu0 0
        %1639 = vmatpush1.bf16.msra.mxu0 %v1234
        %1640 = vmatprep.subr.bf16.mxu0 0
        %1641 = vmatpush1.bf16.msra.mxu0 %v1237
        %1642 = vmatprep.subr.bf16.mxu0 0
        %1643 = vmatpush1.bf16.msra.mxu0 %v1240
        %1644 = vmatprep.subr.bf16.mxu0 0
        %1645 = vmatpush1.bf16.msra.mxu0 %v1243
        %1646 = vmatprep.mubr.bf16.mxu0 %v813
        %1647 = vmatmul.mubr.bf16.gmra.mrb[0].mxu0 %v812
        %v1648 = vpop.f32.mrb[0].mxu0
        %v1649 = vadd.f32 0.0, %v1648
        %v1650 = vpop.f32.mrb[0].mxu0
        %v1651 = vpop.f32.mrb[0].mxu0
        %v1652 = vadd.f32 0.0, %v1651
        %v1653 = vpop.f32.mrb[0].mxu0
        %1654 = vmatprep.mubr.bf16.mxu0 %v817
        %1655 = vmatmul.mubr.bf16.gmra.mrb[0].mxu0 %v816
        %v1656 = vpop.f32.mrb[0].mxu0
        %v1657 = vadd.f32 0.0, %v1656
        %v1658 = vpop.f32.mrb[0].mxu0
        %v1659 = vpop.f32.mrb[0].mxu0
        %v1660 = vadd.f32 0.0, %v1659
        %v1661 = vpop.f32.mrb[0].mxu0
        %1662 = vmatprep.mubr.bf16.mxu0 %v821
        %1663 = vmatmul.mubr.bf16.gmra.mrb[0].mxu0 %v820
        %v1664 = vpop.f32.mrb[0].mxu0
        %v1665 = vadd.f32 0.0, %v1664
        %v1666 = vpop.f32.mrb[0].mxu0
        %v1667 = vpop.f32.mrb[0].mxu0
        %v1668 = vadd.f32 0.0, %v1667
        %v1669 = vpop.f32.mrb[0].mxu0
        %1670 = vmatprep.mubr.bf16.mxu0 %v825
        %1671 = vmatmul.mubr.bf16.gmra.mrb[0].mxu0 %v824
        %v1672 = vpop.f32.mrb[0].mxu0
        %v1673 = vadd.f32 0.0, %v1672
        %v1674 = vpop.f32.mrb[0].mxu0
        %v1675 = vpop.f32.mrb[0].mxu0
        %v1676 = vadd.f32 0.0, %v1675
        %v1677 = vpop.f32.mrb[0].mxu0
        %1678 = vmatprep.mubr.bf16.mxu0 %v829
        %1679 = vmatmul.mubr.bf16.gmra.mrb[0].mxu0 %v828
        %v1680 = vpop.f32.mrb[0].mxu0
        %v1681 = vadd.f32 0.0, %v1680
        %v1682 = vpop.f32.mrb[0].mxu0
        %v1683 = vpop.f32.mrb[0].mxu0
        %v1684 = vadd.f32 0.0, %v1683
        %v1685 = vpop.f32.mrb[0].mxu0
        %1686 = vmatprep.mubr.bf16.mxu0 %v833
        %1687 = vmatmul.mubr.bf16.gmra.mrb[0].mxu0 %v832
        %v1688 = vpop.f32.mrb[0].mxu0
        %v1689 = vadd.f32 0.0, %v1688
        %v1690 = vpop.f32.mrb[0].mxu0
        %v1691 = vpop.f32.mrb[0].mxu0
        %v1692 = vadd.f32 0.0, %v1691
        %v1693 = vpop.f32.mrb[0].mxu0
        %1694 = vmatprep.mubr.bf16.mxu0 %v837
        %1695 = vmatmul.mubr.bf16.gmra.mrb[0].mxu0 %v836
        %v1696 = vpop.f32.mrb[0].mxu0
        %v1697 = vadd.f32 0.0, %v1696
        %v1698 = vpop.f32.mrb[0].mxu0
        %v1699 = vpop.f32.mrb[0].mxu0
        %v1700 = vadd.f32 0.0, %v1699
        %v1701 = vpop.f32.mrb[0].mxu0
        %1702 = vmatprep.mubr.bf16.mxu0 %v841
        %1703 = vmatmul.mubr.bf16.gmra.mrb[0].mxu0 %v840
        %v1704 = vpop.f32.mrb[0].mxu0
        %v1705 = vadd.f32 0.0, %v1704
        %v1706 = vpop.f32.mrb[0].mxu0
        %v1707 = vpop.f32.mrb[0].mxu0
        %v1708 = vadd.f32 0.0, %v1707
        %v1709 = vpop.f32.mrb[0].mxu0
        %1710 = vdwg.mxu0
        %1711 = vmatprep.subr.bf16.mxu0 0
        %1712 = vmatpush1.bf16.msra.mxu0 %v1246
        %1713 = vmatprep.subr.bf16.mxu0 0
        %1714 = vmatpush1.bf16.msra.mxu0 %v1249
        %1715 = vmatprep.subr.bf16.mxu0 0
        %1716 = vmatpush1.bf16.msra.mxu0 %v1252
        %1717 = vmatprep.subr.bf16.mxu0 0
        %1718 = vmatpush1.bf16.msra.mxu0 %v1255
        %1719 = vmatprep.subr.bf16.mxu0 0
        %1720 = vmatpush1.bf16.msra.mxu0 %v1258
        %1721 = vmatprep.subr.bf16.mxu0 0
        %1722 = vmatpush1.bf16.msra.mxu0 %v1261
        %1723 = vmatprep.subr.bf16.mxu0 0
        %1724 = vmatpush1.bf16.msra.mxu0 %v1264
        %1725 = vmatprep.subr.bf16.mxu0 0
        %1726 = vmatpush1.bf16.msra.mxu0 %v1267
        %1727 = vmatprep.subr.bf16.mxu0 0
        %1728 = vmatpush1.bf16.msra.mxu0 %v1270
        %1729 = vmatprep.subr.bf16.mxu0 0
        %1730 = vmatpush1.bf16.msra.mxu0 %v1273
        %1731 = vmatprep.subr.bf16.mxu0 0
        %1732 = vmatpush1.bf16.msra.mxu0 %v1276
        %1733 = vmatprep.subr.bf16.mxu0 0
        %1734 = vmatpush1.bf16.msra.mxu0 %v1279
        %1735 = vmatprep.subr.bf16.mxu0 0
        %1736 = vmatpush1.bf16.msra.mxu0 %v1282
        %1737 = vmatprep.subr.bf16.mxu0 0
        %1738 = vmatpush1.bf16.msra.mxu0 %v1285
        %1739 = vmatprep.subr.bf16.mxu0 0
        %1740 = vmatpush1.bf16.msra.mxu0 %v1288
        %1741 = vmatprep.subr.bf16.mxu0 0
        %1742 = vmatpush1.bf16.msra.mxu0 %v1291
        %1743 = vmatprep.mubr.bf16.mxu0 %v815
        %1744 = vmatmul.mubr.bf16.gmra.mrb[0].mxu0 %v814
        %v1745 = vpop.f32.mrb[0].mxu0
        %v1746 = vadd.f32 %v1649, %v1745
        %v1747 = vpop.f32.mrb[0].mxu0
        %v1748 = vpop.f32.mrb[0].mxu0
        %v1749 = vadd.f32 %v1652, %v1748
        %v1750 = vpop.f32.mrb[0].mxu0
        %1751 = vmatprep.mubr.bf16.mxu0 %v819
        %1752 = vmatmul.mubr.bf16.gmra.mrb[0].mxu0 %v818
        %v1753 = vpop.f32.mrb[0].mxu0
        %v1754 = vadd.f32 %v1657, %v1753
        %v1755 = vpop.f32.mrb[0].mxu0
        %v1756 = vpop.f32.mrb[0].mxu0
        %v1757 = vadd.f32 %v1660, %v1756
        %v1758 = vpop.f32.mrb[0].mxu0
        %1759 = vmatprep.mubr.bf16.mxu0 %v823
        %1760 = vmatmul.mubr.bf16.gmra.mrb[0].mxu0 %v822
        %v1761 = vpop.f32.mrb[0].mxu0
        %v1762 = vadd.f32 %v1665, %v1761
        %v1763 = vpop.f32.mrb[0].mxu0
        %v1764 = vpop.f32.mrb[0].mxu0
        %v1765 = vadd.f32 %v1668, %v1764
        %v1766 = vpop.f32.mrb[0].mxu0
        %1767 = vmatprep.mubr.bf16.mxu0 %v827
        %1768 = vmatmul.mubr.bf16.gmra.mrb[0].mxu0 %v826
        %v1769 = vpop.f32.mrb[0].mxu0
        %v1770 = vadd.f32 %v1673, %v1769
        %v1771 = vpop.f32.mrb[0].mxu0
        %v1772 = vpop.f32.mrb[0].mxu0
        %v1773 = vadd.f32 %v1676, %v1772
        %v1774 = vpop.f32.mrb[0].mxu0
        %1775 = vmatprep.mubr.bf16.mxu0 %v831
        %1776 = vmatmul.mubr.bf16.gmra.mrb[0].mxu0 %v830
        %v1777 = vpop.f32.mrb[0].mxu0
        %v1778 = vadd.f32 %v1681, %v1777
        %v1779 = vpop.f32.mrb[0].mxu0
        %v1780 = vpop.f32.mrb[0].mxu0
        %v1781 = vadd.f32 %v1684, %v1780
        %v1782 = vpop.f32.mrb[0].mxu0
        %1783 = vmatprep.mubr.bf16.mxu0 %v835
        %1784 = vmatmul.mubr.bf16.gmra.mrb[0].mxu0 %v834
        %v1785 = vpop.f32.mrb[0].mxu0
        %v1786 = vadd.f32 %v1689, %v1785
        %v1787 = vpop.f32.mrb[0].mxu0
        %v1788 = vpop.f32.mrb[0].mxu0
        %v1789 = vadd.f32 %v1692, %v1788
        %v1790 = vpop.f32.mrb[0].mxu0
        %1791 = vmatprep.mubr.bf16.mxu0 %v839
        %1792 = vmatmul.mubr.bf16.gmra.mrb[0].mxu0 %v838
        %v1793 = vpop.f32.mrb[0].mxu0
        %v1794 = vadd.f32 %v1697, %v1793
        %v1795 = vpop.f32.mrb[0].mxu0
        %v1796 = vpop.f32.mrb[0].mxu0
        %v1797 = vadd.f32 %v1700, %v1796
        %v1798 = vpop.f32.mrb[0].mxu0
        %1799 = vmatprep.mubr.bf16.mxu0 %v843
        %1800 = vmatmul.mubr.bf16.gmra.mrb[0].mxu0 %v842
        %v1801 = vpop.f32.mrb[0].mxu0
        %v1802 = vadd.f32 %v1705, %v1801
        %v1803 = vpop.f32.mrb[0].mxu0
        %v1804 = vpop.f32.mrb[0].mxu0
        %v1805 = vadd.f32 %v1708, %v1804
        %v1806 = vpop.f32.mrb[0].mxu0
        %1807 = vdwg.mxu0
        %v1808 = vld [vmem:[%s546] sm:$0x7]
        %v1810 = vlaneseq
        %v1811 = vshrl.u32 %v1810, 7
        %v1812 = vsub.s32 0, %v1811
        %v1813 = vrot.slane %v1808, %v1812
        %v1814 = vlaneseq
        %v1815 = vshrl.u32 %v1814, 7
        %v1816 = vsub.s32 1, %v1815
        %v1817 = vrot.slane %v1808, %v1816
        %v1818 = vlaneseq
        %v1819 = vshrl.u32 %v1818, 7
        %v1820 = vsub.s32 2, %v1819
        %v1821 = vrot.slane %v1808, %v1820
        %v1825 = vmul.f32 %v1536, %v1813
        %v1826 = vmul.f32 %v1538, %v1817
        %v1827 = vmul.f32 %v1746, %v1821
        %v1828 = vmul.f32 %v1540, %v1813
        %v1829 = vmul.f32 %v1542, %v1817
        %v1830 = vmul.f32 %v1749, %v1821
        %v1831 = vmul.f32 %v1546, %v1813
        %v1832 = vmul.f32 %v1548, %v1817
        %v1833 = vmul.f32 %v1754, %v1821
        %v1834 = vmul.f32 %v1550, %v1813
        %v1835 = vmul.f32 %v1552, %v1817
        %v1836 = vmul.f32 %v1757, %v1821
        %v1837 = vmul.f32 %v1556, %v1813
        %v1838 = vmul.f32 %v1558, %v1817
        %v1839 = vmul.f32 %v1762, %v1821
        %v1840 = vmul.f32 %v1560, %v1813
        %v1841 = vmul.f32 %v1562, %v1817
        %v1842 = vmul.f32 %v1765, %v1821
        %v1843 = vmul.f32 %v1566, %v1813
        %v1844 = vmul.f32 %v1568, %v1817
        %v1845 = vmul.f32 %v1770, %v1821
        %v1846 = vmul.f32 %v1570, %v1813
        %v1847 = vmul.f32 %v1572, %v1817
        %v1848 = vmul.f32 %v1773, %v1821
        %v1849 = vmul.f32 %v1576, %v1813
        %v1850 = vmul.f32 %v1578, %v1817
        %v1851 = vmul.f32 %v1778, %v1821
        %v1852 = vmul.f32 %v1580, %v1813
        %v1853 = vmul.f32 %v1582, %v1817
        %v1854 = vmul.f32 %v1781, %v1821
        %v1855 = vmul.f32 %v1586, %v1813
        %v1856 = vmul.f32 %v1588, %v1817
        %v1857 = vmul.f32 %v1786, %v1821
        %v1858 = vmul.f32 %v1590, %v1813
        %v1859 = vmul.f32 %v1592, %v1817
        %v1860 = vmul.f32 %v1789, %v1821
        %v1861 = vmul.f32 %v1596, %v1813
        %v1862 = vmul.f32 %v1598, %v1817
        %v1863 = vmul.f32 %v1794, %v1821
        %v1864 = vmul.f32 %v1600, %v1813
        %v1865 = vmul.f32 %v1602, %v1817
        %v1866 = vmul.f32 %v1797, %v1821
        %v1867 = vmul.f32 %v1606, %v1813
        %v1868 = vmul.f32 %v1608, %v1817
        %v1869 = vmul.f32 %v1802, %v1821
        %v1870 = vmul.f32 %v1610, %v1813
        %v1871 = vmul.f32 %v1612, %v1817
        %v1872 = vmul.f32 %v1805, %v1821
        %v1873 = vld [vmem:[%s551] sm:$0x7]
        %v1875 = vlaneseq
        %v1876 = vshrl.u32 %v1875, 7
        %v1877 = vsub.s32 0, %v1876
        %v1878 = vrot.slane %v1873, %v1877
        %v1879 = vlaneseq
        %v1880 = vshrl.u32 %v1879, 7
        %v1881 = vsub.s32 1, %v1880
        %v1882 = vrot.slane %v1873, %v1881
        %v1883 = vlaneseq
        %v1884 = vshrl.u32 %v1883, 7
        %v1885 = vsub.s32 2, %v1884
        %v1886 = vrot.slane %v1873, %v1885
        %v1890 = vadd.f32 %v1825, %v1878
        %v1891 = vadd.f32 %v1826, %v1882
        %v1892 = vadd.f32 %v1827, %v1886
        %v1893 = vadd.f32 %v1828, %v1878
        %v1894 = vadd.f32 %v1829, %v1882
        %v1895 = vadd.f32 %v1830, %v1886
        %v1896 = vadd.f32 %v1831, %v1878
        %v1897 = vadd.f32 %v1832, %v1882
        %v1898 = vadd.f32 %v1833, %v1886
        %v1899 = vadd.f32 %v1834, %v1878
        %v1900 = vadd.f32 %v1835, %v1882
        %v1901 = vadd.f32 %v1836, %v1886
        %v1902 = vadd.f32 %v1837, %v1878
        %v1903 = vadd.f32 %v1838, %v1882
        %v1904 = vadd.f32 %v1839, %v1886
        %v1905 = vadd.f32 %v1840, %v1878
        %v1906 = vadd.f32 %v1841, %v1882
        %v1907 = vadd.f32 %v1842, %v1886
        %v1908 = vadd.f32 %v1843, %v1878
        %v1909 = vadd.f32 %v1844, %v1882
        %v1910 = vadd.f32 %v1845, %v1886
        %v1911 = vadd.f32 %v1846, %v1878
        %v1912 = vadd.f32 %v1847, %v1882
        %v1913 = vadd.f32 %v1848, %v1886
        %v1914 = vadd.f32 %v1849, %v1878
        %v1915 = vadd.f32 %v1850, %v1882
        %v1916 = vadd.f32 %v1851, %v1886
        %v1917 = vadd.f32 %v1852, %v1878
        %v1918 = vadd.f32 %v1853, %v1882
        %v1919 = vadd.f32 %v1854, %v1886
        %v1920 = vadd.f32 %v1855, %v1878
        %v1921 = vadd.f32 %v1856, %v1882
        %v1922 = vadd.f32 %v1857, %v1886
        %v1923 = vadd.f32 %v1858, %v1878
        %v1924 = vadd.f32 %v1859, %v1882
        %v1925 = vadd.f32 %v1860, %v1886
        %v1926 = vadd.f32 %v1861, %v1878
        %v1927 = vadd.f32 %v1862, %v1882
        %v1928 = vadd.f32 %v1863, %v1886
        %v1929 = vadd.f32 %v1864, %v1878
        %v1930 = vadd.f32 %v1865, %v1882
        %v1931 = vadd.f32 %v1866, %v1886
        %v1932 = vadd.f32 %v1867, %v1878
        %v1933 = vadd.f32 %v1868, %v1882
        %v1934 = vadd.f32 %v1869, %v1886
        %v1935 = vadd.f32 %v1870, %v1878
        %v1936 = vadd.f32 %v1871, %v1882
        %v1937 = vadd.f32 %v1872, %v1886
        %v1938 = vmax.f32 %v1890, 0.0
        %v1939 = vmax.f32 %v1891, 0.0
        %v1940 = vmax.f32 %v1892, 0.0
        %v1941 = vmax.f32 %v1893, 0.0
        %v1942 = vmax.f32 %v1894, 0.0
        %v1943 = vmax.f32 %v1895, 0.0
        %v1944 = vmax.f32 %v1896, 0.0
        %v1945 = vmax.f32 %v1897, 0.0
        %v1946 = vmax.f32 %v1898, 0.0
        %v1947 = vmax.f32 %v1899, 0.0
        %v1948 = vmax.f32 %v1900, 0.0
        %v1949 = vmax.f32 %v1901, 0.0
        %v1950 = vmax.f32 %v1902, 0.0
        %v1951 = vmax.f32 %v1903, 0.0
        %v1952 = vmax.f32 %v1904, 0.0
        %v1953 = vmax.f32 %v1905, 0.0
        %v1954 = vmax.f32 %v1906, 0.0
        %v1955 = vmax.f32 %v1907, 0.0
        %v1956 = vmax.f32 %v1908, 0.0
        %v1957 = vmax.f32 %v1909, 0.0
        %v1958 = vmax.f32 %v1910, 0.0
        %v1959 = vmax.f32 %v1911, 0.0
        %v1960 = vmax.f32 %v1912, 0.0
        %v1961 = vmax.f32 %v1913, 0.0
        %v1962 = vmax.f32 %v1914, 0.0
        %v1963 = vmax.f32 %v1915, 0.0
        %v1964 = vmax.f32 %v1916, 0.0
        %v1965 = vmax.f32 %v1917, 0.0
        %v1966 = vmax.f32 %v1918, 0.0
        %v1967 = vmax.f32 %v1919, 0.0
        %v1968 = vmax.f32 %v1920, 0.0
        %v1969 = vmax.f32 %v1921, 0.0
        %v1970 = vmax.f32 %v1922, 0.0
        %v1971 = vmax.f32 %v1923, 0.0
        %v1972 = vmax.f32 %v1924, 0.0
        %v1973 = vmax.f32 %v1925, 0.0
        %v1974 = vmax.f32 %v1926, 0.0
        %v1975 = vmax.f32 %v1927, 0.0
        %v1976 = vmax.f32 %v1928, 0.0
        %v1977 = vmax.f32 %v1929, 0.0
        %v1978 = vmax.f32 %v1930, 0.0
        %v1979 = vmax.f32 %v1931, 0.0
        %v1980 = vmax.f32 %v1932, 0.0
        %v1981 = vmax.f32 %v1933, 0.0
        %v1982 = vmax.f32 %v1934, 0.0
        %v1983 = vmax.f32 %v1935, 0.0
        %v1984 = vmax.f32 %v1936, 0.0
        %v1985 = vmax.f32 %v1937, 0.0
        %v1986 = vpack.c.bf16 %v1941, %v1938
        %v1987 = vpack.c.bf16 %v1942, %v1939
        %v1988 = vpack.c.bf16 %v1943, %v1940
        %v1989 = vpack.c.bf16 %v1947, %v1944
        %v1990 = vpack.c.bf16 %v1948, %v1945
        %v1991 = vpack.c.bf16 %v1949, %v1946
        %v1992 = vpack.c.bf16 %v1953, %v1950
        %v1993 = vpack.c.bf16 %v1954, %v1951
        %v1994 = vpack.c.bf16 %v1955, %v1952
        %v1995 = vpack.c.bf16 %v1959, %v1956
        %v1996 = vpack.c.bf16 %v1960, %v1957
        %v1997 = vpack.c.bf16 %v1961, %v1958
        %v1998 = vpack.c.bf16 %v1965, %v1962
        %v1999 = vpack.c.bf16 %v1966, %v1963
        %v2000 = vpack.c.bf16 %v1967, %v1964
        %v2001 = vpack.c.bf16 %v1971, %v1968
        %v2002 = vpack.c.bf16 %v1972, %v1969
        %v2003 = vpack.c.bf16 %v1973, %v1970
        %v2004 = vpack.c.bf16 %v1977, %v1974
        %v2005 = vpack.c.bf16 %v1978, %v1975
        %v2006 = vpack.c.bf16 %v1979, %v1976
        %v2007 = vpack.c.bf16 %v1983, %v1980
        %v2008 = vpack.c.bf16 %v1984, %v1981
        %v2009 = vpack.c.bf16 %v1985, %v1982
        %v2034 = vunpack.c.l.b16 %v1986
        %v2035 = vunpack.c.l.b16 %v1987
        %v2036 = vunpack.c.l.b16 %v1988
        %v2037 = vunpack.c.h.b16 %v1986
        %v2038 = vunpack.c.h.b16 %v1987
        %v2039 = vunpack.c.h.b16 %v1988
        %v2040 = vunpack.c.l.b16 %v1989
        %v2041 = vunpack.c.l.b16 %v1990
        %v2042 = vunpack.c.l.b16 %v1991
        %v2043 = vunpack.c.h.b16 %v1989
        %v2044 = vunpack.c.h.b16 %v1990
        %v2045 = vunpack.c.h.b16 %v1991
        %v2046 = vunpack.c.l.b16 %v1992
        %v2047 = vunpack.c.l.b16 %v1993
        %v2048 = vunpack.c.l.b16 %v1994
        %v2049 = vunpack.c.h.b16 %v1992
        %v2050 = vunpack.c.h.b16 %v1993
        %v2051 = vunpack.c.h.b16 %v1994
        %v2052 = vunpack.c.l.b16 %v1995
        %v2053 = vunpack.c.l.b16 %v1996
        %v2054 = vunpack.c.l.b16 %v1997
        %v2055 = vunpack.c.h.b16 %v1995
        %v2056 = vunpack.c.h.b16 %v1996
        %v2057 = vunpack.c.h.b16 %v1997
        %v2058 = vunpack.c.l.b16 %v1998
        %v2059 = vunpack.c.l.b16 %v1999
        %v2060 = vunpack.c.l.b16 %v2000
        %v2061 = vunpack.c.h.b16 %v1998
        %v2062 = vunpack.c.h.b16 %v1999
        %v2063 = vunpack.c.h.b16 %v2000
        %v2064 = vunpack.c.l.b16 %v2001
        %v2065 = vunpack.c.l.b16 %v2002
        %v2066 = vunpack.c.l.b16 %v2003
        %v2067 = vunpack.c.h.b16 %v2001
        %v2068 = vunpack.c.h.b16 %v2002
        %v2069 = vunpack.c.h.b16 %v2003
        %v2070 = vunpack.c.l.b16 %v2004
        %v2071 = vunpack.c.l.b16 %v2005
        %v2072 = vunpack.c.l.b16 %v2006
        %v2073 = vunpack.c.h.b16 %v2004
        %v2074 = vunpack.c.h.b16 %v2005
        %v2075 = vunpack.c.h.b16 %v2006
        %v2076 = vunpack.c.l.b16 %v2007
        %v2077 = vunpack.c.l.b16 %v2008
        %v2078 = vunpack.c.l.b16 %v2009
        %v2079 = vunpack.c.h.b16 %v2007
        %v2080 = vunpack.c.h.b16 %v2008
        %v2081 = vunpack.c.h.b16 %v2009
        %v2082 = vpack.c.b16 %v2035, %v2034
        %v2083 = vpack.c.b16 %v2036, %v2036
        %v2084 = vpack.c.b16 %v2038, %v2037
        %v2085 = vpack.c.b16 %v2039, %v2039
        %v2086 = vpack.c.b16 %v2041, %v2040
        %v2087 = vpack.c.b16 %v2042, %v2042
        %v2088 = vpack.c.b16 %v2044, %v2043
        %v2089 = vpack.c.b16 %v2045, %v2045
        %v2090 = vpack.c.b16 %v2047, %v2046
        %v2091 = vpack.c.b16 %v2048, %v2048
        %v2092 = vpack.c.b16 %v2050, %v2049
        %v2093 = vpack.c.b16 %v2051, %v2051
        %v2094 = vpack.c.b16 %v2053, %v2052
        %v2095 = vpack.c.b16 %v2054, %v2054
        %v2096 = vpack.c.b16 %v2056, %v2055
        %v2097 = vpack.c.b16 %v2057, %v2057
        %v2098 = vpack.c.b16 %v2059, %v2058
        %v2099 = vpack.c.b16 %v2060, %v2060
        %v2100 = vpack.c.b16 %v2062, %v2061
        %v2101 = vpack.c.b16 %v2063, %v2063
        %v2102 = vpack.c.b16 %v2065, %v2064
        %v2103 = vpack.c.b16 %v2066, %v2066
        %v2104 = vpack.c.b16 %v2068, %v2067
        %v2105 = vpack.c.b16 %v2069, %v2069
        %v2106 = vpack.c.b16 %v2071, %v2070
        %v2107 = vpack.c.b16 %v2072, %v2072
        %v2108 = vpack.c.b16 %v2074, %v2073
        %v2109 = vpack.c.b16 %v2075, %v2075
        %v2110 = vpack.c.b16 %v2077, %v2076
        %v2111 = vpack.c.b16 %v2078, %v2078
        %v2112 = vpack.c.b16 %v2080, %v2079
        %v2113 = vpack.c.b16 %v2081, %v2081
        %2146 = vst [vmem:[%s534] sm:$0xff] %v2082
        %2147 = vst [vmem:[%s534 + $0x8] sm:$0xf] %v2083
        %2148 = vst [vmem:[%s534 + $0xc] sm:$0xff] %v2084
        %2149 = vst [vmem:[%s534 + $0x14] sm:$0xf] %v2085
        %2150 = vst [vmem:[%s534 + $0x18] sm:$0xff] %v2086
        %2151 = vst [vmem:[%s534 + $0x20] sm:$0xf] %v2087
        %2152 = vst [vmem:[%s534 + $0x24] sm:$0xff] %v2088
        %2153 = vst [vmem:[%s534 + $0x2c] sm:$0xf] %v2089
        %2154 = vst [vmem:[%s534 + $0x30] sm:$0xff] %v2090
        %2155 = vst [vmem:[%s534 + $0x38] sm:$0xf] %v2091
        %2156 = vst [vmem:[%s534 + $0x3c] sm:$0xff] %v2092
        %2157 = vst [vmem:[%s534 + $0x44] sm:$0xf] %v2093
        %2158 = vst [vmem:[%s534 + $0x48] sm:$0xff] %v2094
        %2159 = vst [vmem:[%s534 + $0x50] sm:$0xf] %v2095
        %2160 = vst [vmem:[%s534 + $0x54] sm:$0xff] %v2096
        %2161 = vst [vmem:[%s534 + $0x5c] sm:$0xf] %v2097
        %2162 = vst [vmem:[%s534 + $0x60] sm:$0xff] %v2098
        %2163 = vst [vmem:[%s534 + $0x68] sm:$0xf] %v2099
        %2164 = vst [vmem:[%s534 + $0x6c] sm:$0xff] %v2100
        %2165 = vst [vmem:[%s534 + $0x74] sm:$0xf] %v2101
        %2166 = vst [vmem:[%s534 + $0x78] sm:$0xff] %v2102
        %2167 = vst [vmem:[%s534 + $0x80] sm:$0xf] %v2103
        %2168 = vst [vmem:[%s534 + $0x84] sm:$0xff] %v2104
        %2169 = vst [vmem:[%s534 + $0x8c] sm:$0xf] %v2105
        %2170 = vst [vmem:[%s534 + $0x90] sm:$0xff] %v2106
        %2171 = vst [vmem:[%s534 + $0x98] sm:$0xf] %v2107
        %2172 = vst [vmem:[%s534 + $0x9c] sm:$0xff] %v2108
        %2173 = vst [vmem:[%s534 + $0xa4] sm:$0xf] %v2109
        %2174 = vst [vmem:[%s534 + $0xa8] sm:$0xff] %v2110
        %2175 = vst [vmem:[%s534 + $0xb0] sm:$0xf] %v2111
        %2176 = vst [vmem:[%s534 + $0xb4] sm:$0xff] %v2112
        %2177 = vst [vmem:[%s534 + $0xbc] sm:$0xf] %v2113
        %s2178 = sand.u32 %s141, 1
        %s2179 = sand.u32 %s141, 1
        %s2180 = smul.addr %s2179, 192
        %s2181 = scalar_lea.vmem [#allocation3], %s2180
        // Predicated region
        $region63: #{self_attention_aspp_forward.3} parent=57 // pred_check
          %p2182 = pneg %p151
        $region64: #{self_attention_aspp_forward.3} parent=57 // pred_check_branch
          %2184 = sbr.rel (%p2182) target = $region66
        $region65: #{self_attention_aspp_forward.3} parent=57 // pred_region
          %s2185 = smul.u32 16, %s19
          %s2186 = smul.u32 3, %s20
          %s2187 = smul.addr %s2185, 6
          %s2188 = sadd.s32 %s2186, %s2187
          %s2189 = smul.addr %s2188, 4
          %s2190 = scalar_lea.vmem %s4, %s2189
          // Predicated region
          $region67: #{self_attention_aspp_forward.3} parent=65 // pred_check
            _
          $region68: #{self_attention_aspp_forward.3} parent=65 // pred_check_branch
            %2192 = sbr.rel (0) target = $region70
          $region69: #{self_attention_aspp_forward.3} parent=65 // pred_region
            // Predicated region
            $region71: #{self_attention_aspp_forward.3} parent=69 // pred_check
              _
            $region72: #{self_attention_aspp_forward.3} parent=69 // pred_check_branch
              %2194 = sbr.rel (0) target = $region74
            $region73: #{self_attention_aspp_forward.3} parent=69 // pred_region
              %s2195 = scalar_lea.vmem %s2181, 8 [#allocation3]
              %s2196 = scalar_lea.vmem %s2190, 8
              loop: start=0, step=1, limit=1
              $region75: #{self_attention_aspp_forward.3} parent=73 // loop_pre_header
                _
              $region76: #{self_attention_aspp_forward.3} parent=73 // loop_header
                %s2198 = sphi 0, %s2202
                %p2199 = scmp.ge.s32.totalorder %s2198, 1
                %s2203 = sphi %s2181, %s2181
                %s2204 = sphi %s2190, %s2190
              $region77: #{self_attention_aspp_forward.3} parent=73 // loop_header_branch
                %2201 = sbr.rel (%p2199) target = $region81
              $region78: #{self_attention_aspp_forward.3} parent=73 // loop_body
                %v2205 = vld [vmem:[%s2203] sm:$0xff]
                %2206 = vst [vmem:[%s2204] sm:$0xff] %v2205
                %v2207 = vld [vmem:[%s2203 + $0xc] sm:$0xff]
                %2208 = vst [vmem:[%s2204 + $0x18] sm:$0xff] %v2207
                %v2209 = vld [vmem:[%s2203 + $0x18] sm:$0xff]
                %2210 = vst [vmem:[%s2204 + $0x30] sm:$0xff] %v2209
                %v2211 = vld [vmem:[%s2203 + $0x24] sm:$0xff]
                %2212 = vst [vmem:[%s2204 + $0x48] sm:$0xff] %v2211
                %v2213 = vld [vmem:[%s2203 + $0x30] sm:$0xff]
                %2214 = vst [vmem:[%s2204 + $0x60] sm:$0xff] %v2213
                %v2215 = vld [vmem:[%s2203 + $0x3c] sm:$0xff]
                %2216 = vst [vmem:[%s2204 + $0x78] sm:$0xff] %v2215
                %v2217 = vld [vmem:[%s2203 + $0x48] sm:$0xff]
                %2218 = vst [vmem:[%s2204 + $0x90] sm:$0xff] %v2217
                %v2219 = vld [vmem:[%s2203 + $0x54] sm:$0xff]
                %2220 = vst [vmem:[%s2204 + $0xa8] sm:$0xff] %v2219
                %v2221 = vld [vmem:[%s2203 + $0x60] sm:$0xff]
                %2222 = vst [vmem:[%s2204 + $0xc0] sm:$0xff] %v2221
                %v2223 = vld [vmem:[%s2203 + $0x6c] sm:$0xff]
                %2224 = vst [vmem:[%s2204 + $0xd8] sm:$0xff] %v2223
                %v2225 = vld [vmem:[%s2203 + $0x78] sm:$0xff]
                %2226 = vst [vmem:[%s2204 + $0xf0] sm:$0xff] %v2225
                %v2227 = vld [vmem:[%s2203 + $0x84] sm:$0xff]
                %2228 = vst [vmem:[%s2204 + $0x108] sm:$0xff] %v2227
                %v2229 = vld [vmem:[%s2203 + $0x90] sm:$0xff]
                %2230 = vst [vmem:[%s2204 + $0x120] sm:$0xff] %v2229
                %v2231 = vld [vmem:[%s2203 + $0x9c] sm:$0xff]
                %2232 = vst [vmem:[%s2204 + $0x138] sm:$0xff] %v2231
                %v2233 = vld [vmem:[%s2203 + $0xa8] sm:$0xff]
                %2234 = vst [vmem:[%s2204 + $0x150] sm:$0xff] %v2233
                %v2235 = vld [vmem:[%s2203 + $0xb4] sm:$0xff]
                %2236 = vst [vmem:[%s2204 + $0x168] sm:$0xff] %v2235
              $region79: #{self_attention_aspp_forward.3} parent=73 // loop_footer
                %s2202 = sadd.s32 1, %s2198
              $region80: #{self_attention_aspp_forward.3} parent=73 // loop_footer_branch
                %2197 = sbr.rel target = $region76
              $region81: #{self_attention_aspp_forward.3} parent=73 // loop_exit
                _
              loop: start=0, step=1, limit=1
              $region82: #{self_attention_aspp_forward.3} parent=73 // loop_pre_header
                _
              $region83: #{self_attention_aspp_forward.3} parent=73 // loop_header
                %s2239 = sphi 0, %s2243
                %p2240 = scmp.ge.s32.totalorder %s2239, 1
                %s2244 = sphi %s2195, %s2195
                %s2245 = sphi %s2196, %s2196
              $region84: #{self_attention_aspp_forward.3} parent=73 // loop_header_branch
                %2242 = sbr.rel (%p2240) target = $region88
              $region85: #{self_attention_aspp_forward.3} parent=73 // loop_body
                %v2246 = vld [vmem:[%s2244] sm:$0xf]
                %2247 = vst [vmem:[%s2245] sm:$0xf] %v2246
                %v2248 = vld [vmem:[%s2244 + $0xc] sm:$0xf]
                %2249 = vst [vmem:[%s2245 + $0x18] sm:$0xf] %v2248
                %v2250 = vld [vmem:[%s2244 + $0x18] sm:$0xf]
                %2251 = vst [vmem:[%s2245 + $0x30] sm:$0xf] %v2250
                %v2252 = vld [vmem:[%s2244 + $0x24] sm:$0xf]
                %2253 = vst [vmem:[%s2245 + $0x48] sm:$0xf] %v2252
                %v2254 = vld [vmem:[%s2244 + $0x30] sm:$0xf]
                %2255 = vst [vmem:[%s2245 + $0x60] sm:$0xf] %v2254
                %v2256 = vld [vmem:[%s2244 + $0x3c] sm:$0xf]
                %2257 = vst [vmem:[%s2245 + $0x78] sm:$0xf] %v2256
                %v2258 = vld [vmem:[%s2244 + $0x48] sm:$0xf]
                %2259 = vst [vmem:[%s2245 + $0x90] sm:$0xf] %v2258
                %v2260 = vld [vmem:[%s2244 + $0x54] sm:$0xf]
                %2261 = vst [vmem:[%s2245 + $0xa8] sm:$0xf] %v2260
                %v2262 = vld [vmem:[%s2244 + $0x60] sm:$0xf]
                %2263 = vst [vmem:[%s2245 + $0xc0] sm:$0xf] %v2262
                %v2264 = vld [vmem:[%s2244 + $0x6c] sm:$0xf]
                %2265 = vst [vmem:[%s2245 + $0xd8] sm:$0xf] %v2264
                %v2266 = vld [vmem:[%s2244 + $0x78] sm:$0xf]
                %2267 = vst [vmem:[%s2245 + $0xf0] sm:$0xf] %v2266
                %v2268 = vld [vmem:[%s2244 + $0x84] sm:$0xf]
                %2269 = vst [vmem:[%s2245 + $0x108] sm:$0xf] %v2268
                %v2270 = vld [vmem:[%s2244 + $0x90] sm:$0xf]
                %2271 = vst [vmem:[%s2245 + $0x120] sm:$0xf] %v2270
                %v2272 = vld [vmem:[%s2244 + $0x9c] sm:$0xf]
                %2273 = vst [vmem:[%s2245 + $0x138] sm:$0xf] %v2272
                %v2274 = vld [vmem:[%s2244 + $0xa8] sm:$0xf]
                %2275 = vst [vmem:[%s2245 + $0x150] sm:$0xf] %v2274
                %v2276 = vld [vmem:[%s2244 + $0xb4] sm:$0xf]
                %2277 = vst [vmem:[%s2245 + $0x168] sm:$0xf] %v2276
              $region86: #{self_attention_aspp_forward.3} parent=73 // loop_footer
                %s2243 = sadd.s32 1, %s2239
              $region87: #{self_attention_aspp_forward.3} parent=73 // loop_footer_branch
                %2238 = sbr.rel target = $region83
              $region88: #{self_attention_aspp_forward.3} parent=73 // loop_exit
                _
            $region74: #{self_attention_aspp_forward.3} parent=69 // pred_fallthru
              _
          $region70: #{self_attention_aspp_forward.3} parent=65 // pred_fallthru
            _
          %2278 = vnop
        $region66: #{self_attention_aspp_forward.3} parent=57 // pred_fallthru
          _
      $region58: #{self_attention_aspp_forward.3} parent=5 // pred_fallthru
        _
      %p2279 = scmp.le.s32.totalorder 2, %s10
      // Predicated region
      $region89: #{self_attention_aspp_forward.3} parent=5 // pred_check
        %p2280 = pneg %p2279
      $region90: #{self_attention_aspp_forward.3} parent=5 // pred_check_branch
        %2282 = sbr.rel (%p2280) target = $region92
      $region91: #{self_attention_aspp_forward.3} parent=5 // pred_region
        %s2283 = ssub.s32 %s10, 2
        // Predicated region
        $region93: #{self_attention_aspp_forward.3} parent=91 // pred_check
          %p2284 = pneg %p157
        $region94: #{self_attention_aspp_forward.3} parent=91 // pred_check_branch
          %2286 = sbr.rel (%p2284) target = $region96
        $region95: #{self_attention_aspp_forward.3} parent=91 // pred_region
          %s2287 = sand.u32 %s142, 1
          %s2288 = sand.u32 %s142, 1
          %s2289 = smul.addr %s2288, 192
          %s2290 = scalar_lea.vmem [#allocation3], %s2289
        $region96: #{self_attention_aspp_forward.3} parent=91 // pred_fallthru
          _
      $region92: #{self_attention_aspp_forward.3} parent=5 // pred_fallthru
        _
    $region6: #{self_attention_aspp_forward.3} parent=1 // loop_footer
      %s14 = sadd.s32 1, %s10
    $region7: #{self_attention_aspp_forward.3} parent=1 // loop_footer_branch
      %9 = sbr.rel target = $region3
    $region8: #{self_attention_aspp_forward.3} parent=1 // loop_exit
      _

// kernel: self_attention_aspp_forward.5
$region0: #{self_attention_aspp_forward.5}
  #allocation0 [shape = 'u32[]', space=smem, size = 0x4, offset = 0x4, fixed_abs, tag = 'smem constant byte address 0x4 - core index']
  #allocation1 [shape = 'u32[144,128]{1,0:T(1,128)}', space=vmem, size = 0x12000, scoped, tag = 'internal scratch']
  #allocation2 [shape = 'f32[1,1]{1,0:T(1,128)S(1)}', space=vmem, size = 0x200, scoped, tag = 'scoped memory for self_attention_aspp_forward.5']
  %s0 = inlined_call_operand.vmem [shape: bf16[2,64,768], index: 0, kind: input, shape index: {}]
  %s1 = inlined_call_operand.vmem [shape: bf16[2,64,256], index: 1, kind: input, shape index: {}]
  %s2 = inlined_call_operand.vmem [shape: f32[2,1,256], index: 2, kind: input, shape index: {}]
  %s3 = inlined_call_operand.vmem [shape: bf16[768,256], index: 3, kind: input, shape index: {}]
  %s4 = inlined_call_operand.vmem [shape: bf16[256,256], index: 4, kind: input, shape index: {}]
  %s5 = inlined_call_operand.vmem [shape: f32[1,256], index: 5, kind: input, shape index: {}]
  %s6 = inlined_call_operand.vmem [shape: f32[1,256], index: 6, kind: input, shape index: {}]
  %s7 = inlined_call_operand.vmem [shape: bf16[256,64], index: 7, kind: input, shape index: {}]
  %s8 = inlined_call_operand.vmem [shape: bf16[256,256], index: 8, kind: input, shape index: {}]
  %s9 = inlined_call_operand.vmem [shape: f32[1,64], index: 9, kind: input, shape index: {}]
  %s10 = inlined_call_operand.vmem [shape: f32[1,256], index: 10, kind: input, shape index: {}]
  %s11 = inlined_call_operand.<no memory space> [shape: f32[1,1], index: 11, kind: input, shape index: {}]
  %s12 = inlined_call_operand.vmem [shape: f32[1,256], index: 12, kind: input, shape index: {}]
  %s13 = inlined_call_operand.vmem [shape: f32[1,256], index: 13, kind: input, shape index: {}]
  %s14 = inlined_call_operand.hbm [shape: f32[2,64,256], index: 14, kind: output, shape index: {}]
  %s15 = sld [smem:[#allocation0]]
  $region89: #{self_attention_aspp_forward.5} parent=0
    _
  %s17 = ssub.s32 1, %s15
  %s18 = scalar_select 0, %s17, %s15
  %v19 = vstv %s11
  %20 = vst [vmem:[#allocation2] sm:$0x1] %v19
  $region1: #{self_attention_aspp_forward.5} parent=0
    #allocation3 [shape = 'u8[131072]{0}', space=vmem, size = 0x20000, scoped, tag = 'output window, operand 0']
    #allocation4 [shape = 's32[2]{0}', space=sflag, size = 0x8, scoped, tag = 'scoped memory for self_attention_aspp_forward.5']
    %21 = vsyncpa [#allocation4], 0
    %s22 = scalar_lea.sflag [#allocation4], 1
    %23 = vsyncpa %s22, 0
    loop: start=0, step=1, limit=4
    $region2: #{self_attention_aspp_forward.5} parent=1 // loop_pre_header
      _
    $region3: #{self_attention_aspp_forward.5} parent=1 // loop_header
      %s25 = sphi 0, %s29
      %p26 = scmp.ge.s32.totalorder %s25, 4
      %s35 = sphi 0, %s37
      %s38 = sphi 0, %s35
      %s39 = sphi 0, %s38
      %s55 = sphi 0, %s39
      %s61 = sphi 0, %s63
      %s64 = sphi 0, %s61
      %s65 = sphi 0, %s64
      %s81 = sphi 0, %s65
      %s87 = sphi 0, %s89
      %s90 = sphi 0, %s87
      %s91 = sphi 0, %s90
      %s107 = sphi 0, %s91
      %s111 = sphi 0, %s111
      %s113 = sphi 0, %s111
      %s114 = sphi 0, %s113
      %s128 = sphi 0, %s114
      %s132 = sphi 0, %s132
      %s134 = sphi 0, %s132
      %s135 = sphi 0, %s134
      %s149 = sphi 0, %s135
      %s153 = sphi 0, %s153
      %s155 = sphi 0, %s153
      %s156 = sphi 0, %s155
      %s170 = sphi 0, %s156
      %s174 = sphi 0, %s174
      %s176 = sphi 0, %s174
      %s177 = sphi 0, %s176
      %s191 = sphi 0, %s177
      %s195 = sphi 0, %s195
      %s197 = sphi 0, %s195
      %s198 = sphi 0, %s197
      %s212 = sphi 0, %s198
      %s216 = sphi 0, %s216
      %s218 = sphi 0, %s216
      %s219 = sphi 0, %s218
      %s233 = sphi 0, %s219
      %s237 = sphi 0, %s237
      %s239 = sphi 0, %s237
      %s240 = sphi 0, %s239
      %s254 = sphi 0, %s240
      %s258 = sphi 0, %s258
      %s260 = sphi 0, %s258
      %s261 = sphi 0, %s260
      %s275 = sphi 0, %s261
      %s279 = sphi 0, %s279
      %s281 = sphi 0, %s279
      %s282 = sphi 0, %s281
      %s296 = sphi 0, %s282
      %s300 = sphi 0, %s300
      %s302 = sphi 0, %s300
      %s303 = sphi 0, %s302
      %s317 = sphi 0, %s303
      %s321 = sphi 0, %s321
      %s323 = sphi 0, %s321
      %s324 = sphi 0, %s323
      %s338 = sphi 0, %s324
      %s344 = sphi 0, %s346
      %s347 = sphi 0, %s344
      %s348 = sphi 0, %s347
      %s364 = sphi 0, %s348
    $region4: #{self_attention_aspp_forward.5} parent=1 // loop_header_branch
      %28 = sbr.rel (%p26) target = $region8
    $region5: #{self_attention_aspp_forward.5} parent=1 // loop_body
      %s30 = ssub.s32 %s25, 1
      %s31 = ssub.s32 %s25, 2
      %s32 = sadd.s32 %s25, 1
      %s33 = ssub.s32 %s25, %s32
      %p34 = scmp.eq.s32.totalorder %s33, 0
      %s36 = sadd.s32 %s35, 1
      %s37 = scalar_select %p34, %s35, %s36
      %p40 = pneg %p34
      %p41 = scmp.eq.s32.totalorder %s25, 1
      %p42 = por %p40, %p41
      %p43 = scmp.ne.s32.totalorder %s35, %s38
      %p44 = scmp.eq.s32.totalorder %s25, 0
      %p45 = por %p43, %p44
      %p46 = scmp.ne.s32.totalorder %s35, %s38
      %p47 = scmp.eq.s32.totalorder %s30, 1
      %p48 = por %p46, %p47
      %p49 = scmp.ne.s32.totalorder %s38, %s39
      %p50 = scmp.eq.s32.totalorder %s30, 0
      %p51 = por %p49, %p50
      %p52 = scmp.ne.s32.totalorder %s38, %s39
      %p53 = scmp.eq.s32.totalorder %s31, 1
      %p54 = por %p52, %p53
      %p56 = scmp.ne.s32.totalorder %s39, %s55
      %p57 = scmp.eq.s32.totalorder %s31, 0
      %p58 = por %p56, %p57
      %s59 = ssub.s32 %s25, %s32
      %p60 = scmp.eq.s32.totalorder %s59, 0
      %s62 = sadd.s32 %s61, 1
      %s63 = scalar_select %p60, %s61, %s62
      %p66 = pneg %p60
      %p67 = scmp.eq.s32.totalorder %s25, 1
      %p68 = por %p66, %p67
      %p69 = scmp.ne.s32.totalorder %s61, %s64
      %p70 = scmp.eq.s32.totalorder %s25, 0
      %p71 = por %p69, %p70
      %p72 = scmp.ne.s32.totalorder %s61, %s64
      %p73 = scmp.eq.s32.totalorder %s30, 1
      %p74 = por %p72, %p73
      %p75 = scmp.ne.s32.totalorder %s64, %s65
      %p76 = scmp.eq.s32.totalorder %s30, 0
      %p77 = por %p75, %p76
      %p78 = scmp.ne.s32.totalorder %s64, %s65
      %p79 = scmp.eq.s32.totalorder %s31, 1
      %p80 = por %p78, %p79
      %p82 = scmp.ne.s32.totalorder %s65, %s81
      %p83 = scmp.eq.s32.totalorder %s31, 0
      %p84 = por %p82, %p83
      %s85 = ssub.s32 %s25, %s32
      %p86 = scmp.eq.s32.totalorder %s85, 0
      %s88 = sadd.s32 %s87, 1
      %s89 = scalar_select %p86, %s87, %s88
      %p92 = pneg %p86
      %p93 = scmp.eq.s32.totalorder %s25, 1
      %p94 = por %p92, %p93
      %p95 = scmp.ne.s32.totalorder %s87, %s90
      %p96 = scmp.eq.s32.totalorder %s25, 0
      %p97 = por %p95, %p96
      %p98 = scmp.ne.s32.totalorder %s87, %s90
      %p99 = scmp.eq.s32.totalorder %s30, 1
      %p100 = por %p98, %p99
      %p101 = scmp.ne.s32.totalorder %s90, %s91
      %p102 = scmp.eq.s32.totalorder %s30, 0
      %p103 = por %p101, %p102
      %p104 = scmp.ne.s32.totalorder %s90, %s91
      %p105 = scmp.eq.s32.totalorder %s31, 1
      %p106 = por %p104, %p105
      %p108 = scmp.ne.s32.totalorder %s91, %s107
      %p109 = scmp.eq.s32.totalorder %s31, 0
      %p110 = por %p108, %p109
      %s112 = sadd.s32 %s111, 1
      %p115 = scmp.eq.s32.totalorder %s25, 1
      %p116 = scmp.ne.s32.totalorder %s111, %s113
      %p117 = scmp.eq.s32.totalorder %s25, 0
      %p118 = por %p116, %p117
      %p119 = scmp.ne.s32.totalorder %s111, %s113
      %p120 = scmp.eq.s32.totalorder %s30, 1
      %p121 = por %p119, %p120
      %p122 = scmp.ne.s32.totalorder %s113, %s114
      %p123 = scmp.eq.s32.totalorder %s30, 0
      %p124 = por %p122, %p123
      %p125 = scmp.ne.s32.totalorder %s113, %s114
      %p126 = scmp.eq.s32.totalorder %s31, 1
      %p127 = por %p125, %p126
      %p129 = scmp.ne.s32.totalorder %s114, %s128
      %p130 = scmp.eq.s32.totalorder %s31, 0
      %p131 = por %p129, %p130
      %s133 = sadd.s32 %s132, 1
      %p136 = scmp.eq.s32.totalorder %s25, 1
      %p137 = scmp.ne.s32.totalorder %s132, %s134
      %p138 = scmp.eq.s32.totalorder %s25, 0
      %p139 = por %p137, %p138
      %p140 = scmp.ne.s32.totalorder %s132, %s134
      %p141 = scmp.eq.s32.totalorder %s30, 1
      %p142 = por %p140, %p141
      %p143 = scmp.ne.s32.totalorder %s134, %s135
      %p144 = scmp.eq.s32.totalorder %s30, 0
      %p145 = por %p143, %p144
      %p146 = scmp.ne.s32.totalorder %s134, %s135
      %p147 = scmp.eq.s32.totalorder %s31, 1
      %p148 = por %p146, %p147
      %p150 = scmp.ne.s32.totalorder %s135, %s149
      %p151 = scmp.eq.s32.totalorder %s31, 0
      %p152 = por %p150, %p151
      %s154 = sadd.s32 %s153, 1
      %p157 = scmp.eq.s32.totalorder %s25, 1
      %p158 = scmp.ne.s32.totalorder %s153, %s155
      %p159 = scmp.eq.s32.totalorder %s25, 0
      %p160 = por %p158, %p159
      %p161 = scmp.ne.s32.totalorder %s153, %s155
      %p162 = scmp.eq.s32.totalorder %s30, 1
      %p163 = por %p161, %p162
      %p164 = scmp.ne.s32.totalorder %s155, %s156
      %p165 = scmp.eq.s32.totalorder %s30, 0
      %p166 = por %p164, %p165
      %p167 = scmp.ne.s32.totalorder %s155, %s156
      %p168 = scmp.eq.s32.totalorder %s31, 1
      %p169 = por %p167, %p168
      %p171 = scmp.ne.s32.totalorder %s156, %s170
      %p172 = scmp.eq.s32.totalorder %s31, 0
      %p173 = por %p171, %p172
      %s175 = sadd.s32 %s174, 1
      %p178 = scmp.eq.s32.totalorder %s25, 1
      %p179 = scmp.ne.s32.totalorder %s174, %s176
      %p180 = scmp.eq.s32.totalorder %s25, 0
      %p181 = por %p179, %p180
      %p182 = scmp.ne.s32.totalorder %s174, %s176
      %p183 = scmp.eq.s32.totalorder %s30, 1
      %p184 = por %p182, %p183
      %p185 = scmp.ne.s32.totalorder %s176, %s177
      %p186 = scmp.eq.s32.totalorder %s30, 0
      %p187 = por %p185, %p186
      %p188 = scmp.ne.s32.totalorder %s176, %s177
      %p189 = scmp.eq.s32.totalorder %s31, 1
      %p190 = por %p188, %p189
      %p192 = scmp.ne.s32.totalorder %s177, %s191
      %p193 = scmp.eq.s32.totalorder %s31, 0
      %p194 = por %p192, %p193
      %s196 = sadd.s32 %s195, 1
      %p199 = scmp.eq.s32.totalorder %s25, 1
      %p200 = scmp.ne.s32.totalorder %s195, %s197
      %p201 = scmp.eq.s32.totalorder %s25, 0
      %p202 = por %p200, %p201
      %p203 = scmp.ne.s32.totalorder %s195, %s197
      %p204 = scmp.eq.s32.totalorder %s30, 1
      %p205 = por %p203, %p204
      %p206 = scmp.ne.s32.totalorder %s197, %s198
      %p207 = scmp.eq.s32.totalorder %s30, 0
      %p208 = por %p206, %p207
      %p209 = scmp.ne.s32.totalorder %s197, %s198
      %p210 = scmp.eq.s32.totalorder %s31, 1
      %p211 = por %p209, %p210
      %p213 = scmp.ne.s32.totalorder %s198, %s212
      %p214 = scmp.eq.s32.totalorder %s31, 0
      %p215 = por %p213, %p214
      %s217 = sadd.s32 %s216, 1
      %p220 = scmp.eq.s32.totalorder %s25, 1
      %p221 = scmp.ne.s32.totalorder %s216, %s218
      %p222 = scmp.eq.s32.totalorder %s25, 0
      %p223 = por %p221, %p222
      %p224 = scmp.ne.s32.totalorder %s216, %s218
      %p225 = scmp.eq.s32.totalorder %s30, 1
      %p226 = por %p224, %p225
      %p227 = scmp.ne.s32.totalorder %s218, %s219
      %p228 = scmp.eq.s32.totalorder %s30, 0
      %p229 = por %p227, %p228
      %p230 = scmp.ne.s32.totalorder %s218, %s219
      %p231 = scmp.eq.s32.totalorder %s31, 1
      %p232 = por %p230, %p231
      %p234 = scmp.ne.s32.totalorder %s219, %s233
      %p235 = scmp.eq.s32.totalorder %s31, 0
      %p236 = por %p234, %p235
      %s238 = sadd.s32 %s237, 1
      %p241 = scmp.eq.s32.totalorder %s25, 1
      %p242 = scmp.ne.s32.totalorder %s237, %s239
      %p243 = scmp.eq.s32.totalorder %s25, 0
      %p244 = por %p242, %p243
      %p245 = scmp.ne.s32.totalorder %s237, %s239
      %p246 = scmp.eq.s32.totalorder %s30, 1
      %p247 = por %p245, %p246
      %p248 = scmp.ne.s32.totalorder %s239, %s240
      %p249 = scmp.eq.s32.totalorder %s30, 0
      %p250 = por %p248, %p249
      %p251 = scmp.ne.s32.totalorder %s239, %s240
      %p252 = scmp.eq.s32.totalorder %s31, 1
      %p253 = por %p251, %p252
      %p255 = scmp.ne.s32.totalorder %s240, %s254
      %p256 = scmp.eq.s32.totalorder %s31, 0
      %p257 = por %p255, %p256
      %s259 = sadd.s32 %s258, 1
      %p262 = scmp.eq.s32.totalorder %s25, 1
      %p263 = scmp.ne.s32.totalorder %s258, %s260
      %p264 = scmp.eq.s32.totalorder %s25, 0
      %p265 = por %p263, %p264
      %p266 = scmp.ne.s32.totalorder %s258, %s260
      %p267 = scmp.eq.s32.totalorder %s30, 1
      %p268 = por %p266, %p267
      %p269 = scmp.ne.s32.totalorder %s260, %s261
      %p270 = scmp.eq.s32.totalorder %s30, 0
      %p271 = por %p269, %p270
      %p272 = scmp.ne.s32.totalorder %s260, %s261
      %p273 = scmp.eq.s32.totalorder %s31, 1
      %p274 = por %p272, %p273
      %p276 = scmp.ne.s32.totalorder %s261, %s275
      %p277 = scmp.eq.s32.totalorder %s31, 0
      %p278 = por %p276, %p277
      %s280 = sadd.s32 %s279, 1
      %p283 = scmp.eq.s32.totalorder %s25, 1
      %p284 = scmp.ne.s32.totalorder %s279, %s281
      %p285 = scmp.eq.s32.totalorder %s25, 0
      %p286 = por %p284, %p285
      %p287 = scmp.ne.s32.totalorder %s279, %s281
      %p288 = scmp.eq.s32.totalorder %s30, 1
      %p289 = por %p287, %p288
      %p290 = scmp.ne.s32.totalorder %s281, %s282
      %p291 = scmp.eq.s32.totalorder %s30, 0
      %p292 = por %p290, %p291
      %p293 = scmp.ne.s32.totalorder %s281, %s282
      %p294 = scmp.eq.s32.totalorder %s31, 1
      %p295 = por %p293, %p294
      %p297 = scmp.ne.s32.totalorder %s282, %s296
      %p298 = scmp.eq.s32.totalorder %s31, 0
      %p299 = por %p297, %p298
      %s301 = sadd.s32 %s300, 1
      %p304 = scmp.eq.s32.totalorder %s25, 1
      %p305 = scmp.ne.s32.totalorder %s300, %s302
      %p306 = scmp.eq.s32.totalorder %s25, 0
      %p307 = por %p305, %p306
      %p308 = scmp.ne.s32.totalorder %s300, %s302
      %p309 = scmp.eq.s32.totalorder %s30, 1
      %p310 = por %p308, %p309
      %p311 = scmp.ne.s32.totalorder %s302, %s303
      %p312 = scmp.eq.s32.totalorder %s30, 0
      %p313 = por %p311, %p312
      %p314 = scmp.ne.s32.totalorder %s302, %s303
      %p315 = scmp.eq.s32.totalorder %s31, 1
      %p316 = por %p314, %p315
      %p318 = scmp.ne.s32.totalorder %s303, %s317
      %p319 = scmp.eq.s32.totalorder %s31, 0
      %p320 = por %p318, %p319
      %s322 = sadd.s32 %s321, 1
      %p325 = scmp.eq.s32.totalorder %s25, 1
      %p326 = scmp.ne.s32.totalorder %s321, %s323
      %p327 = scmp.eq.s32.totalorder %s25, 0
      %p328 = por %p326, %p327
      %p329 = scmp.ne.s32.totalorder %s321, %s323
      %p330 = scmp.eq.s32.totalorder %s30, 1
      %p331 = por %p329, %p330
      %p332 = scmp.ne.s32.totalorder %s323, %s324
      %p333 = scmp.eq.s32.totalorder %s30, 0
      %p334 = por %p332, %p333
      %p335 = scmp.ne.s32.totalorder %s323, %s324
      %p336 = scmp.eq.s32.totalorder %s31, 1
      %p337 = por %p335, %p336
      %p339 = scmp.ne.s32.totalorder %s324, %s338
      %p340 = scmp.eq.s32.totalorder %s31, 0
      %p341 = por %p339, %p340
      %s342 = ssub.s32 %s25, %s32
      %p343 = scmp.eq.s32.totalorder %s342, 0
      %s345 = sadd.s32 %s344, 1
      %s346 = scalar_select %p343, %s344, %s345
      %p349 = pneg %p343
      %p350 = scmp.eq.s32.totalorder %s25, 1
      %p351 = por %p349, %p350
      %p352 = scmp.ne.s32.totalorder %s344, %s347
      %p353 = scmp.eq.s32.totalorder %s25, 0
      %p354 = por %p352, %p353
      %p355 = scmp.ne.s32.totalorder %s344, %s347
      %p356 = scmp.eq.s32.totalorder %s30, 1
      %p357 = por %p355, %p356
      %p358 = scmp.ne.s32.totalorder %s347, %s348
      %p359 = scmp.eq.s32.totalorder %s30, 0
      %p360 = por %p358, %p359
      %p361 = scmp.ne.s32.totalorder %s347, %s348
      %p362 = scmp.eq.s32.totalorder %s31, 1
      %p363 = por %p361, %p362
      %p365 = scmp.ne.s32.totalorder %s348, %s364
      %p366 = scmp.eq.s32.totalorder %s31, 0
      %p367 = por %p365, %p366
      %p368 = scmp.le.s32.totalorder 1, %s25
      %p369 = scmp.lt.s32.totalorder %s25, 3
      %p370 = pnand %p368, %p369
      %p371 = pneg %p370
      // Predicated region
      $region9: #{self_attention_aspp_forward.5} parent=5 // pred_check
        _
      $region10: #{self_attention_aspp_forward.5} parent=5 // pred_check_branch
        %373 = sbr.rel (%p370) target = $region12
      $region11: #{self_attention_aspp_forward.5} parent=5 // pred_region
        %s374 = ssub.s32 %s25, 1
        // Predicated region
        $region13: #{self_attention_aspp_forward.5} parent=11 // pred_check
          %p375 = pneg %p124
        $region14: #{self_attention_aspp_forward.5} parent=11 // pred_check_branch
          %377 = sbr.rel (%p375) target = $region16
        $region15: #{self_attention_aspp_forward.5} parent=11 // pred_region
          _
        $region16: #{self_attention_aspp_forward.5} parent=11 // pred_fallthru
          _
        // Predicated region
        $region17: #{self_attention_aspp_forward.5} parent=11 // pred_check
          %p378 = pneg %p145
        $region18: #{self_attention_aspp_forward.5} parent=11 // pred_check_branch
          %380 = sbr.rel (%p378) target = $region20
        $region19: #{self_attention_aspp_forward.5} parent=11 // pred_region
          _
        $region20: #{self_attention_aspp_forward.5} parent=11 // pred_fallthru
          _
        // Predicated region
        $region21: #{self_attention_aspp_forward.5} parent=11 // pred_check
          %p381 = pneg %p166
        $region22: #{self_attention_aspp_forward.5} parent=11 // pred_check_branch
          %383 = sbr.rel (%p381) target = $region24
        $region23: #{self_attention_aspp_forward.5} parent=11 // pred_region
          _
        $region24: #{self_attention_aspp_forward.5} parent=11 // pred_fallthru
          _
        // Predicated region
        $region25: #{self_attention_aspp_forward.5} parent=11 // pred_check
          %p384 = pneg %p187
        $region26: #{self_attention_aspp_forward.5} parent=11 // pred_check_branch
          %386 = sbr.rel (%p384) target = $region28
        $region27: #{self_attention_aspp_forward.5} parent=11 // pred_region
          _
        $region28: #{self_attention_aspp_forward.5} parent=11 // pred_fallthru
          _
        // Predicated region
        $region29: #{self_attention_aspp_forward.5} parent=11 // pred_check
          %p387 = pneg %p208
        $region30: #{self_attention_aspp_forward.5} parent=11 // pred_check_branch
          %389 = sbr.rel (%p387) target = $region32
        $region31: #{self_attention_aspp_forward.5} parent=11 // pred_region
          _
        $region32: #{self_attention_aspp_forward.5} parent=11 // pred_fallthru
          _
        // Predicated region
        $region33: #{self_attention_aspp_forward.5} parent=11 // pred_check
          %p390 = pneg %p229
        $region34: #{self_attention_aspp_forward.5} parent=11 // pred_check_branch
          %392 = sbr.rel (%p390) target = $region36
        $region35: #{self_attention_aspp_forward.5} parent=11 // pred_region
          _
        $region36: #{self_attention_aspp_forward.5} parent=11 // pred_fallthru
          _
        // Predicated region
        $region37: #{self_attention_aspp_forward.5} parent=11 // pred_check
          %p393 = pneg %p250
        $region38: #{self_attention_aspp_forward.5} parent=11 // pred_check_branch
          %395 = sbr.rel (%p393) target = $region40
        $region39: #{self_attention_aspp_forward.5} parent=11 // pred_region
          _
        $region40: #{self_attention_aspp_forward.5} parent=11 // pred_fallthru
          _
        // Predicated region
        $region41: #{self_attention_aspp_forward.5} parent=11 // pred_check
          %p396 = pneg %p271
        $region42: #{self_attention_aspp_forward.5} parent=11 // pred_check_branch
          %398 = sbr.rel (%p396) target = $region44
        $region43: #{self_attention_aspp_forward.5} parent=11 // pred_region
          _
        $region44: #{self_attention_aspp_forward.5} parent=11 // pred_fallthru
          _
        // Predicated region
        $region45: #{self_attention_aspp_forward.5} parent=11 // pred_check
          %p399 = pneg %p292
        $region46: #{self_attention_aspp_forward.5} parent=11 // pred_check_branch
          %401 = sbr.rel (%p399) target = $region48
        $region47: #{self_attention_aspp_forward.5} parent=11 // pred_region
          _
        $region48: #{self_attention_aspp_forward.5} parent=11 // pred_fallthru
          _
        // Predicated region
        $region49: #{self_attention_aspp_forward.5} parent=11 // pred_check
          %p402 = pneg %p313
        $region50: #{self_attention_aspp_forward.5} parent=11 // pred_check_branch
          %404 = sbr.rel (%p402) target = $region52
        $region51: #{self_attention_aspp_forward.5} parent=11 // pred_region
          _
        $region52: #{self_attention_aspp_forward.5} parent=11 // pred_fallthru
          _
        // Predicated region
        $region53: #{self_attention_aspp_forward.5} parent=11 // pred_check
          %p405 = pneg %p334
        $region54: #{self_attention_aspp_forward.5} parent=11 // pred_check_branch
          %407 = sbr.rel (%p405) target = $region56
        $region55: #{self_attention_aspp_forward.5} parent=11 // pred_region
          _
        $region56: #{self_attention_aspp_forward.5} parent=11 // pred_fallthru
          _
      $region12: #{self_attention_aspp_forward.5} parent=5 // pred_fallthru
        _
      %p408 = scmp.lt.s32.totalorder %s25, 2
      // Predicated region
      $region57: #{self_attention_aspp_forward.5} parent=5 // pred_check
        %p409 = pneg %p408
      $region58: #{self_attention_aspp_forward.5} parent=5 // pred_check_branch
        %411 = sbr.rel (%p409) target = $region60
      $region59: #{self_attention_aspp_forward.5} parent=5 // pred_region
        // Predicated region
        $region61: #{self_attention_aspp_forward.5} parent=59 // pred_check
          %p412 = pneg %p45
        $region62: #{self_attention_aspp_forward.5} parent=59 // pred_check_branch
          %414 = sbr.rel (%p412) target = $region64
        $region63: #{self_attention_aspp_forward.5} parent=59 // pred_region
          %p415 = scmp.lt.s32.totalorder %s25, 1
          %s416 = scalar_select %p415, %s25, 1
          %s417 = smul.addr %s416, 48
          %s418 = smul.addr %s417, 4
          %s419 = scalar_lea.vmem %s0, %s418
        $region64: #{self_attention_aspp_forward.5} parent=59 // pred_fallthru
          _
        // Predicated region
        $region65: #{self_attention_aspp_forward.5} parent=59 // pred_check
          %p420 = pneg %p71
        $region66: #{self_attention_aspp_forward.5} parent=59 // pred_check_branch
          %422 = sbr.rel (%p420) target = $region68
        $region67: #{self_attention_aspp_forward.5} parent=59 // pred_region
          %p423 = scmp.lt.s32.totalorder %s25, 1
          %s424 = scalar_select %p423, %s25, 1
          %s425 = smul.addr %s424, 16
          %s426 = smul.addr %s425, 4
          %s427 = scalar_lea.vmem %s1, %s426
        $region68: #{self_attention_aspp_forward.5} parent=59 // pred_fallthru
          _
        // Predicated region
        $region69: #{self_attention_aspp_forward.5} parent=59 // pred_check
          %p428 = pneg %p97
        $region70: #{self_attention_aspp_forward.5} parent=59 // pred_check_branch
          %430 = sbr.rel (%p428) target = $region72
        $region71: #{self_attention_aspp_forward.5} parent=59 // pred_region
          %p431 = scmp.lt.s32.totalorder %s25, 1
          %s432 = scalar_select %p431, %s25, 1
          %s433 = smul.addr %s432, 2
          %s434 = scalar_lea.vmem %s2, %s433
        $region72: #{self_attention_aspp_forward.5} parent=59 // pred_fallthru
          _
      $region60: #{self_attention_aspp_forward.5} parent=5 // pred_fallthru
        _
      %p435 = scmp.le.s32.totalorder 1, %s25
      %p436 = scmp.lt.s32.totalorder %s25, 3
      %p437 = pnand %p435, %p436
      %p438 = pneg %p437
      // Predicated region
      $region73: #{self_attention_aspp_forward.5} parent=5 // pred_check
        _
      $region74: #{self_attention_aspp_forward.5} parent=5 // pred_check_branch
        %440 = sbr.rel (%p437) target = $region76
      $region75: #{self_attention_aspp_forward.5} parent=5 // pred_region
        %s441 = ssub.s32 %s25, 1
        %p442 = scmp.lt.s32.totalorder %s30, 1
        %s443 = scalar_select %p442, %s30, 1
        %s444 = smul.addr %s443, 48
        %s445 = smul.addr %s444, 4
        %s446 = scalar_lea.vmem %s0, %s445
        %p447 = pneg %p51
        %p448 = pneg %p48
        %p449 = scmp.lt.s32.totalorder %s30, 1
        %s450 = scalar_select %p449, %s30, 1
        %s451 = smul.addr %s450, 16
        %s452 = smul.addr %s451, 4
        %s453 = scalar_lea.vmem %s1, %s452
        %p454 = pneg %p77
        %p455 = pneg %p74
        %p456 = scmp.lt.s32.totalorder %s30, 1
        %s457 = scalar_select %p456, %s30, 1
        %s458 = smul.addr %s457, 2
        %s459 = scalar_lea.vmem %s2, %s458
        %p460 = pneg %p103
        %p461 = pneg %p100
        %p462 = pneg %p124
        %p463 = pneg %p121
        %p464 = pneg %p145
        %p465 = pneg %p142
        %p466 = pneg %p166
        %p467 = pneg %p163
        %p468 = pneg %p187
        %p469 = pneg %p184
        %p470 = pneg %p208
        %p471 = pneg %p205
        %p472 = pneg %p229
        %p473 = pneg %p226
        %p474 = pneg %p250
        %p475 = pneg %p247
        %p476 = pneg %p271
        %p477 = pneg %p268
        %p478 = pneg %p292
        %p479 = pneg %p289
        %p480 = pneg %p313
        %p481 = pneg %p310
        %p482 = pneg %p334
        %p483 = pneg %p331
        %p484 = pneg %p360
        %p485 = pneg %p357
        %s486 = sand.u32 %s347, 1
        %s487 = scalar_lea.sflag [#allocation4], %s486
        %s488 = sand.u32 %s347, 1
        %s489 = smul.addr %s488, 128
        %s490 = scalar_lea.vmem [#allocation3], %s489
        %p491 = scmp.lt.s32.totalorder %s30, 1
        %s492 = scalar_select %p491, %s30, 1
        %s493 = smul.addr %s492, 48
        %s494 = smul.addr %s493, 4
        %s495 = scalar_lea.vmem %s0, %s494
        %p496 = scmp.lt.s32.totalorder %s30, 1
        %s497 = scalar_select %p496, %s30, 1
        %s498 = smul.addr %s497, 16
        %s499 = smul.addr %s498, 4
        %s500 = scalar_lea.vmem %s1, %s499
        %p501 = scmp.lt.s32.totalorder %s30, 1
        %s502 = scalar_select %p501, %s30, 1
        %s503 = smul.addr %s502, 2
        %s504 = scalar_lea.vmem %s2, %s503
        %v506 = vld [vmem:[%s495] sm:$0xff]
        %v507 = vld [vmem:[%s495 + $0x8] sm:$0xff]
        %v508 = vld [vmem:[%s495 + $0x10] sm:$0xff]
        %v509 = vld [vmem:[%s495 + $0x18] sm:$0xff]
        %v510 = vld [vmem:[%s495 + $0x20] sm:$0xff]
        %v511 = vld [vmem:[%s495 + $0x28] sm:$0xff]
        %v512 = vld [vmem:[%s495 + $0x30] sm:$0xff]
        %v513 = vld [vmem:[%s495 + $0x38] sm:$0xff]
        %v514 = vld [vmem:[%s495 + $0x40] sm:$0xff]
        %v515 = vld [vmem:[%s495 + $0x48] sm:$0xff]
        %v516 = vld [vmem:[%s495 + $0x50] sm:$0xff]
        %v517 = vld [vmem:[%s495 + $0x58] sm:$0xff]
        %v518 = vld [vmem:[%s495 + $0x60] sm:$0xff]
        %v519 = vld [vmem:[%s495 + $0x68] sm:$0xff]
        %v520 = vld [vmem:[%s495 + $0x70] sm:$0xff]
        %v521 = vld [vmem:[%s495 + $0x78] sm:$0xff]
        %v522 = vld [vmem:[%s495 + $0x80] sm:$0xff]
        %v523 = vld [vmem:[%s495 + $0x88] sm:$0xff]
        %v524 = vld [vmem:[%s495 + $0x90] sm:$0xff]
        %v525 = vld [vmem:[%s495 + $0x98] sm:$0xff]
        %v526 = vld [vmem:[%s495 + $0xa0] sm:$0xff]
        %v527 = vld [vmem:[%s495 + $0xa8] sm:$0xff]
        %v528 = vld [vmem:[%s495 + $0xb0] sm:$0xff]
        %v529 = vld [vmem:[%s495 + $0xb8] sm:$0xff]
        %v530 = vld [vmem:[%s3] sm:$0xff]
        %v531 = vld [vmem:[%s3 + $0x8] sm:$0xff]
        %v532 = vld [vmem:[%s3 + $0x10] sm:$0xff]
        %v533 = vld [vmem:[%s3 + $0x18] sm:$0xff]
        %v534 = vld [vmem:[%s3 + $0x20] sm:$0xff]
        %v535 = vld [vmem:[%s3 + $0x28] sm:$0xff]
        %v536 = vld [vmem:[%s3 + $0x30] sm:$0xff]
        %v537 = vld [vmem:[%s3 + $0x38] sm:$0xff]
        %v538 = vld [vmem:[%s3 + $0x40] sm:$0xff]
        %v539 = vld [vmem:[%s3 + $0x48] sm:$0xff]
        %v540 = vld [vmem:[%s3 + $0x50] sm:$0xff]
        %v541 = vld [vmem:[%s3 + $0x58] sm:$0xff]
        %v542 = vld [vmem:[%s3 + $0x60] sm:$0xff]
        %v543 = vld [vmem:[%s3 + $0x68] sm:$0xff]
        %v544 = vld [vmem:[%s3 + $0x70] sm:$0xff]
        %v545 = vld [vmem:[%s3 + $0x78] sm:$0xff]
        %v546 = vld [vmem:[%s3 + $0x80] sm:$0xff]
        %v547 = vld [vmem:[%s3 + $0x88] sm:$0xff]
        %v548 = vld [vmem:[%s3 + $0x90] sm:$0xff]
        %v549 = vld [vmem:[%s3 + $0x98] sm:$0xff]
        %v550 = vld [vmem:[%s3 + $0xa0] sm:$0xff]
        %v551 = vld [vmem:[%s3 + $0xa8] sm:$0xff]
        %v552 = vld [vmem:[%s3 + $0xb0] sm:$0xff]
        %v553 = vld [vmem:[%s3 + $0xb8] sm:$0xff]
        %v554 = vld [vmem:[%s3 + $0xc0] sm:$0xff]
        %v555 = vld [vmem:[%s3 + $0xc8] sm:$0xff]
        %v556 = vld [vmem:[%s3 + $0xd0] sm:$0xff]
        %v557 = vld [vmem:[%s3 + $0xd8] sm:$0xff]
        %v558 = vld [vmem:[%s3 + $0xe0] sm:$0xff]
        %v559 = vld [vmem:[%s3 + $0xe8] sm:$0xff]
        %v560 = vld [vmem:[%s3 + $0xf0] sm:$0xff]
        %v561 = vld [vmem:[%s3 + $0xf8] sm:$0xff]
        %v562 = vld [vmem:[%s3 + $0x100] sm:$0xff]
        %v563 = vld [vmem:[%s3 + $0x108] sm:$0xff]
        %v564 = vld [vmem:[%s3 + $0x110] sm:$0xff]
        %v565 = vld [vmem:[%s3 + $0x118] sm:$0xff]
        %v566 = vld [vmem:[%s3 + $0x120] sm:$0xff]
        %v567 = vld [vmem:[%s3 + $0x128] sm:$0xff]
        %v568 = vld [vmem:[%s3 + $0x130] sm:$0xff]
        %v569 = vld [vmem:[%s3 + $0x138] sm:$0xff]
        %v570 = vld [vmem:[%s3 + $0x140] sm:$0xff]
        %v571 = vld [vmem:[%s3 + $0x148] sm:$0xff]
        %v572 = vld [vmem:[%s3 + $0x150] sm:$0xff]
        %v573 = vld [vmem:[%s3 + $0x158] sm:$0xff]
        %v574 = vld [vmem:[%s3 + $0x160] sm:$0xff]
        %v575 = vld [vmem:[%s3 + $0x168] sm:$0xff]
        %v576 = vld [vmem:[%s3 + $0x170] sm:$0xff]
        %v577 = vld [vmem:[%s3 + $0x178] sm:$0xff]
        %v578 = vld [vmem:[%s3 + $0x180] sm:$0xff]
        %v579 = vld [vmem:[%s3 + $0x188] sm:$0xff]
        %v580 = vld [vmem:[%s3 + $0x190] sm:$0xff]
        %v581 = vld [vmem:[%s3 + $0x198] sm:$0xff]
        %v582 = vld [vmem:[%s3 + $0x1a0] sm:$0xff]
        %v583 = vld [vmem:[%s3 + $0x1a8] sm:$0xff]
        %v584 = vld [vmem:[%s3 + $0x1b0] sm:$0xff]
        %v585 = vld [vmem:[%s3 + $0x1b8] sm:$0xff]
        %v586 = vld [vmem:[%s3 + $0x1c0] sm:$0xff]
        %v587 = vld [vmem:[%s3 + $0x1c8] sm:$0xff]
        %v588 = vld [vmem:[%s3 + $0x1d0] sm:$0xff]
        %v589 = vld [vmem:[%s3 + $0x1d8] sm:$0xff]
        %v590 = vld [vmem:[%s3 + $0x1e0] sm:$0xff]
        %v591 = vld [vmem:[%s3 + $0x1e8] sm:$0xff]
        %v592 = vld [vmem:[%s3 + $0x1f0] sm:$0xff]
        %v593 = vld [vmem:[%s3 + $0x1f8] sm:$0xff]
        %v594 = vld [vmem:[%s3 + $0x200] sm:$0xff]
        %v595 = vld [vmem:[%s3 + $0x208] sm:$0xff]
        %v596 = vld [vmem:[%s3 + $0x210] sm:$0xff]
        %v597 = vld [vmem:[%s3 + $0x218] sm:$0xff]
        %v598 = vld [vmem:[%s3 + $0x220] sm:$0xff]
        %v599 = vld [vmem:[%s3 + $0x228] sm:$0xff]
        %v600 = vld [vmem:[%s3 + $0x230] sm:$0xff]
        %v601 = vld [vmem:[%s3 + $0x238] sm:$0xff]
        %v602 = vld [vmem:[%s3 + $0x240] sm:$0xff]
        %v603 = vld [vmem:[%s3 + $0x248] sm:$0xff]
        %v604 = vld [vmem:[%s3 + $0x250] sm:$0xff]
        %v605 = vld [vmem:[%s3 + $0x258] sm:$0xff]
        %v606 = vld [vmem:[%s3 + $0x260] sm:$0xff]
        %v607 = vld [vmem:[%s3 + $0x268] sm:$0xff]
        %v608 = vld [vmem:[%s3 + $0x270] sm:$0xff]
        %v609 = vld [vmem:[%s3 + $0x278] sm:$0xff]
        %v610 = vld [vmem:[%s3 + $0x280] sm:$0xff]
        %v611 = vld [vmem:[%s3 + $0x288] sm:$0xff]
        %v612 = vld [vmem:[%s3 + $0x290] sm:$0xff]
        %v613 = vld [vmem:[%s3 + $0x298] sm:$0xff]
        %v614 = vld [vmem:[%s3 + $0x2a0] sm:$0xff]
        %v615 = vld [vmem:[%s3 + $0x2a8] sm:$0xff]
        %v616 = vld [vmem:[%s3 + $0x2b0] sm:$0xff]
        %v617 = vld [vmem:[%s3 + $0x2b8] sm:$0xff]
        %v618 = vld [vmem:[%s3 + $0x2c0] sm:$0xff]
        %v619 = vld [vmem:[%s3 + $0x2c8] sm:$0xff]
        %v620 = vld [vmem:[%s3 + $0x2d0] sm:$0xff]
        %v621 = vld [vmem:[%s3 + $0x2d8] sm:$0xff]
        %v622 = vld [vmem:[%s3 + $0x2e0] sm:$0xff]
        %v623 = vld [vmem:[%s3 + $0x2e8] sm:$0xff]
        %v624 = vld [vmem:[%s3 + $0x2f0] sm:$0xff]
        %v625 = vld [vmem:[%s3 + $0x2f8] sm:$0xff]
        %v626 = vld [vmem:[%s500] sm:$0xff]
        %v627 = vld [vmem:[%s500 + $0x8] sm:$0xff]
        %v628 = vld [vmem:[%s500 + $0x10] sm:$0xff]
        %v629 = vld [vmem:[%s500 + $0x18] sm:$0xff]
        %v630 = vld [vmem:[%s500 + $0x20] sm:$0xff]
        %v631 = vld [vmem:[%s500 + $0x28] sm:$0xff]
        %v632 = vld [vmem:[%s500 + $0x30] sm:$0xff]
        %v633 = vld [vmem:[%s500 + $0x38] sm:$0xff]
        %v634 = vld [vmem:[%s4] sm:$0xff]
        %v635 = vld [vmem:[%s4 + $0x8] sm:$0xff]
        %v636 = vld [vmem:[%s4 + $0x10] sm:$0xff]
        %v637 = vld [vmem:[%s4 + $0x18] sm:$0xff]
        %v638 = vld [vmem:[%s4 + $0x20] sm:$0xff]
        %v639 = vld [vmem:[%s4 + $0x28] sm:$0xff]
        %v640 = vld [vmem:[%s4 + $0x30] sm:$0xff]
        %v641 = vld [vmem:[%s4 + $0x38] sm:$0xff]
        %v642 = vld [vmem:[%s4 + $0x40] sm:$0xff]
        %v643 = vld [vmem:[%s4 + $0x48] sm:$0xff]
        %v644 = vld [vmem:[%s4 + $0x50] sm:$0xff]
        %v645 = vld [vmem:[%s4 + $0x58] sm:$0xff]
        %v646 = vld [vmem:[%s4 + $0x60] sm:$0xff]
        %v647 = vld [vmem:[%s4 + $0x68] sm:$0xff]
        %v648 = vld [vmem:[%s4 + $0x70] sm:$0xff]
        %v649 = vld [vmem:[%s4 + $0x78] sm:$0xff]
        %v650 = vld [vmem:[%s4 + $0x80] sm:$0xff]
        %v651 = vld [vmem:[%s4 + $0x88] sm:$0xff]
        %v652 = vld [vmem:[%s4 + $0x90] sm:$0xff]
        %v653 = vld [vmem:[%s4 + $0x98] sm:$0xff]
        %v654 = vld [vmem:[%s4 + $0xa0] sm:$0xff]
        %v655 = vld [vmem:[%s4 + $0xa8] sm:$0xff]
        %v656 = vld [vmem:[%s4 + $0xb0] sm:$0xff]
        %v657 = vld [vmem:[%s4 + $0xb8] sm:$0xff]
        %v658 = vld [vmem:[%s4 + $0xc0] sm:$0xff]
        %v659 = vld [vmem:[%s4 + $0xc8] sm:$0xff]
        %v660 = vld [vmem:[%s4 + $0xd0] sm:$0xff]
        %v661 = vld [vmem:[%s4 + $0xd8] sm:$0xff]
        %v662 = vld [vmem:[%s4 + $0xe0] sm:$0xff]
        %v663 = vld [vmem:[%s4 + $0xe8] sm:$0xff]
        %v664 = vld [vmem:[%s4 + $0xf0] sm:$0xff]
        %v665 = vld [vmem:[%s4 + $0xf8] sm:$0xff]
        %v674 = vunpack.c.l.b16 %v626
        %v675 = vunpack.c.h.b16 %v626
        %v676 = vunpack.c.l.b16 %v627
        %v677 = vunpack.c.h.b16 %v627
        %v678 = vunpack.c.l.b16 %v628
        %v679 = vunpack.c.h.b16 %v628
        %v680 = vunpack.c.l.b16 %v629
        %v681 = vunpack.c.h.b16 %v629
        %v682 = vunpack.c.l.b16 %v630
        %v683 = vunpack.c.h.b16 %v630
        %v684 = vunpack.c.l.b16 %v631
        %v685 = vunpack.c.h.b16 %v631
        %v686 = vunpack.c.l.b16 %v632
        %v687 = vunpack.c.h.b16 %v632
        %v688 = vunpack.c.l.b16 %v633
        %v689 = vunpack.c.h.b16 %v633
        %v690 = vpack.c.b16 %v676, %v674
        %v691 = vpack.c.b16 %v677, %v675
        %v692 = vpack.c.b16 %v680, %v678
        %v693 = vpack.c.b16 %v681, %v679
        %v694 = vpack.c.b16 %v684, %v682
        %v695 = vpack.c.b16 %v685, %v683
        %v696 = vpack.c.b16 %v688, %v686
        %v697 = vpack.c.b16 %v689, %v687
        %v738 = vunpack.c.l.b16 %v634
        %v739 = vunpack.c.h.b16 %v634
        %v740 = vunpack.c.l.b16 %v635
        %v741 = vunpack.c.h.b16 %v635
        %v742 = vunpack.c.l.b16 %v636
        %v743 = vunpack.c.h.b16 %v636
        %v744 = vunpack.c.l.b16 %v637
        %v745 = vunpack.c.h.b16 %v637
        %v746 = vunpack.c.l.b16 %v638
        %v747 = vunpack.c.h.b16 %v638
        %v748 = vunpack.c.l.b16 %v639
        %v749 = vunpack.c.h.b16 %v639
        %v750 = vunpack.c.l.b16 %v640
        %v751 = vunpack.c.h.b16 %v640
        %v752 = vunpack.c.l.b16 %v641
        %v753 = vunpack.c.h.b16 %v641
        %v754 = vunpack.c.l.b16 %v642
        %v755 = vunpack.c.h.b16 %v642
        %v756 = vunpack.c.l.b16 %v643
        %v757 = vunpack.c.h.b16 %v643
        %v758 = vunpack.c.l.b16 %v644
        %v759 = vunpack.c.h.b16 %v644
        %v760 = vunpack.c.l.b16 %v645
        %v761 = vunpack.c.h.b16 %v645
        %v762 = vunpack.c.l.b16 %v646
        %v763 = vunpack.c.h.b16 %v646
        %v764 = vunpack.c.l.b16 %v647
        %v765 = vunpack.c.h.b16 %v647
        %v766 = vunpack.c.l.b16 %v648
        %v767 = vunpack.c.h.b16 %v648
        %v768 = vunpack.c.l.b16 %v649
        %v769 = vunpack.c.h.b16 %v649
        %v770 = vunpack.c.l.b16 %v650
        %v771 = vunpack.c.h.b16 %v650
        %v772 = vunpack.c.l.b16 %v651
        %v773 = vunpack.c.h.b16 %v651
        %v774 = vunpack.c.l.b16 %v652
        %v775 = vunpack.c.h.b16 %v652
        %v776 = vunpack.c.l.b16 %v653
        %v777 = vunpack.c.h.b16 %v653
        %v778 = vunpack.c.l.b16 %v654
        %v779 = vunpack.c.h.b16 %v654
        %v780 = vunpack.c.l.b16 %v655
        %v781 = vunpack.c.h.b16 %v655
        %v782 = vunpack.c.l.b16 %v656
        %v783 = vunpack.c.h.b16 %v656
        %v784 = vunpack.c.l.b16 %v657
        %v785 = vunpack.c.h.b16 %v657
        %v786 = vunpack.c.l.b16 %v658
        %v787 = vunpack.c.h.b16 %v658
        %v788 = vunpack.c.l.b16 %v659
        %v789 = vunpack.c.h.b16 %v659
        %v790 = vunpack.c.l.b16 %v660
        %v791 = vunpack.c.h.b16 %v660
        %v792 = vunpack.c.l.b16 %v661
        %v793 = vunpack.c.h.b16 %v661
        %v794 = vunpack.c.l.b16 %v662
        %v795 = vunpack.c.h.b16 %v662
        %v796 = vunpack.c.l.b16 %v663
        %v797 = vunpack.c.h.b16 %v663
        %v798 = vunpack.c.l.b16 %v664
        %v799 = vunpack.c.h.b16 %v664
        %v800 = vunpack.c.l.b16 %v665
        %v801 = vunpack.c.h.b16 %v665
        %v802 = vpack.c.b16 %v740, %v738
        %v803 = vpack.c.b16 %v741, %v739
        %v804 = vpack.c.b16 %v744, %v742
        %v805 = vpack.c.b16 %v745, %v743
        %v806 = vpack.c.b16 %v748, %v746
        %v807 = vpack.c.b16 %v749, %v747
        %v808 = vpack.c.b16 %v752, %v750
        %v809 = vpack.c.b16 %v753, %v751
        %v810 = vpack.c.b16 %v756, %v754
        %v811 = vpack.c.b16 %v757, %v755
        %v812 = vpack.c.b16 %v760, %v758
        %v813 = vpack.c.b16 %v761, %v759
        %v814 = vpack.c.b16 %v764, %v762
        %v815 = vpack.c.b16 %v765, %v763
        %v816 = vpack.c.b16 %v768, %v766
        %v817 = vpack.c.b16 %v769, %v767
        %v818 = vpack.c.b16 %v772, %v770
        %v819 = vpack.c.b16 %v773, %v771
        %v820 = vpack.c.b16 %v776, %v774
        %v821 = vpack.c.b16 %v777, %v775
        %v822 = vpack.c.b16 %v780, %v778
        %v823 = vpack.c.b16 %v781, %v779
        %v824 = vpack.c.b16 %v784, %v782
        %v825 = vpack.c.b16 %v785, %v783
        %v826 = vpack.c.b16 %v788, %v786
        %v827 = vpack.c.b16 %v789, %v787
        %v828 = vpack.c.b16 %v792, %v790
        %v829 = vpack.c.b16 %v793, %v791
        %v830 = vpack.c.b16 %v796, %v794
        %v831 = vpack.c.b16 %v797, %v795
        %v832 = vpack.c.b16 %v800, %v798
        %v833 = vpack.c.b16 %v801, %v799
        %866 = vmatprep.subr.bf16.mxu0 %v803
        %867 = vmatpush1.bf16.msra.mxu0 %v802
        %868 = vmatprep.subr.bf16.mxu0 %v805
        %869 = vmatpush1.bf16.msra.mxu0 %v804
        %870 = vmatprep.subr.bf16.mxu0 %v807
        %871 = vmatpush1.bf16.msra.mxu0 %v806
        %872 = vmatprep.subr.bf16.mxu0 %v809
        %873 = vmatpush1.bf16.msra.mxu0 %v808
        %874 = vmatprep.subr.bf16.mxu0 %v811
        %875 = vmatpush1.bf16.msra.mxu0 %v810
        %876 = vmatprep.subr.bf16.mxu0 %v813
        %877 = vmatpush1.bf16.msra.mxu0 %v812
        %878 = vmatprep.subr.bf16.mxu0 %v815
        %879 = vmatpush1.bf16.msra.mxu0 %v814
        %880 = vmatprep.subr.bf16.mxu0 %v817
        %881 = vmatpush1.bf16.msra.mxu0 %v816
        %882 = vmatprep.subr.bf16.mxu0 %v819
        %883 = vmatpush1.bf16.msra.mxu0 %v818
        %884 = vmatprep.subr.bf16.mxu0 %v821
        %885 = vmatpush1.bf16.msra.mxu0 %v820
        %886 = vmatprep.subr.bf16.mxu0 %v823
        %887 = vmatpush1.bf16.msra.mxu0 %v822
        %888 = vmatprep.subr.bf16.mxu0 %v825
        %889 = vmatpush1.bf16.msra.mxu0 %v824
        %890 = vmatprep.subr.bf16.mxu0 %v827
        %891 = vmatpush1.bf16.msra.mxu0 %v826
        %892 = vmatprep.subr.bf16.mxu0 %v829
        %893 = vmatpush1.bf16.msra.mxu0 %v828
        %894 = vmatprep.subr.bf16.mxu0 %v831
        %895 = vmatpush1.bf16.msra.mxu0 %v830
        %896 = vmatprep.subr.bf16.mxu0 %v833
        %897 = vmatpush1.bf16.msra.mxu0 %v832
        %898 = vmatprep.mubr.bf16.mxu0 %v691
        %899 = vmatmul.mubr.bf16.gmra.mrb[0].mxu0 %v690
        %v900 = vpop.f32.mrb[0].mxu0
        %v901 = vadd.f32 0.0, %v900
        %v902 = vpop.f32.mrb[0].mxu0
        %v903 = vadd.f32 0.0, %v902
        %v904 = vpop.f32.mrb[0].mxu0
        %v905 = vadd.f32 0.0, %v904
        %v906 = vpop.f32.mrb[0].mxu0
        %v907 = vadd.f32 0.0, %v906
        %908 = vmatprep.mubr.bf16.mxu0 %v693
        %909 = vmatmul.mubr.bf16.gmra.mrb[0].mxu0 %v692
        %v910 = vpop.f32.mrb[0].mxu0
        %v911 = vadd.f32 0.0, %v910
        %v912 = vpop.f32.mrb[0].mxu0
        %v913 = vadd.f32 0.0, %v912
        %v914 = vpop.f32.mrb[0].mxu0
        %v915 = vadd.f32 0.0, %v914
        %v916 = vpop.f32.mrb[0].mxu0
        %v917 = vadd.f32 0.0, %v916
        %918 = vmatprep.mubr.bf16.mxu0 %v695
        %919 = vmatmul.mubr.bf16.gmra.mrb[0].mxu0 %v694
        %v920 = vpop.f32.mrb[0].mxu0
        %v921 = vadd.f32 0.0, %v920
        %v922 = vpop.f32.mrb[0].mxu0
        %v923 = vadd.f32 0.0, %v922
        %v924 = vpop.f32.mrb[0].mxu0
        %v925 = vadd.f32 0.0, %v924
        %v926 = vpop.f32.mrb[0].mxu0
        %v927 = vadd.f32 0.0, %v926
        %928 = vmatprep.mubr.bf16.mxu0 %v697
        %929 = vmatmul.mubr.bf16.gmra.mrb[0].mxu0 %v696
        %v930 = vpop.f32.mrb[0].mxu0
        %v931 = vadd.f32 0.0, %v930
        %v932 = vpop.f32.mrb[0].mxu0
        %v933 = vadd.f32 0.0, %v932
        %v934 = vpop.f32.mrb[0].mxu0
        %v935 = vadd.f32 0.0, %v934
        %v936 = vpop.f32.mrb[0].mxu0
        %v937 = vadd.f32 0.0, %v936
        %938 = vdwg.mxu0
        %v963 = vunpack.c.l.b16 %v506
        %v964 = vunpack.c.h.b16 %v506
        %v965 = vunpack.c.l.b16 %v507
        %v966 = vunpack.c.h.b16 %v507
        %v967 = vunpack.c.l.b16 %v508
        %v968 = vunpack.c.h.b16 %v508
        %v969 = vunpack.c.l.b16 %v509
        %v970 = vunpack.c.h.b16 %v509
        %v971 = vunpack.c.l.b16 %v510
        %v972 = vunpack.c.h.b16 %v510
        %v973 = vunpack.c.l.b16 %v511
        %v974 = vunpack.c.h.b16 %v511
        %v975 = vunpack.c.l.b16 %v512
        %v976 = vunpack.c.h.b16 %v512
        %v977 = vunpack.c.l.b16 %v513
        %v978 = vunpack.c.h.b16 %v513
        %v979 = vunpack.c.l.b16 %v514
        %v980 = vunpack.c.h.b16 %v514
        %v981 = vunpack.c.l.b16 %v515
        %v982 = vunpack.c.h.b16 %v515
        %v983 = vunpack.c.l.b16 %v516
        %v984 = vunpack.c.h.b16 %v516
        %v985 = vunpack.c.l.b16 %v517
        %v986 = vunpack.c.h.b16 %v517
        %v987 = vunpack.c.l.b16 %v518
        %v988 = vunpack.c.h.b16 %v518
        %v989 = vunpack.c.l.b16 %v519
        %v990 = vunpack.c.h.b16 %v519
        %v991 = vunpack.c.l.b16 %v520
        %v992 = vunpack.c.h.b16 %v520
        %v993 = vunpack.c.l.b16 %v521
        %v994 = vunpack.c.h.b16 %v521
        %v995 = vunpack.c.l.b16 %v522
        %v996 = vunpack.c.h.b16 %v522
        %v997 = vunpack.c.l.b16 %v523
        %v998 = vunpack.c.h.b16 %v523
        %v999 = vunpack.c.l.b16 %v524
        %v1000 = vunpack.c.h.b16 %v524
        %v1001 = vunpack.c.l.b16 %v525
        %v1002 = vunpack.c.h.b16 %v525
        %v1003 = vunpack.c.l.b16 %v526
        %v1004 = vunpack.c.h.b16 %v526
        %v1005 = vunpack.c.l.b16 %v527
        %v1006 = vunpack.c.h.b16 %v527
        %v1007 = vunpack.c.l.b16 %v528
        %v1008 = vunpack.c.h.b16 %v528
        %v1009 = vunpack.c.l.b16 %v529
        %v1010 = vunpack.c.h.b16 %v529
        %v1011 = vpack.c.b16 %v969, %v963
        %v1012 = vpack.c.b16 %v970, %v964
        %v1013 = vpack.c.b16 %v971, %v965
        %v1014 = vpack.c.b16 %v972, %v966
        %v1015 = vpack.c.b16 %v973, %v967
        %v1016 = vpack.c.b16 %v974, %v968
        %v1017 = vpack.c.b16 %v981, %v975
        %v1018 = vpack.c.b16 %v982, %v976
        %v1019 = vpack.c.b16 %v983, %v977
        %v1020 = vpack.c.b16 %v984, %v978
        %v1021 = vpack.c.b16 %v985, %v979
        %v1022 = vpack.c.b16 %v986, %v980
        %v1023 = vpack.c.b16 %v993, %v987
        %v1024 = vpack.c.b16 %v994, %v988
        %v1025 = vpack.c.b16 %v995, %v989
        %v1026 = vpack.c.b16 %v996, %v990
        %v1027 = vpack.c.b16 %v997, %v991
        %v1028 = vpack.c.b16 %v998, %v992
        %v1029 = vpack.c.b16 %v1005, %v999
        %v1030 = vpack.c.b16 %v1006, %v1000
        %v1031 = vpack.c.b16 %v1007, %v1001
        %v1032 = vpack.c.b16 %v1008, %v1002
        %v1033 = vpack.c.b16 %v1009, %v1003
        %v1034 = vpack.c.b16 %v1010, %v1004
        %v1155 = vunpack.c.l.b16 %v530
        %v1156 = vunpack.c.h.b16 %v530
        %v1157 = vunpack.c.l.b16 %v531
        %v1158 = vunpack.c.h.b16 %v531
        %v1159 = vunpack.c.l.b16 %v532
        %v1160 = vunpack.c.h.b16 %v532
        %v1161 = vunpack.c.l.b16 %v533
        %v1162 = vunpack.c.h.b16 %v533
        %v1163 = vunpack.c.l.b16 %v534
        %v1164 = vunpack.c.h.b16 %v534
        %v1165 = vunpack.c.l.b16 %v535
        %v1166 = vunpack.c.h.b16 %v535
        %v1167 = vunpack.c.l.b16 %v536
        %v1168 = vunpack.c.h.b16 %v536
        %v1169 = vunpack.c.l.b16 %v537
        %v1170 = vunpack.c.h.b16 %v537
        %v1171 = vunpack.c.l.b16 %v538
        %v1172 = vunpack.c.h.b16 %v538
        %v1173 = vunpack.c.l.b16 %v539
        %v1174 = vunpack.c.h.b16 %v539
        %v1175 = vunpack.c.l.b16 %v540
        %v1176 = vunpack.c.h.b16 %v540
        %v1177 = vunpack.c.l.b16 %v541
        %v1178 = vunpack.c.h.b16 %v541
        %v1179 = vunpack.c.l.b16 %v542
        %v1180 = vunpack.c.h.b16 %v542
        %v1181 = vunpack.c.l.b16 %v543
        %v1182 = vunpack.c.h.b16 %v543
        %v1183 = vunpack.c.l.b16 %v544
        %v1184 = vunpack.c.h.b16 %v544
        %v1185 = vunpack.c.l.b16 %v545
        %v1186 = vunpack.c.h.b16 %v545
        %v1187 = vunpack.c.l.b16 %v546
        %v1188 = vunpack.c.h.b16 %v546
        %v1189 = vunpack.c.l.b16 %v547
        %v1190 = vunpack.c.h.b16 %v547
        %v1191 = vunpack.c.l.b16 %v548
        %v1192 = vunpack.c.h.b16 %v548
        %v1193 = vunpack.c.l.b16 %v549
        %v1194 = vunpack.c.h.b16 %v549
        %v1195 = vunpack.c.l.b16 %v550
        %v1196 = vunpack.c.h.b16 %v550
        %v1197 = vunpack.c.l.b16 %v551
        %v1198 = vunpack.c.h.b16 %v551
        %v1199 = vunpack.c.l.b16 %v552
        %v1200 = vunpack.c.h.b16 %v552
        %v1201 = vunpack.c.l.b16 %v553
        %v1202 = vunpack.c.h.b16 %v553
        %v1203 = vunpack.c.l.b16 %v554
        %v1204 = vunpack.c.h.b16 %v554
        %v1205 = vunpack.c.l.b16 %v555
        %v1206 = vunpack.c.h.b16 %v555
        %v1207 = vunpack.c.l.b16 %v556
        %v1208 = vunpack.c.h.b16 %v556
        %v1209 = vunpack.c.l.b16 %v557
        %v1210 = vunpack.c.h.b16 %v557
        %v1211 = vunpack.c.l.b16 %v558
        %v1212 = vunpack.c.h.b16 %v558
        %v1213 = vunpack.c.l.b16 %v559
        %v1214 = vunpack.c.h.b16 %v559
        %v1215 = vunpack.c.l.b16 %v560
        %v1216 = vunpack.c.h.b16 %v560
        %v1217 = vunpack.c.l.b16 %v561
        %v1218 = vunpack.c.h.b16 %v561
        %v1219 = vunpack.c.l.b16 %v562
        %v1220 = vunpack.c.h.b16 %v562
        %v1221 = vunpack.c.l.b16 %v563
        %v1222 = vunpack.c.h.b16 %v563
        %v1223 = vunpack.c.l.b16 %v564
        %v1224 = vunpack.c.h.b16 %v564
        %v1225 = vunpack.c.l.b16 %v565
        %v1226 = vunpack.c.h.b16 %v565
        %v1227 = vunpack.c.l.b16 %v566
        %v1228 = vunpack.c.h.b16 %v566
        %v1229 = vunpack.c.l.b16 %v567
        %v1230 = vunpack.c.h.b16 %v567
        %v1231 = vunpack.c.l.b16 %v568
        %v1232 = vunpack.c.h.b16 %v568
        %v1233 = vunpack.c.l.b16 %v569
        %v1234 = vunpack.c.h.b16 %v569
        %v1235 = vunpack.c.l.b16 %v570
        %v1236 = vunpack.c.h.b16 %v570
        %v1237 = vunpack.c.l.b16 %v571
        %v1238 = vunpack.c.h.b16 %v571
        %v1239 = vunpack.c.l.b16 %v572
        %v1240 = vunpack.c.h.b16 %v572
        %v1241 = vunpack.c.l.b16 %v573
        %v1242 = vunpack.c.h.b16 %v573
        %v1243 = vunpack.c.l.b16 %v574
        %v1244 = vunpack.c.h.b16 %v574
        %v1245 = vunpack.c.l.b16 %v575
        %v1246 = vunpack.c.h.b16 %v575
        %v1247 = vunpack.c.l.b16 %v576
        %v1248 = vunpack.c.h.b16 %v576
        %v1249 = vunpack.c.l.b16 %v577
        %v1250 = vunpack.c.h.b16 %v577
        %v1251 = vunpack.c.l.b16 %v578
        %v1252 = vunpack.c.h.b16 %v578
        %v1253 = vunpack.c.l.b16 %v579
        %v1254 = vunpack.c.h.b16 %v579
        %v1255 = vunpack.c.l.b16 %v580
        %v1256 = vunpack.c.h.b16 %v580
        %v1257 = vunpack.c.l.b16 %v581
        %v1258 = vunpack.c.h.b16 %v581
        %v1259 = vunpack.c.l.b16 %v582
        %v1260 = vunpack.c.h.b16 %v582
        %v1261 = vunpack.c.l.b16 %v583
        %v1262 = vunpack.c.h.b16 %v583
        %v1263 = vunpack.c.l.b16 %v584
        %v1264 = vunpack.c.h.b16 %v584
        %v1265 = vunpack.c.l.b16 %v585
        %v1266 = vunpack.c.h.b16 %v585
        %v1267 = vunpack.c.l.b16 %v586
        %v1268 = vunpack.c.h.b16 %v586
        %v1269 = vunpack.c.l.b16 %v587
        %v1270 = vunpack.c.h.b16 %v587
        %v1271 = vunpack.c.l.b16 %v588
        %v1272 = vunpack.c.h.b16 %v588
        %v1273 = vunpack.c.l.b16 %v589
        %v1274 = vunpack.c.h.b16 %v589
        %v1275 = vunpack.c.l.b16 %v590
        %v1276 = vunpack.c.h.b16 %v590
        %v1277 = vunpack.c.l.b16 %v591
        %v1278 = vunpack.c.h.b16 %v591
        %v1279 = vunpack.c.l.b16 %v592
        %v1280 = vunpack.c.h.b16 %v592
        %v1281 = vunpack.c.l.b16 %v593
        %v1282 = vunpack.c.h.b16 %v593
        %v1283 = vunpack.c.l.b16 %v594
        %v1284 = vunpack.c.h.b16 %v594
        %v1285 = vunpack.c.l.b16 %v595
        %v1286 = vunpack.c.h.b16 %v595
        %v1287 = vunpack.c.l.b16 %v596
        %v1288 = vunpack.c.h.b16 %v596
        %v1289 = vunpack.c.l.b16 %v597
        %v1290 = vunpack.c.h.b16 %v597
        %v1291 = vunpack.c.l.b16 %v598
        %v1292 = vunpack.c.h.b16 %v598
        %v1293 = vunpack.c.l.b16 %v599
        %v1294 = vunpack.c.h.b16 %v599
        %v1295 = vunpack.c.l.b16 %v600
        %v1296 = vunpack.c.h.b16 %v600
        %v1297 = vunpack.c.l.b16 %v601
        %v1298 = vunpack.c.h.b16 %v601
        %v1299 = vunpack.c.l.b16 %v602
        %v1300 = vunpack.c.h.b16 %v602
        %v1301 = vunpack.c.l.b16 %v603
        %v1302 = vunpack.c.h.b16 %v603
        %v1303 = vunpack.c.l.b16 %v604
        %v1304 = vunpack.c.h.b16 %v604
        %v1305 = vunpack.c.l.b16 %v605
        %v1306 = vunpack.c.h.b16 %v605
        %v1307 = vunpack.c.l.b16 %v606
        %v1308 = vunpack.c.h.b16 %v606
        %v1309 = vunpack.c.l.b16 %v607
        %v1310 = vunpack.c.h.b16 %v607
        %v1311 = vunpack.c.l.b16 %v608
        %v1312 = vunpack.c.h.b16 %v608
        %v1313 = vunpack.c.l.b16 %v609
        %v1314 = vunpack.c.h.b16 %v609
        %v1315 = vunpack.c.l.b16 %v610
        %v1316 = vunpack.c.h.b16 %v610
        %v1317 = vunpack.c.l.b16 %v611
        %v1318 = vunpack.c.h.b16 %v611
        %v1319 = vunpack.c.l.b16 %v612
        %v1320 = vunpack.c.h.b16 %v612
        %v1321 = vunpack.c.l.b16 %v613
        %v1322 = vunpack.c.h.b16 %v613
        %v1323 = vunpack.c.l.b16 %v614
        %v1324 = vunpack.c.h.b16 %v614
        %v1325 = vunpack.c.l.b16 %v615
        %v1326 = vunpack.c.h.b16 %v615
        %v1327 = vunpack.c.l.b16 %v616
        %v1328 = vunpack.c.h.b16 %v616
        %v1329 = vunpack.c.l.b16 %v617
        %v1330 = vunpack.c.h.b16 %v617
        %v1331 = vunpack.c.l.b16 %v618
        %v1332 = vunpack.c.h.b16 %v618
        %v1333 = vunpack.c.l.b16 %v619
        %v1334 = vunpack.c.h.b16 %v619
        %v1335 = vunpack.c.l.b16 %v620
        %v1336 = vunpack.c.h.b16 %v620
        %v1337 = vunpack.c.l.b16 %v621
        %v1338 = vunpack.c.h.b16 %v621
        %v1339 = vunpack.c.l.b16 %v622
        %v1340 = vunpack.c.h.b16 %v622
        %v1341 = vunpack.c.l.b16 %v623
        %v1342 = vunpack.c.h.b16 %v623
        %v1343 = vunpack.c.l.b16 %v624
        %v1344 = vunpack.c.h.b16 %v624
        %v1345 = vunpack.c.l.b16 %v625
        %v1346 = vunpack.c.h.b16 %v625
        %v1347 = vpack.c.b16 %v1157, %v1155
        %v1348 = vpack.c.b16 %v1158, %v1156
        %v1349 = vpack.c.b16 %v1161, %v1159
        %v1350 = vpack.c.b16 %v1162, %v1160
        %v1351 = vpack.c.b16 %v1165, %v1163
        %v1352 = vpack.c.b16 %v1166, %v1164
        %v1353 = vpack.c.b16 %v1169, %v1167
        %v1354 = vpack.c.b16 %v1170, %v1168
        %v1355 = vpack.c.b16 %v1173, %v1171
        %v1356 = vpack.c.b16 %v1174, %v1172
        %v1357 = vpack.c.b16 %v1177, %v1175
        %v1358 = vpack.c.b16 %v1178, %v1176
        %v1359 = vpack.c.b16 %v1181, %v1179
        %v1360 = vpack.c.b16 %v1182, %v1180
        %v1361 = vpack.c.b16 %v1185, %v1183
        %v1362 = vpack.c.b16 %v1186, %v1184
        %v1363 = vpack.c.b16 %v1189, %v1187
        %v1364 = vpack.c.b16 %v1190, %v1188
        %v1365 = vpack.c.b16 %v1193, %v1191
        %v1366 = vpack.c.b16 %v1194, %v1192
        %v1367 = vpack.c.b16 %v1197, %v1195
        %v1368 = vpack.c.b16 %v1198, %v1196
        %v1369 = vpack.c.b16 %v1201, %v1199
        %v1370 = vpack.c.b16 %v1202, %v1200
        %v1371 = vpack.c.b16 %v1205, %v1203
        %v1372 = vpack.c.b16 %v1206, %v1204
        %v1373 = vpack.c.b16 %v1209, %v1207
        %v1374 = vpack.c.b16 %v1210, %v1208
        %v1375 = vpack.c.b16 %v1213, %v1211
        %v1376 = vpack.c.b16 %v1214, %v1212
        %v1377 = vpack.c.b16 %v1217, %v1215
        %v1378 = vpack.c.b16 %v1218, %v1216
        %v1379 = vpack.c.b16 %v1221, %v1219
        %v1380 = vpack.c.b16 %v1222, %v1220
        %v1381 = vpack.c.b16 %v1225, %v1223
        %v1382 = vpack.c.b16 %v1226, %v1224
        %v1383 = vpack.c.b16 %v1229, %v1227
        %v1384 = vpack.c.b16 %v1230, %v1228
        %v1385 = vpack.c.b16 %v1233, %v1231
        %v1386 = vpack.c.b16 %v1234, %v1232
        %v1387 = vpack.c.b16 %v1237, %v1235
        %v1388 = vpack.c.b16 %v1238, %v1236
        %v1389 = vpack.c.b16 %v1241, %v1239
        %v1390 = vpack.c.b16 %v1242, %v1240
        %v1391 = vpack.c.b16 %v1245, %v1243
        %v1392 = vpack.c.b16 %v1246, %v1244
        %v1393 = vpack.c.b16 %v1249, %v1247
        %v1394 = vpack.c.b16 %v1250, %v1248
        %v1395 = vpack.c.b16 %v1253, %v1251
        %v1396 = vpack.c.b16 %v1254, %v1252
        %v1397 = vpack.c.b16 %v1257, %v1255
        %v1398 = vpack.c.b16 %v1258, %v1256
        %v1399 = vpack.c.b16 %v1261, %v1259
        %v1400 = vpack.c.b16 %v1262, %v1260
        %v1401 = vpack.c.b16 %v1265, %v1263
        %v1402 = vpack.c.b16 %v1266, %v1264
        %v1403 = vpack.c.b16 %v1269, %v1267
        %v1404 = vpack.c.b16 %v1270, %v1268
        %v1405 = vpack.c.b16 %v1273, %v1271
        %v1406 = vpack.c.b16 %v1274, %v1272
        %v1407 = vpack.c.b16 %v1277, %v1275
        %v1408 = vpack.c.b16 %v1278, %v1276
        %v1409 = vpack.c.b16 %v1281, %v1279
        %v1410 = vpack.c.b16 %v1282, %v1280
        %v1411 = vpack.c.b16 %v1285, %v1283
        %v1412 = vpack.c.b16 %v1286, %v1284
        %v1413 = vpack.c.b16 %v1289, %v1287
        %v1414 = vpack.c.b16 %v1290, %v1288
        %v1415 = vpack.c.b16 %v1293, %v1291
        %v1416 = vpack.c.b16 %v1294, %v1292
        %v1417 = vpack.c.b16 %v1297, %v1295
        %v1418 = vpack.c.b16 %v1298, %v1296
        %v1419 = vpack.c.b16 %v1301, %v1299
        %v1420 = vpack.c.b16 %v1302, %v1300
        %v1421 = vpack.c.b16 %v1305, %v1303
        %v1422 = vpack.c.b16 %v1306, %v1304
        %v1423 = vpack.c.b16 %v1309, %v1307
        %v1424 = vpack.c.b16 %v1310, %v1308
        %v1425 = vpack.c.b16 %v1313, %v1311
        %v1426 = vpack.c.b16 %v1314, %v1312
        %v1427 = vpack.c.b16 %v1317, %v1315
        %v1428 = vpack.c.b16 %v1318, %v1316
        %v1429 = vpack.c.b16 %v1321, %v1319
        %v1430 = vpack.c.b16 %v1322, %v1320
        %v1431 = vpack.c.b16 %v1325, %v1323
        %v1432 = vpack.c.b16 %v1326, %v1324
        %v1433 = vpack.c.b16 %v1329, %v1327
        %v1434 = vpack.c.b16 %v1330, %v1328
        %v1435 = vpack.c.b16 %v1333, %v1331
        %v1436 = vpack.c.b16 %v1334, %v1332
        %v1437 = vpack.c.b16 %v1337, %v1335
        %v1438 = vpack.c.b16 %v1338, %v1336
        %v1439 = vpack.c.b16 %v1341, %v1339
        %v1440 = vpack.c.b16 %v1342, %v1340
        %v1441 = vpack.c.b16 %v1345, %v1343
        %v1442 = vpack.c.b16 %v1346, %v1344
        %1539 = vmatprep.subr.bf16.mxu0 %v1348
        %1540 = vmatpush1.bf16.msra.mxu0 %v1347
        %1541 = vmatprep.subr.bf16.mxu0 %v1350
        %1542 = vmatpush1.bf16.msra.mxu0 %v1349
        %1543 = vmatprep.subr.bf16.mxu0 %v1352
        %1544 = vmatpush1.bf16.msra.mxu0 %v1351
        %1545 = vmatprep.subr.bf16.mxu0 %v1354
        %1546 = vmatpush1.bf16.msra.mxu0 %v1353
        %1547 = vmatprep.subr.bf16.mxu0 %v1356
        %1548 = vmatpush1.bf16.msra.mxu0 %v1355
        %1549 = vmatprep.subr.bf16.mxu0 %v1358
        %1550 = vmatpush1.bf16.msra.mxu0 %v1357
        %1551 = vmatprep.subr.bf16.mxu0 %v1360
        %1552 = vmatpush1.bf16.msra.mxu0 %v1359
        %1553 = vmatprep.subr.bf16.mxu0 %v1362
        %1554 = vmatpush1.bf16.msra.mxu0 %v1361
        %1555 = vmatprep.subr.bf16.mxu0 %v1364
        %1556 = vmatpush1.bf16.msra.mxu0 %v1363
        %1557 = vmatprep.subr.bf16.mxu0 %v1366
        %1558 = vmatpush1.bf16.msra.mxu0 %v1365
        %1559 = vmatprep.subr.bf16.mxu0 %v1368
        %1560 = vmatpush1.bf16.msra.mxu0 %v1367
        %1561 = vmatprep.subr.bf16.mxu0 %v1370
        %1562 = vmatpush1.bf16.msra.mxu0 %v1369
        %1563 = vmatprep.subr.bf16.mxu0 %v1372
        %1564 = vmatpush1.bf16.msra.mxu0 %v1371
        %1565 = vmatprep.subr.bf16.mxu0 %v1374
        %1566 = vmatpush1.bf16.msra.mxu0 %v1373
        %1567 = vmatprep.subr.bf16.mxu0 %v1376
        %1568 = vmatpush1.bf16.msra.mxu0 %v1375
        %1569 = vmatprep.subr.bf16.mxu0 %v1378
        %1570 = vmatpush1.bf16.msra.mxu0 %v1377
        %1571 = vmatprep.mubr.bf16.mxu0 %v1012
        %1572 = vmatmul.mubr.bf16.gmra.mrb[0].mxu0 %v1011
        %v1573 = vpop.f32.mrb[0].mxu0
        %v1574 = vadd.f32 %v901, %v1573
        %v1575 = vpop.f32.mrb[0].mxu0
        %v1576 = vadd.f32 %v903, %v1575
        %v1577 = vpop.f32.mrb[0].mxu0
        %v1578 = vadd.f32 %v905, %v1577
        %v1579 = vpop.f32.mrb[0].mxu0
        %v1580 = vadd.f32 %v907, %v1579
        %1581 = vmatprep.mubr.bf16.mxu0 %v1018
        %1582 = vmatmul.mubr.bf16.gmra.mrb[0].mxu0 %v1017
        %v1583 = vpop.f32.mrb[0].mxu0
        %v1584 = vadd.f32 %v911, %v1583
        %v1585 = vpop.f32.mrb[0].mxu0
        %v1586 = vadd.f32 %v913, %v1585
        %v1587 = vpop.f32.mrb[0].mxu0
        %v1588 = vadd.f32 %v915, %v1587
        %v1589 = vpop.f32.mrb[0].mxu0
        %v1590 = vadd.f32 %v917, %v1589
        %1591 = vmatprep.mubr.bf16.mxu0 %v1024
        %1592 = vmatmul.mubr.bf16.gmra.mrb[0].mxu0 %v1023
        %v1593 = vpop.f32.mrb[0].mxu0
        %v1594 = vadd.f32 %v921, %v1593
        %v1595 = vpop.f32.mrb[0].mxu0
        %v1596 = vadd.f32 %v923, %v1595
        %v1597 = vpop.f32.mrb[0].mxu0
        %v1598 = vadd.f32 %v925, %v1597
        %v1599 = vpop.f32.mrb[0].mxu0
        %v1600 = vadd.f32 %v927, %v1599
        %1601 = vmatprep.mubr.bf16.mxu0 %v1030
        %1602 = vmatmul.mubr.bf16.gmra.mrb[0].mxu0 %v1029
        %v1603 = vpop.f32.mrb[0].mxu0
        %v1604 = vadd.f32 %v931, %v1603
        %v1605 = vpop.f32.mrb[0].mxu0
        %v1606 = vadd.f32 %v933, %v1605
        %v1607 = vpop.f32.mrb[0].mxu0
        %v1608 = vadd.f32 %v935, %v1607
        %v1609 = vpop.f32.mrb[0].mxu0
        %v1610 = vadd.f32 %v937, %v1609
        %1611 = vdwg.mxu0
        %1612 = vmatprep.subr.bf16.mxu0 %v1380
        %1613 = vmatpush1.bf16.msra.mxu0 %v1379
        %1614 = vmatprep.subr.bf16.mxu0 %v1382
        %1615 = vmatpush1.bf16.msra.mxu0 %v1381
        %1616 = vmatprep.subr.bf16.mxu0 %v1384
        %1617 = vmatpush1.bf16.msra.mxu0 %v1383
        %1618 = vmatprep.subr.bf16.mxu0 %v1386
        %1619 = vmatpush1.bf16.msra.mxu0 %v1385
        %1620 = vmatprep.subr.bf16.mxu0 %v1388
        %1621 = vmatpush1.bf16.msra.mxu0 %v1387
        %1622 = vmatprep.subr.bf16.mxu0 %v1390
        %1623 = vmatpush1.bf16.msra.mxu0 %v1389
        %1624 = vmatprep.subr.bf16.mxu0 %v1392
        %1625 = vmatpush1.bf16.msra.mxu0 %v1391
        %1626 = vmatprep.subr.bf16.mxu0 %v1394
        %1627 = vmatpush1.bf16.msra.mxu0 %v1393
        %1628 = vmatprep.subr.bf16.mxu0 %v1396
        %1629 = vmatpush1.bf16.msra.mxu0 %v1395
        %1630 = vmatprep.subr.bf16.mxu0 %v1398
        %1631 = vmatpush1.bf16.msra.mxu0 %v1397
        %1632 = vmatprep.subr.bf16.mxu0 %v1400
        %1633 = vmatpush1.bf16.msra.mxu0 %v1399
        %1634 = vmatprep.subr.bf16.mxu0 %v1402
        %1635 = vmatpush1.bf16.msra.mxu0 %v1401
        %1636 = vmatprep.subr.bf16.mxu0 %v1404
        %1637 = vmatpush1.bf16.msra.mxu0 %v1403
        %1638 = vmatprep.subr.bf16.mxu0 %v1406
        %1639 = vmatpush1.bf16.msra.mxu0 %v1405
        %1640 = vmatprep.subr.bf16.mxu0 %v1408
        %1641 = vmatpush1.bf16.msra.mxu0 %v1407
        %1642 = vmatprep.subr.bf16.mxu0 %v1410
        %1643 = vmatpush1.bf16.msra.mxu0 %v1409
        %1644 = vmatprep.mubr.bf16.mxu0 %v1014
        %1645 = vmatmul.mubr.bf16.gmra.mrb[0].mxu0 %v1013
        %v1646 = vpop.f32.mrb[0].mxu0
        %v1647 = vadd.f32 %v1574, %v1646
        %v1648 = vpop.f32.mrb[0].mxu0
        %v1649 = vadd.f32 %v1576, %v1648
        %v1650 = vpop.f32.mrb[0].mxu0
        %v1651 = vadd.f32 %v1578, %v1650
        %v1652 = vpop.f32.mrb[0].mxu0
        %v1653 = vadd.f32 %v1580, %v1652
        %1654 = vmatprep.mubr.bf16.mxu0 %v1020
        %1655 = vmatmul.mubr.bf16.gmra.mrb[0].mxu0 %v1019
        %v1656 = vpop.f32.mrb[0].mxu0
        %v1657 = vadd.f32 %v1584, %v1656
        %v1658 = vpop.f32.mrb[0].mxu0
        %v1659 = vadd.f32 %v1586, %v1658
        %v1660 = vpop.f32.mrb[0].mxu0
        %v1661 = vadd.f32 %v1588, %v1660
        %v1662 = vpop.f32.mrb[0].mxu0
        %v1663 = vadd.f32 %v1590, %v1662
        %1664 = vmatprep.mubr.bf16.mxu0 %v1026
        %1665 = vmatmul.mubr.bf16.gmra.mrb[0].mxu0 %v1025
        %v1666 = vpop.f32.mrb[0].mxu0
        %v1667 = vadd.f32 %v1594, %v1666
        %v1668 = vpop.f32.mrb[0].mxu0
        %v1669 = vadd.f32 %v1596, %v1668
        %v1670 = vpop.f32.mrb[0].mxu0
        %v1671 = vadd.f32 %v1598, %v1670
        %v1672 = vpop.f32.mrb[0].mxu0
        %v1673 = vadd.f32 %v1600, %v1672
        %1674 = vmatprep.mubr.bf16.mxu0 %v1032
        %1675 = vmatmul.mubr.bf16.gmra.mrb[0].mxu0 %v1031
        %v1676 = vpop.f32.mrb[0].mxu0
        %v1677 = vadd.f32 %v1604, %v1676
        %v1678 = vpop.f32.mrb[0].mxu0
        %v1679 = vadd.f32 %v1606, %v1678
        %v1680 = vpop.f32.mrb[0].mxu0
        %v1681 = vadd.f32 %v1608, %v1680
        %v1682 = vpop.f32.mrb[0].mxu0
        %v1683 = vadd.f32 %v1610, %v1682
        %1684 = vdwg.mxu0
        %1685 = vmatprep.subr.bf16.mxu0 %v1412
        %1686 = vmatpush1.bf16.msra.mxu0 %v1411
        %1687 = vmatprep.subr.bf16.mxu0 %v1414
        %1688 = vmatpush1.bf16.msra.mxu0 %v1413
        %1689 = vmatprep.subr.bf16.mxu0 %v1416
        %1690 = vmatpush1.bf16.msra.mxu0 %v1415
        %1691 = vmatprep.subr.bf16.mxu0 %v1418
        %1692 = vmatpush1.bf16.msra.mxu0 %v1417
        %1693 = vmatprep.subr.bf16.mxu0 %v1420
        %1694 = vmatpush1.bf16.msra.mxu0 %v1419
        %1695 = vmatprep.subr.bf16.mxu0 %v1422
        %1696 = vmatpush1.bf16.msra.mxu0 %v1421
        %1697 = vmatprep.subr.bf16.mxu0 %v1424
        %1698 = vmatpush1.bf16.msra.mxu0 %v1423
        %1699 = vmatprep.subr.bf16.mxu0 %v1426
        %1700 = vmatpush1.bf16.msra.mxu0 %v1425
        %1701 = vmatprep.subr.bf16.mxu0 %v1428
        %1702 = vmatpush1.bf16.msra.mxu0 %v1427
        %1703 = vmatprep.subr.bf16.mxu0 %v1430
        %1704 = vmatpush1.bf16.msra.mxu0 %v1429
        %1705 = vmatprep.subr.bf16.mxu0 %v1432
        %1706 = vmatpush1.bf16.msra.mxu0 %v1431
        %1707 = vmatprep.subr.bf16.mxu0 %v1434
        %1708 = vmatpush1.bf16.msra.mxu0 %v1433
        %1709 = vmatprep.subr.bf16.mxu0 %v1436
        %1710 = vmatpush1.bf16.msra.mxu0 %v1435
        %1711 = vmatprep.subr.bf16.mxu0 %v1438
        %1712 = vmatpush1.bf16.msra.mxu0 %v1437
        %1713 = vmatprep.subr.bf16.mxu0 %v1440
        %1714 = vmatpush1.bf16.msra.mxu0 %v1439
        %1715 = vmatprep.subr.bf16.mxu0 %v1442
        %1716 = vmatpush1.bf16.msra.mxu0 %v1441
        %1717 = vmatprep.mubr.bf16.mxu0 %v1016
        %1718 = vmatmul.mubr.bf16.gmra.mrb[0].mxu0 %v1015
        %v1719 = vpop.f32.mrb[0].mxu0
        %v1720 = vadd.f32 %v1647, %v1719
        %v1721 = vpop.f32.mrb[0].mxu0
        %v1722 = vadd.f32 %v1649, %v1721
        %v1723 = vpop.f32.mrb[0].mxu0
        %v1724 = vadd.f32 %v1651, %v1723
        %v1725 = vpop.f32.mrb[0].mxu0
        %v1726 = vadd.f32 %v1653, %v1725
        %1727 = vmatprep.mubr.bf16.mxu0 %v1022
        %1728 = vmatmul.mubr.bf16.gmra.mrb[0].mxu0 %v1021
        %v1729 = vpop.f32.mrb[0].mxu0
        %v1730 = vadd.f32 %v1657, %v1729
        %v1731 = vpop.f32.mrb[0].mxu0
        %v1732 = vadd.f32 %v1659, %v1731
        %v1733 = vpop.f32.mrb[0].mxu0
        %v1734 = vadd.f32 %v1661, %v1733
        %v1735 = vpop.f32.mrb[0].mxu0
        %v1736 = vadd.f32 %v1663, %v1735
        %1737 = vmatprep.mubr.bf16.mxu0 %v1028
        %1738 = vmatmul.mubr.bf16.gmra.mrb[0].mxu0 %v1027
        %v1739 = vpop.f32.mrb[0].mxu0
        %v1740 = vadd.f32 %v1667, %v1739
        %v1741 = vpop.f32.mrb[0].mxu0
        %v1742 = vadd.f32 %v1669, %v1741
        %v1743 = vpop.f32.mrb[0].mxu0
        %v1744 = vadd.f32 %v1671, %v1743
        %v1745 = vpop.f32.mrb[0].mxu0
        %v1746 = vadd.f32 %v1673, %v1745
        %1747 = vmatprep.mubr.bf16.mxu0 %v1034
        %1748 = vmatmul.mubr.bf16.gmra.mrb[0].mxu0 %v1033
        %v1749 = vpop.f32.mrb[0].mxu0
        %v1750 = vadd.f32 %v1677, %v1749
        %v1751 = vpop.f32.mrb[0].mxu0
        %v1752 = vadd.f32 %v1679, %v1751
        %v1753 = vpop.f32.mrb[0].mxu0
        %v1754 = vadd.f32 %v1681, %v1753
        %v1755 = vpop.f32.mrb[0].mxu0
        %v1756 = vadd.f32 %v1683, %v1755
        %1757 = vdwg.mxu0
        %v1758 = vld [vmem:[%s504] sm:$0x3]
        %v1760 = vlaneseq
        %v1761 = vshrl.u32 %v1760, 7
        %v1762 = vsub.s32 0, %v1761
        %v1763 = vrot.slane %v1758, %v1762
        %v1764 = vlaneseq
        %v1765 = vshrl.u32 %v1764, 7
        %v1766 = vsub.s32 1, %v1765
        %v1767 = vrot.slane %v1758, %v1766
        %v1770 = vadd.f32 %v1720, %v1763
        %v1771 = vadd.f32 %v1722, %v1767
        %v1772 = vadd.f32 %v1724, %v1763
        %v1773 = vadd.f32 %v1726, %v1767
        %v1774 = vadd.f32 %v1730, %v1763
        %v1775 = vadd.f32 %v1732, %v1767
        %v1776 = vadd.f32 %v1734, %v1763
        %v1777 = vadd.f32 %v1736, %v1767
        %v1778 = vadd.f32 %v1740, %v1763
        %v1779 = vadd.f32 %v1742, %v1767
        %v1780 = vadd.f32 %v1744, %v1763
        %v1781 = vadd.f32 %v1746, %v1767
        %v1782 = vadd.f32 %v1750, %v1763
        %v1783 = vadd.f32 %v1752, %v1767
        %v1784 = vadd.f32 %v1754, %v1763
        %v1785 = vadd.f32 %v1756, %v1767
        %v1786 = vld [vmem:[%s5] sm:$0x3]
        %v1788 = vlaneseq
        %v1789 = vshrl.u32 %v1788, 7
        %v1790 = vsub.s32 0, %v1789
        %v1791 = vrot.slane %v1786, %v1790
        %v1792 = vlaneseq
        %v1793 = vshrl.u32 %v1792, 7
        %v1794 = vsub.s32 1, %v1793
        %v1795 = vrot.slane %v1786, %v1794
        %v1798 = vmul.f32 %v1770, %v1791
        %v1799 = vmul.f32 %v1771, %v1795
        %v1800 = vmul.f32 %v1772, %v1791
        %v1801 = vmul.f32 %v1773, %v1795
        %v1802 = vmul.f32 %v1774, %v1791
        %v1803 = vmul.f32 %v1775, %v1795
        %v1804 = vmul.f32 %v1776, %v1791
        %v1805 = vmul.f32 %v1777, %v1795
        %v1806 = vmul.f32 %v1778, %v1791
        %v1807 = vmul.f32 %v1779, %v1795
        %v1808 = vmul.f32 %v1780, %v1791
        %v1809 = vmul.f32 %v1781, %v1795
        %v1810 = vmul.f32 %v1782, %v1791
        %v1811 = vmul.f32 %v1783, %v1795
        %v1812 = vmul.f32 %v1784, %v1791
        %v1813 = vmul.f32 %v1785, %v1795
        %v1814 = vld [vmem:[%s6] sm:$0x3]
        %v1816 = vlaneseq
        %v1817 = vshrl.u32 %v1816, 7
        %v1818 = vsub.s32 0, %v1817
        %v1819 = vrot.slane %v1814, %v1818
        %v1820 = vlaneseq
        %v1821 = vshrl.u32 %v1820, 7
        %v1822 = vsub.s32 1, %v1821
        %v1823 = vrot.slane %v1814, %v1822
        %v1826 = vadd.f32 %v1798, %v1819
        %v1827 = vadd.f32 %v1799, %v1823
        %v1828 = vadd.f32 %v1800, %v1819
        %v1829 = vadd.f32 %v1801, %v1823
        %v1830 = vadd.f32 %v1802, %v1819
        %v1831 = vadd.f32 %v1803, %v1823
        %v1832 = vadd.f32 %v1804, %v1819
        %v1833 = vadd.f32 %v1805, %v1823
        %v1834 = vadd.f32 %v1806, %v1819
        %v1835 = vadd.f32 %v1807, %v1823
        %v1836 = vadd.f32 %v1808, %v1819
        %v1837 = vadd.f32 %v1809, %v1823
        %v1838 = vadd.f32 %v1810, %v1819
        %v1839 = vadd.f32 %v1811, %v1823
        %v1840 = vadd.f32 %v1812, %v1819
        %v1841 = vadd.f32 %v1813, %v1823
        %v1842 = vmax.f32 %v1826, 0.0
        %v1843 = vmax.f32 %v1827, 0.0
        %v1844 = vmax.f32 %v1828, 0.0
        %v1845 = vmax.f32 %v1829, 0.0
        %v1846 = vmax.f32 %v1830, 0.0
        %v1847 = vmax.f32 %v1831, 0.0
        %v1848 = vmax.f32 %v1832, 0.0
        %v1849 = vmax.f32 %v1833, 0.0
        %v1850 = vmax.f32 %v1834, 0.0
        %v1851 = vmax.f32 %v1835, 0.0
        %v1852 = vmax.f32 %v1836, 0.0
        %v1853 = vmax.f32 %v1837, 0.0
        %v1854 = vmax.f32 %v1838, 0.0
        %v1855 = vmax.f32 %v1839, 0.0
        %v1856 = vmax.f32 %v1840, 0.0
        %v1857 = vmax.f32 %v1841, 0.0
        %v1858 = vpack.c.bf16 %v1844, %v1842
        %v1859 = vpack.c.bf16 %v1845, %v1843
        %v1860 = vpack.c.bf16 %v1848, %v1846
        %v1861 = vpack.c.bf16 %v1849, %v1847
        %v1862 = vpack.c.bf16 %v1852, %v1850
        %v1863 = vpack.c.bf16 %v1853, %v1851
        %v1864 = vpack.c.bf16 %v1856, %v1854
        %v1865 = vpack.c.bf16 %v1857, %v1855
        %v1866 = vld [vmem:[%s7] sm:$0xf]
        %v1867 = vld [vmem:[%s7 + $0x4] sm:$0xf]
        %v1868 = vld [vmem:[%s7 + $0x8] sm:$0xf]
        %v1869 = vld [vmem:[%s7 + $0xc] sm:$0xf]
        %v1870 = vld [vmem:[%s7 + $0x10] sm:$0xf]
        %v1871 = vld [vmem:[%s7 + $0x14] sm:$0xf]
        %v1872 = vld [vmem:[%s7 + $0x18] sm:$0xf]
        %v1873 = vld [vmem:[%s7 + $0x1c] sm:$0xf]
        %v1874 = vld [vmem:[%s7 + $0x20] sm:$0xf]
        %v1875 = vld [vmem:[%s7 + $0x24] sm:$0xf]
        %v1876 = vld [vmem:[%s7 + $0x28] sm:$0xf]
        %v1877 = vld [vmem:[%s7 + $0x2c] sm:$0xf]
        %v1878 = vld [vmem:[%s7 + $0x30] sm:$0xf]
        %v1879 = vld [vmem:[%s7 + $0x34] sm:$0xf]
        %v1880 = vld [vmem:[%s7 + $0x38] sm:$0xf]
        %v1881 = vld [vmem:[%s7 + $0x3c] sm:$0xf]
        %v1882 = vld [vmem:[%s7 + $0x40] sm:$0xf]
        %v1883 = vld [vmem:[%s7 + $0x44] sm:$0xf]
        %v1884 = vld [vmem:[%s7 + $0x48] sm:$0xf]
        %v1885 = vld [vmem:[%s7 + $0x4c] sm:$0xf]
        %v1886 = vld [vmem:[%s7 + $0x50] sm:$0xf]
        %v1887 = vld [vmem:[%s7 + $0x54] sm:$0xf]
        %v1888 = vld [vmem:[%s7 + $0x58] sm:$0xf]
        %v1889 = vld [vmem:[%s7 + $0x5c] sm:$0xf]
        %v1890 = vld [vmem:[%s7 + $0x60] sm:$0xf]
        %v1891 = vld [vmem:[%s7 + $0x64] sm:$0xf]
        %v1892 = vld [vmem:[%s7 + $0x68] sm:$0xf]
        %v1893 = vld [vmem:[%s7 + $0x6c] sm:$0xf]
        %v1894 = vld [vmem:[%s7 + $0x70] sm:$0xf]
        %v1895 = vld [vmem:[%s7 + $0x74] sm:$0xf]
        %v1896 = vld [vmem:[%s7 + $0x78] sm:$0xf]
        %v1897 = vld [vmem:[%s7 + $0x7c] sm:$0xf]
        %v1898 = vld [vmem:[%s9] sm:$0x1]
        %v1900 = vlaneseq
        %v1901 = vshrl.u32 %v1900, 7
        %v1902 = vsub.s32 0, %v1901
        %v1903 = vrot.slane %v1898, %v1902
        %v1937 = vunpack.c.l.b16 %v1866
        %v1938 = vunpack.c.l.b16 %v1867
        %v1939 = vunpack.c.l.b16 %v1868
        %v1940 = vunpack.c.l.b16 %v1869
        %v1941 = vunpack.c.l.b16 %v1870
        %v1942 = vunpack.c.l.b16 %v1871
        %v1943 = vunpack.c.l.b16 %v1872
        %v1944 = vunpack.c.l.b16 %v1873
        %v1945 = vunpack.c.l.b16 %v1874
        %v1946 = vunpack.c.l.b16 %v1875
        %v1947 = vunpack.c.l.b16 %v1876
        %v1948 = vunpack.c.l.b16 %v1877
        %v1949 = vunpack.c.l.b16 %v1878
        %v1950 = vunpack.c.l.b16 %v1879
        %v1951 = vunpack.c.l.b16 %v1880
        %v1952 = vunpack.c.l.b16 %v1881
        %v1953 = vunpack.c.l.b16 %v1882
        %v1954 = vunpack.c.l.b16 %v1883
        %v1955 = vunpack.c.l.b16 %v1884
        %v1956 = vunpack.c.l.b16 %v1885
        %v1957 = vunpack.c.l.b16 %v1886
        %v1958 = vunpack.c.l.b16 %v1887
        %v1959 = vunpack.c.l.b16 %v1888
        %v1960 = vunpack.c.l.b16 %v1889
        %v1961 = vunpack.c.l.b16 %v1890
        %v1962 = vunpack.c.l.b16 %v1891
        %v1963 = vunpack.c.l.b16 %v1892
        %v1964 = vunpack.c.l.b16 %v1893
        %v1965 = vunpack.c.l.b16 %v1894
        %v1966 = vunpack.c.l.b16 %v1895
        %v1967 = vunpack.c.l.b16 %v1896
        %v1968 = vunpack.c.l.b16 %v1897
        %v1969 = vpack.c.b16 %v1938, %v1937
        %v1970 = vpack.c.b16 %v1940, %v1939
        %v1971 = vpack.c.b16 %v1942, %v1941
        %v1972 = vpack.c.b16 %v1944, %v1943
        %v1973 = vpack.c.b16 %v1946, %v1945
        %v1974 = vpack.c.b16 %v1948, %v1947
        %v1975 = vpack.c.b16 %v1950, %v1949
        %v1976 = vpack.c.b16 %v1952, %v1951
        %v1977 = vpack.c.b16 %v1954, %v1953
        %v1978 = vpack.c.b16 %v1956, %v1955
        %v1979 = vpack.c.b16 %v1958, %v1957
        %v1980 = vpack.c.b16 %v1960, %v1959
        %v1981 = vpack.c.b16 %v1962, %v1961
        %v1982 = vpack.c.b16 %v1964, %v1963
        %v1983 = vpack.c.b16 %v1966, %v1965
        %v1984 = vpack.c.b16 %v1968, %v1967
        %2001 = vmatprep.subr.bf16.mxu0 0
        %2002 = vmatpush1.bf16.msra.mxu0 %v1969
        %2003 = vmatprep.subr.bf16.mxu0 0
        %2004 = vmatpush1.bf16.msra.mxu0 %v1970
        %2005 = vmatprep.subr.bf16.mxu0 0
        %2006 = vmatpush1.bf16.msra.mxu0 %v1971
        %2007 = vmatprep.subr.bf16.mxu0 0
        %2008 = vmatpush1.bf16.msra.mxu0 %v1972
        %2009 = vmatprep.subr.bf16.mxu0 0
        %2010 = vmatpush1.bf16.msra.mxu0 %v1973
        %2011 = vmatprep.subr.bf16.mxu0 0
        %2012 = vmatpush1.bf16.msra.mxu0 %v1974
        %2013 = vmatprep.subr.bf16.mxu0 0
        %2014 = vmatpush1.bf16.msra.mxu0 %v1975
        %2015 = vmatprep.subr.bf16.mxu0 0
        %2016 = vmatpush1.bf16.msra.mxu0 %v1976
        %2017 = vmatprep.subr.bf16.mxu0 0
        %2018 = vmatpush1.bf16.msra.mxu0 %v1977
        %2019 = vmatprep.subr.bf16.mxu0 0
        %2020 = vmatpush1.bf16.msra.mxu0 %v1978
        %2021 = vmatprep.subr.bf16.mxu0 0
        %2022 = vmatpush1.bf16.msra.mxu0 %v1979
        %2023 = vmatprep.subr.bf16.mxu0 0
        %2024 = vmatpush1.bf16.msra.mxu0 %v1980
        %2025 = vmatprep.subr.bf16.mxu0 0
        %2026 = vmatpush1.bf16.msra.mxu0 %v1981
        %2027 = vmatprep.subr.bf16.mxu0 0
        %2028 = vmatpush1.bf16.msra.mxu0 %v1982
        %2029 = vmatprep.subr.bf16.mxu0 0
        %2030 = vmatpush1.bf16.msra.mxu0 %v1983
        %2031 = vmatprep.subr.bf16.mxu0 0
        %2032 = vmatpush1.bf16.msra.mxu0 %v1984
        %2033 = vmatprep.mubr.bf16.mxu0 %v1859
        %2034 = vmatmul.mubr.bf16.gmra.mrb[0].mxu0 %v1858
        %v2035 = vpop.f32.mrb[0].mxu0
        %v2036 = vadd.f32 %v1903, %v2035
        %v2037 = vpop.f32.mrb[0].mxu0
        %v2038 = vpop.f32.mrb[0].mxu0
        %v2039 = vadd.f32 %v1903, %v2038
        %v2040 = vpop.f32.mrb[0].mxu0
        %2041 = vmatprep.mubr.bf16.mxu0 %v1861
        %2042 = vmatmul.mubr.bf16.gmra.mrb[0].mxu0 %v1860
        %v2043 = vpop.f32.mrb[0].mxu0
        %v2044 = vadd.f32 %v1903, %v2043
        %v2045 = vpop.f32.mrb[0].mxu0
        %v2046 = vpop.f32.mrb[0].mxu0
        %v2047 = vadd.f32 %v1903, %v2046
        %v2048 = vpop.f32.mrb[0].mxu0
        %2049 = vmatprep.mubr.bf16.mxu0 %v1863
        %2050 = vmatmul.mubr.bf16.gmra.mrb[0].mxu0 %v1862
        %v2051 = vpop.f32.mrb[0].mxu0
        %v2052 = vadd.f32 %v1903, %v2051
        %v2053 = vpop.f32.mrb[0].mxu0
        %v2054 = vpop.f32.mrb[0].mxu0
        %v2055 = vadd.f32 %v1903, %v2054
        %v2056 = vpop.f32.mrb[0].mxu0
        %2057 = vmatprep.mubr.bf16.mxu0 %v1865
        %2058 = vmatmul.mubr.bf16.gmra.mrb[0].mxu0 %v1864
        %v2059 = vpop.f32.mrb[0].mxu0
        %v2060 = vadd.f32 %v1903, %v2059
        %v2061 = vpop.f32.mrb[0].mxu0
        %v2062 = vpop.f32.mrb[0].mxu0
        %v2063 = vadd.f32 %v1903, %v2062
        %v2064 = vpop.f32.mrb[0].mxu0
        %2065 = vdwg.mxu0
        %v2066 = vpack.c.bf16 %v2039, %v2036
        %v2067 = vpack.c.bf16 %v2047, %v2044
        %v2068 = vpack.c.bf16 %v2055, %v2052
        %v2069 = vpack.c.bf16 %v2063, %v2060
        %2074 = vrot.lane.b32.xlu0 %v2066, 96
        %v2075 = vpop.permute.xlu0 %2074
        %2076 = vrot.lane.b32.xlu0 %v2067, 96
        %v2077 = vpop.permute.xlu0 %2076
        %2078 = vrot.lane.b32.xlu0 %v2068, 96
        %v2079 = vpop.permute.xlu0 %2078
        %2080 = vrot.lane.b32.xlu0 %v2069, 96
        %v2081 = vpop.permute.xlu0 %2080
        %vm2082 = vcmask 261120
        %v2084 = vsel %vm2082, %v2066, 0
        %v2087 = vsel %vm2082, %v2067, 0
        %v2090 = vsel %vm2082, %v2068, 0
        %v2093 = vsel %vm2082, %v2069, 0
        %v2096 = vsel %vm2082, %v2075, 0
        %v2099 = vsel %vm2082, %v2077, 0
        %v2102 = vsel %vm2082, %v2079, 0
        %v2105 = vsel %vm2082, %v2081, 0
        %2107 = vmatprep.subr.bf16.mxu0 0
        %2108 = vmatpush1.bf16.xpose.msra.mxu0 %v2096
        %2109 = vmatprep.subr.bf16.mxu0 0
        %2110 = vmatpush1.bf16.xpose.msra.mxu0 %v2099
        %2111 = vmatprep.subr.bf16.mxu0 0
        %2112 = vmatpush1.bf16.xpose.msra.mxu0 %v2102
        %2113 = vmatprep.subr.bf16.mxu0 0
        %2114 = vmatpush1.bf16.xpose.msra.mxu0 %v2105
        %2115 = vmatprep.subr.bf16.mxu0 0
        %2116 = vmatpush1.bf16.xpose.msra.mxu0 0
        %2117 = vmatprep.subr.bf16.mxu0 0
        %2118 = vmatpush1.bf16.xpose.msra.mxu0 0
        %2119 = vmatprep.subr.bf16.mxu0 0
        %2120 = vmatpush1.bf16.xpose.msra.mxu0 0
        %2121 = vmatprep.subr.bf16.mxu0 0
        %2122 = vmatpush1.bf16.xpose.msra.mxu0 0
        %2123 = vmatprep.subr.bf16.mxu0 0
        %2124 = vmatpush1.bf16.xpose.msra.mxu0 0
        %2125 = vmatprep.subr.bf16.mxu0 0
        %2126 = vmatpush1.bf16.xpose.msra.mxu0 0
        %2127 = vmatprep.subr.bf16.mxu0 0
        %2128 = vmatpush1.bf16.xpose.msra.mxu0 0
        %2129 = vmatprep.subr.bf16.mxu0 0
        %2130 = vmatpush1.bf16.xpose.msra.mxu0 0
        %2131 = vmatprep.subr.bf16.mxu0 0
        %2132 = vmatpush1.bf16.xpose.msra.mxu0 0
        %2133 = vmatprep.subr.bf16.mxu0 0
        %2134 = vmatpush1.bf16.xpose.msra.mxu0 0
        %2135 = vmatprep.subr.bf16.mxu0 0
        %2136 = vmatpush1.bf16.xpose.msra.mxu0 0
        %2137 = vmatprep.subr.bf16.mxu0 0
        %2138 = vmatpush1.bf16.xpose.msra.mxu0 0
        %2139 = vmatprep.mubr.bf16.mxu0 0
        %2140 = vmatmul.mubr.bf16.gmra.mrb[0].mxu0 %v2084
        %v2141 = vpop.f32.mrb[0].mxu0
        %v2142 = vadd.f32 0.0, %v2141
        %v2143 = vpop.f32.mrb[0].mxu0
        %v2144 = vpop.f32.mrb[0].mxu0
        %v2145 = vadd.f32 0.0, %v2144
        %v2146 = vpop.f32.mrb[0].mxu0
        %2147 = vmatprep.mubr.bf16.mxu0 0
        %2148 = vmatmul.mubr.bf16.gmra.mrb[0].mxu0 %v2087
        %v2149 = vpop.f32.mrb[0].mxu0
        %v2150 = vadd.f32 0.0, %v2149
        %v2151 = vpop.f32.mrb[0].mxu0
        %v2152 = vpop.f32.mrb[0].mxu0
        %v2153 = vadd.f32 0.0, %v2152
        %v2154 = vpop.f32.mrb[0].mxu0
        %2155 = vmatprep.mubr.bf16.mxu0 0
        %2156 = vmatmul.mubr.bf16.gmra.mrb[0].mxu0 %v2090
        %v2157 = vpop.f32.mrb[0].mxu0
        %v2158 = vadd.f32 0.0, %v2157
        %v2159 = vpop.f32.mrb[0].mxu0
        %v2160 = vpop.f32.mrb[0].mxu0
        %v2161 = vadd.f32 0.0, %v2160
        %v2162 = vpop.f32.mrb[0].mxu0
        %2163 = vmatprep.mubr.bf16.mxu0 0
        %2164 = vmatmul.mubr.bf16.gmra.mrb[0].mxu0 %v2093
        %v2165 = vpop.f32.mrb[0].mxu0
        %v2166 = vadd.f32 0.0, %v2165
        %v2167 = vpop.f32.mrb[0].mxu0
        %v2168 = vpop.f32.mrb[0].mxu0
        %v2169 = vadd.f32 0.0, %v2168
        %v2170 = vpop.f32.mrb[0].mxu0
        %2171 = vdwg.mxu0
        %vm2172 = vcmask 523264
        %v2173 = vsel %vm2172, %v2142, -inf
        %2174 = vmax.xlane.f32.xlu0 %v2173
        %v2175 = vpop.xlane.xlu0 %2174
        %v2176 = vsel %vm2172, %v2145, -inf
        %2177 = vmax.xlane.f32.xlu0 %v2176
        %v2178 = vpop.xlane.xlu0 %2177
        %v2179 = vsel %vm2172, %v2150, -inf
        %2180 = vmax.xlane.f32.xlu0 %v2179
        %v2181 = vpop.xlane.xlu0 %2180
        %v2182 = vsel %vm2172, %v2153, -inf
        %2183 = vmax.xlane.f32.xlu0 %v2182
        %v2184 = vpop.xlane.xlu0 %2183
        %v2185 = vsel %vm2172, %v2158, -inf
        %2186 = vmax.xlane.f32.xlu0 %v2185
        %v2187 = vpop.xlane.xlu0 %2186
        %v2188 = vsel %vm2172, %v2161, -inf
        %2189 = vmax.xlane.f32.xlu0 %v2188
        %v2190 = vpop.xlane.xlu0 %2189
        %v2191 = vsel %vm2172, %v2166, -inf
        %2192 = vmax.xlane.f32.xlu0 %v2191
        %v2193 = vpop.xlane.xlu0 %2192
        %v2194 = vsel %vm2172, %v2169, -inf
        %2195 = vmax.xlane.f32.xlu0 %v2194
        %v2196 = vpop.xlane.xlu0 %2195
        %v2197 = vsub.f32 %v2142, %v2175
        %v2198 = vsub.f32 %v2145, %v2178
        %v2199 = vsub.f32 %v2150, %v2181
        %v2200 = vsub.f32 %v2153, %v2184
        %v2201 = vsub.f32 %v2158, %v2187
        %v2202 = vsub.f32 %v2161, %v2190
        %v2203 = vsub.f32 %v2166, %v2193
        %v2204 = vsub.f32 %v2169, %v2196
        %v2205 = vmul.f32 %v2197, 1.442695
        %v2206 = vpow.pop %v2205
        %v2207 = vmul.f32 %v2198, 1.442695
        %v2208 = vpow.pop %v2207
        %v2209 = vmul.f32 %v2199, 1.442695
        %v2210 = vpow.pop %v2209
        %v2211 = vmul.f32 %v2200, 1.442695
        %v2212 = vpow.pop %v2211
        %v2213 = vmul.f32 %v2201, 1.442695
        %v2214 = vpow.pop %v2213
        %v2215 = vmul.f32 %v2202, 1.442695
        %v2216 = vpow.pop %v2215
        %v2217 = vmul.f32 %v2203, 1.442695
        %v2218 = vpow.pop %v2217
        %v2219 = vmul.f32 %v2204, 1.442695
        %v2220 = vpow.pop %v2219
        %v2221 = vsel %vm2172, %v2206, 0.0
        %2222 = vadd.xlane.f32.xlu0 %v2221
        %v2223 = vpop.xlane.xlu0 %2222
        %v2224 = vsel %vm2172, %v2208, 0.0
        %2225 = vadd.xlane.f32.xlu0 %v2224
        %v2226 = vpop.xlane.xlu0 %2225
        %v2227 = vsel %vm2172, %v2210, 0.0
        %2228 = vadd.xlane.f32.xlu0 %v2227
        %v2229 = vpop.xlane.xlu0 %2228
        %v2230 = vsel %vm2172, %v2212, 0.0
        %2231 = vadd.xlane.f32.xlu0 %v2230
        %v2232 = vpop.xlane.xlu0 %2231
        %v2233 = vsel %vm2172, %v2214, 0.0
        %2234 = vadd.xlane.f32.xlu0 %v2233
        %v2235 = vpop.xlane.xlu0 %2234
        %v2236 = vsel %vm2172, %v2216, 0.0
        %2237 = vadd.xlane.f32.xlu0 %v2236
        %v2238 = vpop.xlane.xlu0 %2237
        %v2239 = vsel %vm2172, %v2218, 0.0
        %2240 = vadd.xlane.f32.xlu0 %v2239
        %v2241 = vpop.xlane.xlu0 %2240
        %v2242 = vsel %vm2172, %v2220, 0.0
        %2243 = vadd.xlane.f32.xlu0 %v2242
        %v2244 = vpop.xlane.xlu0 %2243
        %v2245 = vrcp.pop %v2223
        %v2246 = vrcp.pop %v2226
        %v2247 = vrcp.pop %v2229
        %v2248 = vrcp.pop %v2232
        %v2249 = vrcp.pop %v2235
        %v2250 = vrcp.pop %v2238
        %v2251 = vrcp.pop %v2241
        %v2252 = vrcp.pop %v2244
        %v2253 = vmul.f32 %v2206, %v2245
        %v2254 = vmul.f32 %v2208, %v2246
        %v2255 = vmul.f32 %v2210, %v2247
        %v2256 = vmul.f32 %v2212, %v2248
        %v2257 = vmul.f32 %v2214, %v2249
        %v2258 = vmul.f32 %v2216, %v2250
        %v2259 = vmul.f32 %v2218, %v2251
        %v2260 = vmul.f32 %v2220, %v2252
        %v2261 = vpack.c.bf16 %v2254, %v2253
        %v2262 = vpack.c.bf16 %v2256, %v2255
        %v2263 = vpack.c.bf16 %v2258, %v2257
        %v2264 = vpack.c.bf16 %v2260, %v2259
        %v2265 = vld [vmem:[%s8] sm:$0xff]
        %v2266 = vld [vmem:[%s8 + $0x8] sm:$0xff]
        %v2267 = vld [vmem:[%s8 + $0x10] sm:$0xff]
        %v2268 = vld [vmem:[%s8 + $0x18] sm:$0xff]
        %v2269 = vld [vmem:[%s8 + $0x20] sm:$0xff]
        %v2270 = vld [vmem:[%s8 + $0x28] sm:$0xff]
        %v2271 = vld [vmem:[%s8 + $0x30] sm:$0xff]
        %v2272 = vld [vmem:[%s8 + $0x38] sm:$0xff]
        %v2273 = vld [vmem:[%s8 + $0x40] sm:$0xff]
        %v2274 = vld [vmem:[%s8 + $0x48] sm:$0xff]
        %v2275 = vld [vmem:[%s8 + $0x50] sm:$0xff]
        %v2276 = vld [vmem:[%s8 + $0x58] sm:$0xff]
        %v2277 = vld [vmem:[%s8 + $0x60] sm:$0xff]
        %v2278 = vld [vmem:[%s8 + $0x68] sm:$0xff]
        %v2279 = vld [vmem:[%s8 + $0x70] sm:$0xff]
        %v2280 = vld [vmem:[%s8 + $0x78] sm:$0xff]
        %v2281 = vld [vmem:[%s8 + $0x80] sm:$0xff]
        %v2282 = vld [vmem:[%s8 + $0x88] sm:$0xff]
        %v2283 = vld [vmem:[%s8 + $0x90] sm:$0xff]
        %v2284 = vld [vmem:[%s8 + $0x98] sm:$0xff]
        %v2285 = vld [vmem:[%s8 + $0xa0] sm:$0xff]
        %v2286 = vld [vmem:[%s8 + $0xa8] sm:$0xff]
        %v2287 = vld [vmem:[%s8 + $0xb0] sm:$0xff]
        %v2288 = vld [vmem:[%s8 + $0xb8] sm:$0xff]
        %v2289 = vld [vmem:[%s8 + $0xc0] sm:$0xff]
        %v2290 = vld [vmem:[%s8 + $0xc8] sm:$0xff]
        %v2291 = vld [vmem:[%s8 + $0xd0] sm:$0xff]
        %v2292 = vld [vmem:[%s8 + $0xd8] sm:$0xff]
        %v2293 = vld [vmem:[%s8 + $0xe0] sm:$0xff]
        %v2294 = vld [vmem:[%s8 + $0xe8] sm:$0xff]
        %v2295 = vld [vmem:[%s8 + $0xf0] sm:$0xff]
        %v2296 = vld [vmem:[%s8 + $0xf8] sm:$0xff]
        %v2297 = vld [vmem:[%s10] sm:$0x3]
        %v2299 = vlaneseq
        %v2300 = vshrl.u32 %v2299, 7
        %v2301 = vsub.s32 0, %v2300
        %v2302 = vrot.slane %v2297, %v2301
        %v2303 = vlaneseq
        %v2304 = vshrl.u32 %v2303, 7
        %v2305 = vsub.s32 1, %v2304
        %v2306 = vrot.slane %v2297, %v2305
        %v2341 = vunpack.c.l.b16 %v2265
        %v2342 = vunpack.c.h.b16 %v2265
        %v2343 = vunpack.c.l.b16 %v2266
        %v2344 = vunpack.c.h.b16 %v2266
        %v2345 = vunpack.c.l.b16 %v2267
        %v2346 = vunpack.c.h.b16 %v2267
        %v2347 = vunpack.c.l.b16 %v2268
        %v2348 = vunpack.c.h.b16 %v2268
        %v2349 = vunpack.c.l.b16 %v2269
        %v2350 = vunpack.c.h.b16 %v2269
        %v2351 = vunpack.c.l.b16 %v2270
        %v2352 = vunpack.c.h.b16 %v2270
        %v2353 = vunpack.c.l.b16 %v2271
        %v2354 = vunpack.c.h.b16 %v2271
        %v2355 = vunpack.c.l.b16 %v2272
        %v2356 = vunpack.c.h.b16 %v2272
        %v2357 = vunpack.c.l.b16 %v2273
        %v2358 = vunpack.c.h.b16 %v2273
        %v2359 = vunpack.c.l.b16 %v2274
        %v2360 = vunpack.c.h.b16 %v2274
        %v2361 = vunpack.c.l.b16 %v2275
        %v2362 = vunpack.c.h.b16 %v2275
        %v2363 = vunpack.c.l.b16 %v2276
        %v2364 = vunpack.c.h.b16 %v2276
        %v2365 = vunpack.c.l.b16 %v2277
        %v2366 = vunpack.c.h.b16 %v2277
        %v2367 = vunpack.c.l.b16 %v2278
        %v2368 = vunpack.c.h.b16 %v2278
        %v2369 = vunpack.c.l.b16 %v2279
        %v2370 = vunpack.c.h.b16 %v2279
        %v2371 = vunpack.c.l.b16 %v2280
        %v2372 = vunpack.c.h.b16 %v2280
        %v2373 = vunpack.c.l.b16 %v2281
        %v2374 = vunpack.c.h.b16 %v2281
        %v2375 = vunpack.c.l.b16 %v2282
        %v2376 = vunpack.c.h.b16 %v2282
        %v2377 = vunpack.c.l.b16 %v2283
        %v2378 = vunpack.c.h.b16 %v2283
        %v2379 = vunpack.c.l.b16 %v2284
        %v2380 = vunpack.c.h.b16 %v2284
        %v2381 = vunpack.c.l.b16 %v2285
        %v2382 = vunpack.c.h.b16 %v2285
        %v2383 = vunpack.c.l.b16 %v2286
        %v2384 = vunpack.c.h.b16 %v2286
        %v2385 = vunpack.c.l.b16 %v2287
        %v2386 = vunpack.c.h.b16 %v2287
        %v2387 = vunpack.c.l.b16 %v2288
        %v2388 = vunpack.c.h.b16 %v2288
        %v2389 = vunpack.c.l.b16 %v2289
        %v2390 = vunpack.c.h.b16 %v2289
        %v2391 = vunpack.c.l.b16 %v2290
        %v2392 = vunpack.c.h.b16 %v2290
        %v2393 = vunpack.c.l.b16 %v2291
        %v2394 = vunpack.c.h.b16 %v2291
        %v2395 = vunpack.c.l.b16 %v2292
        %v2396 = vunpack.c.h.b16 %v2292
        %v2397 = vunpack.c.l.b16 %v2293
        %v2398 = vunpack.c.h.b16 %v2293
        %v2399 = vunpack.c.l.b16 %v2294
        %v2400 = vunpack.c.h.b16 %v2294
        %v2401 = vunpack.c.l.b16 %v2295
        %v2402 = vunpack.c.h.b16 %v2295
        %v2403 = vunpack.c.l.b16 %v2296
        %v2404 = vunpack.c.h.b16 %v2296
        %v2405 = vpack.c.b16 %v2343, %v2341
        %v2406 = vpack.c.b16 %v2344, %v2342
        %v2407 = vpack.c.b16 %v2347, %v2345
        %v2408 = vpack.c.b16 %v2348, %v2346
        %v2409 = vpack.c.b16 %v2351, %v2349
        %v2410 = vpack.c.b16 %v2352, %v2350
        %v2411 = vpack.c.b16 %v2355, %v2353
        %v2412 = vpack.c.b16 %v2356, %v2354
        %v2413 = vpack.c.b16 %v2359, %v2357
        %v2414 = vpack.c.b16 %v2360, %v2358
        %v2415 = vpack.c.b16 %v2363, %v2361
        %v2416 = vpack.c.b16 %v2364, %v2362
        %v2417 = vpack.c.b16 %v2367, %v2365
        %v2418 = vpack.c.b16 %v2368, %v2366
        %v2419 = vpack.c.b16 %v2371, %v2369
        %v2420 = vpack.c.b16 %v2372, %v2370
        %v2421 = vpack.c.b16 %v2375, %v2373
        %v2422 = vpack.c.b16 %v2376, %v2374
        %v2423 = vpack.c.b16 %v2379, %v2377
        %v2424 = vpack.c.b16 %v2380, %v2378
        %v2425 = vpack.c.b16 %v2383, %v2381
        %v2426 = vpack.c.b16 %v2384, %v2382
        %v2427 = vpack.c.b16 %v2387, %v2385
        %v2428 = vpack.c.b16 %v2388, %v2386
        %v2429 = vpack.c.b16 %v2391, %v2389
        %v2430 = vpack.c.b16 %v2392, %v2390
        %v2431 = vpack.c.b16 %v2395, %v2393
        %v2432 = vpack.c.b16 %v2396, %v2394
        %v2433 = vpack.c.b16 %v2399, %v2397
        %v2434 = vpack.c.b16 %v2400, %v2398
        %v2435 = vpack.c.b16 %v2403, %v2401
        %v2436 = vpack.c.b16 %v2404, %v2402
        %2469 = vmatprep.subr.bf16.mxu0 %v2406
        %2470 = vmatpush1.bf16.msra.mxu0 %v2405
        %2471 = vmatprep.subr.bf16.mxu0 %v2408
        %2472 = vmatpush1.bf16.msra.mxu0 %v2407
        %2473 = vmatprep.subr.bf16.mxu0 %v2410
        %2474 = vmatpush1.bf16.msra.mxu0 %v2409
        %2475 = vmatprep.subr.bf16.mxu0 %v2412
        %2476 = vmatpush1.bf16.msra.mxu0 %v2411
        %2477 = vmatprep.subr.bf16.mxu0 %v2414
        %2478 = vmatpush1.bf16.msra.mxu0 %v2413
        %2479 = vmatprep.subr.bf16.mxu0 %v2416
        %2480 = vmatpush1.bf16.msra.mxu0 %v2415
        %2481 = vmatprep.subr.bf16.mxu0 %v2418
        %2482 = vmatpush1.bf16.msra.mxu0 %v2417
        %2483 = vmatprep.subr.bf16.mxu0 %v2420
        %2484 = vmatpush1.bf16.msra.mxu0 %v2419
        %2485 = vmatprep.subr.bf16.mxu0 %v2422
        %2486 = vmatpush1.bf16.msra.mxu0 %v2421
        %2487 = vmatprep.subr.bf16.mxu0 %v2424
        %2488 = vmatpush1.bf16.msra.mxu0 %v2423
        %2489 = vmatprep.subr.bf16.mxu0 %v2426
        %2490 = vmatpush1.bf16.msra.mxu0 %v2425
        %2491 = vmatprep.subr.bf16.mxu0 %v2428
        %2492 = vmatpush1.bf16.msra.mxu0 %v2427
        %2493 = vmatprep.subr.bf16.mxu0 %v2430
        %2494 = vmatpush1.bf16.msra.mxu0 %v2429
        %2495 = vmatprep.subr.bf16.mxu0 %v2432
        %2496 = vmatpush1.bf16.msra.mxu0 %v2431
        %2497 = vmatprep.subr.bf16.mxu0 %v2434
        %2498 = vmatpush1.bf16.msra.mxu0 %v2433
        %2499 = vmatprep.subr.bf16.mxu0 %v2436
        %2500 = vmatpush1.bf16.msra.mxu0 %v2435
        %2501 = vmatprep.mubr.bf16.mxu0 %v1859
        %2502 = vmatmul.mubr.bf16.gmra.mrb[0].mxu0 %v1858
        %v2503 = vpop.f32.mrb[0].mxu0
        %v2504 = vadd.f32 %v2302, %v2503
        %v2505 = vpop.f32.mrb[0].mxu0
        %v2506 = vadd.f32 %v2306, %v2505
        %v2507 = vpop.f32.mrb[0].mxu0
        %v2508 = vadd.f32 %v2302, %v2507
        %v2509 = vpop.f32.mrb[0].mxu0
        %v2510 = vadd.f32 %v2306, %v2509
        %2511 = vmatprep.mubr.bf16.mxu0 %v1861
        %2512 = vmatmul.mubr.bf16.gmra.mrb[0].mxu0 %v1860
        %v2513 = vpop.f32.mrb[0].mxu0
        %v2514 = vadd.f32 %v2302, %v2513
        %v2515 = vpop.f32.mrb[0].mxu0
        %v2516 = vadd.f32 %v2306, %v2515
        %v2517 = vpop.f32.mrb[0].mxu0
        %v2518 = vadd.f32 %v2302, %v2517
        %v2519 = vpop.f32.mrb[0].mxu0
        %v2520 = vadd.f32 %v2306, %v2519
        %2521 = vmatprep.mubr.bf16.mxu0 %v1863
        %2522 = vmatmul.mubr.bf16.gmra.mrb[0].mxu0 %v1862
        %v2523 = vpop.f32.mrb[0].mxu0
        %v2524 = vadd.f32 %v2302, %v2523
        %v2525 = vpop.f32.mrb[0].mxu0
        %v2526 = vadd.f32 %v2306, %v2525
        %v2527 = vpop.f32.mrb[0].mxu0
        %v2528 = vadd.f32 %v2302, %v2527
        %v2529 = vpop.f32.mrb[0].mxu0
        %v2530 = vadd.f32 %v2306, %v2529
        %2531 = vmatprep.mubr.bf16.mxu0 %v1865
        %2532 = vmatmul.mubr.bf16.gmra.mrb[0].mxu0 %v1864
        %v2533 = vpop.f32.mrb[0].mxu0
        %v2534 = vadd.f32 %v2302, %v2533
        %v2535 = vpop.f32.mrb[0].mxu0
        %v2536 = vadd.f32 %v2306, %v2535
        %v2537 = vpop.f32.mrb[0].mxu0
        %v2538 = vadd.f32 %v2302, %v2537
        %v2539 = vpop.f32.mrb[0].mxu0
        %v2540 = vadd.f32 %v2306, %v2539
        %2541 = vdwg.mxu0
        %v2542 = vpack.c.bf16 %v2508, %v2504
        %v2543 = vpack.c.bf16 %v2510, %v2506
        %v2544 = vpack.c.bf16 %v2518, %v2514
        %v2545 = vpack.c.bf16 %v2520, %v2516
        %v2546 = vpack.c.bf16 %v2528, %v2524
        %v2547 = vpack.c.bf16 %v2530, %v2526
        %v2548 = vpack.c.bf16 %v2538, %v2534
        %v2549 = vpack.c.bf16 %v2540, %v2536
        %v2551 = vsel %vm2172, %v2261, 0
        %v2554 = vsel %vm2172, %v2262, 0
        %v2557 = vsel %vm2172, %v2263, 0
        %v2560 = vsel %vm2172, %v2264, 0
        %2562 = vmatprep.subr.bf16.mxu0 %v2543
        %2563 = vmatpush1.bf16.msra.mxu0 %v2542
        %2564 = vmatprep.subr.bf16.mxu0 %v2545
        %2565 = vmatpush1.bf16.msra.mxu0 %v2544
        %2566 = vmatprep.subr.bf16.mxu0 %v2547
        %2567 = vmatpush1.bf16.msra.mxu0 %v2546
        %2568 = vmatprep.subr.bf16.mxu0 %v2549
        %2569 = vmatpush1.bf16.msra.mxu0 %v2548
        %2570 = vmatprep.subr.bf16.mxu0 0
        %2571 = vmatpush1.bf16.msra.mxu0 0
        %2572 = vmatprep.subr.bf16.mxu0 0
        %2573 = vmatpush1.bf16.msra.mxu0 0
        %2574 = vmatprep.subr.bf16.mxu0 0
        %2575 = vmatpush1.bf16.msra.mxu0 0
        %2576 = vmatprep.subr.bf16.mxu0 0
        %2577 = vmatpush1.bf16.msra.mxu0 0
        %2578 = vmatprep.subr.bf16.mxu0 0
        %2579 = vmatpush1.bf16.msra.mxu0 0
        %2580 = vmatprep.subr.bf16.mxu0 0
        %2581 = vmatpush1.bf16.msra.mxu0 0
        %2582 = vmatprep.subr.bf16.mxu0 0
        %2583 = vmatpush1.bf16.msra.mxu0 0
        %2584 = vmatprep.subr.bf16.mxu0 0
        %2585 = vmatpush1.bf16.msra.mxu0 0
        %2586 = vmatprep.subr.bf16.mxu0 0
        %2587 = vmatpush1.bf16.msra.mxu0 0
        %2588 = vmatprep.subr.bf16.mxu0 0
        %2589 = vmatpush1.bf16.msra.mxu0 0
        %2590 = vmatprep.subr.bf16.mxu0 0
        %2591 = vmatpush1.bf16.msra.mxu0 0
        %2592 = vmatprep.subr.bf16.mxu0 0
        %2593 = vmatpush1.bf16.msra.mxu0 0
        %2594 = vmatprep.mubr.bf16.mxu0 0
        %2595 = vmatmul.mubr.bf16.gmra.mrb[0].mxu0 %v2551
        %v2596 = vpop.f32.mrb[0].mxu0
        %v2597 = vadd.f32 0.0, %v2596
        %v2598 = vpop.f32.mrb[0].mxu0
        %v2599 = vadd.f32 0.0, %v2598
        %v2600 = vpop.f32.mrb[0].mxu0
        %v2601 = vadd.f32 0.0, %v2600
        %v2602 = vpop.f32.mrb[0].mxu0
        %v2603 = vadd.f32 0.0, %v2602
        %2604 = vmatprep.mubr.bf16.mxu0 0
        %2605 = vmatmul.mubr.bf16.gmra.mrb[0].mxu0 %v2554
        %v2606 = vpop.f32.mrb[0].mxu0
        %v2607 = vadd.f32 0.0, %v2606
        %v2608 = vpop.f32.mrb[0].mxu0
        %v2609 = vadd.f32 0.0, %v2608
        %v2610 = vpop.f32.mrb[0].mxu0
        %v2611 = vadd.f32 0.0, %v2610
        %v2612 = vpop.f32.mrb[0].mxu0
        %v2613 = vadd.f32 0.0, %v2612
        %2614 = vmatprep.mubr.bf16.mxu0 0
        %2615 = vmatmul.mubr.bf16.gmra.mrb[0].mxu0 %v2557
        %v2616 = vpop.f32.mrb[0].mxu0
        %v2617 = vadd.f32 0.0, %v2616
        %v2618 = vpop.f32.mrb[0].mxu0
        %v2619 = vadd.f32 0.0, %v2618
        %v2620 = vpop.f32.mrb[0].mxu0
        %v2621 = vadd.f32 0.0, %v2620
        %v2622 = vpop.f32.mrb[0].mxu0
        %v2623 = vadd.f32 0.0, %v2622
        %2624 = vmatprep.mubr.bf16.mxu0 0
        %2625 = vmatmul.mubr.bf16.gmra.mrb[0].mxu0 %v2560
        %v2626 = vpop.f32.mrb[0].mxu0
        %v2627 = vadd.f32 0.0, %v2626
        %v2628 = vpop.f32.mrb[0].mxu0
        %v2629 = vadd.f32 0.0, %v2628
        %v2630 = vpop.f32.mrb[0].mxu0
        %v2631 = vadd.f32 0.0, %v2630
        %v2632 = vpop.f32.mrb[0].mxu0
        %v2633 = vadd.f32 0.0, %v2632
        %2634 = vdwg.mxu0
        %v2635 = vld [vmem:[#allocation2] sm:$0x1]
        %s2636 = vtos %v2635
        %v2637 = vstv %s2636
        %v2638 = vmul.f32 %v2637, %v2597
        %v2639 = vmul.f32 %v2637, %v2599
        %v2640 = vmul.f32 %v2637, %v2601
        %v2641 = vmul.f32 %v2637, %v2603
        %v2642 = vmul.f32 %v2637, %v2607
        %v2643 = vmul.f32 %v2637, %v2609
        %v2644 = vmul.f32 %v2637, %v2611
        %v2645 = vmul.f32 %v2637, %v2613
        %v2646 = vmul.f32 %v2637, %v2617
        %v2647 = vmul.f32 %v2637, %v2619
        %v2648 = vmul.f32 %v2637, %v2621
        %v2649 = vmul.f32 %v2637, %v2623
        %v2650 = vmul.f32 %v2637, %v2627
        %v2651 = vmul.f32 %v2637, %v2629
        %v2652 = vmul.f32 %v2637, %v2631
        %v2653 = vmul.f32 %v2637, %v2633
        %v2654 = vadd.f32 %v2638, %v1842
        %v2655 = vadd.f32 %v2639, %v1843
        %v2656 = vadd.f32 %v2640, %v1844
        %v2657 = vadd.f32 %v2641, %v1845
        %v2658 = vadd.f32 %v2642, %v1846
        %v2659 = vadd.f32 %v2643, %v1847
        %v2660 = vadd.f32 %v2644, %v1848
        %v2661 = vadd.f32 %v2645, %v1849
        %v2662 = vadd.f32 %v2646, %v1850
        %v2663 = vadd.f32 %v2647, %v1851
        %v2664 = vadd.f32 %v2648, %v1852
        %v2665 = vadd.f32 %v2649, %v1853
        %v2666 = vadd.f32 %v2650, %v1854
        %v2667 = vadd.f32 %v2651, %v1855
        %v2668 = vadd.f32 %v2652, %v1856
        %v2669 = vadd.f32 %v2653, %v1857
        %v2670 = vld [vmem:[%s12] sm:$0x3]
        %v2672 = vlaneseq
        %v2673 = vshrl.u32 %v2672, 7
        %v2674 = vsub.s32 0, %v2673
        %v2675 = vrot.slane %v2670, %v2674
        %v2676 = vlaneseq
        %v2677 = vshrl.u32 %v2676, 7
        %v2678 = vsub.s32 1, %v2677
        %v2679 = vrot.slane %v2670, %v2678
        %v2682 = vmul.f32 %v2654, %v2675
        %v2683 = vmul.f32 %v2655, %v2679
        %v2684 = vmul.f32 %v2656, %v2675
        %v2685 = vmul.f32 %v2657, %v2679
        %v2686 = vmul.f32 %v2658, %v2675
        %v2687 = vmul.f32 %v2659, %v2679
        %v2688 = vmul.f32 %v2660, %v2675
        %v2689 = vmul.f32 %v2661, %v2679
        %v2690 = vmul.f32 %v2662, %v2675
        %v2691 = vmul.f32 %v2663, %v2679
        %v2692 = vmul.f32 %v2664, %v2675
        %v2693 = vmul.f32 %v2665, %v2679
        %v2694 = vmul.f32 %v2666, %v2675
        %v2695 = vmul.f32 %v2667, %v2679
        %v2696 = vmul.f32 %v2668, %v2675
        %v2697 = vmul.f32 %v2669, %v2679
        %v2698 = vld [vmem:[%s13] sm:$0x3]
        %v2700 = vlaneseq
        %v2701 = vshrl.u32 %v2700, 7
        %v2702 = vsub.s32 0, %v2701
        %v2703 = vrot.slane %v2698, %v2702
        %v2704 = vlaneseq
        %v2705 = vshrl.u32 %v2704, 7
        %v2706 = vsub.s32 1, %v2705
        %v2707 = vrot.slane %v2698, %v2706
        %v2710 = vadd.f32 %v2682, %v2703
        %v2711 = vadd.f32 %v2683, %v2707
        %v2712 = vadd.f32 %v2684, %v2703
        %v2713 = vadd.f32 %v2685, %v2707
        %v2714 = vadd.f32 %v2686, %v2703
        %v2715 = vadd.f32 %v2687, %v2707
        %v2716 = vadd.f32 %v2688, %v2703
        %v2717 = vadd.f32 %v2689, %v2707
        %v2718 = vadd.f32 %v2690, %v2703
        %v2719 = vadd.f32 %v2691, %v2707
        %v2720 = vadd.f32 %v2692, %v2703
        %v2721 = vadd.f32 %v2693, %v2707
        %v2722 = vadd.f32 %v2694, %v2703
        %v2723 = vadd.f32 %v2695, %v2707
        %v2724 = vadd.f32 %v2696, %v2703
        %v2725 = vadd.f32 %v2697, %v2707
        %v2726 = vmax.f32 %v2710, 0.0
        %v2727 = vmax.f32 %v2711, 0.0
        %v2728 = vmax.f32 %v2712, 0.0
        %v2729 = vmax.f32 %v2713, 0.0
        %v2730 = vmax.f32 %v2714, 0.0
        %v2731 = vmax.f32 %v2715, 0.0
        %v2732 = vmax.f32 %v2716, 0.0
        %v2733 = vmax.f32 %v2717, 0.0
        %v2734 = vmax.f32 %v2718, 0.0
        %v2735 = vmax.f32 %v2719, 0.0
        %v2736 = vmax.f32 %v2720, 0.0
        %v2737 = vmax.f32 %v2721, 0.0
        %v2738 = vmax.f32 %v2722, 0.0
        %v2739 = vmax.f32 %v2723, 0.0
        %v2740 = vmax.f32 %v2724, 0.0
        %v2741 = vmax.f32 %v2725, 0.0
        %2742 = vst [vmem:[%s490] sm:$0xff] %v2726
        %2743 = vst [vmem:[%s490 + $0x8] sm:$0xff] %v2727
        %2744 = vst [vmem:[%s490 + $0x10] sm:$0xff] %v2728
        %2745 = vst [vmem:[%s490 + $0x18] sm:$0xff] %v2729
        %2746 = vst [vmem:[%s490 + $0x20] sm:$0xff] %v2730
        %2747 = vst [vmem:[%s490 + $0x28] sm:$0xff] %v2731
        %2748 = vst [vmem:[%s490 + $0x30] sm:$0xff] %v2732
        %2749 = vst [vmem:[%s490 + $0x38] sm:$0xff] %v2733
        %2750 = vst [vmem:[%s490 + $0x40] sm:$0xff] %v2734
        %2751 = vst [vmem:[%s490 + $0x48] sm:$0xff] %v2735
        %2752 = vst [vmem:[%s490 + $0x50] sm:$0xff] %v2736
        %2753 = vst [vmem:[%s490 + $0x58] sm:$0xff] %v2737
        %2754 = vst [vmem:[%s490 + $0x60] sm:$0xff] %v2738
        %2755 = vst [vmem:[%s490 + $0x68] sm:$0xff] %v2739
        %2756 = vst [vmem:[%s490 + $0x70] sm:$0xff] %v2740
        %2757 = vst [vmem:[%s490 + $0x78] sm:$0xff] %v2741
        %s2758 = sand.u32 %s347, 1
        %s2759 = scalar_lea.sflag [#allocation4], %s2758
        %s2760 = sand.u32 %s347, 1
        %s2761 = smul.addr %s2760, 128
        %s2762 = scalar_lea.vmem [#allocation3], %s2761
        // Predicated region
        $region77: #{self_attention_aspp_forward.5} parent=75 // pred_check
          %p2763 = pneg %p357
        $region78: #{self_attention_aspp_forward.5} parent=75 // pred_check_branch
          %2765 = sbr.rel (%p2763) target = $region80
        $region79: #{self_attention_aspp_forward.5} parent=75 // pred_region
          %s2767 = ssub.s32 2048, 2048
          %2768 = vsyncadd %s2759, %s2767
          %s2769 = smul.addr %s30, 16
          %s2770 = smul.addr %s2769, 128
          %s2771 = scalar_lea.hbm %s14, %s2770
          %s2772 = sshll.u32 %s2762, 4
          %s2773 = int_to_ptr.vmem [resolvable:$true] %s2772
          %2778 = dma.vmem_to_hbm [thread:$0]  %s2773, 2048, %s2771, %s2759, 256, 256, 16
        $region80: #{self_attention_aspp_forward.5} parent=75 // pred_fallthru
          _
      $region76: #{self_attention_aspp_forward.5} parent=5 // pred_fallthru
        _
      %p2779 = scmp.le.s32.totalorder 2, %s25
      // Predicated region
      $region81: #{self_attention_aspp_forward.5} parent=5 // pred_check
        %p2780 = pneg %p2779
      $region82: #{self_attention_aspp_forward.5} parent=5 // pred_check_branch
        %2782 = sbr.rel (%p2780) target = $region84
      $region83: #{self_attention_aspp_forward.5} parent=5 // pred_region
        %s2783 = ssub.s32 %s25, 2
        // Predicated region
        $region85: #{self_attention_aspp_forward.5} parent=83 // pred_check
          %p2784 = pneg %p363
        $region86: #{self_attention_aspp_forward.5} parent=83 // pred_check_branch
          %2786 = sbr.rel (%p2784) target = $region88
        $region87: #{self_attention_aspp_forward.5} parent=83 // pred_region
          %s2787 = sand.u32 %s348, 1
          %s2788 = scalar_lea.sflag [#allocation4], %s2787
          %s2789 = sand.u32 %s348, 1
          %s2790 = smul.addr %s2789, 128
          %s2791 = scalar_lea.vmem [#allocation3], %s2790
          %2792 = dma.done %s2788, 2048
        $region88: #{self_attention_aspp_forward.5} parent=83 // pred_fallthru
          _
      $region84: #{self_attention_aspp_forward.5} parent=5 // pred_fallthru
        _
    $region6: #{self_attention_aspp_forward.5} parent=1 // loop_footer
      %s29 = sadd.s32 1, %s25
    $region7: #{self_attention_aspp_forward.5} parent=1 // loop_footer_branch
      %24 = sbr.rel target = $region3
    $region8: #{self_attention_aspp_forward.5} parent=1 // loop_exit
      _
    %2793 = vsyncpa [#allocation4], 1
    %s2794 = scalar_lea.sflag [#allocation4], 1
    %2795 = vsyncpa %s2794, 1

// kernel: self_attention_aspp_forward.4
$region0: #{self_attention_aspp_forward.4}
  #allocation0 [shape = 'u32[]', space=smem, size = 0x4, offset = 0x4, fixed_abs, tag = 'smem constant byte address 0x4 - core index']
  #allocation1 [shape = 'u32[144,128]{1,0:T(1,128)}', space=vmem, size = 0x12000, scoped, tag = 'internal scratch']
  #allocation2 [shape = 'bf16[64,4608]{1,0:T(16,128)(2,1)}', space=vmem, size = 0x90000, scoped, tag = 'scratch operand']
  %s0 = inlined_call_operand.vmem [shape: bf16[2,64,512], index: 0, kind: input, shape index: {}]
  %s1 = inlined_call_operand.vmem [shape: bf16[4608,256], index: 1, kind: input, shape index: {}]
  %s2 = inlined_call_operand.vmem [shape: f32[1,256], index: 2, kind: input, shape index: {}]
  %s3 = inlined_call_operand.vmem [shape: f32[1,256], index: 3, kind: input, shape index: {}]
  %s4 = inlined_call_operand.vmem [shape: bf16[2,64,256], index: 4, kind: output, shape index: {}]
  %s5 = sld [smem:[#allocation0]]
  $region49: #{self_attention_aspp_forward.4} parent=0
    _
  %s7 = ssub.s32 1, %s5
  %s8 = scalar_select 0, %s7, %s5
  loop: start=0, step=1, limit=4
  $region2: #{self_attention_aspp_forward.4} parent=0 // loop_pre_header
    _
  $region3: #{self_attention_aspp_forward.4} parent=0 // loop_header
    %s10 = sphi 0, %s14
    %p11 = scmp.ge.s32.totalorder %s10, 4
    %s20 = sphi 0, %s22
    %s23 = sphi 0, %s20
    %s24 = sphi 0, %s23
    %s40 = sphi 0, %s24
    %s44 = sphi 0, %s44
    %s46 = sphi 0, %s44
    %s47 = sphi 0, %s46
    %s61 = sphi 0, %s47
    %s65 = sphi 0, %s65
    %s67 = sphi 0, %s65
    %s68 = sphi 0, %s67
    %s82 = sphi 0, %s68
    %s86 = sphi 0, %s86
    %s88 = sphi 0, %s86
    %s89 = sphi 0, %s88
    %s103 = sphi 0, %s89
    %s109 = sphi 0, %s111
    %s112 = sphi 0, %s109
    %s113 = sphi 0, %s112
    %s129 = sphi 0, %s113
  $region4: #{self_attention_aspp_forward.4} parent=0 // loop_header_branch
    %13 = sbr.rel (%p11) target = $region8
  $region5: #{self_attention_aspp_forward.4} parent=0 // loop_body
    %s15 = ssub.s32 %s10, 1
    %s16 = ssub.s32 %s10, 2
    %s17 = sadd.s32 %s10, 1
    %s18 = ssub.s32 %s10, %s17
    %p19 = scmp.eq.s32.totalorder %s18, 0
    %s21 = sadd.s32 %s20, 1
    %s22 = scalar_select %p19, %s20, %s21
    %p25 = pneg %p19
    %p26 = scmp.eq.s32.totalorder %s10, 1
    %p27 = por %p25, %p26
    %p28 = scmp.ne.s32.totalorder %s20, %s23
    %p29 = scmp.eq.s32.totalorder %s10, 0
    %p30 = por %p28, %p29
    %p31 = scmp.ne.s32.totalorder %s20, %s23
    %p32 = scmp.eq.s32.totalorder %s15, 1
    %p33 = por %p31, %p32
    %p34 = scmp.ne.s32.totalorder %s23, %s24
    %p35 = scmp.eq.s32.totalorder %s15, 0
    %p36 = por %p34, %p35
    %p37 = scmp.ne.s32.totalorder %s23, %s24
    %p38 = scmp.eq.s32.totalorder %s16, 1
    %p39 = por %p37, %p38
    %p41 = scmp.ne.s32.totalorder %s24, %s40
    %p42 = scmp.eq.s32.totalorder %s16, 0
    %p43 = por %p41, %p42
    %s45 = sadd.s32 %s44, 1
    %p48 = scmp.eq.s32.totalorder %s10, 1
    %p49 = scmp.ne.s32.totalorder %s44, %s46
    %p50 = scmp.eq.s32.totalorder %s10, 0
    %p51 = por %p49, %p50
    %p52 = scmp.ne.s32.totalorder %s44, %s46
    %p53 = scmp.eq.s32.totalorder %s15, 1
    %p54 = por %p52, %p53
    %p55 = scmp.ne.s32.totalorder %s46, %s47
    %p56 = scmp.eq.s32.totalorder %s15, 0
    %p57 = por %p55, %p56
    %p58 = scmp.ne.s32.totalorder %s46, %s47
    %p59 = scmp.eq.s32.totalorder %s16, 1
    %p60 = por %p58, %p59
    %p62 = scmp.ne.s32.totalorder %s47, %s61
    %p63 = scmp.eq.s32.totalorder %s16, 0
    %p64 = por %p62, %p63
    %s66 = sadd.s32 %s65, 1
    %p69 = scmp.eq.s32.totalorder %s10, 1
    %p70 = scmp.ne.s32.totalorder %s65, %s67
    %p71 = scmp.eq.s32.totalorder %s10, 0
    %p72 = por %p70, %p71
    %p73 = scmp.ne.s32.totalorder %s65, %s67
    %p74 = scmp.eq.s32.totalorder %s15, 1
    %p75 = por %p73, %p74
    %p76 = scmp.ne.s32.totalorder %s67, %s68
    %p77 = scmp.eq.s32.totalorder %s15, 0
    %p78 = por %p76, %p77
    %p79 = scmp.ne.s32.totalorder %s67, %s68
    %p80 = scmp.eq.s32.totalorder %s16, 1
    %p81 = por %p79, %p80
    %p83 = scmp.ne.s32.totalorder %s68, %s82
    %p84 = scmp.eq.s32.totalorder %s16, 0
    %p85 = por %p83, %p84
    %s87 = sadd.s32 %s86, 1
    %p90 = scmp.eq.s32.totalorder %s10, 1
    %p91 = scmp.ne.s32.totalorder %s86, %s88
    %p92 = scmp.eq.s32.totalorder %s10, 0
    %p93 = por %p91, %p92
    %p94 = scmp.ne.s32.totalorder %s86, %s88
    %p95 = scmp.eq.s32.totalorder %s15, 1
    %p96 = por %p94, %p95
    %p97 = scmp.ne.s32.totalorder %s88, %s89
    %p98 = scmp.eq.s32.totalorder %s15, 0
    %p99 = por %p97, %p98
    %p100 = scmp.ne.s32.totalorder %s88, %s89
    %p101 = scmp.eq.s32.totalorder %s16, 1
    %p102 = por %p100, %p101
    %p104 = scmp.ne.s32.totalorder %s89, %s103
    %p105 = scmp.eq.s32.totalorder %s16, 0
    %p106 = por %p104, %p105
    %s107 = ssub.s32 %s10, %s17
    %p108 = scmp.eq.s32.totalorder %s107, 0
    %s110 = sadd.s32 %s109, 1
    %s111 = scalar_select %p108, %s109, %s110
    %p114 = pneg %p108
    %p115 = scmp.eq.s32.totalorder %s10, 1
    %p116 = por %p114, %p115
    %p117 = scmp.ne.s32.totalorder %s109, %s112
    %p118 = scmp.eq.s32.totalorder %s10, 0
    %p119 = por %p117, %p118
    %p120 = scmp.ne.s32.totalorder %s109, %s112
    %p121 = scmp.eq.s32.totalorder %s15, 1
    %p122 = por %p120, %p121
    %p123 = scmp.ne.s32.totalorder %s112, %s113
    %p124 = scmp.eq.s32.totalorder %s15, 0
    %p125 = por %p123, %p124
    %p126 = scmp.ne.s32.totalorder %s112, %s113
    %p127 = scmp.eq.s32.totalorder %s16, 1
    %p128 = por %p126, %p127
    %p130 = scmp.ne.s32.totalorder %s113, %s129
    %p131 = scmp.eq.s32.totalorder %s16, 0
    %p132 = por %p130, %p131
    %p133 = scmp.le.s32.totalorder 1, %s10
    %p134 = scmp.lt.s32.totalorder %s10, 3
    %p135 = pnand %p133, %p134
    %p136 = pneg %p135
    // Predicated region
    $region9: #{self_attention_aspp_forward.4} parent=5 // pred_check
      _
    $region10: #{self_attention_aspp_forward.4} parent=5 // pred_check_branch
      %138 = sbr.rel (%p135) target = $region12
    $region11: #{self_attention_aspp_forward.4} parent=5 // pred_region
      %s139 = ssub.s32 %s10, 1
      // Predicated region
      $region13: #{self_attention_aspp_forward.4} parent=11 // pred_check
        %p140 = pneg %p57
      $region14: #{self_attention_aspp_forward.4} parent=11 // pred_check_branch
        %142 = sbr.rel (%p140) target = $region16
      $region15: #{self_attention_aspp_forward.4} parent=11 // pred_region
        _
      $region16: #{self_attention_aspp_forward.4} parent=11 // pred_fallthru
        _
      // Predicated region
      $region17: #{self_attention_aspp_forward.4} parent=11 // pred_check
        %p143 = pneg %p78
      $region18: #{self_attention_aspp_forward.4} parent=11 // pred_check_branch
        %145 = sbr.rel (%p143) target = $region20
      $region19: #{self_attention_aspp_forward.4} parent=11 // pred_region
        _
      $region20: #{self_attention_aspp_forward.4} parent=11 // pred_fallthru
        _
      // Predicated region
      $region21: #{self_attention_aspp_forward.4} parent=11 // pred_check
        %p146 = pneg %p99
      $region22: #{self_attention_aspp_forward.4} parent=11 // pred_check_branch
        %148 = sbr.rel (%p146) target = $region24
      $region23: #{self_attention_aspp_forward.4} parent=11 // pred_region
        _
      $region24: #{self_attention_aspp_forward.4} parent=11 // pred_fallthru
        _
    $region12: #{self_attention_aspp_forward.4} parent=5 // pred_fallthru
      _
    %p149 = scmp.lt.s32.totalorder %s10, 2
    // Predicated region
    $region25: #{self_attention_aspp_forward.4} parent=5 // pred_check
      %p150 = pneg %p149
    $region26: #{self_attention_aspp_forward.4} parent=5 // pred_check_branch
      %152 = sbr.rel (%p150) target = $region28
    $region27: #{self_attention_aspp_forward.4} parent=5 // pred_region
      // Predicated region
      $region29: #{self_attention_aspp_forward.4} parent=27 // pred_check
        %p153 = pneg %p30
      $region30: #{self_attention_aspp_forward.4} parent=27 // pred_check_branch
        %155 = sbr.rel (%p153) target = $region32
      $region31: #{self_attention_aspp_forward.4} parent=27 // pred_region
        %p156 = scmp.lt.s32.totalorder %s10, 1
        %s157 = scalar_select %p156, %s10, 1
        %s158 = smul.addr %s157, 32
        %s159 = smul.addr %s158, 4
        %s160 = scalar_lea.vmem %s0, %s159
      $region32: #{self_attention_aspp_forward.4} parent=27 // pred_fallthru
        _
    $region28: #{self_attention_aspp_forward.4} parent=5 // pred_fallthru
      _
    %p161 = scmp.le.s32.totalorder 1, %s10
    %p162 = scmp.lt.s32.totalorder %s10, 3
    %p163 = pnand %p161, %p162
    %p164 = pneg %p163
    // Predicated region
    $region33: #{self_attention_aspp_forward.4} parent=5 // pred_check
      _
    $region34: #{self_attention_aspp_forward.4} parent=5 // pred_check_branch
      %166 = sbr.rel (%p163) target = $region36
    $region35: #{self_attention_aspp_forward.4} parent=5 // pred_region
      %s167 = ssub.s32 %s10, 1
      %p168 = scmp.lt.s32.totalorder %s15, 1
      %s169 = scalar_select %p168, %s15, 1
      %s170 = smul.addr %s169, 32
      %s171 = smul.addr %s170, 4
      %s172 = scalar_lea.vmem %s0, %s171
      %p173 = pneg %p36
      %p174 = pneg %p33
      %p175 = pneg %p57
      %p176 = pneg %p54
      %p177 = pneg %p78
      %p178 = pneg %p75
      %p179 = pneg %p99
      %p180 = pneg %p96
      %p181 = pneg %p125
      %p182 = pneg %p122
      %p183 = scmp.lt.s32.totalorder %s15, 1
      %s184 = scalar_select %p183, %s15, 1
      %s185 = smul.addr %s184, 16
      %s186 = smul.addr %s185, 4
      %s187 = scalar_lea.vmem %s4, %s186
      %p188 = scmp.lt.s32.totalorder %s15, 1
      %s189 = scalar_select %p188, %s15, 1
      %s190 = smul.addr %s189, 32
      %s191 = smul.addr %s190, 4
      %s192 = scalar_lea.vmem %s0, %s191
      %p193 = scmp.lt.s32.totalorder %s15, 1
      %s194 = scalar_select %p193, %s15, 1
      %s195 = smul.addr %s194, 16
      %s196 = smul.addr %s195, 4
      %s197 = scalar_lea.vmem %s4, %s196
      %199 = vst [vmem:[#allocation2] sm:$0xff] 0
      %200 = vst [vmem:[#allocation2 + $0x8] sm:$0xff] 0
      %201 = vst [vmem:[#allocation2 + $0x10] sm:$0xff] 0
      %202 = vst [vmem:[#allocation2 + $0x18] sm:$0xff] 0
      %203 = vst [vmem:[#allocation2 + $0x20] sm:$0xff] 0
      %204 = vst [vmem:[#allocation2 + $0x28] sm:$0xff] 0
      %205 = vst [vmem:[#allocation2 + $0x30] sm:$0xff] 0
      %206 = vst [vmem:[#allocation2 + $0x38] sm:$0xff] 0
      %207 = vst [vmem:[#allocation2 + $0x40] sm:$0xff] 0
      %208 = vst [vmem:[#allocation2 + $0x48] sm:$0xff] 0
      %209 = vst [vmem:[#allocation2 + $0x50] sm:$0xff] 0
      %210 = vst [vmem:[#allocation2 + $0x58] sm:$0xff] 0
      %211 = vst [vmem:[#allocation2 + $0x60] sm:$0xff] 0
      %212 = vst [vmem:[#allocation2 + $0x68] sm:$0xff] 0
      %213 = vst [vmem:[#allocation2 + $0x70] sm:$0xff] 0
      %214 = vst [vmem:[#allocation2 + $0x78] sm:$0xff] 0
      %215 = vst [vmem:[#allocation2 + $0x80] sm:$0xff] 0
      %216 = vst [vmem:[#allocation2 + $0x88] sm:$0xff] 0
      %217 = vst [vmem:[#allocation2 + $0x90] sm:$0xff] 0
      %218 = vst [vmem:[#allocation2 + $0x98] sm:$0xff] 0
      %219 = vst [vmem:[#allocation2 + $0xa0] sm:$0xff] 0
      %220 = vst [vmem:[#allocation2 + $0xa8] sm:$0xff] 0
      %221 = vst [vmem:[#allocation2 + $0xb0] sm:$0xff] 0
      %222 = vst [vmem:[#allocation2 + $0xb8] sm:$0xff] 0
      %223 = vst [vmem:[#allocation2 + $0xc0] sm:$0xff] 0
      %224 = vst [vmem:[#allocation2 + $0xc8] sm:$0xff] 0
      %225 = vst [vmem:[#allocation2 + $0xd0] sm:$0xff] 0
      %226 = vst [vmem:[#allocation2 + $0xd8] sm:$0xff] 0
      %227 = vst [vmem:[#allocation2 + $0xe0] sm:$0xff] 0
      %228 = vst [vmem:[#allocation2 + $0xe8] sm:$0xff] 0
      %229 = vst [vmem:[#allocation2 + $0xf0] sm:$0xff] 0
      %230 = vst [vmem:[#allocation2 + $0xf8] sm:$0xff] 0
      %231 = vst [vmem:[#allocation2 + $0x100] sm:$0xff] 0
      %232 = vst [vmem:[#allocation2 + $0x108] sm:$0xff] 0
      %233 = vst [vmem:[#allocation2 + $0x110] sm:$0xff] 0
      %234 = vst [vmem:[#allocation2 + $0x118] sm:$0xff] 0
      %235 = vst [vmem:[#allocation2 + $0x120] sm:$0xff] 0
      %236 = vst [vmem:[#allocation2 + $0x128] sm:$0xff] 0
      %237 = vst [vmem:[#allocation2 + $0x130] sm:$0xff] 0
      %238 = vst [vmem:[#allocation2 + $0x138] sm:$0xff] 0
      %239 = vst [vmem:[#allocation2 + $0x140] sm:$0xff] 0
      %240 = vst [vmem:[#allocation2 + $0x148] sm:$0xff] 0
      %241 = vst [vmem:[#allocation2 + $0x150] sm:$0xff] 0
      %242 = vst [vmem:[#allocation2 + $0x158] sm:$0xff] 0
      %243 = vst [vmem:[#allocation2 + $0x160] sm:$0xff] 0
      %244 = vst [vmem:[#allocation2 + $0x168] sm:$0xff] 0
      %245 = vst [vmem:[#allocation2 + $0x170] sm:$0xff] 0
      %246 = vst [vmem:[#allocation2 + $0x178] sm:$0xff] 0
      %247 = vst [vmem:[#allocation2 + $0x180] sm:$0xff] 0
      %248 = vst [vmem:[#allocation2 + $0x188] sm:$0xff] 0
      %249 = vst [vmem:[#allocation2 + $0x190] sm:$0xff] 0
      %250 = vst [vmem:[#allocation2 + $0x198] sm:$0xff] 0
      %251 = vst [vmem:[#allocation2 + $0x1a0] sm:$0xff] 0
      %252 = vst [vmem:[#allocation2 + $0x1a8] sm:$0xff] 0
      %253 = vst [vmem:[#allocation2 + $0x1b0] sm:$0xff] 0
      %254 = vst [vmem:[#allocation2 + $0x1b8] sm:$0xff] 0
      %255 = vst [vmem:[#allocation2 + $0x1c0] sm:$0xff] 0
      %256 = vst [vmem:[#allocation2 + $0x1c8] sm:$0xff] 0
      %257 = vst [vmem:[#allocation2 + $0x1d0] sm:$0xff] 0
      %258 = vst [vmem:[#allocation2 + $0x1d8] sm:$0xff] 0
      %259 = vst [vmem:[#allocation2 + $0x1e0] sm:$0xff] 0
      %260 = vst [vmem:[#allocation2 + $0x1e8] sm:$0xff] 0
      %261 = vst [vmem:[#allocation2 + $0x1f0] sm:$0xff] 0
      %262 = vst [vmem:[#allocation2 + $0x1f8] sm:$0xff] 0
      %263 = vst [vmem:[#allocation2 + $0x200] sm:$0xff] 0
      %264 = vst [vmem:[#allocation2 + $0x208] sm:$0xff] 0
      %265 = vst [vmem:[#allocation2 + $0x210] sm:$0xff] 0
      %266 = vst [vmem:[#allocation2 + $0x218] sm:$0xff] 0
      %267 = vst [vmem:[#allocation2 + $0x220] sm:$0xff] 0
      %268 = vst [vmem:[#allocation2 + $0x228] sm:$0xff] 0
      %269 = vst [vmem:[#allocation2 + $0x230] sm:$0xff] 0
      %270 = vst [vmem:[#allocation2 + $0x238] sm:$0xff] 0
      %271 = vst [vmem:[#allocation2 + $0x240] sm:$0xff] 0
      %272 = vst [vmem:[#allocation2 + $0x248] sm:$0xff] 0
      %273 = vst [vmem:[#allocation2 + $0x250] sm:$0xff] 0
      %274 = vst [vmem:[#allocation2 + $0x258] sm:$0xff] 0
      %275 = vst [vmem:[#allocation2 + $0x260] sm:$0xff] 0
      %276 = vst [vmem:[#allocation2 + $0x268] sm:$0xff] 0
      %277 = vst [vmem:[#allocation2 + $0x270] sm:$0xff] 0
      %278 = vst [vmem:[#allocation2 + $0x278] sm:$0xff] 0
      %279 = vst [vmem:[#allocation2 + $0x280] sm:$0xff] 0
      %280 = vst [vmem:[#allocation2 + $0x288] sm:$0xff] 0
      %281 = vst [vmem:[#allocation2 + $0x290] sm:$0xff] 0
      %282 = vst [vmem:[#allocation2 + $0x298] sm:$0xff] 0
      %283 = vst [vmem:[#allocation2 + $0x2a0] sm:$0xff] 0
      %284 = vst [vmem:[#allocation2 + $0x2a8] sm:$0xff] 0
      %285 = vst [vmem:[#allocation2 + $0x2b0] sm:$0xff] 0
      %286 = vst [vmem:[#allocation2 + $0x2b8] sm:$0xff] 0
      %287 = vst [vmem:[#allocation2 + $0x2c0] sm:$0xff] 0
      %288 = vst [vmem:[#allocation2 + $0x2c8] sm:$0xff] 0
      %289 = vst [vmem:[#allocation2 + $0x2d0] sm:$0xff] 0
      %290 = vst [vmem:[#allocation2 + $0x2d8] sm:$0xff] 0
      %291 = vst [vmem:[#allocation2 + $0x2e0] sm:$0xff] 0
      %292 = vst [vmem:[#allocation2 + $0x2e8] sm:$0xff] 0
      %293 = vst [vmem:[#allocation2 + $0x2f0] sm:$0xff] 0
      %294 = vst [vmem:[#allocation2 + $0x2f8] sm:$0xff] 0
      %295 = vst [vmem:[#allocation2 + $0x300] sm:$0xff] 0
      %296 = vst [vmem:[#allocation2 + $0x308] sm:$0xff] 0
      %297 = vst [vmem:[#allocation2 + $0x310] sm:$0xff] 0
      %298 = vst [vmem:[#allocation2 + $0x318] sm:$0xff] 0
      %299 = vst [vmem:[#allocation2 + $0x320] sm:$0xff] 0
      %300 = vst [vmem:[#allocation2 + $0x328] sm:$0xff] 0
      %301 = vst [vmem:[#allocation2 + $0x330] sm:$0xff] 0
      %302 = vst [vmem:[#allocation2 + $0x338] sm:$0xff] 0
      %303 = vst [vmem:[#allocation2 + $0x340] sm:$0xff] 0
      %304 = vst [vmem:[#allocation2 + $0x348] sm:$0xff] 0
      %305 = vst [vmem:[#allocation2 + $0x350] sm:$0xff] 0
      %306 = vst [vmem:[#allocation2 + $0x358] sm:$0xff] 0
      %307 = vst [vmem:[#allocation2 + $0x360] sm:$0xff] 0
      %308 = vst [vmem:[#allocation2 + $0x368] sm:$0xff] 0
      %309 = vst [vmem:[#allocation2 + $0x370] sm:$0xff] 0
      %310 = vst [vmem:[#allocation2 + $0x378] sm:$0xff] 0
      %311 = vst [vmem:[#allocation2 + $0x380] sm:$0xff] 0
      %312 = vst [vmem:[#allocation2 + $0x388] sm:$0xff] 0
      %313 = vst [vmem:[#allocation2 + $0x390] sm:$0xff] 0
      %314 = vst [vmem:[#allocation2 + $0x398] sm:$0xff] 0
      %315 = vst [vmem:[#allocation2 + $0x3a0] sm:$0xff] 0
      %316 = vst [vmem:[#allocation2 + $0x3a8] sm:$0xff] 0
      %317 = vst [vmem:[#allocation2 + $0x3b0] sm:$0xff] 0
      %318 = vst [vmem:[#allocation2 + $0x3b8] sm:$0xff] 0
      %319 = vst [vmem:[#allocation2 + $0x3c0] sm:$0xff] 0
      %320 = vst [vmem:[#allocation2 + $0x3c8] sm:$0xff] 0
      %321 = vst [vmem:[#allocation2 + $0x3d0] sm:$0xff] 0
      %322 = vst [vmem:[#allocation2 + $0x3d8] sm:$0xff] 0
      %323 = vst [vmem:[#allocation2 + $0x3e0] sm:$0xff] 0
      %324 = vst [vmem:[#allocation2 + $0x3e8] sm:$0xff] 0
      %325 = vst [vmem:[#allocation2 + $0x3f0] sm:$0xff] 0
      %326 = vst [vmem:[#allocation2 + $0x3f8] sm:$0xff] 0
      %327 = vst [vmem:[#allocation2 + $0x400] sm:$0xff] 0
      %328 = vst [vmem:[#allocation2 + $0x408] sm:$0xff] 0
      %329 = vst [vmem:[#allocation2 + $0x410] sm:$0xff] 0
      %330 = vst [vmem:[#allocation2 + $0x418] sm:$0xff] 0
      %331 = vst [vmem:[#allocation2 + $0x420] sm:$0xff] 0
      %332 = vst [vmem:[#allocation2 + $0x428] sm:$0xff] 0
      %333 = vst [vmem:[#allocation2 + $0x430] sm:$0xff] 0
      %334 = vst [vmem:[#allocation2 + $0x438] sm:$0xff] 0
      %335 = vst [vmem:[#allocation2 + $0x440] sm:$0xff] 0
      %336 = vst [vmem:[#allocation2 + $0x448] sm:$0xff] 0
      %337 = vst [vmem:[#allocation2 + $0x450] sm:$0xff] 0
      %338 = vst [vmem:[#allocation2 + $0x458] sm:$0xff] 0
      %339 = vst [vmem:[#allocation2 + $0x460] sm:$0xff] 0
      %340 = vst [vmem:[#allocation2 + $0x468] sm:$0xff] 0
      %341 = vst [vmem:[#allocation2 + $0x470] sm:$0xff] 0
      %342 = vst [vmem:[#allocation2 + $0x478] sm:$0xff] 0
      %v343 = vld [vmem:[%s192] sm:$0x11]
      %v344 = vld [vmem:[%s192 + $0x8] sm:$0x11]
      %v347 = vunpack.c.l.b16 %v343
      %v348 = vunpack.c.h.b16 %v343
      %v349 = vunpack.c.l.b16 %v344
      %v350 = vunpack.c.h.b16 %v344
      %v351 = vpack.c.b16 %v347, %v347
      %v352 = vpack.c.b16 %v348, %v348
      %v353 = vpack.c.b16 %v349, %v349
      %v354 = vpack.c.b16 %v350, %v350
      %v355 = vrot.slane %v351, 5
      %v356 = vrot.slane %v352, 5
      %v357 = vrot.slane %v353, 5
      %v358 = vrot.slane %v354, 5
      %363 = vst [vmem:[#allocation2 + $0x360] sm:$0x8] %v355
      %364 = vst [vmem:[#allocation2 + $0x368] sm:$0x8] %v356
      %365 = vst [vmem:[#allocation2 + $0x370] sm:$0x8] %v357
      %366 = vst [vmem:[#allocation2 + $0x378] sm:$0x8] %v358
      %v367 = vld [vmem:[%s192 + $0x10] sm:$0x11]
      %v368 = vld [vmem:[%s192 + $0x18] sm:$0x11]
      %v371 = vunpack.c.l.b16 %v367
      %v372 = vunpack.c.h.b16 %v367
      %v373 = vunpack.c.l.b16 %v368
      %v374 = vunpack.c.h.b16 %v368
      %v375 = vpack.c.b16 %v371, %v371
      %v376 = vpack.c.b16 %v372, %v372
      %v377 = vpack.c.b16 %v373, %v373
      %v378 = vpack.c.b16 %v374, %v374
      %v379 = vrot.slane %v375, 1
      %v380 = vrot.slane %v376, 1
      %v381 = vrot.slane %v377, 1
      %v382 = vrot.slane %v378, 1
      %387 = vst [vmem:[#allocation2 + $0x360] sm:$0x80] %v379
      %388 = vst [vmem:[#allocation2 + $0x368] sm:$0x80] %v380
      %389 = vst [vmem:[#allocation2 + $0x370] sm:$0x80] %v381
      %390 = vst [vmem:[#allocation2 + $0x378] sm:$0x80] %v382
      %v391 = vld [vmem:[%s192] sm:$0xff]
      %v392 = vld [vmem:[%s192 + $0x8] sm:$0xff]
      %v393 = vld [vmem:[%s192 + $0x10] sm:$0xff]
      %v394 = vld [vmem:[%s192 + $0x18] sm:$0xff]
      %v399 = vunpack.c.l.b16 %v391
      %v400 = vunpack.c.h.b16 %v391
      %v401 = vunpack.c.l.b16 %v392
      %v402 = vunpack.c.h.b16 %v392
      %v403 = vunpack.c.l.b16 %v393
      %v404 = vunpack.c.h.b16 %v393
      %v405 = vunpack.c.l.b16 %v394
      %v406 = vunpack.c.h.b16 %v394
      %v407 = vpack.c.b16 %v403, %v399
      %v408 = vpack.c.b16 %v404, %v400
      %v409 = vpack.c.b16 %v405, %v401
      %v410 = vpack.c.b16 %v406, %v402
      %415 = vst [vmem:[#allocation2 + $0x380] sm:$0xff] %v407
      %416 = vst [vmem:[#allocation2 + $0x388] sm:$0xff] %v408
      %417 = vst [vmem:[#allocation2 + $0x390] sm:$0xff] %v409
      %418 = vst [vmem:[#allocation2 + $0x398] sm:$0xff] %v410
      %v419 = vld [vmem:[%s192] sm:$0x88]
      %v420 = vld [vmem:[%s192 + $0x8] sm:$0x88]
      %v423 = vunpack.c.l.b16 %v419
      %v424 = vunpack.c.h.b16 %v419
      %v425 = vunpack.c.l.b16 %v420
      %v426 = vunpack.c.h.b16 %v420
      %v427 = vpack.c.b16 %v423, %v423
      %v428 = vpack.c.b16 %v424, %v424
      %v429 = vpack.c.b16 %v425, %v425
      %v430 = vpack.c.b16 %v426, %v426
      %v431 = vrot.slane %v427, 3
      %v432 = vrot.slane %v428, 3
      %v433 = vrot.slane %v429, 3
      %v434 = vrot.slane %v430, 3
      %439 = vst [vmem:[#allocation2 + $0x3a0] sm:$0x1] %v431
      %440 = vst [vmem:[#allocation2 + $0x3a8] sm:$0x1] %v432
      %441 = vst [vmem:[#allocation2 + $0x3b0] sm:$0x1] %v433
      %442 = vst [vmem:[#allocation2 + $0x3b8] sm:$0x1] %v434
      %v443 = vld [vmem:[%s192 + $0x10] sm:$0x88]
      %v444 = vld [vmem:[%s192 + $0x18] sm:$0x88]
      %v447 = vunpack.c.l.b16 %v443
      %v448 = vunpack.c.h.b16 %v443
      %v449 = vunpack.c.l.b16 %v444
      %v450 = vunpack.c.h.b16 %v444
      %v451 = vpack.c.b16 %v447, %v447
      %v452 = vpack.c.b16 %v448, %v448
      %v453 = vpack.c.b16 %v449, %v449
      %v454 = vpack.c.b16 %v450, %v450
      %v455 = vrot.slane %v451, 7
      %v456 = vrot.slane %v452, 7
      %v457 = vrot.slane %v453, 7
      %v458 = vrot.slane %v454, 7
      %463 = vst [vmem:[#allocation2 + $0x3a0] sm:$0x10] %v455
      %464 = vst [vmem:[#allocation2 + $0x3a8] sm:$0x10] %v456
      %465 = vst [vmem:[#allocation2 + $0x3b0] sm:$0x10] %v457
      %466 = vst [vmem:[#allocation2 + $0x3b8] sm:$0x10] %v458
      %v467 = vld [vmem:[%s192] sm:$0x11]
      %v468 = vld [vmem:[%s192 + $0x8] sm:$0x11]
      %v471 = vunpack.c.l.b16 %v467
      %v472 = vunpack.c.h.b16 %v467
      %v473 = vunpack.c.l.b16 %v468
      %v474 = vunpack.c.h.b16 %v468
      %v475 = vpack.c.b16 %v471, %v471
      %v476 = vpack.c.b16 %v472, %v472
      %v477 = vpack.c.b16 %v473, %v473
      %v478 = vpack.c.b16 %v474, %v474
      %v479 = vrot.slane %v475, 5
      %v480 = vrot.slane %v476, 5
      %v481 = vrot.slane %v477, 5
      %v482 = vrot.slane %v478, 5
      %487 = vst [vmem:[#allocation2 + $0x60] sm:$0x8] %v479
      %488 = vst [vmem:[#allocation2 + $0x68] sm:$0x8] %v480
      %489 = vst [vmem:[#allocation2 + $0x70] sm:$0x8] %v481
      %490 = vst [vmem:[#allocation2 + $0x78] sm:$0x8] %v482
      %v491 = vld [vmem:[%s192 + $0x10] sm:$0x11]
      %v492 = vld [vmem:[%s192 + $0x18] sm:$0x11]
      %v495 = vunpack.c.l.b16 %v491
      %v496 = vunpack.c.h.b16 %v491
      %v497 = vunpack.c.l.b16 %v492
      %v498 = vunpack.c.h.b16 %v492
      %v499 = vpack.c.b16 %v495, %v495
      %v500 = vpack.c.b16 %v496, %v496
      %v501 = vpack.c.b16 %v497, %v497
      %v502 = vpack.c.b16 %v498, %v498
      %v503 = vrot.slane %v499, 1
      %v504 = vrot.slane %v500, 1
      %v505 = vrot.slane %v501, 1
      %v506 = vrot.slane %v502, 1
      %511 = vst [vmem:[#allocation2 + $0x60] sm:$0x80] %v503
      %512 = vst [vmem:[#allocation2 + $0x68] sm:$0x80] %v504
      %513 = vst [vmem:[#allocation2 + $0x70] sm:$0x80] %v505
      %514 = vst [vmem:[#allocation2 + $0x78] sm:$0x80] %v506
      %v515 = vld [vmem:[%s192 + $0x20] sm:$0x11]
      %v516 = vld [vmem:[%s192 + $0x28] sm:$0x11]
      %v519 = vunpack.c.l.b16 %v515
      %v520 = vunpack.c.h.b16 %v515
      %v521 = vunpack.c.l.b16 %v516
      %v522 = vunpack.c.h.b16 %v516
      %v523 = vpack.c.b16 %v519, %v519
      %v524 = vpack.c.b16 %v520, %v520
      %v525 = vpack.c.b16 %v521, %v521
      %v526 = vpack.c.b16 %v522, %v522
      %v527 = vrot.slane %v523, 5
      %v528 = vrot.slane %v524, 5
      %v529 = vrot.slane %v525, 5
      %v530 = vrot.slane %v526, 5
      %535 = vst [vmem:[#allocation2 + $0x180] sm:$0x8] %v527
      %536 = vst [vmem:[#allocation2 + $0x188] sm:$0x8] %v528
      %537 = vst [vmem:[#allocation2 + $0x190] sm:$0x8] %v529
      %538 = vst [vmem:[#allocation2 + $0x198] sm:$0x8] %v530
      %v539 = vld [vmem:[%s192 + $0x30] sm:$0x11]
      %v540 = vld [vmem:[%s192 + $0x38] sm:$0x11]
      %v543 = vunpack.c.l.b16 %v539
      %v544 = vunpack.c.h.b16 %v539
      %v545 = vunpack.c.l.b16 %v540
      %v546 = vunpack.c.h.b16 %v540
      %v547 = vpack.c.b16 %v543, %v543
      %v548 = vpack.c.b16 %v544, %v544
      %v549 = vpack.c.b16 %v545, %v545
      %v550 = vpack.c.b16 %v546, %v546
      %v551 = vrot.slane %v547, 1
      %v552 = vrot.slane %v548, 1
      %v553 = vrot.slane %v549, 1
      %v554 = vrot.slane %v550, 1
      %559 = vst [vmem:[#allocation2 + $0x180] sm:$0x80] %v551
      %560 = vst [vmem:[#allocation2 + $0x188] sm:$0x80] %v552
      %561 = vst [vmem:[#allocation2 + $0x190] sm:$0x80] %v553
      %562 = vst [vmem:[#allocation2 + $0x198] sm:$0x80] %v554
      %v563 = vld [vmem:[%s192 + $0x40] sm:$0x11]
      %v564 = vld [vmem:[%s192 + $0x48] sm:$0x11]
      %v567 = vunpack.c.l.b16 %v563
      %v568 = vunpack.c.h.b16 %v563
      %v569 = vunpack.c.l.b16 %v564
      %v570 = vunpack.c.h.b16 %v564
      %v571 = vpack.c.b16 %v567, %v567
      %v572 = vpack.c.b16 %v568, %v568
      %v573 = vpack.c.b16 %v569, %v569
      %v574 = vpack.c.b16 %v570, %v570
      %v575 = vrot.slane %v571, 5
      %v576 = vrot.slane %v572, 5
      %v577 = vrot.slane %v573, 5
      %v578 = vrot.slane %v574, 5
      %583 = vst [vmem:[#allocation2 + $0x2a0] sm:$0x8] %v575
      %584 = vst [vmem:[#allocation2 + $0x2a8] sm:$0x8] %v576
      %585 = vst [vmem:[#allocation2 + $0x2b0] sm:$0x8] %v577
      %586 = vst [vmem:[#allocation2 + $0x2b8] sm:$0x8] %v578
      %v587 = vld [vmem:[%s192 + $0x50] sm:$0x11]
      %v588 = vld [vmem:[%s192 + $0x58] sm:$0x11]
      %v591 = vunpack.c.l.b16 %v587
      %v592 = vunpack.c.h.b16 %v587
      %v593 = vunpack.c.l.b16 %v588
      %v594 = vunpack.c.h.b16 %v588
      %v595 = vpack.c.b16 %v591, %v591
      %v596 = vpack.c.b16 %v592, %v592
      %v597 = vpack.c.b16 %v593, %v593
      %v598 = vpack.c.b16 %v594, %v594
      %v599 = vrot.slane %v595, 1
      %v600 = vrot.slane %v596, 1
      %v601 = vrot.slane %v597, 1
      %v602 = vrot.slane %v598, 1
      %607 = vst [vmem:[#allocation2 + $0x2a0] sm:$0x80] %v599
      %608 = vst [vmem:[#allocation2 + $0x2a8] sm:$0x80] %v600
      %609 = vst [vmem:[#allocation2 + $0x2b0] sm:$0x80] %v601
      %610 = vst [vmem:[#allocation2 + $0x2b8] sm:$0x80] %v602
      %v611 = vld [vmem:[%s192 + $0x60] sm:$0x11]
      %v612 = vld [vmem:[%s192 + $0x68] sm:$0x11]
      %v615 = vunpack.c.l.b16 %v611
      %v616 = vunpack.c.h.b16 %v611
      %v617 = vunpack.c.l.b16 %v612
      %v618 = vunpack.c.h.b16 %v612
      %v619 = vpack.c.b16 %v615, %v615
      %v620 = vpack.c.b16 %v616, %v616
      %v621 = vpack.c.b16 %v617, %v617
      %v622 = vpack.c.b16 %v618, %v618
      %v623 = vrot.slane %v619, 5
      %v624 = vrot.slane %v620, 5
      %v625 = vrot.slane %v621, 5
      %v626 = vrot.slane %v622, 5
      %631 = vst [vmem:[#allocation2 + $0x3c0] sm:$0x8] %v623
      %632 = vst [vmem:[#allocation2 + $0x3c8] sm:$0x8] %v624
      %633 = vst [vmem:[#allocation2 + $0x3d0] sm:$0x8] %v625
      %634 = vst [vmem:[#allocation2 + $0x3d8] sm:$0x8] %v626
      %v635 = vld [vmem:[%s192 + $0x70] sm:$0x11]
      %v636 = vld [vmem:[%s192 + $0x78] sm:$0x11]
      %v639 = vunpack.c.l.b16 %v635
      %v640 = vunpack.c.h.b16 %v635
      %v641 = vunpack.c.l.b16 %v636
      %v642 = vunpack.c.h.b16 %v636
      %v643 = vpack.c.b16 %v639, %v639
      %v644 = vpack.c.b16 %v640, %v640
      %v645 = vpack.c.b16 %v641, %v641
      %v646 = vpack.c.b16 %v642, %v642
      %v647 = vrot.slane %v643, 1
      %v648 = vrot.slane %v644, 1
      %v649 = vrot.slane %v645, 1
      %v650 = vrot.slane %v646, 1
      %655 = vst [vmem:[#allocation2 + $0x3c0] sm:$0x80] %v647
      %656 = vst [vmem:[#allocation2 + $0x3c8] sm:$0x80] %v648
      %657 = vst [vmem:[#allocation2 + $0x3d0] sm:$0x80] %v649
      %658 = vst [vmem:[#allocation2 + $0x3d8] sm:$0x80] %v650
      %v659 = vld [vmem:[%s192] sm:$0xff]
      %v660 = vld [vmem:[%s192 + $0x8] sm:$0xff]
      %v661 = vld [vmem:[%s192 + $0x10] sm:$0xff]
      %v662 = vld [vmem:[%s192 + $0x18] sm:$0xff]
      %v663 = vld [vmem:[%s192 + $0x20] sm:$0xff]
      %v664 = vld [vmem:[%s192 + $0x28] sm:$0xff]
      %v665 = vld [vmem:[%s192 + $0x30] sm:$0xff]
      %v666 = vld [vmem:[%s192 + $0x38] sm:$0xff]
      %v667 = vld [vmem:[%s192 + $0x40] sm:$0xff]
      %v668 = vld [vmem:[%s192 + $0x48] sm:$0xff]
      %v669 = vld [vmem:[%s192 + $0x50] sm:$0xff]
      %v670 = vld [vmem:[%s192 + $0x58] sm:$0xff]
      %v671 = vld [vmem:[%s192 + $0x60] sm:$0xff]
      %v672 = vld [vmem:[%s192 + $0x68] sm:$0xff]
      %v673 = vld [vmem:[%s192 + $0x70] sm:$0xff]
      %v674 = vld [vmem:[%s192 + $0x78] sm:$0xff]
      %v691 = vunpack.c.l.b16 %v659
      %v692 = vunpack.c.h.b16 %v659
      %v693 = vunpack.c.l.b16 %v660
      %v694 = vunpack.c.h.b16 %v660
      %v695 = vunpack.c.l.b16 %v661
      %v696 = vunpack.c.h.b16 %v661
      %v697 = vunpack.c.l.b16 %v662
      %v698 = vunpack.c.h.b16 %v662
      %v699 = vunpack.c.l.b16 %v663
      %v700 = vunpack.c.h.b16 %v663
      %v701 = vunpack.c.l.b16 %v664
      %v702 = vunpack.c.h.b16 %v664
      %v703 = vunpack.c.l.b16 %v665
      %v704 = vunpack.c.h.b16 %v665
      %v705 = vunpack.c.l.b16 %v666
      %v706 = vunpack.c.h.b16 %v666
      %v707 = vunpack.c.l.b16 %v667
      %v708 = vunpack.c.h.b16 %v667
      %v709 = vunpack.c.l.b16 %v668
      %v710 = vunpack.c.h.b16 %v668
      %v711 = vunpack.c.l.b16 %v669
      %v712 = vunpack.c.h.b16 %v669
      %v713 = vunpack.c.l.b16 %v670
      %v714 = vunpack.c.h.b16 %v670
      %v715 = vunpack.c.l.b16 %v671
      %v716 = vunpack.c.h.b16 %v671
      %v717 = vunpack.c.l.b16 %v672
      %v718 = vunpack.c.h.b16 %v672
      %v719 = vunpack.c.l.b16 %v673
      %v720 = vunpack.c.h.b16 %v673
      %v721 = vunpack.c.l.b16 %v674
      %v722 = vunpack.c.h.b16 %v674
      %v723 = vpack.c.b16 %v695, %v691
      %v724 = vpack.c.b16 %v696, %v692
      %v725 = vpack.c.b16 %v697, %v693
      %v726 = vpack.c.b16 %v698, %v694
      %v727 = vpack.c.b16 %v703, %v699
      %v728 = vpack.c.b16 %v704, %v700
      %v729 = vpack.c.b16 %v705, %v701
      %v730 = vpack.c.b16 %v706, %v702
      %v731 = vpack.c.b16 %v711, %v707
      %v732 = vpack.c.b16 %v712, %v708
      %v733 = vpack.c.b16 %v713, %v709
      %v734 = vpack.c.b16 %v714, %v710
      %v735 = vpack.c.b16 %v719, %v715
      %v736 = vpack.c.b16 %v720, %v716
      %v737 = vpack.c.b16 %v721, %v717
      %v738 = vpack.c.b16 %v722, %v718
      %755 = vst [vmem:[#allocation2 + $0x80] sm:$0xff] %v723
      %756 = vst [vmem:[#allocation2 + $0x88] sm:$0xff] %v724
      %757 = vst [vmem:[#allocation2 + $0x90] sm:$0xff] %v725
      %758 = vst [vmem:[#allocation2 + $0x98] sm:$0xff] %v726
      %759 = vst [vmem:[#allocation2 + $0x1a0] sm:$0xff] %v727
      %760 = vst [vmem:[#allocation2 + $0x1a8] sm:$0xff] %v728
      %761 = vst [vmem:[#allocation2 + $0x1b0] sm:$0xff] %v729
      %762 = vst [vmem:[#allocation2 + $0x1b8] sm:$0xff] %v730
      %763 = vst [vmem:[#allocation2 + $0x2c0] sm:$0xff] %v731
      %764 = vst [vmem:[#allocation2 + $0x2c8] sm:$0xff] %v732
      %765 = vst [vmem:[#allocation2 + $0x2d0] sm:$0xff] %v733
      %766 = vst [vmem:[#allocation2 + $0x2d8] sm:$0xff] %v734
      %767 = vst [vmem:[#allocation2 + $0x3e0] sm:$0xff] %v735
      %768 = vst [vmem:[#allocation2 + $0x3e8] sm:$0xff] %v736
      %769 = vst [vmem:[#allocation2 + $0x3f0] sm:$0xff] %v737
      %770 = vst [vmem:[#allocation2 + $0x3f8] sm:$0xff] %v738
      %v771 = vld [vmem:[%s192] sm:$0x88]
      %v772 = vld [vmem:[%s192 + $0x8] sm:$0x88]
      %v775 = vunpack.c.l.b16 %v771
      %v776 = vunpack.c.h.b16 %v771
      %v777 = vunpack.c.l.b16 %v772
      %v778 = vunpack.c.h.b16 %v772
      %v779 = vpack.c.b16 %v775, %v775
      %v780 = vpack.c.b16 %v776, %v776
      %v781 = vpack.c.b16 %v777, %v777
      %v782 = vpack.c.b16 %v778, %v778
      %v783 = vrot.slane %v779, 3
      %v784 = vrot.slane %v780, 3
      %v785 = vrot.slane %v781, 3
      %v786 = vrot.slane %v782, 3
      %791 = vst [vmem:[#allocation2 + $0xa0] sm:$0x1] %v783
      %792 = vst [vmem:[#allocation2 + $0xa8] sm:$0x1] %v784
      %793 = vst [vmem:[#allocation2 + $0xb0] sm:$0x1] %v785
      %794 = vst [vmem:[#allocation2 + $0xb8] sm:$0x1] %v786
      %v795 = vld [vmem:[%s192 + $0x10] sm:$0x88]
      %v796 = vld [vmem:[%s192 + $0x18] sm:$0x88]
      %v799 = vunpack.c.l.b16 %v795
      %v800 = vunpack.c.h.b16 %v795
      %v801 = vunpack.c.l.b16 %v796
      %v802 = vunpack.c.h.b16 %v796
      %v803 = vpack.c.b16 %v799, %v799
      %v804 = vpack.c.b16 %v800, %v800
      %v805 = vpack.c.b16 %v801, %v801
      %v806 = vpack.c.b16 %v802, %v802
      %v807 = vrot.slane %v803, 7
      %v808 = vrot.slane %v804, 7
      %v809 = vrot.slane %v805, 7
      %v810 = vrot.slane %v806, 7
      %815 = vst [vmem:[#allocation2 + $0xa0] sm:$0x10] %v807
      %816 = vst [vmem:[#allocation2 + $0xa8] sm:$0x10] %v808
      %817 = vst [vmem:[#allocation2 + $0xb0] sm:$0x10] %v809
      %818 = vst [vmem:[#allocation2 + $0xb8] sm:$0x10] %v810
      %v819 = vld [vmem:[%s192 + $0x20] sm:$0x88]
      %v820 = vld [vmem:[%s192 + $0x28] sm:$0x88]
      %v823 = vunpack.c.l.b16 %v819
      %v824 = vunpack.c.h.b16 %v819
      %v825 = vunpack.c.l.b16 %v820
      %v826 = vunpack.c.h.b16 %v820
      %v827 = vpack.c.b16 %v823, %v823
      %v828 = vpack.c.b16 %v824, %v824
      %v829 = vpack.c.b16 %v825, %v825
      %v830 = vpack.c.b16 %v826, %v826
      %v831 = vrot.slane %v827, 3
      %v832 = vrot.slane %v828, 3
      %v833 = vrot.slane %v829, 3
      %v834 = vrot.slane %v830, 3
      %839 = vst [vmem:[#allocation2 + $0x1c0] sm:$0x1] %v831
      %840 = vst [vmem:[#allocation2 + $0x1c8] sm:$0x1] %v832
      %841 = vst [vmem:[#allocation2 + $0x1d0] sm:$0x1] %v833
      %842 = vst [vmem:[#allocation2 + $0x1d8] sm:$0x1] %v834
      %v843 = vld [vmem:[%s192 + $0x30] sm:$0x88]
      %v844 = vld [vmem:[%s192 + $0x38] sm:$0x88]
      %v847 = vunpack.c.l.b16 %v843
      %v848 = vunpack.c.h.b16 %v843
      %v849 = vunpack.c.l.b16 %v844
      %v850 = vunpack.c.h.b16 %v844
      %v851 = vpack.c.b16 %v847, %v847
      %v852 = vpack.c.b16 %v848, %v848
      %v853 = vpack.c.b16 %v849, %v849
      %v854 = vpack.c.b16 %v850, %v850
      %v855 = vrot.slane %v851, 7
      %v856 = vrot.slane %v852, 7
      %v857 = vrot.slane %v853, 7
      %v858 = vrot.slane %v854, 7
      %863 = vst [vmem:[#allocation2 + $0x1c0] sm:$0x10] %v855
      %864 = vst [vmem:[#allocation2 + $0x1c8] sm:$0x10] %v856
      %865 = vst [vmem:[#allocation2 + $0x1d0] sm:$0x10] %v857
      %866 = vst [vmem:[#allocation2 + $0x1d8] sm:$0x10] %v858
      %v867 = vld [vmem:[%s192 + $0x40] sm:$0x88]
      %v868 = vld [vmem:[%s192 + $0x48] sm:$0x88]
      %v871 = vunpack.c.l.b16 %v867
      %v872 = vunpack.c.h.b16 %v867
      %v873 = vunpack.c.l.b16 %v868
      %v874 = vunpack.c.h.b16 %v868
      %v875 = vpack.c.b16 %v871, %v871
      %v876 = vpack.c.b16 %v872, %v872
      %v877 = vpack.c.b16 %v873, %v873
      %v878 = vpack.c.b16 %v874, %v874
      %v879 = vrot.slane %v875, 3
      %v880 = vrot.slane %v876, 3
      %v881 = vrot.slane %v877, 3
      %v882 = vrot.slane %v878, 3
      %887 = vst [vmem:[#allocation2 + $0x2e0] sm:$0x1] %v879
      %888 = vst [vmem:[#allocation2 + $0x2e8] sm:$0x1] %v880
      %889 = vst [vmem:[#allocation2 + $0x2f0] sm:$0x1] %v881
      %890 = vst [vmem:[#allocation2 + $0x2f8] sm:$0x1] %v882
      %v891 = vld [vmem:[%s192 + $0x50] sm:$0x88]
      %v892 = vld [vmem:[%s192 + $0x58] sm:$0x88]
      %v895 = vunpack.c.l.b16 %v891
      %v896 = vunpack.c.h.b16 %v891
      %v897 = vunpack.c.l.b16 %v892
      %v898 = vunpack.c.h.b16 %v892
      %v899 = vpack.c.b16 %v895, %v895
      %v900 = vpack.c.b16 %v896, %v896
      %v901 = vpack.c.b16 %v897, %v897
      %v902 = vpack.c.b16 %v898, %v898
      %v903 = vrot.slane %v899, 7
      %v904 = vrot.slane %v900, 7
      %v905 = vrot.slane %v901, 7
      %v906 = vrot.slane %v902, 7
      %911 = vst [vmem:[#allocation2 + $0x2e0] sm:$0x10] %v903
      %912 = vst [vmem:[#allocation2 + $0x2e8] sm:$0x10] %v904
      %913 = vst [vmem:[#allocation2 + $0x2f0] sm:$0x10] %v905
      %914 = vst [vmem:[#allocation2 + $0x2f8] sm:$0x10] %v906
      %v915 = vld [vmem:[%s192 + $0x60] sm:$0x88]
      %v916 = vld [vmem:[%s192 + $0x68] sm:$0x88]
      %v919 = vunpack.c.l.b16 %v915
      %v920 = vunpack.c.h.b16 %v915
      %v921 = vunpack.c.l.b16 %v916
      %v922 = vunpack.c.h.b16 %v916
      %v923 = vpack.c.b16 %v919, %v919
      %v924 = vpack.c.b16 %v920, %v920
      %v925 = vpack.c.b16 %v921, %v921
      %v926 = vpack.c.b16 %v922, %v922
      %v927 = vrot.slane %v923, 3
      %v928 = vrot.slane %v924, 3
      %v929 = vrot.slane %v925, 3
      %v930 = vrot.slane %v926, 3
      %935 = vst [vmem:[#allocation2 + $0x400] sm:$0x1] %v927
      %936 = vst [vmem:[#allocation2 + $0x408] sm:$0x1] %v928
      %937 = vst [vmem:[#allocation2 + $0x410] sm:$0x1] %v929
      %938 = vst [vmem:[#allocation2 + $0x418] sm:$0x1] %v930
      %v939 = vld [vmem:[%s192 + $0x70] sm:$0x88]
      %v940 = vld [vmem:[%s192 + $0x78] sm:$0x88]
      %v943 = vunpack.c.l.b16 %v939
      %v944 = vunpack.c.h.b16 %v939
      %v945 = vunpack.c.l.b16 %v940
      %v946 = vunpack.c.h.b16 %v940
      %v947 = vpack.c.b16 %v943, %v943
      %v948 = vpack.c.b16 %v944, %v944
      %v949 = vpack.c.b16 %v945, %v945
      %v950 = vpack.c.b16 %v946, %v946
      %v951 = vrot.slane %v947, 7
      %v952 = vrot.slane %v948, 7
      %v953 = vrot.slane %v949, 7
      %v954 = vrot.slane %v950, 7
      %959 = vst [vmem:[#allocation2 + $0x400] sm:$0x10] %v951
      %960 = vst [vmem:[#allocation2 + $0x408] sm:$0x10] %v952
      %961 = vst [vmem:[#allocation2 + $0x410] sm:$0x10] %v953
      %962 = vst [vmem:[#allocation2 + $0x418] sm:$0x10] %v954
      %v963 = vld [vmem:[%s192 + $0x60] sm:$0x11]
      %v964 = vld [vmem:[%s192 + $0x68] sm:$0x11]
      %v967 = vunpack.c.l.b16 %v963
      %v968 = vunpack.c.h.b16 %v963
      %v969 = vunpack.c.l.b16 %v964
      %v970 = vunpack.c.h.b16 %v964
      %v971 = vpack.c.b16 %v967, %v967
      %v972 = vpack.c.b16 %v968, %v968
      %v973 = vpack.c.b16 %v969, %v969
      %v974 = vpack.c.b16 %v970, %v970
      %v975 = vrot.slane %v971, 5
      %v976 = vrot.slane %v972, 5
      %v977 = vrot.slane %v973, 5
      %v978 = vrot.slane %v974, 5
      %983 = vst [vmem:[#allocation2 + $0xc0] sm:$0x8] %v975
      %984 = vst [vmem:[#allocation2 + $0xc8] sm:$0x8] %v976
      %985 = vst [vmem:[#allocation2 + $0xd0] sm:$0x8] %v977
      %986 = vst [vmem:[#allocation2 + $0xd8] sm:$0x8] %v978
      %v987 = vld [vmem:[%s192 + $0x70] sm:$0x11]
      %v988 = vld [vmem:[%s192 + $0x78] sm:$0x11]
      %v991 = vunpack.c.l.b16 %v987
      %v992 = vunpack.c.h.b16 %v987
      %v993 = vunpack.c.l.b16 %v988
      %v994 = vunpack.c.h.b16 %v988
      %v995 = vpack.c.b16 %v991, %v991
      %v996 = vpack.c.b16 %v992, %v992
      %v997 = vpack.c.b16 %v993, %v993
      %v998 = vpack.c.b16 %v994, %v994
      %v999 = vrot.slane %v995, 1
      %v1000 = vrot.slane %v996, 1
      %v1001 = vrot.slane %v997, 1
      %v1002 = vrot.slane %v998, 1
      %1007 = vst [vmem:[#allocation2 + $0xc0] sm:$0x80] %v999
      %1008 = vst [vmem:[#allocation2 + $0xc8] sm:$0x80] %v1000
      %1009 = vst [vmem:[#allocation2 + $0xd0] sm:$0x80] %v1001
      %1010 = vst [vmem:[#allocation2 + $0xd8] sm:$0x80] %v1002
      %v1011 = vld [vmem:[%s192 + $0x60] sm:$0xff]
      %v1012 = vld [vmem:[%s192 + $0x68] sm:$0xff]
      %v1013 = vld [vmem:[%s192 + $0x70] sm:$0xff]
      %v1014 = vld [vmem:[%s192 + $0x78] sm:$0xff]
      %v1019 = vunpack.c.l.b16 %v1011
      %v1020 = vunpack.c.h.b16 %v1011
      %v1021 = vunpack.c.l.b16 %v1012
      %v1022 = vunpack.c.h.b16 %v1012
      %v1023 = vunpack.c.l.b16 %v1013
      %v1024 = vunpack.c.h.b16 %v1013
      %v1025 = vunpack.c.l.b16 %v1014
      %v1026 = vunpack.c.h.b16 %v1014
      %v1027 = vpack.c.b16 %v1023, %v1019
      %v1028 = vpack.c.b16 %v1024, %v1020
      %v1029 = vpack.c.b16 %v1025, %v1021
      %v1030 = vpack.c.b16 %v1026, %v1022
      %1035 = vst [vmem:[#allocation2 + $0xe0] sm:$0xff] %v1027
      %1036 = vst [vmem:[#allocation2 + $0xe8] sm:$0xff] %v1028
      %1037 = vst [vmem:[#allocation2 + $0xf0] sm:$0xff] %v1029
      %1038 = vst [vmem:[#allocation2 + $0xf8] sm:$0xff] %v1030
      %v1039 = vld [vmem:[%s192 + $0x60] sm:$0x88]
      %v1040 = vld [vmem:[%s192 + $0x68] sm:$0x88]
      %v1043 = vunpack.c.l.b16 %v1039
      %v1044 = vunpack.c.h.b16 %v1039
      %v1045 = vunpack.c.l.b16 %v1040
      %v1046 = vunpack.c.h.b16 %v1040
      %v1047 = vpack.c.b16 %v1043, %v1043
      %v1048 = vpack.c.b16 %v1044, %v1044
      %v1049 = vpack.c.b16 %v1045, %v1045
      %v1050 = vpack.c.b16 %v1046, %v1046
      %v1051 = vrot.slane %v1047, 3
      %v1052 = vrot.slane %v1048, 3
      %v1053 = vrot.slane %v1049, 3
      %v1054 = vrot.slane %v1050, 3
      %1059 = vst [vmem:[#allocation2 + $0x100] sm:$0x1] %v1051
      %1060 = vst [vmem:[#allocation2 + $0x108] sm:$0x1] %v1052
      %1061 = vst [vmem:[#allocation2 + $0x110] sm:$0x1] %v1053
      %1062 = vst [vmem:[#allocation2 + $0x118] sm:$0x1] %v1054
      %v1063 = vld [vmem:[%s192 + $0x70] sm:$0x88]
      %v1064 = vld [vmem:[%s192 + $0x78] sm:$0x88]
      %v1067 = vunpack.c.l.b16 %v1063
      %v1068 = vunpack.c.h.b16 %v1063
      %v1069 = vunpack.c.l.b16 %v1064
      %v1070 = vunpack.c.h.b16 %v1064
      %v1071 = vpack.c.b16 %v1067, %v1067
      %v1072 = vpack.c.b16 %v1068, %v1068
      %v1073 = vpack.c.b16 %v1069, %v1069
      %v1074 = vpack.c.b16 %v1070, %v1070
      %v1075 = vrot.slane %v1071, 7
      %v1076 = vrot.slane %v1072, 7
      %v1077 = vrot.slane %v1073, 7
      %v1078 = vrot.slane %v1074, 7
      %1083 = vst [vmem:[#allocation2 + $0x100] sm:$0x10] %v1075
      %1084 = vst [vmem:[#allocation2 + $0x108] sm:$0x10] %v1076
      %1085 = vst [vmem:[#allocation2 + $0x110] sm:$0x10] %v1077
      %1086 = vst [vmem:[#allocation2 + $0x118] sm:$0x10] %v1078
      %v1087 = vld [vmem:[#allocation2] sm:$0xff]
      %v1088 = vld [vmem:[#allocation2 + $0x8] sm:$0xff]
      %v1089 = vld [vmem:[#allocation2 + $0x10] sm:$0xff]
      %v1090 = vld [vmem:[#allocation2 + $0x18] sm:$0xff]
      %v1091 = vld [vmem:[#allocation2 + $0x20] sm:$0xff]
      %v1092 = vld [vmem:[#allocation2 + $0x28] sm:$0xff]
      %v1093 = vld [vmem:[#allocation2 + $0x30] sm:$0xff]
      %v1094 = vld [vmem:[#allocation2 + $0x38] sm:$0xff]
      %v1095 = vld [vmem:[#allocation2 + $0x40] sm:$0xff]
      %v1096 = vld [vmem:[#allocation2 + $0x48] sm:$0xff]
      %v1097 = vld [vmem:[#allocation2 + $0x50] sm:$0xff]
      %v1098 = vld [vmem:[#allocation2 + $0x58] sm:$0xff]
      %v1099 = vld [vmem:[#allocation2 + $0x60] sm:$0xff]
      %v1100 = vld [vmem:[#allocation2 + $0x68] sm:$0xff]
      %v1101 = vld [vmem:[#allocation2 + $0x70] sm:$0xff]
      %v1102 = vld [vmem:[#allocation2 + $0x78] sm:$0xff]
      %v1103 = vld [vmem:[#allocation2 + $0x80] sm:$0xff]
      %v1104 = vld [vmem:[#allocation2 + $0x88] sm:$0xff]
      %v1105 = vld [vmem:[#allocation2 + $0x90] sm:$0xff]
      %v1106 = vld [vmem:[#allocation2 + $0x98] sm:$0xff]
      %v1107 = vld [vmem:[#allocation2 + $0xa0] sm:$0xff]
      %v1108 = vld [vmem:[#allocation2 + $0xa8] sm:$0xff]
      %v1109 = vld [vmem:[#allocation2 + $0xb0] sm:$0xff]
      %v1110 = vld [vmem:[#allocation2 + $0xb8] sm:$0xff]
      %v1111 = vld [vmem:[#allocation2 + $0xc0] sm:$0xff]
      %v1112 = vld [vmem:[#allocation2 + $0xc8] sm:$0xff]
      %v1113 = vld [vmem:[#allocation2 + $0xd0] sm:$0xff]
      %v1114 = vld [vmem:[#allocation2 + $0xd8] sm:$0xff]
      %v1115 = vld [vmem:[#allocation2 + $0xe0] sm:$0xff]
      %v1116 = vld [vmem:[#allocation2 + $0xe8] sm:$0xff]
      %v1117 = vld [vmem:[#allocation2 + $0xf0] sm:$0xff]
      %v1118 = vld [vmem:[#allocation2 + $0xf8] sm:$0xff]
      %v1119 = vld [vmem:[#allocation2 + $0x100] sm:$0xff]
      %v1120 = vld [vmem:[#allocation2 + $0x108] sm:$0xff]
      %v1121 = vld [vmem:[#allocation2 + $0x110] sm:$0xff]
      %v1122 = vld [vmem:[#allocation2 + $0x118] sm:$0xff]
      %v1123 = vld [vmem:[#allocation2 + $0x120] sm:$0xff]
      %v1124 = vld [vmem:[#allocation2 + $0x128] sm:$0xff]
      %v1125 = vld [vmem:[#allocation2 + $0x130] sm:$0xff]
      %v1126 = vld [vmem:[#allocation2 + $0x138] sm:$0xff]
      %v1127 = vld [vmem:[#allocation2 + $0x140] sm:$0xff]
      %v1128 = vld [vmem:[#allocation2 + $0x148] sm:$0xff]
      %v1129 = vld [vmem:[#allocation2 + $0x150] sm:$0xff]
      %v1130 = vld [vmem:[#allocation2 + $0x158] sm:$0xff]
      %v1131 = vld [vmem:[#allocation2 + $0x160] sm:$0xff]
      %v1132 = vld [vmem:[#allocation2 + $0x168] sm:$0xff]
      %v1133 = vld [vmem:[#allocation2 + $0x170] sm:$0xff]
      %v1134 = vld [vmem:[#allocation2 + $0x178] sm:$0xff]
      %v1135 = vld [vmem:[#allocation2 + $0x180] sm:$0xff]
      %v1136 = vld [vmem:[#allocation2 + $0x188] sm:$0xff]
      %v1137 = vld [vmem:[#allocation2 + $0x190] sm:$0xff]
      %v1138 = vld [vmem:[#allocation2 + $0x198] sm:$0xff]
      %v1139 = vld [vmem:[#allocation2 + $0x1a0] sm:$0xff]
      %v1140 = vld [vmem:[#allocation2 + $0x1a8] sm:$0xff]
      %v1141 = vld [vmem:[#allocation2 + $0x1b0] sm:$0xff]
      %v1142 = vld [vmem:[#allocation2 + $0x1b8] sm:$0xff]
      %v1143 = vld [vmem:[#allocation2 + $0x1c0] sm:$0xff]
      %v1144 = vld [vmem:[#allocation2 + $0x1c8] sm:$0xff]
      %v1145 = vld [vmem:[#allocation2 + $0x1d0] sm:$0xff]
      %v1146 = vld [vmem:[#allocation2 + $0x1d8] sm:$0xff]
      %v1147 = vld [vmem:[#allocation2 + $0x1e0] sm:$0xff]
      %v1148 = vld [vmem:[#allocation2 + $0x1e8] sm:$0xff]
      %v1149 = vld [vmem:[#allocation2 + $0x1f0] sm:$0xff]
      %v1150 = vld [vmem:[#allocation2 + $0x1f8] sm:$0xff]
      %v1151 = vld [vmem:[#allocation2 + $0x200] sm:$0xff]
      %v1152 = vld [vmem:[#allocation2 + $0x208] sm:$0xff]
      %v1153 = vld [vmem:[#allocation2 + $0x210] sm:$0xff]
      %v1154 = vld [vmem:[#allocation2 + $0x218] sm:$0xff]
      %v1155 = vld [vmem:[#allocation2 + $0x220] sm:$0xff]
      %v1156 = vld [vmem:[#allocation2 + $0x228] sm:$0xff]
      %v1157 = vld [vmem:[#allocation2 + $0x230] sm:$0xff]
      %v1158 = vld [vmem:[#allocation2 + $0x238] sm:$0xff]
      %v1159 = vld [vmem:[#allocation2 + $0x240] sm:$0xff]
      %v1160 = vld [vmem:[#allocation2 + $0x248] sm:$0xff]
      %v1161 = vld [vmem:[#allocation2 + $0x250] sm:$0xff]
      %v1162 = vld [vmem:[#allocation2 + $0x258] sm:$0xff]
      %v1163 = vld [vmem:[#allocation2 + $0x260] sm:$0xff]
      %v1164 = vld [vmem:[#allocation2 + $0x268] sm:$0xff]
      %v1165 = vld [vmem:[#allocation2 + $0x270] sm:$0xff]
      %v1166 = vld [vmem:[#allocation2 + $0x278] sm:$0xff]
      %v1167 = vld [vmem:[#allocation2 + $0x280] sm:$0xff]
      %v1168 = vld [vmem:[#allocation2 + $0x288] sm:$0xff]
      %v1169 = vld [vmem:[#allocation2 + $0x290] sm:$0xff]
      %v1170 = vld [vmem:[#allocation2 + $0x298] sm:$0xff]
      %v1171 = vld [vmem:[#allocation2 + $0x2a0] sm:$0xff]
      %v1172 = vld [vmem:[#allocation2 + $0x2a8] sm:$0xff]
      %v1173 = vld [vmem:[#allocation2 + $0x2b0] sm:$0xff]
      %v1174 = vld [vmem:[#allocation2 + $0x2b8] sm:$0xff]
      %v1175 = vld [vmem:[#allocation2 + $0x2c0] sm:$0xff]
      %v1176 = vld [vmem:[#allocation2 + $0x2c8] sm:$0xff]
      %v1177 = vld [vmem:[#allocation2 + $0x2d0] sm:$0xff]
      %v1178 = vld [vmem:[#allocation2 + $0x2d8] sm:$0xff]
      %v1179 = vld [vmem:[#allocation2 + $0x2e0] sm:$0xff]
      %v1180 = vld [vmem:[#allocation2 + $0x2e8] sm:$0xff]
      %v1181 = vld [vmem:[#allocation2 + $0x2f0] sm:$0xff]
      %v1182 = vld [vmem:[#allocation2 + $0x2f8] sm:$0xff]
      %v1183 = vld [vmem:[#allocation2 + $0x300] sm:$0xff]
      %v1184 = vld [vmem:[#allocation2 + $0x308] sm:$0xff]
      %v1185 = vld [vmem:[#allocation2 + $0x310] sm:$0xff]
      %v1186 = vld [vmem:[#allocation2 + $0x318] sm:$0xff]
      %v1187 = vld [vmem:[#allocation2 + $0x320] sm:$0xff]
      %v1188 = vld [vmem:[#allocation2 + $0x328] sm:$0xff]
      %v1189 = vld [vmem:[#allocation2 + $0x330] sm:$0xff]
      %v1190 = vld [vmem:[#allocation2 + $0x338] sm:$0xff]
      %v1191 = vld [vmem:[#allocation2 + $0x340] sm:$0xff]
      %v1192 = vld [vmem:[#allocation2 + $0x348] sm:$0xff]
      %v1193 = vld [vmem:[#allocation2 + $0x350] sm:$0xff]
      %v1194 = vld [vmem:[#allocation2 + $0x358] sm:$0xff]
      %v1195 = vld [vmem:[#allocation2 + $0x360] sm:$0xff]
      %v1196 = vld [vmem:[#allocation2 + $0x368] sm:$0xff]
      %v1197 = vld [vmem:[#allocation2 + $0x370] sm:$0xff]
      %v1198 = vld [vmem:[#allocation2 + $0x378] sm:$0xff]
      %v1199 = vld [vmem:[#allocation2 + $0x380] sm:$0xff]
      %v1200 = vld [vmem:[#allocation2 + $0x388] sm:$0xff]
      %v1201 = vld [vmem:[#allocation2 + $0x390] sm:$0xff]
      %v1202 = vld [vmem:[#allocation2 + $0x398] sm:$0xff]
      %v1203 = vld [vmem:[#allocation2 + $0x3a0] sm:$0xff]
      %v1204 = vld [vmem:[#allocation2 + $0x3a8] sm:$0xff]
      %v1205 = vld [vmem:[#allocation2 + $0x3b0] sm:$0xff]
      %v1206 = vld [vmem:[#allocation2 + $0x3b8] sm:$0xff]
      %v1207 = vld [vmem:[#allocation2 + $0x3c0] sm:$0xff]
      %v1208 = vld [vmem:[#allocation2 + $0x3c8] sm:$0xff]
      %v1209 = vld [vmem:[#allocation2 + $0x3d0] sm:$0xff]
      %v1210 = vld [vmem:[#allocation2 + $0x3d8] sm:$0xff]
      %v1211 = vld [vmem:[#allocation2 + $0x3e0] sm:$0xff]
      %v1212 = vld [vmem:[#allocation2 + $0x3e8] sm:$0xff]
      %v1213 = vld [vmem:[#allocation2 + $0x3f0] sm:$0xff]
      %v1214 = vld [vmem:[#allocation2 + $0x3f8] sm:$0xff]
      %v1215 = vld [vmem:[#allocation2 + $0x400] sm:$0xff]
      %v1216 = vld [vmem:[#allocation2 + $0x408] sm:$0xff]
      %v1217 = vld [vmem:[#allocation2 + $0x410] sm:$0xff]
      %v1218 = vld [vmem:[#allocation2 + $0x418] sm:$0xff]
      %v1219 = vld [vmem:[#allocation2 + $0x420] sm:$0xff]
      %v1220 = vld [vmem:[#allocation2 + $0x428] sm:$0xff]
      %v1221 = vld [vmem:[#allocation2 + $0x430] sm:$0xff]
      %v1222 = vld [vmem:[#allocation2 + $0x438] sm:$0xff]
      %v1223 = vld [vmem:[#allocation2 + $0x440] sm:$0xff]
      %v1224 = vld [vmem:[#allocation2 + $0x448] sm:$0xff]
      %v1225 = vld [vmem:[#allocation2 + $0x450] sm:$0xff]
      %v1226 = vld [vmem:[#allocation2 + $0x458] sm:$0xff]
      %v1227 = vld [vmem:[#allocation2 + $0x460] sm:$0xff]
      %v1228 = vld [vmem:[#allocation2 + $0x468] sm:$0xff]
      %v1229 = vld [vmem:[#allocation2 + $0x470] sm:$0xff]
      %v1230 = vld [vmem:[#allocation2 + $0x478] sm:$0xff]
      %v1231 = vld [vmem:[%s1] sm:$0xff]
      %v1232 = vld [vmem:[%s1 + $0x8] sm:$0xff]
      %v1233 = vld [vmem:[%s1 + $0x10] sm:$0xff]
      %v1234 = vld [vmem:[%s1 + $0x18] sm:$0xff]
      %v1235 = vld [vmem:[%s1 + $0x20] sm:$0xff]
      %v1236 = vld [vmem:[%s1 + $0x28] sm:$0xff]
      %v1237 = vld [vmem:[%s1 + $0x30] sm:$0xff]
      %v1238 = vld [vmem:[%s1 + $0x38] sm:$0xff]
      %v1239 = vld [vmem:[%s1 + $0x40] sm:$0xff]
      %v1240 = vld [vmem:[%s1 + $0x48] sm:$0xff]
      %v1241 = vld [vmem:[%s1 + $0x50] sm:$0xff]
      %v1242 = vld [vmem:[%s1 + $0x58] sm:$0xff]
      %v1243 = vld [vmem:[%s1 + $0x60] sm:$0xff]
      %v1244 = vld [vmem:[%s1 + $0x68] sm:$0xff]
      %v1245 = vld [vmem:[%s1 + $0x70] sm:$0xff]
      %v1246 = vld [vmem:[%s1 + $0x78] sm:$0xff]
      %v1247 = vld [vmem:[%s1 + $0x80] sm:$0xff]
      %v1248 = vld [vmem:[%s1 + $0x88] sm:$0xff]
      %v1249 = vld [vmem:[%s1 + $0x90] sm:$0xff]
      %v1250 = vld [vmem:[%s1 + $0x98] sm:$0xff]
      %v1251 = vld [vmem:[%s1 + $0xa0] sm:$0xff]
      %v1252 = vld [vmem:[%s1 + $0xa8] sm:$0xff]
      %v1253 = vld [vmem:[%s1 + $0xb0] sm:$0xff]
      %v1254 = vld [vmem:[%s1 + $0xb8] sm:$0xff]
      %v1255 = vld [vmem:[%s1 + $0xc0] sm:$0xff]
      %v1256 = vld [vmem:[%s1 + $0xc8] sm:$0xff]
      %v1257 = vld [vmem:[%s1 + $0xd0] sm:$0xff]
      %v1258 = vld [vmem:[%s1 + $0xd8] sm:$0xff]
      %v1259 = vld [vmem:[%s1 + $0xe0] sm:$0xff]
      %v1260 = vld [vmem:[%s1 + $0xe8] sm:$0xff]
      %v1261 = vld [vmem:[%s1 + $0xf0] sm:$0xff]
      %v1262 = vld [vmem:[%s1 + $0xf8] sm:$0xff]
      %v1263 = vld [vmem:[%s1 + $0x100] sm:$0xff]
      %v1264 = vld [vmem:[%s1 + $0x108] sm:$0xff]
      %v1265 = vld [vmem:[%s1 + $0x110] sm:$0xff]
      %v1266 = vld [vmem:[%s1 + $0x118] sm:$0xff]
      %v1267 = vld [vmem:[%s1 + $0x120] sm:$0xff]
      %v1268 = vld [vmem:[%s1 + $0x128] sm:$0xff]
      %v1269 = vld [vmem:[%s1 + $0x130] sm:$0xff]
      %v1270 = vld [vmem:[%s1 + $0x138] sm:$0xff]
      %v1271 = vld [vmem:[%s1 + $0x140] sm:$0xff]
      %v1272 = vld [vmem:[%s1 + $0x148] sm:$0xff]
      %v1273 = vld [vmem:[%s1 + $0x150] sm:$0xff]
      %v1274 = vld [vmem:[%s1 + $0x158] sm:$0xff]
      %v1275 = vld [vmem:[%s1 + $0x160] sm:$0xff]
      %v1276 = vld [vmem:[%s1 + $0x168] sm:$0xff]
      %v1277 = vld [vmem:[%s1 + $0x170] sm:$0xff]
      %v1278 = vld [vmem:[%s1 + $0x178] sm:$0xff]
      %v1279 = vld [vmem:[%s1 + $0x180] sm:$0xff]
      %v1280 = vld [vmem:[%s1 + $0x188] sm:$0xff]
      %v1281 = vld [vmem:[%s1 + $0x190] sm:$0xff]
      %v1282 = vld [vmem:[%s1 + $0x198] sm:$0xff]
      %v1283 = vld [vmem:[%s1 + $0x1a0] sm:$0xff]
      %v1284 = vld [vmem:[%s1 + $0x1a8] sm:$0xff]
      %v1285 = vld [vmem:[%s1 + $0x1b0] sm:$0xff]
      %v1286 = vld [vmem:[%s1 + $0x1b8] sm:$0xff]
      %v1287 = vld [vmem:[%s1 + $0x1c0] sm:$0xff]
      %v1288 = vld [vmem:[%s1 + $0x1c8] sm:$0xff]
      %v1289 = vld [vmem:[%s1 + $0x1d0] sm:$0xff]
      %v1290 = vld [vmem:[%s1 + $0x1d8] sm:$0xff]
      %v1291 = vld [vmem:[%s1 + $0x1e0] sm:$0xff]
      %v1292 = vld [vmem:[%s1 + $0x1e8] sm:$0xff]
      %v1293 = vld [vmem:[%s1 + $0x1f0] sm:$0xff]
      %v1294 = vld [vmem:[%s1 + $0x1f8] sm:$0xff]
      %v1295 = vld [vmem:[%s1 + $0x200] sm:$0xff]
      %v1296 = vld [vmem:[%s1 + $0x208] sm:$0xff]
      %v1297 = vld [vmem:[%s1 + $0x210] sm:$0xff]
      %v1298 = vld [vmem:[%s1 + $0x218] sm:$0xff]
      %v1299 = vld [vmem:[%s1 + $0x220] sm:$0xff]
      %v1300 = vld [vmem:[%s1 + $0x228] sm:$0xff]
      %v1301 = vld [vmem:[%s1 + $0x230] sm:$0xff]
      %v1302 = vld [vmem:[%s1 + $0x238] sm:$0xff]
      %v1303 = vld [vmem:[%s1 + $0x240] sm:$0xff]
      %v1304 = vld [vmem:[%s1 + $0x248] sm:$0xff]
      %v1305 = vld [vmem:[%s1 + $0x250] sm:$0xff]
      %v1306 = vld [vmem:[%s1 + $0x258] sm:$0xff]
      %v1307 = vld [vmem:[%s1 + $0x260] sm:$0xff]
      %v1308 = vld [vmem:[%s1 + $0x268] sm:$0xff]
      %v1309 = vld [vmem:[%s1 + $0x270] sm:$0xff]
      %v1310 = vld [vmem:[%s1 + $0x278] sm:$0xff]
      %v1311 = vld [vmem:[%s1 + $0x280] sm:$0xff]
      %v1312 = vld [vmem:[%s1 + $0x288] sm:$0xff]
      %v1313 = vld [vmem:[%s1 + $0x290] sm:$0xff]
      %v1314 = vld [vmem:[%s1 + $0x298] sm:$0xff]
      %v1315 = vld [vmem:[%s1 + $0x2a0] sm:$0xff]
      %v1316 = vld [vmem:[%s1 + $0x2a8] sm:$0xff]
      %v1317 = vld [vmem:[%s1 + $0x2b0] sm:$0xff]
      %v1318 = vld [vmem:[%s1 + $0x2b8] sm:$0xff]
      %v1319 = vld [vmem:[%s1 + $0x2c0] sm:$0xff]
      %v1320 = vld [vmem:[%s1 + $0x2c8] sm:$0xff]
      %v1321 = vld [vmem:[%s1 + $0x2d0] sm:$0xff]
      %v1322 = vld [vmem:[%s1 + $0x2d8] sm:$0xff]
      %v1323 = vld [vmem:[%s1 + $0x2e0] sm:$0xff]
      %v1324 = vld [vmem:[%s1 + $0x2e8] sm:$0xff]
      %v1325 = vld [vmem:[%s1 + $0x2f0] sm:$0xff]
      %v1326 = vld [vmem:[%s1 + $0x2f8] sm:$0xff]
      %v1327 = vld [vmem:[%s1 + $0x300] sm:$0xff]
      %v1328 = vld [vmem:[%s1 + $0x308] sm:$0xff]
      %v1329 = vld [vmem:[%s1 + $0x310] sm:$0xff]
      %v1330 = vld [vmem:[%s1 + $0x318] sm:$0xff]
      %v1331 = vld [vmem:[%s1 + $0x320] sm:$0xff]
      %v1332 = vld [vmem:[%s1 + $0x328] sm:$0xff]
      %v1333 = vld [vmem:[%s1 + $0x330] sm:$0xff]
      %v1334 = vld [vmem:[%s1 + $0x338] sm:$0xff]
      %v1335 = vld [vmem:[%s1 + $0x340] sm:$0xff]
      %v1336 = vld [vmem:[%s1 + $0x348] sm:$0xff]
      %v1337 = vld [vmem:[%s1 + $0x350] sm:$0xff]
      %v1338 = vld [vmem:[%s1 + $0x358] sm:$0xff]
      %v1339 = vld [vmem:[%s1 + $0x360] sm:$0xff]
      %v1340 = vld [vmem:[%s1 + $0x368] sm:$0xff]
      %v1341 = vld [vmem:[%s1 + $0x370] sm:$0xff]
      %v1342 = vld [vmem:[%s1 + $0x378] sm:$0xff]
      %v1343 = vld [vmem:[%s1 + $0x380] sm:$0xff]
      %v1344 = vld [vmem:[%s1 + $0x388] sm:$0xff]
      %v1345 = vld [vmem:[%s1 + $0x390] sm:$0xff]
      %v1346 = vld [vmem:[%s1 + $0x398] sm:$0xff]
      %v1347 = vld [vmem:[%s1 + $0x3a0] sm:$0xff]
      %v1348 = vld [vmem:[%s1 + $0x3a8] sm:$0xff]
      %v1349 = vld [vmem:[%s1 + $0x3b0] sm:$0xff]
      %v1350 = vld [vmem:[%s1 + $0x3b8] sm:$0xff]
      %v1351 = vld [vmem:[%s1 + $0x3c0] sm:$0xff]
      %v1352 = vld [vmem:[%s1 + $0x3c8] sm:$0xff]
      %v1353 = vld [vmem:[%s1 + $0x3d0] sm:$0xff]
      %v1354 = vld [vmem:[%s1 + $0x3d8] sm:$0xff]
      %v1355 = vld [vmem:[%s1 + $0x3e0] sm:$0xff]
      %v1356 = vld [vmem:[%s1 + $0x3e8] sm:$0xff]
      %v1357 = vld [vmem:[%s1 + $0x3f0] sm:$0xff]
      %v1358 = vld [vmem:[%s1 + $0x3f8] sm:$0xff]
      %v1359 = vld [vmem:[%s1 + $0x400] sm:$0xff]
      %v1360 = vld [vmem:[%s1 + $0x408] sm:$0xff]
      %v1361 = vld [vmem:[%s1 + $0x410] sm:$0xff]
      %v1362 = vld [vmem:[%s1 + $0x418] sm:$0xff]
      %v1363 = vld [vmem:[%s1 + $0x420] sm:$0xff]
      %v1364 = vld [vmem:[%s1 + $0x428] sm:$0xff]
      %v1365 = vld [vmem:[%s1 + $0x430] sm:$0xff]
      %v1366 = vld [vmem:[%s1 + $0x438] sm:$0xff]
      %v1367 = vld [vmem:[%s1 + $0x440] sm:$0xff]
      %v1368 = vld [vmem:[%s1 + $0x448] sm:$0xff]
      %v1369 = vld [vmem:[%s1 + $0x450] sm:$0xff]
      %v1370 = vld [vmem:[%s1 + $0x458] sm:$0xff]
      %v1371 = vld [vmem:[%s1 + $0x460] sm:$0xff]
      %v1372 = vld [vmem:[%s1 + $0x468] sm:$0xff]
      %v1373 = vld [vmem:[%s1 + $0x470] sm:$0xff]
      %v1374 = vld [vmem:[%s1 + $0x478] sm:$0xff]
      %v1375 = vld [vmem:[%s1 + $0x480] sm:$0xff]
      %v1376 = vld [vmem:[%s1 + $0x488] sm:$0xff]
      %v1377 = vld [vmem:[%s1 + $0x490] sm:$0xff]
      %v1378 = vld [vmem:[%s1 + $0x498] sm:$0xff]
      %v1379 = vld [vmem:[%s1 + $0x4a0] sm:$0xff]
      %v1380 = vld [vmem:[%s1 + $0x4a8] sm:$0xff]
      %v1381 = vld [vmem:[%s1 + $0x4b0] sm:$0xff]
      %v1382 = vld [vmem:[%s1 + $0x4b8] sm:$0xff]
      %v1383 = vld [vmem:[%s1 + $0x4c0] sm:$0xff]
      %v1384 = vld [vmem:[%s1 + $0x4c8] sm:$0xff]
      %v1385 = vld [vmem:[%s1 + $0x4d0] sm:$0xff]
      %v1386 = vld [vmem:[%s1 + $0x4d8] sm:$0xff]
      %v1387 = vld [vmem:[%s1 + $0x4e0] sm:$0xff]
      %v1388 = vld [vmem:[%s1 + $0x4e8] sm:$0xff]
      %v1389 = vld [vmem:[%s1 + $0x4f0] sm:$0xff]
      %v1390 = vld [vmem:[%s1 + $0x4f8] sm:$0xff]
      %v1391 = vld [vmem:[%s1 + $0x500] sm:$0xff]
      %v1392 = vld [vmem:[%s1 + $0x508] sm:$0xff]
      %v1393 = vld [vmem:[%s1 + $0x510] sm:$0xff]
      %v1394 = vld [vmem:[%s1 + $0x518] sm:$0xff]
      %v1395 = vld [vmem:[%s1 + $0x520] sm:$0xff]
      %v1396 = vld [vmem:[%s1 + $0x528] sm:$0xff]
      %v1397 = vld [vmem:[%s1 + $0x530] sm:$0xff]
      %v1398 = vld [vmem:[%s1 + $0x538] sm:$0xff]
      %v1399 = vld [vmem:[%s1 + $0x540] sm:$0xff]
      %v1400 = vld [vmem:[%s1 + $0x548] sm:$0xff]
      %v1401 = vld [vmem:[%s1 + $0x550] sm:$0xff]
      %v1402 = vld [vmem:[%s1 + $0x558] sm:$0xff]
      %v1403 = vld [vmem:[%s1 + $0x560] sm:$0xff]
      %v1404 = vld [vmem:[%s1 + $0x568] sm:$0xff]
      %v1405 = vld [vmem:[%s1 + $0x570] sm:$0xff]
      %v1406 = vld [vmem:[%s1 + $0x578] sm:$0xff]
      %v1407 = vld [vmem:[%s1 + $0x580] sm:$0xff]
      %v1408 = vld [vmem:[%s1 + $0x588] sm:$0xff]
      %v1409 = vld [vmem:[%s1 + $0x590] sm:$0xff]
      %v1410 = vld [vmem:[%s1 + $0x598] sm:$0xff]
      %v1411 = vld [vmem:[%s1 + $0x5a0] sm:$0xff]
      %v1412 = vld [vmem:[%s1 + $0x5a8] sm:$0xff]
      %v1413 = vld [vmem:[%s1 + $0x5b0] sm:$0xff]
      %v1414 = vld [vmem:[%s1 + $0x5b8] sm:$0xff]
      %v1415 = vld [vmem:[%s1 + $0x5c0] sm:$0xff]
      %v1416 = vld [vmem:[%s1 + $0x5c8] sm:$0xff]
      %v1417 = vld [vmem:[%s1 + $0x5d0] sm:$0xff]
      %v1418 = vld [vmem:[%s1 + $0x5d8] sm:$0xff]
      %v1419 = vld [vmem:[%s1 + $0x5e0] sm:$0xff]
      %v1420 = vld [vmem:[%s1 + $0x5e8] sm:$0xff]
      %v1421 = vld [vmem:[%s1 + $0x5f0] sm:$0xff]
      %v1422 = vld [vmem:[%s1 + $0x5f8] sm:$0xff]
      %v1423 = vld [vmem:[%s1 + $0x600] sm:$0xff]
      %v1424 = vld [vmem:[%s1 + $0x608] sm:$0xff]
      %v1425 = vld [vmem:[%s1 + $0x610] sm:$0xff]
      %v1426 = vld [vmem:[%s1 + $0x618] sm:$0xff]
      %v1427 = vld [vmem:[%s1 + $0x620] sm:$0xff]
      %v1428 = vld [vmem:[%s1 + $0x628] sm:$0xff]
      %v1429 = vld [vmem:[%s1 + $0x630] sm:$0xff]
      %v1430 = vld [vmem:[%s1 + $0x638] sm:$0xff]
      %v1431 = vld [vmem:[%s1 + $0x640] sm:$0xff]
      %v1432 = vld [vmem:[%s1 + $0x648] sm:$0xff]
      %v1433 = vld [vmem:[%s1 + $0x650] sm:$0xff]
      %v1434 = vld [vmem:[%s1 + $0x658] sm:$0xff]
      %v1435 = vld [vmem:[%s1 + $0x660] sm:$0xff]
      %v1436 = vld [vmem:[%s1 + $0x668] sm:$0xff]
      %v1437 = vld [vmem:[%s1 + $0x670] sm:$0xff]
      %v1438 = vld [vmem:[%s1 + $0x678] sm:$0xff]
      %v1439 = vld [vmem:[%s1 + $0x680] sm:$0xff]
      %v1440 = vld [vmem:[%s1 + $0x688] sm:$0xff]
      %v1441 = vld [vmem:[%s1 + $0x690] sm:$0xff]
      %v1442 = vld [vmem:[%s1 + $0x698] sm:$0xff]
      %v1443 = vld [vmem:[%s1 + $0x6a0] sm:$0xff]
      %v1444 = vld [vmem:[%s1 + $0x6a8] sm:$0xff]
      %v1445 = vld [vmem:[%s1 + $0x6b0] sm:$0xff]
      %v1446 = vld [vmem:[%s1 + $0x6b8] sm:$0xff]
      %v1447 = vld [vmem:[%s1 + $0x6c0] sm:$0xff]
      %v1448 = vld [vmem:[%s1 + $0x6c8] sm:$0xff]
      %v1449 = vld [vmem:[%s1 + $0x6d0] sm:$0xff]
      %v1450 = vld [vmem:[%s1 + $0x6d8] sm:$0xff]
      %v1451 = vld [vmem:[%s1 + $0x6e0] sm:$0xff]
      %v1452 = vld [vmem:[%s1 + $0x6e8] sm:$0xff]
      %v1453 = vld [vmem:[%s1 + $0x6f0] sm:$0xff]
      %v1454 = vld [vmem:[%s1 + $0x6f8] sm:$0xff]
      %v1455 = vld [vmem:[%s1 + $0x700] sm:$0xff]
      %v1456 = vld [vmem:[%s1 + $0x708] sm:$0xff]
      %v1457 = vld [vmem:[%s1 + $0x710] sm:$0xff]
      %v1458 = vld [vmem:[%s1 + $0x718] sm:$0xff]
      %v1459 = vld [vmem:[%s1 + $0x720] sm:$0xff]
      %v1460 = vld [vmem:[%s1 + $0x728] sm:$0xff]
      %v1461 = vld [vmem:[%s1 + $0x730] sm:$0xff]
      %v1462 = vld [vmem:[%s1 + $0x738] sm:$0xff]
      %v1463 = vld [vmem:[%s1 + $0x740] sm:$0xff]
      %v1464 = vld [vmem:[%s1 + $0x748] sm:$0xff]
      %v1465 = vld [vmem:[%s1 + $0x750] sm:$0xff]
      %v1466 = vld [vmem:[%s1 + $0x758] sm:$0xff]
      %v1467 = vld [vmem:[%s1 + $0x760] sm:$0xff]
      %v1468 = vld [vmem:[%s1 + $0x768] sm:$0xff]
      %v1469 = vld [vmem:[%s1 + $0x770] sm:$0xff]
      %v1470 = vld [vmem:[%s1 + $0x778] sm:$0xff]
      %v1471 = vld [vmem:[%s1 + $0x780] sm:$0xff]
      %v1472 = vld [vmem:[%s1 + $0x788] sm:$0xff]
      %v1473 = vld [vmem:[%s1 + $0x790] sm:$0xff]
      %v1474 = vld [vmem:[%s1 + $0x798] sm:$0xff]
      %v1475 = vld [vmem:[%s1 + $0x7a0] sm:$0xff]
      %v1476 = vld [vmem:[%s1 + $0x7a8] sm:$0xff]
      %v1477 = vld [vmem:[%s1 + $0x7b0] sm:$0xff]
      %v1478 = vld [vmem:[%s1 + $0x7b8] sm:$0xff]
      %v1479 = vld [vmem:[%s1 + $0x7c0] sm:$0xff]
      %v1480 = vld [vmem:[%s1 + $0x7c8] sm:$0xff]
      %v1481 = vld [vmem:[%s1 + $0x7d0] sm:$0xff]
      %v1482 = vld [vmem:[%s1 + $0x7d8] sm:$0xff]
      %v1483 = vld [vmem:[%s1 + $0x7e0] sm:$0xff]
      %v1484 = vld [vmem:[%s1 + $0x7e8] sm:$0xff]
      %v1485 = vld [vmem:[%s1 + $0x7f0] sm:$0xff]
      %v1486 = vld [vmem:[%s1 + $0x7f8] sm:$0xff]
      %v1487 = vld [vmem:[%s1 + $0x800] sm:$0xff]
      %v1488 = vld [vmem:[%s1 + $0x808] sm:$0xff]
      %v1489 = vld [vmem:[%s1 + $0x810] sm:$0xff]
      %v1490 = vld [vmem:[%s1 + $0x818] sm:$0xff]
      %v1491 = vld [vmem:[%s1 + $0x820] sm:$0xff]
      %v1492 = vld [vmem:[%s1 + $0x828] sm:$0xff]
      %v1493 = vld [vmem:[%s1 + $0x830] sm:$0xff]
      %v1494 = vld [vmem:[%s1 + $0x838] sm:$0xff]
      %v1495 = vld [vmem:[%s1 + $0x840] sm:$0xff]
      %v1496 = vld [vmem:[%s1 + $0x848] sm:$0xff]
      %v1497 = vld [vmem:[%s1 + $0x850] sm:$0xff]
      %v1498 = vld [vmem:[%s1 + $0x858] sm:$0xff]
      %v1499 = vld [vmem:[%s1 + $0x860] sm:$0xff]
      %v1500 = vld [vmem:[%s1 + $0x868] sm:$0xff]
      %v1501 = vld [vmem:[%s1 + $0x870] sm:$0xff]
      %v1502 = vld [vmem:[%s1 + $0x878] sm:$0xff]
      %v1503 = vld [vmem:[%s1 + $0x880] sm:$0xff]
      %v1504 = vld [vmem:[%s1 + $0x888] sm:$0xff]
      %v1505 = vld [vmem:[%s1 + $0x890] sm:$0xff]
      %v1506 = vld [vmem:[%s1 + $0x898] sm:$0xff]
      %v1507 = vld [vmem:[%s1 + $0x8a0] sm:$0xff]
      %v1508 = vld [vmem:[%s1 + $0x8a8] sm:$0xff]
      %v1509 = vld [vmem:[%s1 + $0x8b0] sm:$0xff]
      %v1510 = vld [vmem:[%s1 + $0x8b8] sm:$0xff]
      %v1511 = vld [vmem:[%s1 + $0x8c0] sm:$0xff]
      %v1512 = vld [vmem:[%s1 + $0x8c8] sm:$0xff]
      %v1513 = vld [vmem:[%s1 + $0x8d0] sm:$0xff]
      %v1514 = vld [vmem:[%s1 + $0x8d8] sm:$0xff]
      %v1515 = vld [vmem:[%s1 + $0x8e0] sm:$0xff]
      %v1516 = vld [vmem:[%s1 + $0x8e8] sm:$0xff]
      %v1517 = vld [vmem:[%s1 + $0x8f0] sm:$0xff]
      %v1518 = vld [vmem:[%s1 + $0x8f8] sm:$0xff]
      %v1519 = vld [vmem:[%s1 + $0x900] sm:$0xff]
      %v1520 = vld [vmem:[%s1 + $0x908] sm:$0xff]
      %v1521 = vld [vmem:[%s1 + $0x910] sm:$0xff]
      %v1522 = vld [vmem:[%s1 + $0x918] sm:$0xff]
      %v1523 = vld [vmem:[%s1 + $0x920] sm:$0xff]
      %v1524 = vld [vmem:[%s1 + $0x928] sm:$0xff]
      %v1525 = vld [vmem:[%s1 + $0x930] sm:$0xff]
      %v1526 = vld [vmem:[%s1 + $0x938] sm:$0xff]
      %v1527 = vld [vmem:[%s1 + $0x940] sm:$0xff]
      %v1528 = vld [vmem:[%s1 + $0x948] sm:$0xff]
      %v1529 = vld [vmem:[%s1 + $0x950] sm:$0xff]
      %v1530 = vld [vmem:[%s1 + $0x958] sm:$0xff]
      %v1531 = vld [vmem:[%s1 + $0x960] sm:$0xff]
      %v1532 = vld [vmem:[%s1 + $0x968] sm:$0xff]
      %v1533 = vld [vmem:[%s1 + $0x970] sm:$0xff]
      %v1534 = vld [vmem:[%s1 + $0x978] sm:$0xff]
      %v1535 = vld [vmem:[%s1 + $0x980] sm:$0xff]
      %v1536 = vld [vmem:[%s1 + $0x988] sm:$0xff]
      %v1537 = vld [vmem:[%s1 + $0x990] sm:$0xff]
      %v1538 = vld [vmem:[%s1 + $0x998] sm:$0xff]
      %v1539 = vld [vmem:[%s1 + $0x9a0] sm:$0xff]
      %v1540 = vld [vmem:[%s1 + $0x9a8] sm:$0xff]
      %v1541 = vld [vmem:[%s1 + $0x9b0] sm:$0xff]
      %v1542 = vld [vmem:[%s1 + $0x9b8] sm:$0xff]
      %v1543 = vld [vmem:[%s1 + $0x9c0] sm:$0xff]
      %v1544 = vld [vmem:[%s1 + $0x9c8] sm:$0xff]
      %v1545 = vld [vmem:[%s1 + $0x9d0] sm:$0xff]
      %v1546 = vld [vmem:[%s1 + $0x9d8] sm:$0xff]
      %v1547 = vld [vmem:[%s1 + $0x9e0] sm:$0xff]
      %v1548 = vld [vmem:[%s1 + $0x9e8] sm:$0xff]
      %v1549 = vld [vmem:[%s1 + $0x9f0] sm:$0xff]
      %v1550 = vld [vmem:[%s1 + $0x9f8] sm:$0xff]
      %v1551 = vld [vmem:[%s1 + $0xa00] sm:$0xff]
      %v1552 = vld [vmem:[%s1 + $0xa08] sm:$0xff]
      %v1553 = vld [vmem:[%s1 + $0xa10] sm:$0xff]
      %v1554 = vld [vmem:[%s1 + $0xa18] sm:$0xff]
      %v1555 = vld [vmem:[%s1 + $0xa20] sm:$0xff]
      %v1556 = vld [vmem:[%s1 + $0xa28] sm:$0xff]
      %v1557 = vld [vmem:[%s1 + $0xa30] sm:$0xff]
      %v1558 = vld [vmem:[%s1 + $0xa38] sm:$0xff]
      %v1559 = vld [vmem:[%s1 + $0xa40] sm:$0xff]
      %v1560 = vld [vmem:[%s1 + $0xa48] sm:$0xff]
      %v1561 = vld [vmem:[%s1 + $0xa50] sm:$0xff]
      %v1562 = vld [vmem:[%s1 + $0xa58] sm:$0xff]
      %v1563 = vld [vmem:[%s1 + $0xa60] sm:$0xff]
      %v1564 = vld [vmem:[%s1 + $0xa68] sm:$0xff]
      %v1565 = vld [vmem:[%s1 + $0xa70] sm:$0xff]
      %v1566 = vld [vmem:[%s1 + $0xa78] sm:$0xff]
      %v1567 = vld [vmem:[%s1 + $0xa80] sm:$0xff]
      %v1568 = vld [vmem:[%s1 + $0xa88] sm:$0xff]
      %v1569 = vld [vmem:[%s1 + $0xa90] sm:$0xff]
      %v1570 = vld [vmem:[%s1 + $0xa98] sm:$0xff]
      %v1571 = vld [vmem:[%s1 + $0xaa0] sm:$0xff]
      %v1572 = vld [vmem:[%s1 + $0xaa8] sm:$0xff]
      %v1573 = vld [vmem:[%s1 + $0xab0] sm:$0xff]
      %v1574 = vld [vmem:[%s1 + $0xab8] sm:$0xff]
      %v1575 = vld [vmem:[%s1 + $0xac0] sm:$0xff]
      %v1576 = vld [vmem:[%s1 + $0xac8] sm:$0xff]
      %v1577 = vld [vmem:[%s1 + $0xad0] sm:$0xff]
      %v1578 = vld [vmem:[%s1 + $0xad8] sm:$0xff]
      %v1579 = vld [vmem:[%s1 + $0xae0] sm:$0xff]
      %v1580 = vld [vmem:[%s1 + $0xae8] sm:$0xff]
      %v1581 = vld [vmem:[%s1 + $0xaf0] sm:$0xff]
      %v1582 = vld [vmem:[%s1 + $0xaf8] sm:$0xff]
      %v1583 = vld [vmem:[%s1 + $0xb00] sm:$0xff]
      %v1584 = vld [vmem:[%s1 + $0xb08] sm:$0xff]
      %v1585 = vld [vmem:[%s1 + $0xb10] sm:$0xff]
      %v1586 = vld [vmem:[%s1 + $0xb18] sm:$0xff]
      %v1587 = vld [vmem:[%s1 + $0xb20] sm:$0xff]
      %v1588 = vld [vmem:[%s1 + $0xb28] sm:$0xff]
      %v1589 = vld [vmem:[%s1 + $0xb30] sm:$0xff]
      %v1590 = vld [vmem:[%s1 + $0xb38] sm:$0xff]
      %v1591 = vld [vmem:[%s1 + $0xb40] sm:$0xff]
      %v1592 = vld [vmem:[%s1 + $0xb48] sm:$0xff]
      %v1593 = vld [vmem:[%s1 + $0xb50] sm:$0xff]
      %v1594 = vld [vmem:[%s1 + $0xb58] sm:$0xff]
      %v1595 = vld [vmem:[%s1 + $0xb60] sm:$0xff]
      %v1596 = vld [vmem:[%s1 + $0xb68] sm:$0xff]
      %v1597 = vld [vmem:[%s1 + $0xb70] sm:$0xff]
      %v1598 = vld [vmem:[%s1 + $0xb78] sm:$0xff]
      %v1599 = vld [vmem:[%s1 + $0xb80] sm:$0xff]
      %v1600 = vld [vmem:[%s1 + $0xb88] sm:$0xff]
      %v1601 = vld [vmem:[%s1 + $0xb90] sm:$0xff]
      %v1602 = vld [vmem:[%s1 + $0xb98] sm:$0xff]
      %v1603 = vld [vmem:[%s1 + $0xba0] sm:$0xff]
      %v1604 = vld [vmem:[%s1 + $0xba8] sm:$0xff]
      %v1605 = vld [vmem:[%s1 + $0xbb0] sm:$0xff]
      %v1606 = vld [vmem:[%s1 + $0xbb8] sm:$0xff]
      %v1607 = vld [vmem:[%s1 + $0xbc0] sm:$0xff]
      %v1608 = vld [vmem:[%s1 + $0xbc8] sm:$0xff]
      %v1609 = vld [vmem:[%s1 + $0xbd0] sm:$0xff]
      %v1610 = vld [vmem:[%s1 + $0xbd8] sm:$0xff]
      %v1611 = vld [vmem:[%s1 + $0xbe0] sm:$0xff]
      %v1612 = vld [vmem:[%s1 + $0xbe8] sm:$0xff]
      %v1613 = vld [vmem:[%s1 + $0xbf0] sm:$0xff]
      %v1614 = vld [vmem:[%s1 + $0xbf8] sm:$0xff]
      %v1615 = vld [vmem:[%s1 + $0xc00] sm:$0xff]
      %v1616 = vld [vmem:[%s1 + $0xc08] sm:$0xff]
      %v1617 = vld [vmem:[%s1 + $0xc10] sm:$0xff]
      %v1618 = vld [vmem:[%s1 + $0xc18] sm:$0xff]
      %v1619 = vld [vmem:[%s1 + $0xc20] sm:$0xff]
      %v1620 = vld [vmem:[%s1 + $0xc28] sm:$0xff]
      %v1621 = vld [vmem:[%s1 + $0xc30] sm:$0xff]
      %v1622 = vld [vmem:[%s1 + $0xc38] sm:$0xff]
      %v1623 = vld [vmem:[%s1 + $0xc40] sm:$0xff]
      %v1624 = vld [vmem:[%s1 + $0xc48] sm:$0xff]
      %v1625 = vld [vmem:[%s1 + $0xc50] sm:$0xff]
      %v1626 = vld [vmem:[%s1 + $0xc58] sm:$0xff]
      %v1627 = vld [vmem:[%s1 + $0xc60] sm:$0xff]
      %v1628 = vld [vmem:[%s1 + $0xc68] sm:$0xff]
      %v1629 = vld [vmem:[%s1 + $0xc70] sm:$0xff]
      %v1630 = vld [vmem:[%s1 + $0xc78] sm:$0xff]
      %v1631 = vld [vmem:[%s1 + $0xc80] sm:$0xff]
      %v1632 = vld [vmem:[%s1 + $0xc88] sm:$0xff]
      %v1633 = vld [vmem:[%s1 + $0xc90] sm:$0xff]
      %v1634 = vld [vmem:[%s1 + $0xc98] sm:$0xff]
      %v1635 = vld [vmem:[%s1 + $0xca0] sm:$0xff]
      %v1636 = vld [vmem:[%s1 + $0xca8] sm:$0xff]
      %v1637 = vld [vmem:[%s1 + $0xcb0] sm:$0xff]
      %v1638 = vld [vmem:[%s1 + $0xcb8] sm:$0xff]
      %v1639 = vld [vmem:[%s1 + $0xcc0] sm:$0xff]
      %v1640 = vld [vmem:[%s1 + $0xcc8] sm:$0xff]
      %v1641 = vld [vmem:[%s1 + $0xcd0] sm:$0xff]
      %v1642 = vld [vmem:[%s1 + $0xcd8] sm:$0xff]
      %v1643 = vld [vmem:[%s1 + $0xce0] sm:$0xff]
      %v1644 = vld [vmem:[%s1 + $0xce8] sm:$0xff]
      %v1645 = vld [vmem:[%s1 + $0xcf0] sm:$0xff]
      %v1646 = vld [vmem:[%s1 + $0xcf8] sm:$0xff]
      %v1647 = vld [vmem:[%s1 + $0xd00] sm:$0xff]
      %v1648 = vld [vmem:[%s1 + $0xd08] sm:$0xff]
      %v1649 = vld [vmem:[%s1 + $0xd10] sm:$0xff]
      %v1650 = vld [vmem:[%s1 + $0xd18] sm:$0xff]
      %v1651 = vld [vmem:[%s1 + $0xd20] sm:$0xff]
      %v1652 = vld [vmem:[%s1 + $0xd28] sm:$0xff]
      %v1653 = vld [vmem:[%s1 + $0xd30] sm:$0xff]
      %v1654 = vld [vmem:[%s1 + $0xd38] sm:$0xff]
      %v1655 = vld [vmem:[%s1 + $0xd40] sm:$0xff]
      %v1656 = vld [vmem:[%s1 + $0xd48] sm:$0xff]
      %v1657 = vld [vmem:[%s1 + $0xd50] sm:$0xff]
      %v1658 = vld [vmem:[%s1 + $0xd58] sm:$0xff]
      %v1659 = vld [vmem:[%s1 + $0xd60] sm:$0xff]
      %v1660 = vld [vmem:[%s1 + $0xd68] sm:$0xff]
      %v1661 = vld [vmem:[%s1 + $0xd70] sm:$0xff]
      %v1662 = vld [vmem:[%s1 + $0xd78] sm:$0xff]
      %v1663 = vld [vmem:[%s1 + $0xd80] sm:$0xff]
      %v1664 = vld [vmem:[%s1 + $0xd88] sm:$0xff]
      %v1665 = vld [vmem:[%s1 + $0xd90] sm:$0xff]
      %v1666 = vld [vmem:[%s1 + $0xd98] sm:$0xff]
      %v1667 = vld [vmem:[%s1 + $0xda0] sm:$0xff]
      %v1668 = vld [vmem:[%s1 + $0xda8] sm:$0xff]
      %v1669 = vld [vmem:[%s1 + $0xdb0] sm:$0xff]
      %v1670 = vld [vmem:[%s1 + $0xdb8] sm:$0xff]
      %v1671 = vld [vmem:[%s1 + $0xdc0] sm:$0xff]
      %v1672 = vld [vmem:[%s1 + $0xdc8] sm:$0xff]
      %v1673 = vld [vmem:[%s1 + $0xdd0] sm:$0xff]
      %v1674 = vld [vmem:[%s1 + $0xdd8] sm:$0xff]
      %v1675 = vld [vmem:[%s1 + $0xde0] sm:$0xff]
      %v1676 = vld [vmem:[%s1 + $0xde8] sm:$0xff]
      %v1677 = vld [vmem:[%s1 + $0xdf0] sm:$0xff]
      %v1678 = vld [vmem:[%s1 + $0xdf8] sm:$0xff]
      %v1679 = vld [vmem:[%s1 + $0xe00] sm:$0xff]
      %v1680 = vld [vmem:[%s1 + $0xe08] sm:$0xff]
      %v1681 = vld [vmem:[%s1 + $0xe10] sm:$0xff]
      %v1682 = vld [vmem:[%s1 + $0xe18] sm:$0xff]
      %v1683 = vld [vmem:[%s1 + $0xe20] sm:$0xff]
      %v1684 = vld [vmem:[%s1 + $0xe28] sm:$0xff]
      %v1685 = vld [vmem:[%s1 + $0xe30] sm:$0xff]
      %v1686 = vld [vmem:[%s1 + $0xe38] sm:$0xff]
      %v1687 = vld [vmem:[%s1 + $0xe40] sm:$0xff]
      %v1688 = vld [vmem:[%s1 + $0xe48] sm:$0xff]
      %v1689 = vld [vmem:[%s1 + $0xe50] sm:$0xff]
      %v1690 = vld [vmem:[%s1 + $0xe58] sm:$0xff]
      %v1691 = vld [vmem:[%s1 + $0xe60] sm:$0xff]
      %v1692 = vld [vmem:[%s1 + $0xe68] sm:$0xff]
      %v1693 = vld [vmem:[%s1 + $0xe70] sm:$0xff]
      %v1694 = vld [vmem:[%s1 + $0xe78] sm:$0xff]
      %v1695 = vld [vmem:[%s1 + $0xe80] sm:$0xff]
      %v1696 = vld [vmem:[%s1 + $0xe88] sm:$0xff]
      %v1697 = vld [vmem:[%s1 + $0xe90] sm:$0xff]
      %v1698 = vld [vmem:[%s1 + $0xe98] sm:$0xff]
      %v1699 = vld [vmem:[%s1 + $0xea0] sm:$0xff]
      %v1700 = vld [vmem:[%s1 + $0xea8] sm:$0xff]
      %v1701 = vld [vmem:[%s1 + $0xeb0] sm:$0xff]
      %v1702 = vld [vmem:[%s1 + $0xeb8] sm:$0xff]
      %v1703 = vld [vmem:[%s1 + $0xec0] sm:$0xff]
      %v1704 = vld [vmem:[%s1 + $0xec8] sm:$0xff]
      %v1705 = vld [vmem:[%s1 + $0xed0] sm:$0xff]
      %v1706 = vld [vmem:[%s1 + $0xed8] sm:$0xff]
      %v1707 = vld [vmem:[%s1 + $0xee0] sm:$0xff]
      %v1708 = vld [vmem:[%s1 + $0xee8] sm:$0xff]
      %v1709 = vld [vmem:[%s1 + $0xef0] sm:$0xff]
      %v1710 = vld [vmem:[%s1 + $0xef8] sm:$0xff]
      %v1711 = vld [vmem:[%s1 + $0xf00] sm:$0xff]
      %v1712 = vld [vmem:[%s1 + $0xf08] sm:$0xff]
      %v1713 = vld [vmem:[%s1 + $0xf10] sm:$0xff]
      %v1714 = vld [vmem:[%s1 + $0xf18] sm:$0xff]
      %v1715 = vld [vmem:[%s1 + $0xf20] sm:$0xff]
      %v1716 = vld [vmem:[%s1 + $0xf28] sm:$0xff]
      %v1717 = vld [vmem:[%s1 + $0xf30] sm:$0xff]
      %v1718 = vld [vmem:[%s1 + $0xf38] sm:$0xff]
      %v1719 = vld [vmem:[%s1 + $0xf40] sm:$0xff]
      %v1720 = vld [vmem:[%s1 + $0xf48] sm:$0xff]
      %v1721 = vld [vmem:[%s1 + $0xf50] sm:$0xff]
      %v1722 = vld [vmem:[%s1 + $0xf58] sm:$0xff]
      %v1723 = vld [vmem:[%s1 + $0xf60] sm:$0xff]
      %v1724 = vld [vmem:[%s1 + $0xf68] sm:$0xff]
      %v1725 = vld [vmem:[%s1 + $0xf70] sm:$0xff]
      %v1726 = vld [vmem:[%s1 + $0xf78] sm:$0xff]
      %v1727 = vld [vmem:[%s1 + $0xf80] sm:$0xff]
      %v1728 = vld [vmem:[%s1 + $0xf88] sm:$0xff]
      %v1729 = vld [vmem:[%s1 + $0xf90] sm:$0xff]
      %v1730 = vld [vmem:[%s1 + $0xf98] sm:$0xff]
      %v1731 = vld [vmem:[%s1 + $0xfa0] sm:$0xff]
      %v1732 = vld [vmem:[%s1 + $0xfa8] sm:$0xff]
      %v1733 = vld [vmem:[%s1 + $0xfb0] sm:$0xff]
      %v1734 = vld [vmem:[%s1 + $0xfb8] sm:$0xff]
      %v1735 = vld [vmem:[%s1 + $0xfc0] sm:$0xff]
      %v1736 = vld [vmem:[%s1 + $0xfc8] sm:$0xff]
      %v1737 = vld [vmem:[%s1 + $0xfd0] sm:$0xff]
      %v1738 = vld [vmem:[%s1 + $0xfd8] sm:$0xff]
      %v1739 = vld [vmem:[%s1 + $0xfe0] sm:$0xff]
      %v1740 = vld [vmem:[%s1 + $0xfe8] sm:$0xff]
      %v1741 = vld [vmem:[%s1 + $0xff0] sm:$0xff]
      %v1742 = vld [vmem:[%s1 + $0xff8] sm:$0xff]
      %v1743 = vld [vmem:[%s1 + $0x1000] sm:$0xff]
      %v1744 = vld [vmem:[%s1 + $0x1008] sm:$0xff]
      %v1745 = vld [vmem:[%s1 + $0x1010] sm:$0xff]
      %v1746 = vld [vmem:[%s1 + $0x1018] sm:$0xff]
      %v1747 = vld [vmem:[%s1 + $0x1020] sm:$0xff]
      %v1748 = vld [vmem:[%s1 + $0x1028] sm:$0xff]
      %v1749 = vld [vmem:[%s1 + $0x1030] sm:$0xff]
      %v1750 = vld [vmem:[%s1 + $0x1038] sm:$0xff]
      %v1751 = vld [vmem:[%s1 + $0x1040] sm:$0xff]
      %v1752 = vld [vmem:[%s1 + $0x1048] sm:$0xff]
      %v1753 = vld [vmem:[%s1 + $0x1050] sm:$0xff]
      %v1754 = vld [vmem:[%s1 + $0x1058] sm:$0xff]
      %v1755 = vld [vmem:[%s1 + $0x1060] sm:$0xff]
      %v1756 = vld [vmem:[%s1 + $0x1068] sm:$0xff]
      %v1757 = vld [vmem:[%s1 + $0x1070] sm:$0xff]
      %v1758 = vld [vmem:[%s1 + $0x1078] sm:$0xff]
      %v1759 = vld [vmem:[%s1 + $0x1080] sm:$0xff]
      %v1760 = vld [vmem:[%s1 + $0x1088] sm:$0xff]
      %v1761 = vld [vmem:[%s1 + $0x1090] sm:$0xff]
      %v1762 = vld [vmem:[%s1 + $0x1098] sm:$0xff]
      %v1763 = vld [vmem:[%s1 + $0x10a0] sm:$0xff]
      %v1764 = vld [vmem:[%s1 + $0x10a8] sm:$0xff]
      %v1765 = vld [vmem:[%s1 + $0x10b0] sm:$0xff]
      %v1766 = vld [vmem:[%s1 + $0x10b8] sm:$0xff]
      %v1767 = vld [vmem:[%s1 + $0x10c0] sm:$0xff]
      %v1768 = vld [vmem:[%s1 + $0x10c8] sm:$0xff]
      %v1769 = vld [vmem:[%s1 + $0x10d0] sm:$0xff]
      %v1770 = vld [vmem:[%s1 + $0x10d8] sm:$0xff]
      %v1771 = vld [vmem:[%s1 + $0x10e0] sm:$0xff]
      %v1772 = vld [vmem:[%s1 + $0x10e8] sm:$0xff]
      %v1773 = vld [vmem:[%s1 + $0x10f0] sm:$0xff]
      %v1774 = vld [vmem:[%s1 + $0x10f8] sm:$0xff]
      %v1775 = vld [vmem:[%s1 + $0x1100] sm:$0xff]
      %v1776 = vld [vmem:[%s1 + $0x1108] sm:$0xff]
      %v1777 = vld [vmem:[%s1 + $0x1110] sm:$0xff]
      %v1778 = vld [vmem:[%s1 + $0x1118] sm:$0xff]
      %v1779 = vld [vmem:[%s1 + $0x1120] sm:$0xff]
      %v1780 = vld [vmem:[%s1 + $0x1128] sm:$0xff]
      %v1781 = vld [vmem:[%s1 + $0x1130] sm:$0xff]
      %v1782 = vld [vmem:[%s1 + $0x1138] sm:$0xff]
      %v1783 = vld [vmem:[%s1 + $0x1140] sm:$0xff]
      %v1784 = vld [vmem:[%s1 + $0x1148] sm:$0xff]
      %v1785 = vld [vmem:[%s1 + $0x1150] sm:$0xff]
      %v1786 = vld [vmem:[%s1 + $0x1158] sm:$0xff]
      %v1787 = vld [vmem:[%s1 + $0x1160] sm:$0xff]
      %v1788 = vld [vmem:[%s1 + $0x1168] sm:$0xff]
      %v1789 = vld [vmem:[%s1 + $0x1170] sm:$0xff]
      %v1790 = vld [vmem:[%s1 + $0x1178] sm:$0xff]
      %v1791 = vld [vmem:[%s1 + $0x1180] sm:$0xff]
      %v1792 = vld [vmem:[%s1 + $0x1188] sm:$0xff]
      %v1793 = vld [vmem:[%s1 + $0x1190] sm:$0xff]
      %v1794 = vld [vmem:[%s1 + $0x1198] sm:$0xff]
      %v1795 = vld [vmem:[%s1 + $0x11a0] sm:$0xff]
      %v1796 = vld [vmem:[%s1 + $0x11a8] sm:$0xff]
      %v1797 = vld [vmem:[%s1 + $0x11b0] sm:$0xff]
      %v1798 = vld [vmem:[%s1 + $0x11b8] sm:$0xff]
      %v1799 = vld [vmem:[%s1 + $0x11c0] sm:$0xff]
      %v1800 = vld [vmem:[%s1 + $0x11c8] sm:$0xff]
      %v1801 = vld [vmem:[%s1 + $0x11d0] sm:$0xff]
      %v1802 = vld [vmem:[%s1 + $0x11d8] sm:$0xff]
      %v1803 = vld [vmem:[%s1 + $0x11e0] sm:$0xff]
      %v1804 = vld [vmem:[%s1 + $0x11e8] sm:$0xff]
      %v1805 = vld [vmem:[%s1 + $0x11f0] sm:$0xff]
      %v1806 = vld [vmem:[%s1 + $0x11f8] sm:$0xff]
      %v2383 = vunpack.c.l.b16 %v1231
      %v2384 = vunpack.c.h.b16 %v1231
      %v2385 = vunpack.c.l.b16 %v1232
      %v2386 = vunpack.c.h.b16 %v1232
      %v2387 = vunpack.c.l.b16 %v1233
      %v2388 = vunpack.c.h.b16 %v1233
      %v2389 = vunpack.c.l.b16 %v1234
      %v2390 = vunpack.c.h.b16 %v1234
      %v2391 = vunpack.c.l.b16 %v1235
      %v2392 = vunpack.c.h.b16 %v1235
      %v2393 = vunpack.c.l.b16 %v1236
      %v2394 = vunpack.c.h.b16 %v1236
      %v2395 = vunpack.c.l.b16 %v1237
      %v2396 = vunpack.c.h.b16 %v1237
      %v2397 = vunpack.c.l.b16 %v1238
      %v2398 = vunpack.c.h.b16 %v1238
      %v2399 = vunpack.c.l.b16 %v1239
      %v2400 = vunpack.c.h.b16 %v1239
      %v2401 = vunpack.c.l.b16 %v1240
      %v2402 = vunpack.c.h.b16 %v1240
      %v2403 = vunpack.c.l.b16 %v1241
      %v2404 = vunpack.c.h.b16 %v1241
      %v2405 = vunpack.c.l.b16 %v1242
      %v2406 = vunpack.c.h.b16 %v1242
      %v2407 = vunpack.c.l.b16 %v1243
      %v2408 = vunpack.c.h.b16 %v1243
      %v2409 = vunpack.c.l.b16 %v1244
      %v2410 = vunpack.c.h.b16 %v1244
      %v2411 = vunpack.c.l.b16 %v1245
      %v2412 = vunpack.c.h.b16 %v1245
      %v2413 = vunpack.c.l.b16 %v1246
      %v2414 = vunpack.c.h.b16 %v1246
      %v2415 = vunpack.c.l.b16 %v1247
      %v2416 = vunpack.c.h.b16 %v1247
      %v2417 = vunpack.c.l.b16 %v1248
      %v2418 = vunpack.c.h.b16 %v1248
      %v2419 = vunpack.c.l.b16 %v1249
      %v2420 = vunpack.c.h.b16 %v1249
      %v2421 = vunpack.c.l.b16 %v1250
      %v2422 = vunpack.c.h.b16 %v1250
      %v2423 = vunpack.c.l.b16 %v1251
      %v2424 = vunpack.c.h.b16 %v1251
      %v2425 = vunpack.c.l.b16 %v1252
      %v2426 = vunpack.c.h.b16 %v1252
      %v2427 = vunpack.c.l.b16 %v1253
      %v2428 = vunpack.c.h.b16 %v1253
      %v2429 = vunpack.c.l.b16 %v1254
      %v2430 = vunpack.c.h.b16 %v1254
      %v2431 = vunpack.c.l.b16 %v1255
      %v2432 = vunpack.c.h.b16 %v1255
      %v2433 = vunpack.c.l.b16 %v1256
      %v2434 = vunpack.c.h.b16 %v1256
      %v2435 = vunpack.c.l.b16 %v1257
      %v2436 = vunpack.c.h.b16 %v1257
      %v2437 = vunpack.c.l.b16 %v1258
      %v2438 = vunpack.c.h.b16 %v1258
      %v2439 = vunpack.c.l.b16 %v1259
      %v2440 = vunpack.c.h.b16 %v1259
      %v2441 = vunpack.c.l.b16 %v1260
      %v2442 = vunpack.c.h.b16 %v1260
      %v2443 = vunpack.c.l.b16 %v1261
      %v2444 = vunpack.c.h.b16 %v1261
      %v2445 = vunpack.c.l.b16 %v1262
      %v2446 = vunpack.c.h.b16 %v1262
      %v2447 = vunpack.c.l.b16 %v1263
      %v2448 = vunpack.c.h.b16 %v1263
      %v2449 = vunpack.c.l.b16 %v1264
      %v2450 = vunpack.c.h.b16 %v1264
      %v2451 = vunpack.c.l.b16 %v1265
      %v2452 = vunpack.c.h.b16 %v1265
      %v2453 = vunpack.c.l.b16 %v1266
      %v2454 = vunpack.c.h.b16 %v1266
      %v2455 = vunpack.c.l.b16 %v1267
      %v2456 = vunpack.c.h.b16 %v1267
      %v2457 = vunpack.c.l.b16 %v1268
      %v2458 = vunpack.c.h.b16 %v1268
      %v2459 = vunpack.c.l.b16 %v1269
      %v2460 = vunpack.c.h.b16 %v1269
      %v2461 = vunpack.c.l.b16 %v1270
      %v2462 = vunpack.c.h.b16 %v1270
      %v2463 = vunpack.c.l.b16 %v1271
      %v2464 = vunpack.c.h.b16 %v1271
      %v2465 = vunpack.c.l.b16 %v1272
      %v2466 = vunpack.c.h.b16 %v1272
      %v2467 = vunpack.c.l.b16 %v1273
      %v2468 = vunpack.c.h.b16 %v1273
      %v2469 = vunpack.c.l.b16 %v1274
      %v2470 = vunpack.c.h.b16 %v1274
      %v2471 = vunpack.c.l.b16 %v1275
      %v2472 = vunpack.c.h.b16 %v1275
      %v2473 = vunpack.c.l.b16 %v1276
      %v2474 = vunpack.c.h.b16 %v1276
      %v2475 = vunpack.c.l.b16 %v1277
      %v2476 = vunpack.c.h.b16 %v1277
      %v2477 = vunpack.c.l.b16 %v1278
      %v2478 = vunpack.c.h.b16 %v1278
      %v2479 = vunpack.c.l.b16 %v1279
      %v2480 = vunpack.c.h.b16 %v1279
      %v2481 = vunpack.c.l.b16 %v1280
      %v2482 = vunpack.c.h.b16 %v1280
      %v2483 = vunpack.c.l.b16 %v1281
      %v2484 = vunpack.c.h.b16 %v1281
      %v2485 = vunpack.c.l.b16 %v1282
      %v2486 = vunpack.c.h.b16 %v1282
      %v2487 = vunpack.c.l.b16 %v1283
      %v2488 = vunpack.c.h.b16 %v1283
      %v2489 = vunpack.c.l.b16 %v1284
      %v2490 = vunpack.c.h.b16 %v1284
      %v2491 = vunpack.c.l.b16 %v1285
      %v2492 = vunpack.c.h.b16 %v1285
      %v2493 = vunpack.c.l.b16 %v1286
      %v2494 = vunpack.c.h.b16 %v1286
      %v2495 = vunpack.c.l.b16 %v1287
      %v2496 = vunpack.c.h.b16 %v1287
      %v2497 = vunpack.c.l.b16 %v1288
      %v2498 = vunpack.c.h.b16 %v1288
      %v2499 = vunpack.c.l.b16 %v1289
      %v2500 = vunpack.c.h.b16 %v1289
      %v2501 = vunpack.c.l.b16 %v1290
      %v2502 = vunpack.c.h.b16 %v1290
      %v2503 = vunpack.c.l.b16 %v1291
      %v2504 = vunpack.c.h.b16 %v1291
      %v2505 = vunpack.c.l.b16 %v1292
      %v2506 = vunpack.c.h.b16 %v1292
      %v2507 = vunpack.c.l.b16 %v1293
      %v2508 = vunpack.c.h.b16 %v1293
      %v2509 = vunpack.c.l.b16 %v1294
      %v2510 = vunpack.c.h.b16 %v1294
      %v2511 = vunpack.c.l.b16 %v1295
      %v2512 = vunpack.c.h.b16 %v1295
      %v2513 = vunpack.c.l.b16 %v1296
      %v2514 = vunpack.c.h.b16 %v1296
      %v2515 = vunpack.c.l.b16 %v1297
      %v2516 = vunpack.c.h.b16 %v1297
      %v2517 = vunpack.c.l.b16 %v1298
      %v2518 = vunpack.c.h.b16 %v1298
      %v2519 = vunpack.c.l.b16 %v1299
      %v2520 = vunpack.c.h.b16 %v1299
      %v2521 = vunpack.c.l.b16 %v1300
      %v2522 = vunpack.c.h.b16 %v1300
      %v2523 = vunpack.c.l.b16 %v1301
      %v2524 = vunpack.c.h.b16 %v1301
      %v2525 = vunpack.c.l.b16 %v1302
      %v2526 = vunpack.c.h.b16 %v1302
      %v2527 = vunpack.c.l.b16 %v1303
      %v2528 = vunpack.c.h.b16 %v1303
      %v2529 = vunpack.c.l.b16 %v1304
      %v2530 = vunpack.c.h.b16 %v1304
      %v2531 = vunpack.c.l.b16 %v1305
      %v2532 = vunpack.c.h.b16 %v1305
      %v2533 = vunpack.c.l.b16 %v1306
      %v2534 = vunpack.c.h.b16 %v1306
      %v2535 = vunpack.c.l.b16 %v1307
      %v2536 = vunpack.c.h.b16 %v1307
      %v2537 = vunpack.c.l.b16 %v1308
      %v2538 = vunpack.c.h.b16 %v1308
      %v2539 = vunpack.c.l.b16 %v1309
      %v2540 = vunpack.c.h.b16 %v1309
      %v2541 = vunpack.c.l.b16 %v1310
      %v2542 = vunpack.c.h.b16 %v1310
      %v2543 = vunpack.c.l.b16 %v1311
      %v2544 = vunpack.c.h.b16 %v1311
      %v2545 = vunpack.c.l.b16 %v1312
      %v2546 = vunpack.c.h.b16 %v1312
      %v2547 = vunpack.c.l.b16 %v1313
      %v2548 = vunpack.c.h.b16 %v1313
      %v2549 = vunpack.c.l.b16 %v1314
      %v2550 = vunpack.c.h.b16 %v1314
      %v2551 = vunpack.c.l.b16 %v1315
      %v2552 = vunpack.c.h.b16 %v1315
      %v2553 = vunpack.c.l.b16 %v1316
      %v2554 = vunpack.c.h.b16 %v1316
      %v2555 = vunpack.c.l.b16 %v1317
      %v2556 = vunpack.c.h.b16 %v1317
      %v2557 = vunpack.c.l.b16 %v1318
      %v2558 = vunpack.c.h.b16 %v1318
      %v2559 = vunpack.c.l.b16 %v1319
      %v2560 = vunpack.c.h.b16 %v1319
      %v2561 = vunpack.c.l.b16 %v1320
      %v2562 = vunpack.c.h.b16 %v1320
      %v2563 = vunpack.c.l.b16 %v1321
      %v2564 = vunpack.c.h.b16 %v1321
      %v2565 = vunpack.c.l.b16 %v1322
      %v2566 = vunpack.c.h.b16 %v1322
      %v2567 = vunpack.c.l.b16 %v1323
      %v2568 = vunpack.c.h.b16 %v1323
      %v2569 = vunpack.c.l.b16 %v1324
      %v2570 = vunpack.c.h.b16 %v1324
      %v2571 = vunpack.c.l.b16 %v1325
      %v2572 = vunpack.c.h.b16 %v1325
      %v2573 = vunpack.c.l.b16 %v1326
      %v2574 = vunpack.c.h.b16 %v1326
      %v2575 = vunpack.c.l.b16 %v1327
      %v2576 = vunpack.c.h.b16 %v1327
      %v2577 = vunpack.c.l.b16 %v1328
      %v2578 = vunpack.c.h.b16 %v1328
      %v2579 = vunpack.c.l.b16 %v1329
      %v2580 = vunpack.c.h.b16 %v1329
      %v2581 = vunpack.c.l.b16 %v1330
      %v2582 = vunpack.c.h.b16 %v1330
      %v2583 = vunpack.c.l.b16 %v1331
      %v2584 = vunpack.c.h.b16 %v1331
      %v2585 = vunpack.c.l.b16 %v1332
      %v2586 = vunpack.c.h.b16 %v1332
      %v2587 = vunpack.c.l.b16 %v1333
      %v2588 = vunpack.c.h.b16 %v1333
      %v2589 = vunpack.c.l.b16 %v1334
      %v2590 = vunpack.c.h.b16 %v1334
      %v2591 = vunpack.c.l.b16 %v1335
      %v2592 = vunpack.c.h.b16 %v1335
      %v2593 = vunpack.c.l.b16 %v1336
      %v2594 = vunpack.c.h.b16 %v1336
      %v2595 = vunpack.c.l.b16 %v1337
      %v2596 = vunpack.c.h.b16 %v1337
      %v2597 = vunpack.c.l.b16 %v1338
      %v2598 = vunpack.c.h.b16 %v1338
      %v2599 = vunpack.c.l.b16 %v1339
      %v2600 = vunpack.c.h.b16 %v1339
      %v2601 = vunpack.c.l.b16 %v1340
      %v2602 = vunpack.c.h.b16 %v1340
      %v2603 = vunpack.c.l.b16 %v1341
      %v2604 = vunpack.c.h.b16 %v1341
      %v2605 = vunpack.c.l.b16 %v1342
      %v2606 = vunpack.c.h.b16 %v1342
      %v2607 = vunpack.c.l.b16 %v1343
      %v2608 = vunpack.c.h.b16 %v1343
      %v2609 = vunpack.c.l.b16 %v1344
      %v2610 = vunpack.c.h.b16 %v1344
      %v2611 = vunpack.c.l.b16 %v1345
      %v2612 = vunpack.c.h.b16 %v1345
      %v2613 = vunpack.c.l.b16 %v1346
      %v2614 = vunpack.c.h.b16 %v1346
      %v2615 = vunpack.c.l.b16 %v1347
      %v2616 = vunpack.c.h.b16 %v1347
      %v2617 = vunpack.c.l.b16 %v1348
      %v2618 = vunpack.c.h.b16 %v1348
      %v2619 = vunpack.c.l.b16 %v1349
      %v2620 = vunpack.c.h.b16 %v1349
      %v2621 = vunpack.c.l.b16 %v1350
      %v2622 = vunpack.c.h.b16 %v1350
      %v2623 = vunpack.c.l.b16 %v1351
      %v2624 = vunpack.c.h.b16 %v1351
      %v2625 = vunpack.c.l.b16 %v1352
      %v2626 = vunpack.c.h.b16 %v1352
      %v2627 = vunpack.c.l.b16 %v1353
      %v2628 = vunpack.c.h.b16 %v1353
      %v2629 = vunpack.c.l.b16 %v1354
      %v2630 = vunpack.c.h.b16 %v1354
      %v2631 = vunpack.c.l.b16 %v1355
      %v2632 = vunpack.c.h.b16 %v1355
      %v2633 = vunpack.c.l.b16 %v1356
      %v2634 = vunpack.c.h.b16 %v1356
      %v2635 = vunpack.c.l.b16 %v1357
      %v2636 = vunpack.c.h.b16 %v1357
      %v2637 = vunpack.c.l.b16 %v1358
      %v2638 = vunpack.c.h.b16 %v1358
      %v2639 = vunpack.c.l.b16 %v1359
      %v2640 = vunpack.c.h.b16 %v1359
      %v2641 = vunpack.c.l.b16 %v1360
      %v2642 = vunpack.c.h.b16 %v1360
      %v2643 = vunpack.c.l.b16 %v1361
      %v2644 = vunpack.c.h.b16 %v1361
      %v2645 = vunpack.c.l.b16 %v1362
      %v2646 = vunpack.c.h.b16 %v1362
      %v2647 = vunpack.c.l.b16 %v1363
      %v2648 = vunpack.c.h.b16 %v1363
      %v2649 = vunpack.c.l.b16 %v1364
      %v2650 = vunpack.c.h.b16 %v1364
      %v2651 = vunpack.c.l.b16 %v1365
      %v2652 = vunpack.c.h.b16 %v1365
      %v2653 = vunpack.c.l.b16 %v1366
      %v2654 = vunpack.c.h.b16 %v1366
      %v2655 = vunpack.c.l.b16 %v1367
      %v2656 = vunpack.c.h.b16 %v1367
      %v2657 = vunpack.c.l.b16 %v1368
      %v2658 = vunpack.c.h.b16 %v1368
      %v2659 = vunpack.c.l.b16 %v1369
      %v2660 = vunpack.c.h.b16 %v1369
      %v2661 = vunpack.c.l.b16 %v1370
      %v2662 = vunpack.c.h.b16 %v1370
      %v2663 = vunpack.c.l.b16 %v1371
      %v2664 = vunpack.c.h.b16 %v1371
      %v2665 = vunpack.c.l.b16 %v1372
      %v2666 = vunpack.c.h.b16 %v1372
      %v2667 = vunpack.c.l.b16 %v1373
      %v2668 = vunpack.c.h.b16 %v1373
      %v2669 = vunpack.c.l.b16 %v1374
      %v2670 = vunpack.c.h.b16 %v1374
      %v2671 = vunpack.c.l.b16 %v1375
      %v2672 = vunpack.c.h.b16 %v1375
      %v2673 = vunpack.c.l.b16 %v1376
      %v2674 = vunpack.c.h.b16 %v1376
      %v2675 = vunpack.c.l.b16 %v1377
      %v2676 = vunpack.c.h.b16 %v1377
      %v2677 = vunpack.c.l.b16 %v1378
      %v2678 = vunpack.c.h.b16 %v1378
      %v2679 = vunpack.c.l.b16 %v1379
      %v2680 = vunpack.c.h.b16 %v1379
      %v2681 = vunpack.c.l.b16 %v1380
      %v2682 = vunpack.c.h.b16 %v1380
      %v2683 = vunpack.c.l.b16 %v1381
      %v2684 = vunpack.c.h.b16 %v1381
      %v2685 = vunpack.c.l.b16 %v1382
      %v2686 = vunpack.c.h.b16 %v1382
      %v2687 = vunpack.c.l.b16 %v1383
      %v2688 = vunpack.c.h.b16 %v1383
      %v2689 = vunpack.c.l.b16 %v1384
      %v2690 = vunpack.c.h.b16 %v1384
      %v2691 = vunpack.c.l.b16 %v1385
      %v2692 = vunpack.c.h.b16 %v1385
      %v2693 = vunpack.c.l.b16 %v1386
      %v2694 = vunpack.c.h.b16 %v1386
      %v2695 = vunpack.c.l.b16 %v1387
      %v2696 = vunpack.c.h.b16 %v1387
      %v2697 = vunpack.c.l.b16 %v1388
      %v2698 = vunpack.c.h.b16 %v1388
      %v2699 = vunpack.c.l.b16 %v1389
      %v2700 = vunpack.c.h.b16 %v1389
      %v2701 = vunpack.c.l.b16 %v1390
      %v2702 = vunpack.c.h.b16 %v1390
      %v2703 = vunpack.c.l.b16 %v1391
      %v2704 = vunpack.c.h.b16 %v1391
      %v2705 = vunpack.c.l.b16 %v1392
      %v2706 = vunpack.c.h.b16 %v1392
      %v2707 = vunpack.c.l.b16 %v1393
      %v2708 = vunpack.c.h.b16 %v1393
      %v2709 = vunpack.c.l.b16 %v1394
      %v2710 = vunpack.c.h.b16 %v1394
      %v2711 = vunpack.c.l.b16 %v1395
      %v2712 = vunpack.c.h.b16 %v1395
      %v2713 = vunpack.c.l.b16 %v1396
      %v2714 = vunpack.c.h.b16 %v1396
      %v2715 = vunpack.c.l.b16 %v1397
      %v2716 = vunpack.c.h.b16 %v1397
      %v2717 = vunpack.c.l.b16 %v1398
      %v2718 = vunpack.c.h.b16 %v1398
      %v2719 = vunpack.c.l.b16 %v1399
      %v2720 = vunpack.c.h.b16 %v1399
      %v2721 = vunpack.c.l.b16 %v1400
      %v2722 = vunpack.c.h.b16 %v1400
      %v2723 = vunpack.c.l.b16 %v1401
      %v2724 = vunpack.c.h.b16 %v1401
      %v2725 = vunpack.c.l.b16 %v1402
      %v2726 = vunpack.c.h.b16 %v1402
      %v2727 = vunpack.c.l.b16 %v1403
      %v2728 = vunpack.c.h.b16 %v1403
      %v2729 = vunpack.c.l.b16 %v1404
      %v2730 = vunpack.c.h.b16 %v1404
      %v2731 = vunpack.c.l.b16 %v1405
      %v2732 = vunpack.c.h.b16 %v1405
      %v2733 = vunpack.c.l.b16 %v1406
      %v2734 = vunpack.c.h.b16 %v1406
      %v2735 = vunpack.c.l.b16 %v1407
      %v2736 = vunpack.c.h.b16 %v1407
      %v2737 = vunpack.c.l.b16 %v1408
      %v2738 = vunpack.c.h.b16 %v1408
      %v2739 = vunpack.c.l.b16 %v1409
      %v2740 = vunpack.c.h.b16 %v1409
      %v2741 = vunpack.c.l.b16 %v1410
      %v2742 = vunpack.c.h.b16 %v1410
      %v2743 = vunpack.c.l.b16 %v1411
      %v2744 = vunpack.c.h.b16 %v1411
      %v2745 = vunpack.c.l.b16 %v1412
      %v2746 = vunpack.c.h.b16 %v1412
      %v2747 = vunpack.c.l.b16 %v1413
      %v2748 = vunpack.c.h.b16 %v1413
      %v2749 = vunpack.c.l.b16 %v1414
      %v2750 = vunpack.c.h.b16 %v1414
      %v2751 = vunpack.c.l.b16 %v1415
      %v2752 = vunpack.c.h.b16 %v1415
      %v2753 = vunpack.c.l.b16 %v1416
      %v2754 = vunpack.c.h.b16 %v1416
      %v2755 = vunpack.c.l.b16 %v1417
      %v2756 = vunpack.c.h.b16 %v1417
      %v2757 = vunpack.c.l.b16 %v1418
      %v2758 = vunpack.c.h.b16 %v1418
      %v2759 = vunpack.c.l.b16 %v1419
      %v2760 = vunpack.c.h.b16 %v1419
      %v2761 = vunpack.c.l.b16 %v1420
      %v2762 = vunpack.c.h.b16 %v1420
      %v2763 = vunpack.c.l.b16 %v1421
      %v2764 = vunpack.c.h.b16 %v1421
      %v2765 = vunpack.c.l.b16 %v1422
      %v2766 = vunpack.c.h.b16 %v1422
      %v2767 = vunpack.c.l.b16 %v1423
      %v2768 = vunpack.c.h.b16 %v1423
      %v2769 = vunpack.c.l.b16 %v1424
      %v2770 = vunpack.c.h.b16 %v1424
      %v2771 = vunpack.c.l.b16 %v1425
      %v2772 = vunpack.c.h.b16 %v1425
      %v2773 = vunpack.c.l.b16 %v1426
      %v2774 = vunpack.c.h.b16 %v1426
      %v2775 = vunpack.c.l.b16 %v1427
      %v2776 = vunpack.c.h.b16 %v1427
      %v2777 = vunpack.c.l.b16 %v1428
      %v2778 = vunpack.c.h.b16 %v1428
      %v2779 = vunpack.c.l.b16 %v1429
      %v2780 = vunpack.c.h.b16 %v1429
      %v2781 = vunpack.c.l.b16 %v1430
      %v2782 = vunpack.c.h.b16 %v1430
      %v2783 = vunpack.c.l.b16 %v1431
      %v2784 = vunpack.c.h.b16 %v1431
      %v2785 = vunpack.c.l.b16 %v1432
      %v2786 = vunpack.c.h.b16 %v1432
      %v2787 = vunpack.c.l.b16 %v1433
      %v2788 = vunpack.c.h.b16 %v1433
      %v2789 = vunpack.c.l.b16 %v1434
      %v2790 = vunpack.c.h.b16 %v1434
      %v2791 = vunpack.c.l.b16 %v1435
      %v2792 = vunpack.c.h.b16 %v1435
      %v2793 = vunpack.c.l.b16 %v1436
      %v2794 = vunpack.c.h.b16 %v1436
      %v2795 = vunpack.c.l.b16 %v1437
      %v2796 = vunpack.c.h.b16 %v1437
      %v2797 = vunpack.c.l.b16 %v1438
      %v2798 = vunpack.c.h.b16 %v1438
      %v2799 = vunpack.c.l.b16 %v1439
      %v2800 = vunpack.c.h.b16 %v1439
      %v2801 = vunpack.c.l.b16 %v1440
      %v2802 = vunpack.c.h.b16 %v1440
      %v2803 = vunpack.c.l.b16 %v1441
      %v2804 = vunpack.c.h.b16 %v1441
      %v2805 = vunpack.c.l.b16 %v1442
      %v2806 = vunpack.c.h.b16 %v1442
      %v2807 = vunpack.c.l.b16 %v1443
      %v2808 = vunpack.c.h.b16 %v1443
      %v2809 = vunpack.c.l.b16 %v1444
      %v2810 = vunpack.c.h.b16 %v1444
      %v2811 = vunpack.c.l.b16 %v1445
      %v2812 = vunpack.c.h.b16 %v1445
      %v2813 = vunpack.c.l.b16 %v1446
      %v2814 = vunpack.c.h.b16 %v1446
      %v2815 = vunpack.c.l.b16 %v1447
      %v2816 = vunpack.c.h.b16 %v1447
      %v2817 = vunpack.c.l.b16 %v1448
      %v2818 = vunpack.c.h.b16 %v1448
      %v2819 = vunpack.c.l.b16 %v1449
      %v2820 = vunpack.c.h.b16 %v1449
      %v2821 = vunpack.c.l.b16 %v1450
      %v2822 = vunpack.c.h.b16 %v1450
      %v2823 = vunpack.c.l.b16 %v1451
      %v2824 = vunpack.c.h.b16 %v1451
      %v2825 = vunpack.c.l.b16 %v1452
      %v2826 = vunpack.c.h.b16 %v1452
      %v2827 = vunpack.c.l.b16 %v1453
      %v2828 = vunpack.c.h.b16 %v1453
      %v2829 = vunpack.c.l.b16 %v1454
      %v2830 = vunpack.c.h.b16 %v1454
      %v2831 = vunpack.c.l.b16 %v1455
      %v2832 = vunpack.c.h.b16 %v1455
      %v2833 = vunpack.c.l.b16 %v1456
      %v2834 = vunpack.c.h.b16 %v1456
      %v2835 = vunpack.c.l.b16 %v1457
      %v2836 = vunpack.c.h.b16 %v1457
      %v2837 = vunpack.c.l.b16 %v1458
      %v2838 = vunpack.c.h.b16 %v1458
      %v2839 = vunpack.c.l.b16 %v1459
      %v2840 = vunpack.c.h.b16 %v1459
      %v2841 = vunpack.c.l.b16 %v1460
      %v2842 = vunpack.c.h.b16 %v1460
      %v2843 = vunpack.c.l.b16 %v1461
      %v2844 = vunpack.c.h.b16 %v1461
      %v2845 = vunpack.c.l.b16 %v1462
      %v2846 = vunpack.c.h.b16 %v1462
      %v2847 = vunpack.c.l.b16 %v1463
      %v2848 = vunpack.c.h.b16 %v1463
      %v2849 = vunpack.c.l.b16 %v1464
      %v2850 = vunpack.c.h.b16 %v1464
      %v2851 = vunpack.c.l.b16 %v1465
      %v2852 = vunpack.c.h.b16 %v1465
      %v2853 = vunpack.c.l.b16 %v1466
      %v2854 = vunpack.c.h.b16 %v1466
      %v2855 = vunpack.c.l.b16 %v1467
      %v2856 = vunpack.c.h.b16 %v1467
      %v2857 = vunpack.c.l.b16 %v1468
      %v2858 = vunpack.c.h.b16 %v1468
      %v2859 = vunpack.c.l.b16 %v1469
      %v2860 = vunpack.c.h.b16 %v1469
      %v2861 = vunpack.c.l.b16 %v1470
      %v2862 = vunpack.c.h.b16 %v1470
      %v2863 = vunpack.c.l.b16 %v1471
      %v2864 = vunpack.c.h.b16 %v1471
      %v2865 = vunpack.c.l.b16 %v1472
      %v2866 = vunpack.c.h.b16 %v1472
      %v2867 = vunpack.c.l.b16 %v1473
      %v2868 = vunpack.c.h.b16 %v1473
      %v2869 = vunpack.c.l.b16 %v1474
      %v2870 = vunpack.c.h.b16 %v1474
      %v2871 = vunpack.c.l.b16 %v1475
      %v2872 = vunpack.c.h.b16 %v1475
      %v2873 = vunpack.c.l.b16 %v1476
      %v2874 = vunpack.c.h.b16 %v1476
      %v2875 = vunpack.c.l.b16 %v1477
      %v2876 = vunpack.c.h.b16 %v1477
      %v2877 = vunpack.c.l.b16 %v1478
      %v2878 = vunpack.c.h.b16 %v1478
      %v2879 = vunpack.c.l.b16 %v1479
      %v2880 = vunpack.c.h.b16 %v1479
      %v2881 = vunpack.c.l.b16 %v1480
      %v2882 = vunpack.c.h.b16 %v1480
      %v2883 = vunpack.c.l.b16 %v1481
      %v2884 = vunpack.c.h.b16 %v1481
      %v2885 = vunpack.c.l.b16 %v1482
      %v2886 = vunpack.c.h.b16 %v1482
      %v2887 = vunpack.c.l.b16 %v1483
      %v2888 = vunpack.c.h.b16 %v1483
      %v2889 = vunpack.c.l.b16 %v1484
      %v2890 = vunpack.c.h.b16 %v1484
      %v2891 = vunpack.c.l.b16 %v1485
      %v2892 = vunpack.c.h.b16 %v1485
      %v2893 = vunpack.c.l.b16 %v1486
      %v2894 = vunpack.c.h.b16 %v1486
      %v2895 = vunpack.c.l.b16 %v1487
      %v2896 = vunpack.c.h.b16 %v1487
      %v2897 = vunpack.c.l.b16 %v1488
      %v2898 = vunpack.c.h.b16 %v1488
      %v2899 = vunpack.c.l.b16 %v1489
      %v2900 = vunpack.c.h.b16 %v1489
      %v2901 = vunpack.c.l.b16 %v1490
      %v2902 = vunpack.c.h.b16 %v1490
      %v2903 = vunpack.c.l.b16 %v1491
      %v2904 = vunpack.c.h.b16 %v1491
      %v2905 = vunpack.c.l.b16 %v1492
      %v2906 = vunpack.c.h.b16 %v1492
      %v2907 = vunpack.c.l.b16 %v1493
      %v2908 = vunpack.c.h.b16 %v1493
      %v2909 = vunpack.c.l.b16 %v1494
      %v2910 = vunpack.c.h.b16 %v1494
      %v2911 = vunpack.c.l.b16 %v1495
      %v2912 = vunpack.c.h.b16 %v1495
      %v2913 = vunpack.c.l.b16 %v1496
      %v2914 = vunpack.c.h.b16 %v1496
      %v2915 = vunpack.c.l.b16 %v1497
      %v2916 = vunpack.c.h.b16 %v1497
      %v2917 = vunpack.c.l.b16 %v1498
      %v2918 = vunpack.c.h.b16 %v1498
      %v2919 = vunpack.c.l.b16 %v1499
      %v2920 = vunpack.c.h.b16 %v1499
      %v2921 = vunpack.c.l.b16 %v1500
      %v2922 = vunpack.c.h.b16 %v1500
      %v2923 = vunpack.c.l.b16 %v1501
      %v2924 = vunpack.c.h.b16 %v1501
      %v2925 = vunpack.c.l.b16 %v1502
      %v2926 = vunpack.c.h.b16 %v1502
      %v2927 = vunpack.c.l.b16 %v1503
      %v2928 = vunpack.c.h.b16 %v1503
      %v2929 = vunpack.c.l.b16 %v1504
      %v2930 = vunpack.c.h.b16 %v1504
      %v2931 = vunpack.c.l.b16 %v1505
      %v2932 = vunpack.c.h.b16 %v1505
      %v2933 = vunpack.c.l.b16 %v1506
      %v2934 = vunpack.c.h.b16 %v1506
      %v2935 = vunpack.c.l.b16 %v1507
      %v2936 = vunpack.c.h.b16 %v1507
      %v2937 = vunpack.c.l.b16 %v1508
      %v2938 = vunpack.c.h.b16 %v1508
      %v2939 = vunpack.c.l.b16 %v1509
      %v2940 = vunpack.c.h.b16 %v1509
      %v2941 = vunpack.c.l.b16 %v1510
      %v2942 = vunpack.c.h.b16 %v1510
      %v2943 = vunpack.c.l.b16 %v1511
      %v2944 = vunpack.c.h.b16 %v1511
      %v2945 = vunpack.c.l.b16 %v1512
      %v2946 = vunpack.c.h.b16 %v1512
      %v2947 = vunpack.c.l.b16 %v1513
      %v2948 = vunpack.c.h.b16 %v1513
      %v2949 = vunpack.c.l.b16 %v1514
      %v2950 = vunpack.c.h.b16 %v1514
      %v2951 = vunpack.c.l.b16 %v1515
      %v2952 = vunpack.c.h.b16 %v1515
      %v2953 = vunpack.c.l.b16 %v1516
      %v2954 = vunpack.c.h.b16 %v1516
      %v2955 = vunpack.c.l.b16 %v1517
      %v2956 = vunpack.c.h.b16 %v1517
      %v2957 = vunpack.c.l.b16 %v1518
      %v2958 = vunpack.c.h.b16 %v1518
      %v2959 = vunpack.c.l.b16 %v1519
      %v2960 = vunpack.c.h.b16 %v1519
      %v2961 = vunpack.c.l.b16 %v1520
      %v2962 = vunpack.c.h.b16 %v1520
      %v2963 = vunpack.c.l.b16 %v1521
      %v2964 = vunpack.c.h.b16 %v1521
      %v2965 = vunpack.c.l.b16 %v1522
      %v2966 = vunpack.c.h.b16 %v1522
      %v2967 = vunpack.c.l.b16 %v1523
      %v2968 = vunpack.c.h.b16 %v1523
      %v2969 = vunpack.c.l.b16 %v1524
      %v2970 = vunpack.c.h.b16 %v1524
      %v2971 = vunpack.c.l.b16 %v1525
      %v2972 = vunpack.c.h.b16 %v1525
      %v2973 = vunpack.c.l.b16 %v1526
      %v2974 = vunpack.c.h.b16 %v1526
      %v2975 = vunpack.c.l.b16 %v1527
      %v2976 = vunpack.c.h.b16 %v1527
      %v2977 = vunpack.c.l.b16 %v1528
      %v2978 = vunpack.c.h.b16 %v1528
      %v2979 = vunpack.c.l.b16 %v1529
      %v2980 = vunpack.c.h.b16 %v1529
      %v2981 = vunpack.c.l.b16 %v1530
      %v2982 = vunpack.c.h.b16 %v1530
      %v2983 = vunpack.c.l.b16 %v1531
      %v2984 = vunpack.c.h.b16 %v1531
      %v2985 = vunpack.c.l.b16 %v1532
      %v2986 = vunpack.c.h.b16 %v1532
      %v2987 = vunpack.c.l.b16 %v1533
      %v2988 = vunpack.c.h.b16 %v1533
      %v2989 = vunpack.c.l.b16 %v1534
      %v2990 = vunpack.c.h.b16 %v1534
      %v2991 = vunpack.c.l.b16 %v1535
      %v2992 = vunpack.c.h.b16 %v1535
      %v2993 = vunpack.c.l.b16 %v1536
      %v2994 = vunpack.c.h.b16 %v1536
      %v2995 = vunpack.c.l.b16 %v1537
      %v2996 = vunpack.c.h.b16 %v1537
      %v2997 = vunpack.c.l.b16 %v1538
      %v2998 = vunpack.c.h.b16 %v1538
      %v2999 = vunpack.c.l.b16 %v1539
      %v3000 = vunpack.c.h.b16 %v1539
      %v3001 = vunpack.c.l.b16 %v1540
      %v3002 = vunpack.c.h.b16 %v1540
      %v3003 = vunpack.c.l.b16 %v1541
      %v3004 = vunpack.c.h.b16 %v1541
      %v3005 = vunpack.c.l.b16 %v1542
      %v3006 = vunpack.c.h.b16 %v1542
      %v3007 = vunpack.c.l.b16 %v1543
      %v3008 = vunpack.c.h.b16 %v1543
      %v3009 = vunpack.c.l.b16 %v1544
      %v3010 = vunpack.c.h.b16 %v1544
      %v3011 = vunpack.c.l.b16 %v1545
      %v3012 = vunpack.c.h.b16 %v1545
      %v3013 = vunpack.c.l.b16 %v1546
      %v3014 = vunpack.c.h.b16 %v1546
      %v3015 = vunpack.c.l.b16 %v1547
      %v3016 = vunpack.c.h.b16 %v1547
      %v3017 = vunpack.c.l.b16 %v1548
      %v3018 = vunpack.c.h.b16 %v1548
      %v3019 = vunpack.c.l.b16 %v1549
      %v3020 = vunpack.c.h.b16 %v1549
      %v3021 = vunpack.c.l.b16 %v1550
      %v3022 = vunpack.c.h.b16 %v1550
      %v3023 = vunpack.c.l.b16 %v1551
      %v3024 = vunpack.c.h.b16 %v1551
      %v3025 = vunpack.c.l.b16 %v1552
      %v3026 = vunpack.c.h.b16 %v1552
      %v3027 = vunpack.c.l.b16 %v1553
      %v3028 = vunpack.c.h.b16 %v1553
      %v3029 = vunpack.c.l.b16 %v1554
      %v3030 = vunpack.c.h.b16 %v1554
      %v3031 = vunpack.c.l.b16 %v1555
      %v3032 = vunpack.c.h.b16 %v1555
      %v3033 = vunpack.c.l.b16 %v1556
      %v3034 = vunpack.c.h.b16 %v1556
      %v3035 = vunpack.c.l.b16 %v1557
      %v3036 = vunpack.c.h.b16 %v1557
      %v3037 = vunpack.c.l.b16 %v1558
      %v3038 = vunpack.c.h.b16 %v1558
      %v3039 = vunpack.c.l.b16 %v1559
      %v3040 = vunpack.c.h.b16 %v1559
      %v3041 = vunpack.c.l.b16 %v1560
      %v3042 = vunpack.c.h.b16 %v1560
      %v3043 = vunpack.c.l.b16 %v1561
      %v3044 = vunpack.c.h.b16 %v1561
      %v3045 = vunpack.c.l.b16 %v1562
      %v3046 = vunpack.c.h.b16 %v1562
      %v3047 = vunpack.c.l.b16 %v1563
      %v3048 = vunpack.c.h.b16 %v1563
      %v3049 = vunpack.c.l.b16 %v1564
      %v3050 = vunpack.c.h.b16 %v1564
      %v3051 = vunpack.c.l.b16 %v1565
      %v3052 = vunpack.c.h.b16 %v1565
      %v3053 = vunpack.c.l.b16 %v1566
      %v3054 = vunpack.c.h.b16 %v1566
      %v3055 = vunpack.c.l.b16 %v1567
      %v3056 = vunpack.c.h.b16 %v1567
      %v3057 = vunpack.c.l.b16 %v1568
      %v3058 = vunpack.c.h.b16 %v1568
      %v3059 = vunpack.c.l.b16 %v1569
      %v3060 = vunpack.c.h.b16 %v1569
      %v3061 = vunpack.c.l.b16 %v1570
      %v3062 = vunpack.c.h.b16 %v1570
      %v3063 = vunpack.c.l.b16 %v1571
      %v3064 = vunpack.c.h.b16 %v1571
      %v3065 = vunpack.c.l.b16 %v1572
      %v3066 = vunpack.c.h.b16 %v1572
      %v3067 = vunpack.c.l.b16 %v1573
      %v3068 = vunpack.c.h.b16 %v1573
      %v3069 = vunpack.c.l.b16 %v1574
      %v3070 = vunpack.c.h.b16 %v1574
      %v3071 = vunpack.c.l.b16 %v1575
      %v3072 = vunpack.c.h.b16 %v1575
      %v3073 = vunpack.c.l.b16 %v1576
      %v3074 = vunpack.c.h.b16 %v1576
      %v3075 = vunpack.c.l.b16 %v1577
      %v3076 = vunpack.c.h.b16 %v1577
      %v3077 = vunpack.c.l.b16 %v1578
      %v3078 = vunpack.c.h.b16 %v1578
      %v3079 = vunpack.c.l.b16 %v1579
      %v3080 = vunpack.c.h.b16 %v1579
      %v3081 = vunpack.c.l.b16 %v1580
      %v3082 = vunpack.c.h.b16 %v1580
      %v3083 = vunpack.c.l.b16 %v1581
      %v3084 = vunpack.c.h.b16 %v1581
      %v3085 = vunpack.c.l.b16 %v1582
      %v3086 = vunpack.c.h.b16 %v1582
      %v3087 = vunpack.c.l.b16 %v1583
      %v3088 = vunpack.c.h.b16 %v1583
      %v3089 = vunpack.c.l.b16 %v1584
      %v3090 = vunpack.c.h.b16 %v1584
      %v3091 = vunpack.c.l.b16 %v1585
      %v3092 = vunpack.c.h.b16 %v1585
      %v3093 = vunpack.c.l.b16 %v1586
      %v3094 = vunpack.c.h.b16 %v1586
      %v3095 = vunpack.c.l.b16 %v1587
      %v3096 = vunpack.c.h.b16 %v1587
      %v3097 = vunpack.c.l.b16 %v1588
      %v3098 = vunpack.c.h.b16 %v1588
      %v3099 = vunpack.c.l.b16 %v1589
      %v3100 = vunpack.c.h.b16 %v1589
      %v3101 = vunpack.c.l.b16 %v1590
      %v3102 = vunpack.c.h.b16 %v1590
      %v3103 = vunpack.c.l.b16 %v1591
      %v3104 = vunpack.c.h.b16 %v1591
      %v3105 = vunpack.c.l.b16 %v1592
      %v3106 = vunpack.c.h.b16 %v1592
      %v3107 = vunpack.c.l.b16 %v1593
      %v3108 = vunpack.c.h.b16 %v1593
      %v3109 = vunpack.c.l.b16 %v1594
      %v3110 = vunpack.c.h.b16 %v1594
      %v3111 = vunpack.c.l.b16 %v1595
      %v3112 = vunpack.c.h.b16 %v1595
      %v3113 = vunpack.c.l.b16 %v1596
      %v3114 = vunpack.c.h.b16 %v1596
      %v3115 = vunpack.c.l.b16 %v1597
      %v3116 = vunpack.c.h.b16 %v1597
      %v3117 = vunpack.c.l.b16 %v1598
      %v3118 = vunpack.c.h.b16 %v1598
      %v3119 = vunpack.c.l.b16 %v1599
      %v3120 = vunpack.c.h.b16 %v1599
      %v3121 = vunpack.c.l.b16 %v1600
      %v3122 = vunpack.c.h.b16 %v1600
      %v3123 = vunpack.c.l.b16 %v1601
      %v3124 = vunpack.c.h.b16 %v1601
      %v3125 = vunpack.c.l.b16 %v1602
      %v3126 = vunpack.c.h.b16 %v1602
      %v3127 = vunpack.c.l.b16 %v1603
      %v3128 = vunpack.c.h.b16 %v1603
      %v3129 = vunpack.c.l.b16 %v1604
      %v3130 = vunpack.c.h.b16 %v1604
      %v3131 = vunpack.c.l.b16 %v1605
      %v3132 = vunpack.c.h.b16 %v1605
      %v3133 = vunpack.c.l.b16 %v1606
      %v3134 = vunpack.c.h.b16 %v1606
      %v3135 = vunpack.c.l.b16 %v1607
      %v3136 = vunpack.c.h.b16 %v1607
      %v3137 = vunpack.c.l.b16 %v1608
      %v3138 = vunpack.c.h.b16 %v1608
      %v3139 = vunpack.c.l.b16 %v1609
      %v3140 = vunpack.c.h.b16 %v1609
      %v3141 = vunpack.c.l.b16 %v1610
      %v3142 = vunpack.c.h.b16 %v1610
      %v3143 = vunpack.c.l.b16 %v1611
      %v3144 = vunpack.c.h.b16 %v1611
      %v3145 = vunpack.c.l.b16 %v1612
      %v3146 = vunpack.c.h.b16 %v1612
      %v3147 = vunpack.c.l.b16 %v1613
      %v3148 = vunpack.c.h.b16 %v1613
      %v3149 = vunpack.c.l.b16 %v1614
      %v3150 = vunpack.c.h.b16 %v1614
      %v3151 = vunpack.c.l.b16 %v1615
      %v3152 = vunpack.c.h.b16 %v1615
      %v3153 = vunpack.c.l.b16 %v1616
      %v3154 = vunpack.c.h.b16 %v1616
      %v3155 = vunpack.c.l.b16 %v1617
      %v3156 = vunpack.c.h.b16 %v1617
      %v3157 = vunpack.c.l.b16 %v1618
      %v3158 = vunpack.c.h.b16 %v1618
      %v3159 = vunpack.c.l.b16 %v1619
      %v3160 = vunpack.c.h.b16 %v1619
      %v3161 = vunpack.c.l.b16 %v1620
      %v3162 = vunpack.c.h.b16 %v1620
      %v3163 = vunpack.c.l.b16 %v1621
      %v3164 = vunpack.c.h.b16 %v1621
      %v3165 = vunpack.c.l.b16 %v1622
      %v3166 = vunpack.c.h.b16 %v1622
      %v3167 = vunpack.c.l.b16 %v1623
      %v3168 = vunpack.c.h.b16 %v1623
      %v3169 = vunpack.c.l.b16 %v1624
      %v3170 = vunpack.c.h.b16 %v1624
      %v3171 = vunpack.c.l.b16 %v1625
      %v3172 = vunpack.c.h.b16 %v1625
      %v3173 = vunpack.c.l.b16 %v1626
      %v3174 = vunpack.c.h.b16 %v1626
      %v3175 = vunpack.c.l.b16 %v1627
      %v3176 = vunpack.c.h.b16 %v1627
      %v3177 = vunpack.c.l.b16 %v1628
      %v3178 = vunpack.c.h.b16 %v1628
      %v3179 = vunpack.c.l.b16 %v1629
      %v3180 = vunpack.c.h.b16 %v1629
      %v3181 = vunpack.c.l.b16 %v1630
      %v3182 = vunpack.c.h.b16 %v1630
      %v3183 = vunpack.c.l.b16 %v1631
      %v3184 = vunpack.c.h.b16 %v1631
      %v3185 = vunpack.c.l.b16 %v1632
      %v3186 = vunpack.c.h.b16 %v1632
      %v3187 = vunpack.c.l.b16 %v1633
      %v3188 = vunpack.c.h.b16 %v1633
      %v3189 = vunpack.c.l.b16 %v1634
      %v3190 = vunpack.c.h.b16 %v1634
      %v3191 = vunpack.c.l.b16 %v1635
      %v3192 = vunpack.c.h.b16 %v1635
      %v3193 = vunpack.c.l.b16 %v1636
      %v3194 = vunpack.c.h.b16 %v1636
      %v3195 = vunpack.c.l.b16 %v1637
      %v3196 = vunpack.c.h.b16 %v1637
      %v3197 = vunpack.c.l.b16 %v1638
      %v3198 = vunpack.c.h.b16 %v1638
      %v3199 = vunpack.c.l.b16 %v1639
      %v3200 = vunpack.c.h.b16 %v1639
      %v3201 = vunpack.c.l.b16 %v1640
      %v3202 = vunpack.c.h.b16 %v1640
      %v3203 = vunpack.c.l.b16 %v1641
      %v3204 = vunpack.c.h.b16 %v1641
      %v3205 = vunpack.c.l.b16 %v1642
      %v3206 = vunpack.c.h.b16 %v1642
      %v3207 = vunpack.c.l.b16 %v1643
      %v3208 = vunpack.c.h.b16 %v1643
      %v3209 = vunpack.c.l.b16 %v1644
      %v3210 = vunpack.c.h.b16 %v1644
      %v3211 = vunpack.c.l.b16 %v1645
      %v3212 = vunpack.c.h.b16 %v1645
      %v3213 = vunpack.c.l.b16 %v1646
      %v3214 = vunpack.c.h.b16 %v1646
      %v3215 = vunpack.c.l.b16 %v1647
      %v3216 = vunpack.c.h.b16 %v1647
      %v3217 = vunpack.c.l.b16 %v1648
      %v3218 = vunpack.c.h.b16 %v1648
      %v3219 = vunpack.c.l.b16 %v1649
      %v3220 = vunpack.c.h.b16 %v1649
      %v3221 = vunpack.c.l.b16 %v1650
      %v3222 = vunpack.c.h.b16 %v1650
      %v3223 = vunpack.c.l.b16 %v1651
      %v3224 = vunpack.c.h.b16 %v1651
      %v3225 = vunpack.c.l.b16 %v1652
      %v3226 = vunpack.c.h.b16 %v1652
      %v3227 = vunpack.c.l.b16 %v1653
      %v3228 = vunpack.c.h.b16 %v1653
      %v3229 = vunpack.c.l.b16 %v1654
      %v3230 = vunpack.c.h.b16 %v1654
      %v3231 = vunpack.c.l.b16 %v1655
      %v3232 = vunpack.c.h.b16 %v1655
      %v3233 = vunpack.c.l.b16 %v1656
      %v3234 = vunpack.c.h.b16 %v1656
      %v3235 = vunpack.c.l.b16 %v1657
      %v3236 = vunpack.c.h.b16 %v1657
      %v3237 = vunpack.c.l.b16 %v1658
      %v3238 = vunpack.c.h.b16 %v1658
      %v3239 = vunpack.c.l.b16 %v1659
      %v3240 = vunpack.c.h.b16 %v1659
      %v3241 = vunpack.c.l.b16 %v1660
      %v3242 = vunpack.c.h.b16 %v1660
      %v3243 = vunpack.c.l.b16 %v1661
      %v3244 = vunpack.c.h.b16 %v1661
      %v3245 = vunpack.c.l.b16 %v1662
      %v3246 = vunpack.c.h.b16 %v1662
      %v3247 = vunpack.c.l.b16 %v1663
      %v3248 = vunpack.c.h.b16 %v1663
      %v3249 = vunpack.c.l.b16 %v1664
      %v3250 = vunpack.c.h.b16 %v1664
      %v3251 = vunpack.c.l.b16 %v1665
      %v3252 = vunpack.c.h.b16 %v1665
      %v3253 = vunpack.c.l.b16 %v1666
      %v3254 = vunpack.c.h.b16 %v1666
      %v3255 = vunpack.c.l.b16 %v1667
      %v3256 = vunpack.c.h.b16 %v1667
      %v3257 = vunpack.c.l.b16 %v1668
      %v3258 = vunpack.c.h.b16 %v1668
      %v3259 = vunpack.c.l.b16 %v1669
      %v3260 = vunpack.c.h.b16 %v1669
      %v3261 = vunpack.c.l.b16 %v1670
      %v3262 = vunpack.c.h.b16 %v1670
      %v3263 = vunpack.c.l.b16 %v1671
      %v3264 = vunpack.c.h.b16 %v1671
      %v3265 = vunpack.c.l.b16 %v1672
      %v3266 = vunpack.c.h.b16 %v1672
      %v3267 = vunpack.c.l.b16 %v1673
      %v3268 = vunpack.c.h.b16 %v1673
      %v3269 = vunpack.c.l.b16 %v1674
      %v3270 = vunpack.c.h.b16 %v1674
      %v3271 = vunpack.c.l.b16 %v1675
      %v3272 = vunpack.c.h.b16 %v1675
      %v3273 = vunpack.c.l.b16 %v1676
      %v3274 = vunpack.c.h.b16 %v1676
      %v3275 = vunpack.c.l.b16 %v1677
      %v3276 = vunpack.c.h.b16 %v1677
      %v3277 = vunpack.c.l.b16 %v1678
      %v3278 = vunpack.c.h.b16 %v1678
      %v3279 = vunpack.c.l.b16 %v1679
      %v3280 = vunpack.c.h.b16 %v1679
      %v3281 = vunpack.c.l.b16 %v1680
      %v3282 = vunpack.c.h.b16 %v1680
      %v3283 = vunpack.c.l.b16 %v1681
      %v3284 = vunpack.c.h.b16 %v1681
      %v3285 = vunpack.c.l.b16 %v1682
      %v3286 = vunpack.c.h.b16 %v1682
      %v3287 = vunpack.c.l.b16 %v1683
      %v3288 = vunpack.c.h.b16 %v1683
      %v3289 = vunpack.c.l.b16 %v1684
      %v3290 = vunpack.c.h.b16 %v1684
      %v3291 = vunpack.c.l.b16 %v1685
      %v3292 = vunpack.c.h.b16 %v1685
      %v3293 = vunpack.c.l.b16 %v1686
      %v3294 = vunpack.c.h.b16 %v1686
      %v3295 = vunpack.c.l.b16 %v1687
      %v3296 = vunpack.c.h.b16 %v1687
      %v3297 = vunpack.c.l.b16 %v1688
      %v3298 = vunpack.c.h.b16 %v1688
      %v3299 = vunpack.c.l.b16 %v1689
      %v3300 = vunpack.c.h.b16 %v1689
      %v3301 = vunpack.c.l.b16 %v1690
      %v3302 = vunpack.c.h.b16 %v1690
      %v3303 = vunpack.c.l.b16 %v1691
      %v3304 = vunpack.c.h.b16 %v1691
      %v3305 = vunpack.c.l.b16 %v1692
      %v3306 = vunpack.c.h.b16 %v1692
      %v3307 = vunpack.c.l.b16 %v1693
      %v3308 = vunpack.c.h.b16 %v1693
      %v3309 = vunpack.c.l.b16 %v1694
      %v3310 = vunpack.c.h.b16 %v1694
      %v3311 = vunpack.c.l.b16 %v1695
      %v3312 = vunpack.c.h.b16 %v1695
      %v3313 = vunpack.c.l.b16 %v1696
      %v3314 = vunpack.c.h.b16 %v1696
      %v3315 = vunpack.c.l.b16 %v1697
      %v3316 = vunpack.c.h.b16 %v1697
      %v3317 = vunpack.c.l.b16 %v1698
      %v3318 = vunpack.c.h.b16 %v1698
      %v3319 = vunpack.c.l.b16 %v1699
      %v3320 = vunpack.c.h.b16 %v1699
      %v3321 = vunpack.c.l.b16 %v1700
      %v3322 = vunpack.c.h.b16 %v1700
      %v3323 = vunpack.c.l.b16 %v1701
      %v3324 = vunpack.c.h.b16 %v1701
      %v3325 = vunpack.c.l.b16 %v1702
      %v3326 = vunpack.c.h.b16 %v1702
      %v3327 = vunpack.c.l.b16 %v1703
      %v3328 = vunpack.c.h.b16 %v1703
      %v3329 = vunpack.c.l.b16 %v1704
      %v3330 = vunpack.c.h.b16 %v1704
      %v3331 = vunpack.c.l.b16 %v1705
      %v3332 = vunpack.c.h.b16 %v1705
      %v3333 = vunpack.c.l.b16 %v1706
      %v3334 = vunpack.c.h.b16 %v1706
      %v3335 = vunpack.c.l.b16 %v1707
      %v3336 = vunpack.c.h.b16 %v1707
      %v3337 = vunpack.c.l.b16 %v1708
      %v3338 = vunpack.c.h.b16 %v1708
      %v3339 = vunpack.c.l.b16 %v1709
      %v3340 = vunpack.c.h.b16 %v1709
      %v3341 = vunpack.c.l.b16 %v1710
      %v3342 = vunpack.c.h.b16 %v1710
      %v3343 = vunpack.c.l.b16 %v1711
      %v3344 = vunpack.c.h.b16 %v1711
      %v3345 = vunpack.c.l.b16 %v1712
      %v3346 = vunpack.c.h.b16 %v1712
      %v3347 = vunpack.c.l.b16 %v1713
      %v3348 = vunpack.c.h.b16 %v1713
      %v3349 = vunpack.c.l.b16 %v1714
      %v3350 = vunpack.c.h.b16 %v1714
      %v3351 = vunpack.c.l.b16 %v1715
      %v3352 = vunpack.c.h.b16 %v1715
      %v3353 = vunpack.c.l.b16 %v1716
      %v3354 = vunpack.c.h.b16 %v1716
      %v3355 = vunpack.c.l.b16 %v1717
      %v3356 = vunpack.c.h.b16 %v1717
      %v3357 = vunpack.c.l.b16 %v1718
      %v3358 = vunpack.c.h.b16 %v1718
      %v3359 = vunpack.c.l.b16 %v1719
      %v3360 = vunpack.c.h.b16 %v1719
      %v3361 = vunpack.c.l.b16 %v1720
      %v3362 = vunpack.c.h.b16 %v1720
      %v3363 = vunpack.c.l.b16 %v1721
      %v3364 = vunpack.c.h.b16 %v1721
      %v3365 = vunpack.c.l.b16 %v1722
      %v3366 = vunpack.c.h.b16 %v1722
      %v3367 = vunpack.c.l.b16 %v1723
      %v3368 = vunpack.c.h.b16 %v1723
      %v3369 = vunpack.c.l.b16 %v1724
      %v3370 = vunpack.c.h.b16 %v1724
      %v3371 = vunpack.c.l.b16 %v1725
      %v3372 = vunpack.c.h.b16 %v1725
      %v3373 = vunpack.c.l.b16 %v1726
      %v3374 = vunpack.c.h.b16 %v1726
      %v3375 = vunpack.c.l.b16 %v1727
      %v3376 = vunpack.c.h.b16 %v1727
      %v3377 = vunpack.c.l.b16 %v1728
      %v3378 = vunpack.c.h.b16 %v1728
      %v3379 = vunpack.c.l.b16 %v1729
      %v3380 = vunpack.c.h.b16 %v1729
      %v3381 = vunpack.c.l.b16 %v1730
      %v3382 = vunpack.c.h.b16 %v1730
      %v3383 = vunpack.c.l.b16 %v1731
      %v3384 = vunpack.c.h.b16 %v1731
      %v3385 = vunpack.c.l.b16 %v1732
      %v3386 = vunpack.c.h.b16 %v1732
      %v3387 = vunpack.c.l.b16 %v1733
      %v3388 = vunpack.c.h.b16 %v1733
      %v3389 = vunpack.c.l.b16 %v1734
      %v3390 = vunpack.c.h.b16 %v1734
      %v3391 = vunpack.c.l.b16 %v1735
      %v3392 = vunpack.c.h.b16 %v1735
      %v3393 = vunpack.c.l.b16 %v1736
      %v3394 = vunpack.c.h.b16 %v1736
      %v3395 = vunpack.c.l.b16 %v1737
      %v3396 = vunpack.c.h.b16 %v1737
      %v3397 = vunpack.c.l.b16 %v1738
      %v3398 = vunpack.c.h.b16 %v1738
      %v3399 = vunpack.c.l.b16 %v1739
      %v3400 = vunpack.c.h.b16 %v1739
      %v3401 = vunpack.c.l.b16 %v1740
      %v3402 = vunpack.c.h.b16 %v1740
      %v3403 = vunpack.c.l.b16 %v1741
      %v3404 = vunpack.c.h.b16 %v1741
      %v3405 = vunpack.c.l.b16 %v1742
      %v3406 = vunpack.c.h.b16 %v1742
      %v3407 = vunpack.c.l.b16 %v1743
      %v3408 = vunpack.c.h.b16 %v1743
      %v3409 = vunpack.c.l.b16 %v1744
      %v3410 = vunpack.c.h.b16 %v1744
      %v3411 = vunpack.c.l.b16 %v1745
      %v3412 = vunpack.c.h.b16 %v1745
      %v3413 = vunpack.c.l.b16 %v1746
      %v3414 = vunpack.c.h.b16 %v1746
      %v3415 = vunpack.c.l.b16 %v1747
      %v3416 = vunpack.c.h.b16 %v1747
      %v3417 = vunpack.c.l.b16 %v1748
      %v3418 = vunpack.c.h.b16 %v1748
      %v3419 = vunpack.c.l.b16 %v1749
      %v3420 = vunpack.c.h.b16 %v1749
      %v3421 = vunpack.c.l.b16 %v1750
      %v3422 = vunpack.c.h.b16 %v1750
      %v3423 = vunpack.c.l.b16 %v1751
      %v3424 = vunpack.c.h.b16 %v1751
      %v3425 = vunpack.c.l.b16 %v1752
      %v3426 = vunpack.c.h.b16 %v1752
      %v3427 = vunpack.c.l.b16 %v1753
      %v3428 = vunpack.c.h.b16 %v1753
      %v3429 = vunpack.c.l.b16 %v1754
      %v3430 = vunpack.c.h.b16 %v1754
      %v3431 = vunpack.c.l.b16 %v1755
      %v3432 = vunpack.c.h.b16 %v1755
      %v3433 = vunpack.c.l.b16 %v1756
      %v3434 = vunpack.c.h.b16 %v1756
      %v3435 = vunpack.c.l.b16 %v1757
      %v3436 = vunpack.c.h.b16 %v1757
      %v3437 = vunpack.c.l.b16 %v1758
      %v3438 = vunpack.c.h.b16 %v1758
      %v3439 = vunpack.c.l.b16 %v1759
      %v3440 = vunpack.c.h.b16 %v1759
      %v3441 = vunpack.c.l.b16 %v1760
      %v3442 = vunpack.c.h.b16 %v1760
      %v3443 = vunpack.c.l.b16 %v1761
      %v3444 = vunpack.c.h.b16 %v1761
      %v3445 = vunpack.c.l.b16 %v1762
      %v3446 = vunpack.c.h.b16 %v1762
      %v3447 = vunpack.c.l.b16 %v1763
      %v3448 = vunpack.c.h.b16 %v1763
      %v3449 = vunpack.c.l.b16 %v1764
      %v3450 = vunpack.c.h.b16 %v1764
      %v3451 = vunpack.c.l.b16 %v1765
      %v3452 = vunpack.c.h.b16 %v1765
      %v3453 = vunpack.c.l.b16 %v1766
      %v3454 = vunpack.c.h.b16 %v1766
      %v3455 = vunpack.c.l.b16 %v1767
      %v3456 = vunpack.c.h.b16 %v1767
      %v3457 = vunpack.c.l.b16 %v1768
      %v3458 = vunpack.c.h.b16 %v1768
      %v3459 = vunpack.c.l.b16 %v1769
      %v3460 = vunpack.c.h.b16 %v1769
      %v3461 = vunpack.c.l.b16 %v1770
      %v3462 = vunpack.c.h.b16 %v1770
      %v3463 = vunpack.c.l.b16 %v1771
      %v3464 = vunpack.c.h.b16 %v1771
      %v3465 = vunpack.c.l.b16 %v1772
      %v3466 = vunpack.c.h.b16 %v1772
      %v3467 = vunpack.c.l.b16 %v1773
      %v3468 = vunpack.c.h.b16 %v1773
      %v3469 = vunpack.c.l.b16 %v1774
      %v3470 = vunpack.c.h.b16 %v1774
      %v3471 = vunpack.c.l.b16 %v1775
      %v3472 = vunpack.c.h.b16 %v1775
      %v3473 = vunpack.c.l.b16 %v1776
      %v3474 = vunpack.c.h.b16 %v1776
      %v3475 = vunpack.c.l.b16 %v1777
      %v3476 = vunpack.c.h.b16 %v1777
      %v3477 = vunpack.c.l.b16 %v1778
      %v3478 = vunpack.c.h.b16 %v1778
      %v3479 = vunpack.c.l.b16 %v1779
      %v3480 = vunpack.c.h.b16 %v1779
      %v3481 = vunpack.c.l.b16 %v1780
      %v3482 = vunpack.c.h.b16 %v1780
      %v3483 = vunpack.c.l.b16 %v1781
      %v3484 = vunpack.c.h.b16 %v1781
      %v3485 = vunpack.c.l.b16 %v1782
      %v3486 = vunpack.c.h.b16 %v1782
      %v3487 = vunpack.c.l.b16 %v1783
      %v3488 = vunpack.c.h.b16 %v1783
      %v3489 = vunpack.c.l.b16 %v1784
      %v3490 = vunpack.c.h.b16 %v1784
      %v3491 = vunpack.c.l.b16 %v1785
      %v3492 = vunpack.c.h.b16 %v1785
      %v3493 = vunpack.c.l.b16 %v1786
      %v3494 = vunpack.c.h.b16 %v1786
      %v3495 = vunpack.c.l.b16 %v1787
      %v3496 = vunpack.c.h.b16 %v1787
      %v3497 = vunpack.c.l.b16 %v1788
      %v3498 = vunpack.c.h.b16 %v1788
      %v3499 = vunpack.c.l.b16 %v1789
      %v3500 = vunpack.c.h.b16 %v1789
      %v3501 = vunpack.c.l.b16 %v1790
      %v3502 = vunpack.c.h.b16 %v1790
      %v3503 = vunpack.c.l.b16 %v1791
      %v3504 = vunpack.c.h.b16 %v1791
      %v3505 = vunpack.c.l.b16 %v1792
      %v3506 = vunpack.c.h.b16 %v1792
      %v3507 = vunpack.c.l.b16 %v1793
      %v3508 = vunpack.c.h.b16 %v1793
      %v3509 = vunpack.c.l.b16 %v1794
      %v3510 = vunpack.c.h.b16 %v1794
      %v3511 = vunpack.c.l.b16 %v1795
      %v3512 = vunpack.c.h.b16 %v1795
      %v3513 = vunpack.c.l.b16 %v1796
      %v3514 = vunpack.c.h.b16 %v1796
      %v3515 = vunpack.c.l.b16 %v1797
      %v3516 = vunpack.c.h.b16 %v1797
      %v3517 = vunpack.c.l.b16 %v1798
      %v3518 = vunpack.c.h.b16 %v1798
      %v3519 = vunpack.c.l.b16 %v1799
      %v3520 = vunpack.c.h.b16 %v1799
      %v3521 = vunpack.c.l.b16 %v1800
      %v3522 = vunpack.c.h.b16 %v1800
      %v3523 = vunpack.c.l.b16 %v1801
      %v3524 = vunpack.c.h.b16 %v1801
      %v3525 = vunpack.c.l.b16 %v1802
      %v3526 = vunpack.c.h.b16 %v1802
      %v3527 = vunpack.c.l.b16 %v1803
      %v3528 = vunpack.c.h.b16 %v1803
      %v3529 = vunpack.c.l.b16 %v1804
      %v3530 = vunpack.c.h.b16 %v1804
      %v3531 = vunpack.c.l.b16 %v1805
      %v3532 = vunpack.c.h.b16 %v1805
      %v3533 = vunpack.c.l.b16 %v1806
      %v3534 = vunpack.c.h.b16 %v1806
      %v3535 = vpack.c.b16 %v2385, %v2383
      %v3536 = vpack.c.b16 %v2386, %v2384
      %v3537 = vpack.c.b16 %v2389, %v2387
      %v3538 = vpack.c.b16 %v2390, %v2388
      %v3539 = vpack.c.b16 %v2393, %v2391
      %v3540 = vpack.c.b16 %v2394, %v2392
      %v3541 = vpack.c.b16 %v2397, %v2395
      %v3542 = vpack.c.b16 %v2398, %v2396
      %v3543 = vpack.c.b16 %v2401, %v2399
      %v3544 = vpack.c.b16 %v2402, %v2400
      %v3545 = vpack.c.b16 %v2405, %v2403
      %v3546 = vpack.c.b16 %v2406, %v2404
      %v3547 = vpack.c.b16 %v2409, %v2407
      %v3548 = vpack.c.b16 %v2410, %v2408
      %v3549 = vpack.c.b16 %v2413, %v2411
      %v3550 = vpack.c.b16 %v2414, %v2412
      %v3551 = vpack.c.b16 %v2417, %v2415
      %v3552 = vpack.c.b16 %v2418, %v2416
      %v3553 = vpack.c.b16 %v2421, %v2419
      %v3554 = vpack.c.b16 %v2422, %v2420
      %v3555 = vpack.c.b16 %v2425, %v2423
      %v3556 = vpack.c.b16 %v2426, %v2424
      %v3557 = vpack.c.b16 %v2429, %v2427
      %v3558 = vpack.c.b16 %v2430, %v2428
      %v3559 = vpack.c.b16 %v2433, %v2431
      %v3560 = vpack.c.b16 %v2434, %v2432
      %v3561 = vpack.c.b16 %v2437, %v2435
      %v3562 = vpack.c.b16 %v2438, %v2436
      %v3563 = vpack.c.b16 %v2441, %v2439
      %v3564 = vpack.c.b16 %v2442, %v2440
      %v3565 = vpack.c.b16 %v2445, %v2443
      %v3566 = vpack.c.b16 %v2446, %v2444
      %v3567 = vpack.c.b16 %v2449, %v2447
      %v3568 = vpack.c.b16 %v2450, %v2448
      %v3569 = vpack.c.b16 %v2453, %v2451
      %v3570 = vpack.c.b16 %v2454, %v2452
      %v3571 = vpack.c.b16 %v2457, %v2455
      %v3572 = vpack.c.b16 %v2458, %v2456
      %v3573 = vpack.c.b16 %v2461, %v2459
      %v3574 = vpack.c.b16 %v2462, %v2460
      %v3575 = vpack.c.b16 %v2465, %v2463
      %v3576 = vpack.c.b16 %v2466, %v2464
      %v3577 = vpack.c.b16 %v2469, %v2467
      %v3578 = vpack.c.b16 %v2470, %v2468
      %v3579 = vpack.c.b16 %v2473, %v2471
      %v3580 = vpack.c.b16 %v2474, %v2472
      %v3581 = vpack.c.b16 %v2477, %v2475
      %v3582 = vpack.c.b16 %v2478, %v2476
      %v3583 = vpack.c.b16 %v2481, %v2479
      %v3584 = vpack.c.b16 %v2482, %v2480
      %v3585 = vpack.c.b16 %v2485, %v2483
      %v3586 = vpack.c.b16 %v2486, %v2484
      %v3587 = vpack.c.b16 %v2489, %v2487
      %v3588 = vpack.c.b16 %v2490, %v2488
      %v3589 = vpack.c.b16 %v2493, %v2491
      %v3590 = vpack.c.b16 %v2494, %v2492
      %v3591 = vpack.c.b16 %v2497, %v2495
      %v3592 = vpack.c.b16 %v2498, %v2496
      %v3593 = vpack.c.b16 %v2501, %v2499
      %v3594 = vpack.c.b16 %v2502, %v2500
      %v3595 = vpack.c.b16 %v2505, %v2503
      %v3596 = vpack.c.b16 %v2506, %v2504
      %v3597 = vpack.c.b16 %v2509, %v2507
      %v3598 = vpack.c.b16 %v2510, %v2508
      %v3599 = vpack.c.b16 %v2513, %v2511
      %v3600 = vpack.c.b16 %v2514, %v2512
      %v3601 = vpack.c.b16 %v2517, %v2515
      %v3602 = vpack.c.b16 %v2518, %v2516
      %v3603 = vpack.c.b16 %v2521, %v2519
      %v3604 = vpack.c.b16 %v2522, %v2520
      %v3605 = vpack.c.b16 %v2525, %v2523
      %v3606 = vpack.c.b16 %v2526, %v2524
      %v3607 = vpack.c.b16 %v2529, %v2527
      %v3608 = vpack.c.b16 %v2530, %v2528
      %v3609 = vpack.c.b16 %v2533, %v2531
      %v3610 = vpack.c.b16 %v2534, %v2532
      %v3611 = vpack.c.b16 %v2537, %v2535
      %v3612 = vpack.c.b16 %v2538, %v2536
      %v3613 = vpack.c.b16 %v2541, %v2539
      %v3614 = vpack.c.b16 %v2542, %v2540
      %v3615 = vpack.c.b16 %v2545, %v2543
      %v3616 = vpack.c.b16 %v2546, %v2544
      %v3617 = vpack.c.b16 %v2549, %v2547
      %v3618 = vpack.c.b16 %v2550, %v2548
      %v3619 = vpack.c.b16 %v2553, %v2551
      %v3620 = vpack.c.b16 %v2554, %v2552
      %v3621 = vpack.c.b16 %v2557, %v2555
      %v3622 = vpack.c.b16 %v2558, %v2556
      %v3623 = vpack.c.b16 %v2561, %v2559
      %v3624 = vpack.c.b16 %v2562, %v2560
      %v3625 = vpack.c.b16 %v2565, %v2563
      %v3626 = vpack.c.b16 %v2566, %v2564
      %v3627 = vpack.c.b16 %v2569, %v2567
      %v3628 = vpack.c.b16 %v2570, %v2568
      %v3629 = vpack.c.b16 %v2573, %v2571
      %v3630 = vpack.c.b16 %v2574, %v2572
      %v3631 = vpack.c.b16 %v2577, %v2575
      %v3632 = vpack.c.b16 %v2578, %v2576
      %v3633 = vpack.c.b16 %v2581, %v2579
      %v3634 = vpack.c.b16 %v2582, %v2580
      %v3635 = vpack.c.b16 %v2585, %v2583
      %v3636 = vpack.c.b16 %v2586, %v2584
      %v3637 = vpack.c.b16 %v2589, %v2587
      %v3638 = vpack.c.b16 %v2590, %v2588
      %v3639 = vpack.c.b16 %v2593, %v2591
      %v3640 = vpack.c.b16 %v2594, %v2592
      %v3641 = vpack.c.b16 %v2597, %v2595
      %v3642 = vpack.c.b16 %v2598, %v2596
      %v3643 = vpack.c.b16 %v2601, %v2599
      %v3644 = vpack.c.b16 %v2602, %v2600
      %v3645 = vpack.c.b16 %v2605, %v2603
      %v3646 = vpack.c.b16 %v2606, %v2604
      %v3647 = vpack.c.b16 %v2609, %v2607
      %v3648 = vpack.c.b16 %v2610, %v2608
      %v3649 = vpack.c.b16 %v2613, %v2611
      %v3650 = vpack.c.b16 %v2614, %v2612
      %v3651 = vpack.c.b16 %v2617, %v2615
      %v3652 = vpack.c.b16 %v2618, %v2616
      %v3653 = vpack.c.b16 %v2621, %v2619
      %v3654 = vpack.c.b16 %v2622, %v2620
      %v3655 = vpack.c.b16 %v2625, %v2623
      %v3656 = vpack.c.b16 %v2626, %v2624
      %v3657 = vpack.c.b16 %v2629, %v2627
      %v3658 = vpack.c.b16 %v2630, %v2628
      %v3659 = vpack.c.b16 %v2633, %v2631
      %v3660 = vpack.c.b16 %v2634, %v2632
      %v3661 = vpack.c.b16 %v2637, %v2635
      %v3662 = vpack.c.b16 %v2638, %v2636
      %v3663 = vpack.c.b16 %v2641, %v2639
      %v3664 = vpack.c.b16 %v2642, %v2640
      %v3665 = vpack.c.b16 %v2645, %v2643
      %v3666 = vpack.c.b16 %v2646, %v2644
      %v3667 = vpack.c.b16 %v2649, %v2647
      %v3668 = vpack.c.b16 %v2650, %v2648
      %v3669 = vpack.c.b16 %v2653, %v2651
      %v3670 = vpack.c.b16 %v2654, %v2652
      %v3671 = vpack.c.b16 %v2657, %v2655
      %v3672 = vpack.c.b16 %v2658, %v2656
      %v3673 = vpack.c.b16 %v2661, %v2659
      %v3674 = vpack.c.b16 %v2662, %v2660
      %v3675 = vpack.c.b16 %v2665, %v2663
      %v3676 = vpack.c.b16 %v2666, %v2664
      %v3677 = vpack.c.b16 %v2669, %v2667
      %v3678 = vpack.c.b16 %v2670, %v2668
      %v3679 = vpack.c.b16 %v2673, %v2671
      %v3680 = vpack.c.b16 %v2674, %v2672
      %v3681 = vpack.c.b16 %v2677, %v2675
      %v3682 = vpack.c.b16 %v2678, %v2676
      %v3683 = vpack.c.b16 %v2681, %v2679
      %v3684 = vpack.c.b16 %v2682, %v2680
      %v3685 = vpack.c.b16 %v2685, %v2683
      %v3686 = vpack.c.b16 %v2686, %v2684
      %v3687 = vpack.c.b16 %v2689, %v2687
      %v3688 = vpack.c.b16 %v2690, %v2688
      %v3689 = vpack.c.b16 %v2693, %v2691
      %v3690 = vpack.c.b16 %v2694, %v2692
      %v3691 = vpack.c.b16 %v2697, %v2695
      %v3692 = vpack.c.b16 %v2698, %v2696
      %v3693 = vpack.c.b16 %v2701, %v2699
      %v3694 = vpack.c.b16 %v2702, %v2700
      %v3695 = vpack.c.b16 %v2705, %v2703
      %v3696 = vpack.c.b16 %v2706, %v2704
      %v3697 = vpack.c.b16 %v2709, %v2707
      %v3698 = vpack.c.b16 %v2710, %v2708
      %v3699 = vpack.c.b16 %v2713, %v2711
      %v3700 = vpack.c.b16 %v2714, %v2712
      %v3701 = vpack.c.b16 %v2717, %v2715
      %v3702 = vpack.c.b16 %v2718, %v2716
      %v3703 = vpack.c.b16 %v2721, %v2719
      %v3704 = vpack.c.b16 %v2722, %v2720
      %v3705 = vpack.c.b16 %v2725, %v2723
      %v3706 = vpack.c.b16 %v2726, %v2724
      %v3707 = vpack.c.b16 %v2729, %v2727
      %v3708 = vpack.c.b16 %v2730, %v2728
      %v3709 = vpack.c.b16 %v2733, %v2731
      %v3710 = vpack.c.b16 %v2734, %v2732
      %v3711 = vpack.c.b16 %v2737, %v2735
      %v3712 = vpack.c.b16 %v2738, %v2736
      %v3713 = vpack.c.b16 %v2741, %v2739
      %v3714 = vpack.c.b16 %v2742, %v2740
      %v3715 = vpack.c.b16 %v2745, %v2743
      %v3716 = vpack.c.b16 %v2746, %v2744
      %v3717 = vpack.c.b16 %v2749, %v2747
      %v3718 = vpack.c.b16 %v2750, %v2748
      %v3719 = vpack.c.b16 %v2753, %v2751
      %v3720 = vpack.c.b16 %v2754, %v2752
      %v3721 = vpack.c.b16 %v2757, %v2755
      %v3722 = vpack.c.b16 %v2758, %v2756
      %v3723 = vpack.c.b16 %v2761, %v2759
      %v3724 = vpack.c.b16 %v2762, %v2760
      %v3725 = vpack.c.b16 %v2765, %v2763
      %v3726 = vpack.c.b16 %v2766, %v2764
      %v3727 = vpack.c.b16 %v2769, %v2767
      %v3728 = vpack.c.b16 %v2770, %v2768
      %v3729 = vpack.c.b16 %v2773, %v2771
      %v3730 = vpack.c.b16 %v2774, %v2772
      %v3731 = vpack.c.b16 %v2777, %v2775
      %v3732 = vpack.c.b16 %v2778, %v2776
      %v3733 = vpack.c.b16 %v2781, %v2779
      %v3734 = vpack.c.b16 %v2782, %v2780
      %v3735 = vpack.c.b16 %v2785, %v2783
      %v3736 = vpack.c.b16 %v2786, %v2784
      %v3737 = vpack.c.b16 %v2789, %v2787
      %v3738 = vpack.c.b16 %v2790, %v2788
      %v3739 = vpack.c.b16 %v2793, %v2791
      %v3740 = vpack.c.b16 %v2794, %v2792
      %v3741 = vpack.c.b16 %v2797, %v2795
      %v3742 = vpack.c.b16 %v2798, %v2796
      %v3743 = vpack.c.b16 %v2801, %v2799
      %v3744 = vpack.c.b16 %v2802, %v2800
      %v3745 = vpack.c.b16 %v2805, %v2803
      %v3746 = vpack.c.b16 %v2806, %v2804
      %v3747 = vpack.c.b16 %v2809, %v2807
      %v3748 = vpack.c.b16 %v2810, %v2808
      %v3749 = vpack.c.b16 %v2813, %v2811
      %v3750 = vpack.c.b16 %v2814, %v2812
      %v3751 = vpack.c.b16 %v2817, %v2815
      %v3752 = vpack.c.b16 %v2818, %v2816
      %v3753 = vpack.c.b16 %v2821, %v2819
      %v3754 = vpack.c.b16 %v2822, %v2820
      %v3755 = vpack.c.b16 %v2825, %v2823
      %v3756 = vpack.c.b16 %v2826, %v2824
      %v3757 = vpack.c.b16 %v2829, %v2827
      %v3758 = vpack.c.b16 %v2830, %v2828
      %v3759 = vpack.c.b16 %v2833, %v2831
      %v3760 = vpack.c.b16 %v2834, %v2832
      %v3761 = vpack.c.b16 %v2837, %v2835
      %v3762 = vpack.c.b16 %v2838, %v2836
      %v3763 = vpack.c.b16 %v2841, %v2839
      %v3764 = vpack.c.b16 %v2842, %v2840
      %v3765 = vpack.c.b16 %v2845, %v2843
      %v3766 = vpack.c.b16 %v2846, %v2844
      %v3767 = vpack.c.b16 %v2849, %v2847
      %v3768 = vpack.c.b16 %v2850, %v2848
      %v3769 = vpack.c.b16 %v2853, %v2851
      %v3770 = vpack.c.b16 %v2854, %v2852
      %v3771 = vpack.c.b16 %v2857, %v2855
      %v3772 = vpack.c.b16 %v2858, %v2856
      %v3773 = vpack.c.b16 %v2861, %v2859
      %v3774 = vpack.c.b16 %v2862, %v2860
      %v3775 = vpack.c.b16 %v2865, %v2863
      %v3776 = vpack.c.b16 %v2866, %v2864
      %v3777 = vpack.c.b16 %v2869, %v2867
      %v3778 = vpack.c.b16 %v2870, %v2868
      %v3779 = vpack.c.b16 %v2873, %v2871
      %v3780 = vpack.c.b16 %v2874, %v2872
      %v3781 = vpack.c.b16 %v2877, %v2875
      %v3782 = vpack.c.b16 %v2878, %v2876
      %v3783 = vpack.c.b16 %v2881, %v2879
      %v3784 = vpack.c.b16 %v2882, %v2880
      %v3785 = vpack.c.b16 %v2885, %v2883
      %v3786 = vpack.c.b16 %v2886, %v2884
      %v3787 = vpack.c.b16 %v2889, %v2887
      %v3788 = vpack.c.b16 %v2890, %v2888
      %v3789 = vpack.c.b16 %v2893, %v2891
      %v3790 = vpack.c.b16 %v2894, %v2892
      %v3791 = vpack.c.b16 %v2897, %v2895
      %v3792 = vpack.c.b16 %v2898, %v2896
      %v3793 = vpack.c.b16 %v2901, %v2899
      %v3794 = vpack.c.b16 %v2902, %v2900
      %v3795 = vpack.c.b16 %v2905, %v2903
      %v3796 = vpack.c.b16 %v2906, %v2904
      %v3797 = vpack.c.b16 %v2909, %v2907
      %v3798 = vpack.c.b16 %v2910, %v2908
      %v3799 = vpack.c.b16 %v2913, %v2911
      %v3800 = vpack.c.b16 %v2914, %v2912
      %v3801 = vpack.c.b16 %v2917, %v2915
      %v3802 = vpack.c.b16 %v2918, %v2916
      %v3803 = vpack.c.b16 %v2921, %v2919
      %v3804 = vpack.c.b16 %v2922, %v2920
      %v3805 = vpack.c.b16 %v2925, %v2923
      %v3806 = vpack.c.b16 %v2926, %v2924
      %v3807 = vpack.c.b16 %v2929, %v2927
      %v3808 = vpack.c.b16 %v2930, %v2928
      %v3809 = vpack.c.b16 %v2933, %v2931
      %v3810 = vpack.c.b16 %v2934, %v2932
      %v3811 = vpack.c.b16 %v2937, %v2935
      %v3812 = vpack.c.b16 %v2938, %v2936
      %v3813 = vpack.c.b16 %v2941, %v2939
      %v3814 = vpack.c.b16 %v2942, %v2940
      %v3815 = vpack.c.b16 %v2945, %v2943
      %v3816 = vpack.c.b16 %v2946, %v2944
      %v3817 = vpack.c.b16 %v2949, %v2947
      %v3818 = vpack.c.b16 %v2950, %v2948
      %v3819 = vpack.c.b16 %v2953, %v2951
      %v3820 = vpack.c.b16 %v2954, %v2952
      %v3821 = vpack.c.b16 %v2957, %v2955
      %v3822 = vpack.c.b16 %v2958, %v2956
      %v3823 = vpack.c.b16 %v2961, %v2959
      %v3824 = vpack.c.b16 %v2962, %v2960
      %v3825 = vpack.c.b16 %v2965, %v2963
      %v3826 = vpack.c.b16 %v2966, %v2964
      %v3827 = vpack.c.b16 %v2969, %v2967
      %v3828 = vpack.c.b16 %v2970, %v2968
      %v3829 = vpack.c.b16 %v2973, %v2971
      %v3830 = vpack.c.b16 %v2974, %v2972
      %v3831 = vpack.c.b16 %v2977, %v2975
      %v3832 = vpack.c.b16 %v2978, %v2976
      %v3833 = vpack.c.b16 %v2981, %v2979
      %v3834 = vpack.c.b16 %v2982, %v2980
      %v3835 = vpack.c.b16 %v2985, %v2983
      %v3836 = vpack.c.b16 %v2986, %v2984
      %v3837 = vpack.c.b16 %v2989, %v2987
      %v3838 = vpack.c.b16 %v2990, %v2988
      %v3839 = vpack.c.b16 %v2993, %v2991
      %v3840 = vpack.c.b16 %v2994, %v2992
      %v3841 = vpack.c.b16 %v2997, %v2995
      %v3842 = vpack.c.b16 %v2998, %v2996
      %v3843 = vpack.c.b16 %v3001, %v2999
      %v3844 = vpack.c.b16 %v3002, %v3000
      %v3845 = vpack.c.b16 %v3005, %v3003
      %v3846 = vpack.c.b16 %v3006, %v3004
      %v3847 = vpack.c.b16 %v3009, %v3007
      %v3848 = vpack.c.b16 %v3010, %v3008
      %v3849 = vpack.c.b16 %v3013, %v3011
      %v3850 = vpack.c.b16 %v3014, %v3012
      %v3851 = vpack.c.b16 %v3017, %v3015
      %v3852 = vpack.c.b16 %v3018, %v3016
      %v3853 = vpack.c.b16 %v3021, %v3019
      %v3854 = vpack.c.b16 %v3022, %v3020
      %v3855 = vpack.c.b16 %v3025, %v3023
      %v3856 = vpack.c.b16 %v3026, %v3024
      %v3857 = vpack.c.b16 %v3029, %v3027
      %v3858 = vpack.c.b16 %v3030, %v3028
      %v3859 = vpack.c.b16 %v3033, %v3031
      %v3860 = vpack.c.b16 %v3034, %v3032
      %v3861 = vpack.c.b16 %v3037, %v3035
      %v3862 = vpack.c.b16 %v3038, %v3036
      %v3863 = vpack.c.b16 %v3041, %v3039
      %v3864 = vpack.c.b16 %v3042, %v3040
      %v3865 = vpack.c.b16 %v3045, %v3043
      %v3866 = vpack.c.b16 %v3046, %v3044
      %v3867 = vpack.c.b16 %v3049, %v3047
      %v3868 = vpack.c.b16 %v3050, %v3048
      %v3869 = vpack.c.b16 %v3053, %v3051
      %v3870 = vpack.c.b16 %v3054, %v3052
      %v3871 = vpack.c.b16 %v3057, %v3055
      %v3872 = vpack.c.b16 %v3058, %v3056
      %v3873 = vpack.c.b16 %v3061, %v3059
      %v3874 = vpack.c.b16 %v3062, %v3060
      %v3875 = vpack.c.b16 %v3065, %v3063
      %v3876 = vpack.c.b16 %v3066, %v3064
      %v3877 = vpack.c.b16 %v3069, %v3067
      %v3878 = vpack.c.b16 %v3070, %v3068
      %v3879 = vpack.c.b16 %v3073, %v3071
      %v3880 = vpack.c.b16 %v3074, %v3072
      %v3881 = vpack.c.b16 %v3077, %v3075
      %v3882 = vpack.c.b16 %v3078, %v3076
      %v3883 = vpack.c.b16 %v3081, %v3079
      %v3884 = vpack.c.b16 %v3082, %v3080
      %v3885 = vpack.c.b16 %v3085, %v3083
      %v3886 = vpack.c.b16 %v3086, %v3084
      %v3887 = vpack.c.b16 %v3089, %v3087
      %v3888 = vpack.c.b16 %v3090, %v3088
      %v3889 = vpack.c.b16 %v3093, %v3091
      %v3890 = vpack.c.b16 %v3094, %v3092
      %v3891 = vpack.c.b16 %v3097, %v3095
      %v3892 = vpack.c.b16 %v3098, %v3096
      %v3893 = vpack.c.b16 %v3101, %v3099
      %v3894 = vpack.c.b16 %v3102, %v3100
      %v3895 = vpack.c.b16 %v3105, %v3103
      %v3896 = vpack.c.b16 %v3106, %v3104
      %v3897 = vpack.c.b16 %v3109, %v3107
      %v3898 = vpack.c.b16 %v3110, %v3108
      %v3899 = vpack.c.b16 %v3113, %v3111
      %v3900 = vpack.c.b16 %v3114, %v3112
      %v3901 = vpack.c.b16 %v3117, %v3115
      %v3902 = vpack.c.b16 %v3118, %v3116
      %v3903 = vpack.c.b16 %v3121, %v3119
      %v3904 = vpack.c.b16 %v3122, %v3120
      %v3905 = vpack.c.b16 %v3125, %v3123
      %v3906 = vpack.c.b16 %v3126, %v3124
      %v3907 = vpack.c.b16 %v3129, %v3127
      %v3908 = vpack.c.b16 %v3130, %v3128
      %v3909 = vpack.c.b16 %v3133, %v3131
      %v3910 = vpack.c.b16 %v3134, %v3132
      %v3911 = vpack.c.b16 %v3137, %v3135
      %v3912 = vpack.c.b16 %v3138, %v3136
      %v3913 = vpack.c.b16 %v3141, %v3139
      %v3914 = vpack.c.b16 %v3142, %v3140
      %v3915 = vpack.c.b16 %v3145, %v3143
      %v3916 = vpack.c.b16 %v3146, %v3144
      %v3917 = vpack.c.b16 %v3149, %v3147
      %v3918 = vpack.c.b16 %v3150, %v3148
      %v3919 = vpack.c.b16 %v3153, %v3151
      %v3920 = vpack.c.b16 %v3154, %v3152
      %v3921 = vpack.c.b16 %v3157, %v3155
      %v3922 = vpack.c.b16 %v3158, %v3156
      %v3923 = vpack.c.b16 %v3161, %v3159
      %v3924 = vpack.c.b16 %v3162, %v3160
      %v3925 = vpack.c.b16 %v3165, %v3163
      %v3926 = vpack.c.b16 %v3166, %v3164
      %v3927 = vpack.c.b16 %v3169, %v3167
      %v3928 = vpack.c.b16 %v3170, %v3168
      %v3929 = vpack.c.b16 %v3173, %v3171
      %v3930 = vpack.c.b16 %v3174, %v3172
      %v3931 = vpack.c.b16 %v3177, %v3175
      %v3932 = vpack.c.b16 %v3178, %v3176
      %v3933 = vpack.c.b16 %v3181, %v3179
      %v3934 = vpack.c.b16 %v3182, %v3180
      %v3935 = vpack.c.b16 %v3185, %v3183
      %v3936 = vpack.c.b16 %v3186, %v3184
      %v3937 = vpack.c.b16 %v3189, %v3187
      %v3938 = vpack.c.b16 %v3190, %v3188
      %v3939 = vpack.c.b16 %v3193, %v3191
      %v3940 = vpack.c.b16 %v3194, %v3192
      %v3941 = vpack.c.b16 %v3197, %v3195
      %v3942 = vpack.c.b16 %v3198, %v3196
      %v3943 = vpack.c.b16 %v3201, %v3199
      %v3944 = vpack.c.b16 %v3202, %v3200
      %v3945 = vpack.c.b16 %v3205, %v3203
      %v3946 = vpack.c.b16 %v3206, %v3204
      %v3947 = vpack.c.b16 %v3209, %v3207
      %v3948 = vpack.c.b16 %v3210, %v3208
      %v3949 = vpack.c.b16 %v3213, %v3211
      %v3950 = vpack.c.b16 %v3214, %v3212
      %v3951 = vpack.c.b16 %v3217, %v3215
      %v3952 = vpack.c.b16 %v3218, %v3216
      %v3953 = vpack.c.b16 %v3221, %v3219
      %v3954 = vpack.c.b16 %v3222, %v3220
      %v3955 = vpack.c.b16 %v3225, %v3223
      %v3956 = vpack.c.b16 %v3226, %v3224
      %v3957 = vpack.c.b16 %v3229, %v3227
      %v3958 = vpack.c.b16 %v3230, %v3228
      %v3959 = vpack.c.b16 %v3233, %v3231
      %v3960 = vpack.c.b16 %v3234, %v3232
      %v3961 = vpack.c.b16 %v3237, %v3235
      %v3962 = vpack.c.b16 %v3238, %v3236
      %v3963 = vpack.c.b16 %v3241, %v3239
      %v3964 = vpack.c.b16 %v3242, %v3240
      %v3965 = vpack.c.b16 %v3245, %v3243
      %v3966 = vpack.c.b16 %v3246, %v3244
      %v3967 = vpack.c.b16 %v3249, %v3247
      %v3968 = vpack.c.b16 %v3250, %v3248
      %v3969 = vpack.c.b16 %v3253, %v3251
      %v3970 = vpack.c.b16 %v3254, %v3252
      %v3971 = vpack.c.b16 %v3257, %v3255
      %v3972 = vpack.c.b16 %v3258, %v3256
      %v3973 = vpack.c.b16 %v3261, %v3259
      %v3974 = vpack.c.b16 %v3262, %v3260
      %v3975 = vpack.c.b16 %v3265, %v3263
      %v3976 = vpack.c.b16 %v3266, %v3264
      %v3977 = vpack.c.b16 %v3269, %v3267
      %v3978 = vpack.c.b16 %v3270, %v3268
      %v3979 = vpack.c.b16 %v3273, %v3271
      %v3980 = vpack.c.b16 %v3274, %v3272
      %v3981 = vpack.c.b16 %v3277, %v3275
      %v3982 = vpack.c.b16 %v3278, %v3276
      %v3983 = vpack.c.b16 %v3281, %v3279
      %v3984 = vpack.c.b16 %v3282, %v3280
      %v3985 = vpack.c.b16 %v3285, %v3283
      %v3986 = vpack.c.b16 %v3286, %v3284
      %v3987 = vpack.c.b16 %v3289, %v3287
      %v3988 = vpack.c.b16 %v3290, %v3288
      %v3989 = vpack.c.b16 %v3293, %v3291
      %v3990 = vpack.c.b16 %v3294, %v3292
      %v3991 = vpack.c.b16 %v3297, %v3295
      %v3992 = vpack.c.b16 %v3298, %v3296
      %v3993 = vpack.c.b16 %v3301, %v3299
      %v3994 = vpack.c.b16 %v3302, %v3300
      %v3995 = vpack.c.b16 %v3305, %v3303
      %v3996 = vpack.c.b16 %v3306, %v3304
      %v3997 = vpack.c.b16 %v3309, %v3307
      %v3998 = vpack.c.b16 %v3310, %v3308
      %v3999 = vpack.c.b16 %v3313, %v3311
      %v4000 = vpack.c.b16 %v3314, %v3312
      %v4001 = vpack.c.b16 %v3317, %v3315
      %v4002 = vpack.c.b16 %v3318, %v3316
      %v4003 = vpack.c.b16 %v3321, %v3319
      %v4004 = vpack.c.b16 %v3322, %v3320
      %v4005 = vpack.c.b16 %v3325, %v3323
      %v4006 = vpack.c.b16 %v3326, %v3324
      %v4007 = vpack.c.b16 %v3329, %v3327
      %v4008 = vpack.c.b16 %v3330, %v3328
      %v4009 = vpack.c.b16 %v3333, %v3331
      %v4010 = vpack.c.b16 %v3334, %v3332
      %v4011 = vpack.c.b16 %v3337, %v3335
      %v4012 = vpack.c.b16 %v3338, %v3336
      %v4013 = vpack.c.b16 %v3341, %v3339
      %v4014 = vpack.c.b16 %v3342, %v3340
      %v4015 = vpack.c.b16 %v3345, %v3343
      %v4016 = vpack.c.b16 %v3346, %v3344
      %v4017 = vpack.c.b16 %v3349, %v3347
      %v4018 = vpack.c.b16 %v3350, %v3348
      %v4019 = vpack.c.b16 %v3353, %v3351
      %v4020 = vpack.c.b16 %v3354, %v3352
      %v4021 = vpack.c.b16 %v3357, %v3355
      %v4022 = vpack.c.b16 %v3358, %v3356
      %v4023 = vpack.c.b16 %v3361, %v3359
      %v4024 = vpack.c.b16 %v3362, %v3360
      %v4025 = vpack.c.b16 %v3365, %v3363
      %v4026 = vpack.c.b16 %v3366, %v3364
      %v4027 = vpack.c.b16 %v3369, %v3367
      %v4028 = vpack.c.b16 %v3370, %v3368
      %v4029 = vpack.c.b16 %v3373, %v3371
      %v4030 = vpack.c.b16 %v3374, %v3372
      %v4031 = vpack.c.b16 %v3377, %v3375
      %v4032 = vpack.c.b16 %v3378, %v3376
      %v4033 = vpack.c.b16 %v3381, %v3379
      %v4034 = vpack.c.b16 %v3382, %v3380
      %v4035 = vpack.c.b16 %v3385, %v3383
      %v4036 = vpack.c.b16 %v3386, %v3384
      %v4037 = vpack.c.b16 %v3389, %v3387
      %v4038 = vpack.c.b16 %v3390, %v3388
      %v4039 = vpack.c.b16 %v3393, %v3391
      %v4040 = vpack.c.b16 %v3394, %v3392
      %v4041 = vpack.c.b16 %v3397, %v3395
      %v4042 = vpack.c.b16 %v3398, %v3396
      %v4043 = vpack.c.b16 %v3401, %v3399
      %v4044 = vpack.c.b16 %v3402, %v3400
      %v4045 = vpack.c.b16 %v3405, %v3403
      %v4046 = vpack.c.b16 %v3406, %v3404
      %v4047 = vpack.c.b16 %v3409, %v3407
      %v4048 = vpack.c.b16 %v3410, %v3408
      %v4049 = vpack.c.b16 %v3413, %v3411
      %v4050 = vpack.c.b16 %v3414, %v3412
      %v4051 = vpack.c.b16 %v3417, %v3415
      %v4052 = vpack.c.b16 %v3418, %v3416
      %v4053 = vpack.c.b16 %v3421, %v3419
      %v4054 = vpack.c.b16 %v3422, %v3420
      %v4055 = vpack.c.b16 %v3425, %v3423
      %v4056 = vpack.c.b16 %v3426, %v3424
      %v4057 = vpack.c.b16 %v3429, %v3427
      %v4058 = vpack.c.b16 %v3430, %v3428
      %v4059 = vpack.c.b16 %v3433, %v3431
      %v4060 = vpack.c.b16 %v3434, %v3432
      %v4061 = vpack.c.b16 %v3437, %v3435
      %v4062 = vpack.c.b16 %v3438, %v3436
      %v4063 = vpack.c.b16 %v3441, %v3439
      %v4064 = vpack.c.b16 %v3442, %v3440
      %v4065 = vpack.c.b16 %v3445, %v3443
      %v4066 = vpack.c.b16 %v3446, %v3444
      %v4067 = vpack.c.b16 %v3449, %v3447
      %v4068 = vpack.c.b16 %v3450, %v3448
      %v4069 = vpack.c.b16 %v3453, %v3451
      %v4070 = vpack.c.b16 %v3454, %v3452
      %v4071 = vpack.c.b16 %v3457, %v3455
      %v4072 = vpack.c.b16 %v3458, %v3456
      %v4073 = vpack.c.b16 %v3461, %v3459
      %v4074 = vpack.c.b16 %v3462, %v3460
      %v4075 = vpack.c.b16 %v3465, %v3463
      %v4076 = vpack.c.b16 %v3466, %v3464
      %v4077 = vpack.c.b16 %v3469, %v3467
      %v4078 = vpack.c.b16 %v3470, %v3468
      %v4079 = vpack.c.b16 %v3473, %v3471
      %v4080 = vpack.c.b16 %v3474, %v3472
      %v4081 = vpack.c.b16 %v3477, %v3475
      %v4082 = vpack.c.b16 %v3478, %v3476
      %v4083 = vpack.c.b16 %v3481, %v3479
      %v4084 = vpack.c.b16 %v3482, %v3480
      %v4085 = vpack.c.b16 %v3485, %v3483
      %v4086 = vpack.c.b16 %v3486, %v3484
      %v4087 = vpack.c.b16 %v3489, %v3487
      %v4088 = vpack.c.b16 %v3490, %v3488
      %v4089 = vpack.c.b16 %v3493, %v3491
      %v4090 = vpack.c.b16 %v3494, %v3492
      %v4091 = vpack.c.b16 %v3497, %v3495
      %v4092 = vpack.c.b16 %v3498, %v3496
      %v4093 = vpack.c.b16 %v3501, %v3499
      %v4094 = vpack.c.b16 %v3502, %v3500
      %v4095 = vpack.c.b16 %v3505, %v3503
      %v4096 = vpack.c.b16 %v3506, %v3504
      %v4097 = vpack.c.b16 %v3509, %v3507
      %v4098 = vpack.c.b16 %v3510, %v3508
      %v4099 = vpack.c.b16 %v3513, %v3511
      %v4100 = vpack.c.b16 %v3514, %v3512
      %v4101 = vpack.c.b16 %v3517, %v3515
      %v4102 = vpack.c.b16 %v3518, %v3516
      %v4103 = vpack.c.b16 %v3521, %v3519
      %v4104 = vpack.c.b16 %v3522, %v3520
      %v4105 = vpack.c.b16 %v3525, %v3523
      %v4106 = vpack.c.b16 %v3526, %v3524
      %v4107 = vpack.c.b16 %v3529, %v3527
      %v4108 = vpack.c.b16 %v3530, %v3528
      %v4109 = vpack.c.b16 %v3533, %v3531
      %v4110 = vpack.c.b16 %v3534, %v3532
      %4687 = vmatprep.subr.bf16.mxu0 %v3536
      %4688 = vmatpush1.bf16.msra.mxu0 %v3535
      %4689 = vmatprep.subr.bf16.mxu0 %v3538
      %4690 = vmatpush1.bf16.msra.mxu0 %v3537
      %4691 = vmatprep.subr.bf16.mxu0 %v3540
      %4692 = vmatpush1.bf16.msra.mxu0 %v3539
      %4693 = vmatprep.subr.bf16.mxu0 %v3542
      %4694 = vmatpush1.bf16.msra.mxu0 %v3541
      %4695 = vmatprep.subr.bf16.mxu0 %v3544
      %4696 = vmatpush1.bf16.msra.mxu0 %v3543
      %4697 = vmatprep.subr.bf16.mxu0 %v3546
      %4698 = vmatpush1.bf16.msra.mxu0 %v3545
      %4699 = vmatprep.subr.bf16.mxu0 %v3548
      %4700 = vmatpush1.bf16.msra.mxu0 %v3547
      %4701 = vmatprep.subr.bf16.mxu0 %v3550
      %4702 = vmatpush1.bf16.msra.mxu0 %v3549
      %4703 = vmatprep.subr.bf16.mxu0 %v3552
      %4704 = vmatpush1.bf16.msra.mxu0 %v3551
      %4705 = vmatprep.subr.bf16.mxu0 %v3554
      %4706 = vmatpush1.bf16.msra.mxu0 %v3553
      %4707 = vmatprep.subr.bf16.mxu0 %v3556
      %4708 = vmatpush1.bf16.msra.mxu0 %v3555
      %4709 = vmatprep.subr.bf16.mxu0 %v3558
      %4710 = vmatpush1.bf16.msra.mxu0 %v3557
      %4711 = vmatprep.subr.bf16.mxu0 %v3560
      %4712 = vmatpush1.bf16.msra.mxu0 %v3559
      %4713 = vmatprep.subr.bf16.mxu0 %v3562
      %4714 = vmatpush1.bf16.msra.mxu0 %v3561
      %4715 = vmatprep.subr.bf16.mxu0 %v3564
      %4716 = vmatpush1.bf16.msra.mxu0 %v3563
      %4717 = vmatprep.subr.bf16.mxu0 %v3566
      %4718 = vmatpush1.bf16.msra.mxu0 %v3565
      %4719 = vmatprep.mubr.bf16.mxu0 %v1088
      %4720 = vmatmul.mubr.bf16.gmra.mrb[0].mxu0 %v1087
      %v4721 = vpop.f32.mrb[0].mxu0
      %v4722 = vadd.f32 0.0, %v4721
      %v4723 = vpop.f32.mrb[0].mxu0
      %v4724 = vadd.f32 0.0, %v4723
      %v4725 = vpop.f32.mrb[0].mxu0
      %v4726 = vadd.f32 0.0, %v4725
      %v4727 = vpop.f32.mrb[0].mxu0
      %v4728 = vadd.f32 0.0, %v4727
      %4729 = vmatprep.mubr.bf16.mxu0 %v1124
      %4730 = vmatmul.mubr.bf16.gmra.mrb[0].mxu0 %v1123
      %v4731 = vpop.f32.mrb[0].mxu0
      %v4732 = vadd.f32 0.0, %v4731
      %v4733 = vpop.f32.mrb[0].mxu0
      %v4734 = vadd.f32 0.0, %v4733
      %v4735 = vpop.f32.mrb[0].mxu0
      %v4736 = vadd.f32 0.0, %v4735
      %v4737 = vpop.f32.mrb[0].mxu0
      %v4738 = vadd.f32 0.0, %v4737
      %4739 = vmatprep.mubr.bf16.mxu0 %v1160
      %4740 = vmatmul.mubr.bf16.gmra.mrb[0].mxu0 %v1159
      %v4741 = vpop.f32.mrb[0].mxu0
      %v4742 = vadd.f32 0.0, %v4741
      %v4743 = vpop.f32.mrb[0].mxu0
      %v4744 = vadd.f32 0.0, %v4743
      %v4745 = vpop.f32.mrb[0].mxu0
      %v4746 = vadd.f32 0.0, %v4745
      %v4747 = vpop.f32.mrb[0].mxu0
      %v4748 = vadd.f32 0.0, %v4747
      %4749 = vmatprep.mubr.bf16.mxu0 %v1196
      %4750 = vmatmul.mubr.bf16.gmra.mrb[0].mxu0 %v1195
      %v4751 = vpop.f32.mrb[0].mxu0
      %v4752 = vadd.f32 0.0, %v4751
      %v4753 = vpop.f32.mrb[0].mxu0
      %v4754 = vadd.f32 0.0, %v4753
      %v4755 = vpop.f32.mrb[0].mxu0
      %v4756 = vadd.f32 0.0, %v4755
      %v4757 = vpop.f32.mrb[0].mxu0
      %v4758 = vadd.f32 0.0, %v4757
      %4759 = vdwg.mxu0
      %4760 = vmatprep.subr.bf16.mxu0 %v3568
      %4761 = vmatpush1.bf16.msra.mxu0 %v3567
      %4762 = vmatprep.subr.bf16.mxu0 %v3570
      %4763 = vmatpush1.bf16.msra.mxu0 %v3569
      %4764 = vmatprep.subr.bf16.mxu0 %v3572
      %4765 = vmatpush1.bf16.msra.mxu0 %v3571
      %4766 = vmatprep.subr.bf16.mxu0 %v3574
      %4767 = vmatpush1.bf16.msra.mxu0 %v3573
      %4768 = vmatprep.subr.bf16.mxu0 %v3576
      %4769 = vmatpush1.bf16.msra.mxu0 %v3575
      %4770 = vmatprep.subr.bf16.mxu0 %v3578
      %4771 = vmatpush1.bf16.msra.mxu0 %v3577
      %4772 = vmatprep.subr.bf16.mxu0 %v3580
      %4773 = vmatpush1.bf16.msra.mxu0 %v3579
      %4774 = vmatprep.subr.bf16.mxu0 %v3582
      %4775 = vmatpush1.bf16.msra.mxu0 %v3581
      %4776 = vmatprep.subr.bf16.mxu0 %v3584
      %4777 = vmatpush1.bf16.msra.mxu0 %v3583
      %4778 = vmatprep.subr.bf16.mxu0 %v3586
      %4779 = vmatpush1.bf16.msra.mxu0 %v3585
      %4780 = vmatprep.subr.bf16.mxu0 %v3588
      %4781 = vmatpush1.bf16.msra.mxu0 %v3587
      %4782 = vmatprep.subr.bf16.mxu0 %v3590
      %4783 = vmatpush1.bf16.msra.mxu0 %v3589
      %4784 = vmatprep.subr.bf16.mxu0 %v3592
      %4785 = vmatpush1.bf16.msra.mxu0 %v3591
      %4786 = vmatprep.subr.bf16.mxu0 %v3594
      %4787 = vmatpush1.bf16.msra.mxu0 %v3593
      %4788 = vmatprep.subr.bf16.mxu0 %v3596
      %4789 = vmatpush1.bf16.msra.mxu0 %v3595
      %4790 = vmatprep.subr.bf16.mxu0 %v3598
      %4791 = vmatpush1.bf16.msra.mxu0 %v3597
      %4792 = vmatprep.mubr.bf16.mxu0 %v1090
      %4793 = vmatmul.mubr.bf16.gmra.mrb[0].mxu0 %v1089
      %v4794 = vpop.f32.mrb[0].mxu0
      %v4795 = vadd.f32 %v4722, %v4794
      %v4796 = vpop.f32.mrb[0].mxu0
      %v4797 = vadd.f32 %v4724, %v4796
      %v4798 = vpop.f32.mrb[0].mxu0
      %v4799 = vadd.f32 %v4726, %v4798
      %v4800 = vpop.f32.mrb[0].mxu0
      %v4801 = vadd.f32 %v4728, %v4800
      %4802 = vmatprep.mubr.bf16.mxu0 %v1126
      %4803 = vmatmul.mubr.bf16.gmra.mrb[0].mxu0 %v1125
      %v4804 = vpop.f32.mrb[0].mxu0
      %v4805 = vadd.f32 %v4732, %v4804
      %v4806 = vpop.f32.mrb[0].mxu0
      %v4807 = vadd.f32 %v4734, %v4806
      %v4808 = vpop.f32.mrb[0].mxu0
      %v4809 = vadd.f32 %v4736, %v4808
      %v4810 = vpop.f32.mrb[0].mxu0
      %v4811 = vadd.f32 %v4738, %v4810
      %4812 = vmatprep.mubr.bf16.mxu0 %v1162
      %4813 = vmatmul.mubr.bf16.gmra.mrb[0].mxu0 %v1161
      %v4814 = vpop.f32.mrb[0].mxu0
      %v4815 = vadd.f32 %v4742, %v4814
      %v4816 = vpop.f32.mrb[0].mxu0
      %v4817 = vadd.f32 %v4744, %v4816
      %v4818 = vpop.f32.mrb[0].mxu0
      %v4819 = vadd.f32 %v4746, %v4818
      %v4820 = vpop.f32.mrb[0].mxu0
      %v4821 = vadd.f32 %v4748, %v4820
      %4822 = vmatprep.mubr.bf16.mxu0 %v1198
      %4823 = vmatmul.mubr.bf16.gmra.mrb[0].mxu0 %v1197
      %v4824 = vpop.f32.mrb[0].mxu0
      %v4825 = vadd.f32 %v4752, %v4824
      %v4826 = vpop.f32.mrb[0].mxu0
      %v4827 = vadd.f32 %v4754, %v4826
      %v4828 = vpop.f32.mrb[0].mxu0
      %v4829 = vadd.f32 %v4756, %v4828
      %v4830 = vpop.f32.mrb[0].mxu0
      %v4831 = vadd.f32 %v4758, %v4830
      %4832 = vdwg.mxu0
      %4833 = vmatprep.subr.bf16.mxu0 %v3600
      %4834 = vmatpush1.bf16.msra.mxu0 %v3599
      %4835 = vmatprep.subr.bf16.mxu0 %v3602
      %4836 = vmatpush1.bf16.msra.mxu0 %v3601
      %4837 = vmatprep.subr.bf16.mxu0 %v3604
      %4838 = vmatpush1.bf16.msra.mxu0 %v3603
      %4839 = vmatprep.subr.bf16.mxu0 %v3606
      %4840 = vmatpush1.bf16.msra.mxu0 %v3605
      %4841 = vmatprep.subr.bf16.mxu0 %v3608
      %4842 = vmatpush1.bf16.msra.mxu0 %v3607
      %4843 = vmatprep.subr.bf16.mxu0 %v3610
      %4844 = vmatpush1.bf16.msra.mxu0 %v3609
      %4845 = vmatprep.subr.bf16.mxu0 %v3612
      %4846 = vmatpush1.bf16.msra.mxu0 %v3611
      %4847 = vmatprep.subr.bf16.mxu0 %v3614
      %4848 = vmatpush1.bf16.msra.mxu0 %v3613
      %4849 = vmatprep.subr.bf16.mxu0 %v3616
      %4850 = vmatpush1.bf16.msra.mxu0 %v3615
      %4851 = vmatprep.subr.bf16.mxu0 %v3618
      %4852 = vmatpush1.bf16.msra.mxu0 %v3617
      %4853 = vmatprep.subr.bf16.mxu0 %v3620
      %4854 = vmatpush1.bf16.msra.mxu0 %v3619
      %4855 = vmatprep.subr.bf16.mxu0 %v3622
      %4856 = vmatpush1.bf16.msra.mxu0 %v3621
      %4857 = vmatprep.subr.bf16.mxu0 %v3624
      %4858 = vmatpush1.bf16.msra.mxu0 %v3623
      %4859 = vmatprep.subr.bf16.mxu0 %v3626
      %4860 = vmatpush1.bf16.msra.mxu0 %v3625
      %4861 = vmatprep.subr.bf16.mxu0 %v3628
      %4862 = vmatpush1.bf16.msra.mxu0 %v3627
      %4863 = vmatprep.subr.bf16.mxu0 %v3630
      %4864 = vmatpush1.bf16.msra.mxu0 %v3629
      %4865 = vmatprep.mubr.bf16.mxu0 %v1092
      %4866 = vmatmul.mubr.bf16.gmra.mrb[0].mxu0 %v1091
      %v4867 = vpop.f32.mrb[0].mxu0
      %v4868 = vadd.f32 %v4795, %v4867
      %v4869 = vpop.f32.mrb[0].mxu0
      %v4870 = vadd.f32 %v4797, %v4869
      %v4871 = vpop.f32.mrb[0].mxu0
      %v4872 = vadd.f32 %v4799, %v4871
      %v4873 = vpop.f32.mrb[0].mxu0
      %v4874 = vadd.f32 %v4801, %v4873
      %4875 = vmatprep.mubr.bf16.mxu0 %v1128
      %4876 = vmatmul.mubr.bf16.gmra.mrb[0].mxu0 %v1127
      %v4877 = vpop.f32.mrb[0].mxu0
      %v4878 = vadd.f32 %v4805, %v4877
      %v4879 = vpop.f32.mrb[0].mxu0
      %v4880 = vadd.f32 %v4807, %v4879
      %v4881 = vpop.f32.mrb[0].mxu0
      %v4882 = vadd.f32 %v4809, %v4881
      %v4883 = vpop.f32.mrb[0].mxu0
      %v4884 = vadd.f32 %v4811, %v4883
      %4885 = vmatprep.mubr.bf16.mxu0 %v1164
      %4886 = vmatmul.mubr.bf16.gmra.mrb[0].mxu0 %v1163
      %v4887 = vpop.f32.mrb[0].mxu0
      %v4888 = vadd.f32 %v4815, %v4887
      %v4889 = vpop.f32.mrb[0].mxu0
      %v4890 = vadd.f32 %v4817, %v4889
      %v4891 = vpop.f32.mrb[0].mxu0
      %v4892 = vadd.f32 %v4819, %v4891
      %v4893 = vpop.f32.mrb[0].mxu0
      %v4894 = vadd.f32 %v4821, %v4893
      %4895 = vmatprep.mubr.bf16.mxu0 %v1200
      %4896 = vmatmul.mubr.bf16.gmra.mrb[0].mxu0 %v1199
      %v4897 = vpop.f32.mrb[0].mxu0
      %v4898 = vadd.f32 %v4825, %v4897
      %v4899 = vpop.f32.mrb[0].mxu0
      %v4900 = vadd.f32 %v4827, %v4899
      %v4901 = vpop.f32.mrb[0].mxu0
      %v4902 = vadd.f32 %v4829, %v4901
      %v4903 = vpop.f32.mrb[0].mxu0
      %v4904 = vadd.f32 %v4831, %v4903
      %4905 = vdwg.mxu0
      %4906 = vmatprep.subr.bf16.mxu0 %v3632
      %4907 = vmatpush1.bf16.msra.mxu0 %v3631
      %4908 = vmatprep.subr.bf16.mxu0 %v3634
      %4909 = vmatpush1.bf16.msra.mxu0 %v3633
      %4910 = vmatprep.subr.bf16.mxu0 %v3636
      %4911 = vmatpush1.bf16.msra.mxu0 %v3635
      %4912 = vmatprep.subr.bf16.mxu0 %v3638
      %4913 = vmatpush1.bf16.msra.mxu0 %v3637
      %4914 = vmatprep.subr.bf16.mxu0 %v3640
      %4915 = vmatpush1.bf16.msra.mxu0 %v3639
      %4916 = vmatprep.subr.bf16.mxu0 %v3642
      %4917 = vmatpush1.bf16.msra.mxu0 %v3641
      %4918 = vmatprep.subr.bf16.mxu0 %v3644
      %4919 = vmatpush1.bf16.msra.mxu0 %v3643
      %4920 = vmatprep.subr.bf16.mxu0 %v3646
      %4921 = vmatpush1.bf16.msra.mxu0 %v3645
      %4922 = vmatprep.subr.bf16.mxu0 %v3648
      %4923 = vmatpush1.bf16.msra.mxu0 %v3647
      %4924 = vmatprep.subr.bf16.mxu0 %v3650
      %4925 = vmatpush1.bf16.msra.mxu0 %v3649
      %4926 = vmatprep.subr.bf16.mxu0 %v3652
      %4927 = vmatpush1.bf16.msra.mxu0 %v3651
      %4928 = vmatprep.subr.bf16.mxu0 %v3654
      %4929 = vmatpush1.bf16.msra.mxu0 %v3653
      %4930 = vmatprep.subr.bf16.mxu0 %v3656
      %4931 = vmatpush1.bf16.msra.mxu0 %v3655
      %4932 = vmatprep.subr.bf16.mxu0 %v3658
      %4933 = vmatpush1.bf16.msra.mxu0 %v3657
      %4934 = vmatprep.subr.bf16.mxu0 %v3660
      %4935 = vmatpush1.bf16.msra.mxu0 %v3659
      %4936 = vmatprep.subr.bf16.mxu0 %v3662
      %4937 = vmatpush1.bf16.msra.mxu0 %v3661
      %4938 = vmatprep.mubr.bf16.mxu0 %v1094
      %4939 = vmatmul.mubr.bf16.gmra.mrb[0].mxu0 %v1093
      %v4940 = vpop.f32.mrb[0].mxu0
      %v4941 = vadd.f32 %v4868, %v4940
      %v4942 = vpop.f32.mrb[0].mxu0
      %v4943 = vadd.f32 %v4870, %v4942
      %v4944 = vpop.f32.mrb[0].mxu0
      %v4945 = vadd.f32 %v4872, %v4944
      %v4946 = vpop.f32.mrb[0].mxu0
      %v4947 = vadd.f32 %v4874, %v4946
      %4948 = vmatprep.mubr.bf16.mxu0 %v1130
      %4949 = vmatmul.mubr.bf16.gmra.mrb[0].mxu0 %v1129
      %v4950 = vpop.f32.mrb[0].mxu0
      %v4951 = vadd.f32 %v4878, %v4950
      %v4952 = vpop.f32.mrb[0].mxu0
      %v4953 = vadd.f32 %v4880, %v4952
      %v4954 = vpop.f32.mrb[0].mxu0
      %v4955 = vadd.f32 %v4882, %v4954
      %v4956 = vpop.f32.mrb[0].mxu0
      %v4957 = vadd.f32 %v4884, %v4956
      %4958 = vmatprep.mubr.bf16.mxu0 %v1166
      %4959 = vmatmul.mubr.bf16.gmra.mrb[0].mxu0 %v1165
      %v4960 = vpop.f32.mrb[0].mxu0
      %v4961 = vadd.f32 %v4888, %v4960
      %v4962 = vpop.f32.mrb[0].mxu0
      %v4963 = vadd.f32 %v4890, %v4962
      %v4964 = vpop.f32.mrb[0].mxu0
      %v4965 = vadd.f32 %v4892, %v4964
      %v4966 = vpop.f32.mrb[0].mxu0
      %v4967 = vadd.f32 %v4894, %v4966
      %4968 = vmatprep.mubr.bf16.mxu0 %v1202
      %4969 = vmatmul.mubr.bf16.gmra.mrb[0].mxu0 %v1201
      %v4970 = vpop.f32.mrb[0].mxu0
      %v4971 = vadd.f32 %v4898, %v4970
      %v4972 = vpop.f32.mrb[0].mxu0
      %v4973 = vadd.f32 %v4900, %v4972
      %v4974 = vpop.f32.mrb[0].mxu0
      %v4975 = vadd.f32 %v4902, %v4974
      %v4976 = vpop.f32.mrb[0].mxu0
      %v4977 = vadd.f32 %v4904, %v4976
      %4978 = vdwg.mxu0
      %4979 = vmatprep.subr.bf16.mxu0 %v3664
      %4980 = vmatpush1.bf16.msra.mxu0 %v3663
      %4981 = vmatprep.subr.bf16.mxu0 %v3666
      %4982 = vmatpush1.bf16.msra.mxu0 %v3665
      %4983 = vmatprep.subr.bf16.mxu0 %v3668
      %4984 = vmatpush1.bf16.msra.mxu0 %v3667
      %4985 = vmatprep.subr.bf16.mxu0 %v3670
      %4986 = vmatpush1.bf16.msra.mxu0 %v3669
      %4987 = vmatprep.subr.bf16.mxu0 %v3672
      %4988 = vmatpush1.bf16.msra.mxu0 %v3671
      %4989 = vmatprep.subr.bf16.mxu0 %v3674
      %4990 = vmatpush1.bf16.msra.mxu0 %v3673
      %4991 = vmatprep.subr.bf16.mxu0 %v3676
      %4992 = vmatpush1.bf16.msra.mxu0 %v3675
      %4993 = vmatprep.subr.bf16.mxu0 %v3678
      %4994 = vmatpush1.bf16.msra.mxu0 %v3677
      %4995 = vmatprep.subr.bf16.mxu0 %v3680
      %4996 = vmatpush1.bf16.msra.mxu0 %v3679
      %4997 = vmatprep.subr.bf16.mxu0 %v3682
      %4998 = vmatpush1.bf16.msra.mxu0 %v3681
      %4999 = vmatprep.subr.bf16.mxu0 %v3684
      %5000 = vmatpush1.bf16.msra.mxu0 %v3683
      %5001 = vmatprep.subr.bf16.mxu0 %v3686
      %5002 = vmatpush1.bf16.msra.mxu0 %v3685
      %5003 = vmatprep.subr.bf16.mxu0 %v3688
      %5004 = vmatpush1.bf16.msra.mxu0 %v3687
      %5005 = vmatprep.subr.bf16.mxu0 %v3690
      %5006 = vmatpush1.bf16.msra.mxu0 %v3689
      %5007 = vmatprep.subr.bf16.mxu0 %v3692
      %5008 = vmatpush1.bf16.msra.mxu0 %v3691
      %5009 = vmatprep.subr.bf16.mxu0 %v3694
      %5010 = vmatpush1.bf16.msra.mxu0 %v3693
      %5011 = vmatprep.mubr.bf16.mxu0 %v1096
      %5012 = vmatmul.mubr.bf16.gmra.mrb[0].mxu0 %v1095
      %v5013 = vpop.f32.mrb[0].mxu0
      %v5014 = vadd.f32 %v4941, %v5013
      %v5015 = vpop.f32.mrb[0].mxu0
      %v5016 = vadd.f32 %v4943, %v5015
      %v5017 = vpop.f32.mrb[0].mxu0
      %v5018 = vadd.f32 %v4945, %v5017
      %v5019 = vpop.f32.mrb[0].mxu0
      %v5020 = vadd.f32 %v4947, %v5019
      %5021 = vmatprep.mubr.bf16.mxu0 %v1132
      %5022 = vmatmul.mubr.bf16.gmra.mrb[0].mxu0 %v1131
      %v5023 = vpop.f32.mrb[0].mxu0
      %v5024 = vadd.f32 %v4951, %v5023
      %v5025 = vpop.f32.mrb[0].mxu0
      %v5026 = vadd.f32 %v4953, %v5025
      %v5027 = vpop.f32.mrb[0].mxu0
      %v5028 = vadd.f32 %v4955, %v5027
      %v5029 = vpop.f32.mrb[0].mxu0
      %v5030 = vadd.f32 %v4957, %v5029
      %5031 = vmatprep.mubr.bf16.mxu0 %v1168
      %5032 = vmatmul.mubr.bf16.gmra.mrb[0].mxu0 %v1167
      %v5033 = vpop.f32.mrb[0].mxu0
      %v5034 = vadd.f32 %v4961, %v5033
      %v5035 = vpop.f32.mrb[0].mxu0
      %v5036 = vadd.f32 %v4963, %v5035
      %v5037 = vpop.f32.mrb[0].mxu0
      %v5038 = vadd.f32 %v4965, %v5037
      %v5039 = vpop.f32.mrb[0].mxu0
      %v5040 = vadd.f32 %v4967, %v5039
      %5041 = vmatprep.mubr.bf16.mxu0 %v1204
      %5042 = vmatmul.mubr.bf16.gmra.mrb[0].mxu0 %v1203
      %v5043 = vpop.f32.mrb[0].mxu0
      %v5044 = vadd.f32 %v4971, %v5043
      %v5045 = vpop.f32.mrb[0].mxu0
      %v5046 = vadd.f32 %v4973, %v5045
      %v5047 = vpop.f32.mrb[0].mxu0
      %v5048 = vadd.f32 %v4975, %v5047
      %v5049 = vpop.f32.mrb[0].mxu0
      %v5050 = vadd.f32 %v4977, %v5049
      %5051 = vdwg.mxu0
      %5052 = vmatprep.subr.bf16.mxu0 %v3696
      %5053 = vmatpush1.bf16.msra.mxu0 %v3695
      %5054 = vmatprep.subr.bf16.mxu0 %v3698
      %5055 = vmatpush1.bf16.msra.mxu0 %v3697
      %5056 = vmatprep.subr.bf16.mxu0 %v3700
      %5057 = vmatpush1.bf16.msra.mxu0 %v3699
      %5058 = vmatprep.subr.bf16.mxu0 %v3702
      %5059 = vmatpush1.bf16.msra.mxu0 %v3701
      %5060 = vmatprep.subr.bf16.mxu0 %v3704
      %5061 = vmatpush1.bf16.msra.mxu0 %v3703
      %5062 = vmatprep.subr.bf16.mxu0 %v3706
      %5063 = vmatpush1.bf16.msra.mxu0 %v3705
      %5064 = vmatprep.subr.bf16.mxu0 %v3708
      %5065 = vmatpush1.bf16.msra.mxu0 %v3707
      %5066 = vmatprep.subr.bf16.mxu0 %v3710
      %5067 = vmatpush1.bf16.msra.mxu0 %v3709
      %5068 = vmatprep.subr.bf16.mxu0 %v3712
      %5069 = vmatpush1.bf16.msra.mxu0 %v3711
      %5070 = vmatprep.subr.bf16.mxu0 %v3714
      %5071 = vmatpush1.bf16.msra.mxu0 %v3713
      %5072 = vmatprep.subr.bf16.mxu0 %v3716
      %5073 = vmatpush1.bf16.msra.mxu0 %v3715
      %5074 = vmatprep.subr.bf16.mxu0 %v3718
      %5075 = vmatpush1.bf16.msra.mxu0 %v3717
      %5076 = vmatprep.subr.bf16.mxu0 %v3720
      %5077 = vmatpush1.bf16.msra.mxu0 %v3719
      %5078 = vmatprep.subr.bf16.mxu0 %v3722
      %5079 = vmatpush1.bf16.msra.mxu0 %v3721
      %5080 = vmatprep.subr.bf16.mxu0 %v3724
      %5081 = vmatpush1.bf16.msra.mxu0 %v3723
      %5082 = vmatprep.subr.bf16.mxu0 %v3726
      %5083 = vmatpush1.bf16.msra.mxu0 %v3725
      %5084 = vmatprep.mubr.bf16.mxu0 %v1098
      %5085 = vmatmul.mubr.bf16.gmra.mrb[0].mxu0 %v1097
      %v5086 = vpop.f32.mrb[0].mxu0
      %v5087 = vadd.f32 %v5014, %v5086
      %v5088 = vpop.f32.mrb[0].mxu0
      %v5089 = vadd.f32 %v5016, %v5088
      %v5090 = vpop.f32.mrb[0].mxu0
      %v5091 = vadd.f32 %v5018, %v5090
      %v5092 = vpop.f32.mrb[0].mxu0
      %v5093 = vadd.f32 %v5020, %v5092
      %5094 = vmatprep.mubr.bf16.mxu0 %v1134
      %5095 = vmatmul.mubr.bf16.gmra.mrb[0].mxu0 %v1133
      %v5096 = vpop.f32.mrb[0].mxu0
      %v5097 = vadd.f32 %v5024, %v5096
      %v5098 = vpop.f32.mrb[0].mxu0
      %v5099 = vadd.f32 %v5026, %v5098
      %v5100 = vpop.f32.mrb[0].mxu0
      %v5101 = vadd.f32 %v5028, %v5100
      %v5102 = vpop.f32.mrb[0].mxu0
      %v5103 = vadd.f32 %v5030, %v5102
      %5104 = vmatprep.mubr.bf16.mxu0 %v1170
      %5105 = vmatmul.mubr.bf16.gmra.mrb[0].mxu0 %v1169
      %v5106 = vpop.f32.mrb[0].mxu0
      %v5107 = vadd.f32 %v5034, %v5106
      %v5108 = vpop.f32.mrb[0].mxu0
      %v5109 = vadd.f32 %v5036, %v5108
      %v5110 = vpop.f32.mrb[0].mxu0
      %v5111 = vadd.f32 %v5038, %v5110
      %v5112 = vpop.f32.mrb[0].mxu0
      %v5113 = vadd.f32 %v5040, %v5112
      %5114 = vmatprep.mubr.bf16.mxu0 %v1206
      %5115 = vmatmul.mubr.bf16.gmra.mrb[0].mxu0 %v1205
      %v5116 = vpop.f32.mrb[0].mxu0
      %v5117 = vadd.f32 %v5044, %v5116
      %v5118 = vpop.f32.mrb[0].mxu0
      %v5119 = vadd.f32 %v5046, %v5118
      %v5120 = vpop.f32.mrb[0].mxu0
      %v5121 = vadd.f32 %v5048, %v5120
      %v5122 = vpop.f32.mrb[0].mxu0
      %v5123 = vadd.f32 %v5050, %v5122
      %5124 = vdwg.mxu0
      %5125 = vmatprep.subr.bf16.mxu0 %v3728
      %5126 = vmatpush1.bf16.msra.mxu0 %v3727
      %5127 = vmatprep.subr.bf16.mxu0 %v3730
      %5128 = vmatpush1.bf16.msra.mxu0 %v3729
      %5129 = vmatprep.subr.bf16.mxu0 %v3732
      %5130 = vmatpush1.bf16.msra.mxu0 %v3731
      %5131 = vmatprep.subr.bf16.mxu0 %v3734
      %5132 = vmatpush1.bf16.msra.mxu0 %v3733
      %5133 = vmatprep.subr.bf16.mxu0 %v3736
      %5134 = vmatpush1.bf16.msra.mxu0 %v3735
      %5135 = vmatprep.subr.bf16.mxu0 %v3738
      %5136 = vmatpush1.bf16.msra.mxu0 %v3737
      %5137 = vmatprep.subr.bf16.mxu0 %v3740
      %5138 = vmatpush1.bf16.msra.mxu0 %v3739
      %5139 = vmatprep.subr.bf16.mxu0 %v3742
      %5140 = vmatpush1.bf16.msra.mxu0 %v3741
      %5141 = vmatprep.subr.bf16.mxu0 %v3744
      %5142 = vmatpush1.bf16.msra.mxu0 %v3743
      %5143 = vmatprep.subr.bf16.mxu0 %v3746
      %5144 = vmatpush1.bf16.msra.mxu0 %v3745
      %5145 = vmatprep.subr.bf16.mxu0 %v3748
      %5146 = vmatpush1.bf16.msra.mxu0 %v3747
      %5147 = vmatprep.subr.bf16.mxu0 %v3750
      %5148 = vmatpush1.bf16.msra.mxu0 %v3749
      %5149 = vmatprep.subr.bf16.mxu0 %v3752
      %5150 = vmatpush1.bf16.msra.mxu0 %v3751
      %5151 = vmatprep.subr.bf16.mxu0 %v3754
      %5152 = vmatpush1.bf16.msra.mxu0 %v3753
      %5153 = vmatprep.subr.bf16.mxu0 %v3756
      %5154 = vmatpush1.bf16.msra.mxu0 %v3755
      %5155 = vmatprep.subr.bf16.mxu0 %v3758
      %5156 = vmatpush1.bf16.msra.mxu0 %v3757
      %5157 = vmatprep.mubr.bf16.mxu0 %v1100
      %5158 = vmatmul.mubr.bf16.gmra.mrb[0].mxu0 %v1099
      %v5159 = vpop.f32.mrb[0].mxu0
      %v5160 = vadd.f32 %v5087, %v5159
      %v5161 = vpop.f32.mrb[0].mxu0
      %v5162 = vadd.f32 %v5089, %v5161
      %v5163 = vpop.f32.mrb[0].mxu0
      %v5164 = vadd.f32 %v5091, %v5163
      %v5165 = vpop.f32.mrb[0].mxu0
      %v5166 = vadd.f32 %v5093, %v5165
      %5167 = vmatprep.mubr.bf16.mxu0 %v1136
      %5168 = vmatmul.mubr.bf16.gmra.mrb[0].mxu0 %v1135
      %v5169 = vpop.f32.mrb[0].mxu0
      %v5170 = vadd.f32 %v5097, %v5169
      %v5171 = vpop.f32.mrb[0].mxu0
      %v5172 = vadd.f32 %v5099, %v5171
      %v5173 = vpop.f32.mrb[0].mxu0
      %v5174 = vadd.f32 %v5101, %v5173
      %v5175 = vpop.f32.mrb[0].mxu0
      %v5176 = vadd.f32 %v5103, %v5175
      %5177 = vmatprep.mubr.bf16.mxu0 %v1172
      %5178 = vmatmul.mubr.bf16.gmra.mrb[0].mxu0 %v1171
      %v5179 = vpop.f32.mrb[0].mxu0
      %v5180 = vadd.f32 %v5107, %v5179
      %v5181 = vpop.f32.mrb[0].mxu0
      %v5182 = vadd.f32 %v5109, %v5181
      %v5183 = vpop.f32.mrb[0].mxu0
      %v5184 = vadd.f32 %v5111, %v5183
      %v5185 = vpop.f32.mrb[0].mxu0
      %v5186 = vadd.f32 %v5113, %v5185
      %5187 = vmatprep.mubr.bf16.mxu0 %v1208
      %5188 = vmatmul.mubr.bf16.gmra.mrb[0].mxu0 %v1207
      %v5189 = vpop.f32.mrb[0].mxu0
      %v5190 = vadd.f32 %v5117, %v5189
      %v5191 = vpop.f32.mrb[0].mxu0
      %v5192 = vadd.f32 %v5119, %v5191
      %v5193 = vpop.f32.mrb[0].mxu0
      %v5194 = vadd.f32 %v5121, %v5193
      %v5195 = vpop.f32.mrb[0].mxu0
      %v5196 = vadd.f32 %v5123, %v5195
      %5197 = vdwg.mxu0
      %5198 = vmatprep.subr.bf16.mxu0 %v3760
      %5199 = vmatpush1.bf16.msra.mxu0 %v3759
      %5200 = vmatprep.subr.bf16.mxu0 %v3762
      %5201 = vmatpush1.bf16.msra.mxu0 %v3761
      %5202 = vmatprep.subr.bf16.mxu0 %v3764
      %5203 = vmatpush1.bf16.msra.mxu0 %v3763
      %5204 = vmatprep.subr.bf16.mxu0 %v3766
      %5205 = vmatpush1.bf16.msra.mxu0 %v3765
      %5206 = vmatprep.subr.bf16.mxu0 %v3768
      %5207 = vmatpush1.bf16.msra.mxu0 %v3767
      %5208 = vmatprep.subr.bf16.mxu0 %v3770
      %5209 = vmatpush1.bf16.msra.mxu0 %v3769
      %5210 = vmatprep.subr.bf16.mxu0 %v3772
      %5211 = vmatpush1.bf16.msra.mxu0 %v3771
      %5212 = vmatprep.subr.bf16.mxu0 %v3774
      %5213 = vmatpush1.bf16.msra.mxu0 %v3773
      %5214 = vmatprep.subr.bf16.mxu0 %v3776
      %5215 = vmatpush1.bf16.msra.mxu0 %v3775
      %5216 = vmatprep.subr.bf16.mxu0 %v3778
      %5217 = vmatpush1.bf16.msra.mxu0 %v3777
      %5218 = vmatprep.subr.bf16.mxu0 %v3780
      %5219 = vmatpush1.bf16.msra.mxu0 %v3779
      %5220 = vmatprep.subr.bf16.mxu0 %v3782
      %5221 = vmatpush1.bf16.msra.mxu0 %v3781
      %5222 = vmatprep.subr.bf16.mxu0 %v3784
      %5223 = vmatpush1.bf16.msra.mxu0 %v3783
      %5224 = vmatprep.subr.bf16.mxu0 %v3786
      %5225 = vmatpush1.bf16.msra.mxu0 %v3785
      %5226 = vmatprep.subr.bf16.mxu0 %v3788
      %5227 = vmatpush1.bf16.msra.mxu0 %v3787
      %5228 = vmatprep.subr.bf16.mxu0 %v3790
      %5229 = vmatpush1.bf16.msra.mxu0 %v3789
      %5230 = vmatprep.mubr.bf16.mxu0 %v1102
      %5231 = vmatmul.mubr.bf16.gmra.mrb[0].mxu0 %v1101
      %v5232 = vpop.f32.mrb[0].mxu0
      %v5233 = vadd.f32 %v5160, %v5232
      %v5234 = vpop.f32.mrb[0].mxu0
      %v5235 = vadd.f32 %v5162, %v5234
      %v5236 = vpop.f32.mrb[0].mxu0
      %v5237 = vadd.f32 %v5164, %v5236
      %v5238 = vpop.f32.mrb[0].mxu0
      %v5239 = vadd.f32 %v5166, %v5238
      %5240 = vmatprep.mubr.bf16.mxu0 %v1138
      %5241 = vmatmul.mubr.bf16.gmra.mrb[0].mxu0 %v1137
      %v5242 = vpop.f32.mrb[0].mxu0
      %v5243 = vadd.f32 %v5170, %v5242
      %v5244 = vpop.f32.mrb[0].mxu0
      %v5245 = vadd.f32 %v5172, %v5244
      %v5246 = vpop.f32.mrb[0].mxu0
      %v5247 = vadd.f32 %v5174, %v5246
      %v5248 = vpop.f32.mrb[0].mxu0
      %v5249 = vadd.f32 %v5176, %v5248
      %5250 = vmatprep.mubr.bf16.mxu0 %v1174
      %5251 = vmatmul.mubr.bf16.gmra.mrb[0].mxu0 %v1173
      %v5252 = vpop.f32.mrb[0].mxu0
      %v5253 = vadd.f32 %v5180, %v5252
      %v5254 = vpop.f32.mrb[0].mxu0
      %v5255 = vadd.f32 %v5182, %v5254
      %v5256 = vpop.f32.mrb[0].mxu0
      %v5257 = vadd.f32 %v5184, %v5256
      %v5258 = vpop.f32.mrb[0].mxu0
      %v5259 = vadd.f32 %v5186, %v5258
      %5260 = vmatprep.mubr.bf16.mxu0 %v1210
      %5261 = vmatmul.mubr.bf16.gmra.mrb[0].mxu0 %v1209
      %v5262 = vpop.f32.mrb[0].mxu0
      %v5263 = vadd.f32 %v5190, %v5262
      %v5264 = vpop.f32.mrb[0].mxu0
      %v5265 = vadd.f32 %v5192, %v5264
      %v5266 = vpop.f32.mrb[0].mxu0
      %v5267 = vadd.f32 %v5194, %v5266
      %v5268 = vpop.f32.mrb[0].mxu0
      %v5269 = vadd.f32 %v5196, %v5268
      %5270 = vdwg.mxu0
      %5271 = vmatprep.subr.bf16.mxu0 %v3792
      %5272 = vmatpush1.bf16.msra.mxu0 %v3791
      %5273 = vmatprep.subr.bf16.mxu0 %v3794
      %5274 = vmatpush1.bf16.msra.mxu0 %v3793
      %5275 = vmatprep.subr.bf16.mxu0 %v3796
      %5276 = vmatpush1.bf16.msra.mxu0 %v3795
      %5277 = vmatprep.subr.bf16.mxu0 %v3798
      %5278 = vmatpush1.bf16.msra.mxu0 %v3797
      %5279 = vmatprep.subr.bf16.mxu0 %v3800
      %5280 = vmatpush1.bf16.msra.mxu0 %v3799
      %5281 = vmatprep.subr.bf16.mxu0 %v3802
      %5282 = vmatpush1.bf16.msra.mxu0 %v3801
      %5283 = vmatprep.subr.bf16.mxu0 %v3804
      %5284 = vmatpush1.bf16.msra.mxu0 %v3803
      %5285 = vmatprep.subr.bf16.mxu0 %v3806
      %5286 = vmatpush1.bf16.msra.mxu0 %v3805
      %5287 = vmatprep.subr.bf16.mxu0 %v3808
      %5288 = vmatpush1.bf16.msra.mxu0 %v3807
      %5289 = vmatprep.subr.bf16.mxu0 %v3810
      %5290 = vmatpush1.bf16.msra.mxu0 %v3809
      %5291 = vmatprep.subr.bf16.mxu0 %v3812
      %5292 = vmatpush1.bf16.msra.mxu0 %v3811
      %5293 = vmatprep.subr.bf16.mxu0 %v3814
      %5294 = vmatpush1.bf16.msra.mxu0 %v3813
      %5295 = vmatprep.subr.bf16.mxu0 %v3816
      %5296 = vmatpush1.bf16.msra.mxu0 %v3815
      %5297 = vmatprep.subr.bf16.mxu0 %v3818
      %5298 = vmatpush1.bf16.msra.mxu0 %v3817
      %5299 = vmatprep.subr.bf16.mxu0 %v3820
      %5300 = vmatpush1.bf16.msra.mxu0 %v3819
      %5301 = vmatprep.subr.bf16.mxu0 %v3822
      %5302 = vmatpush1.bf16.msra.mxu0 %v3821
      %5303 = vmatprep.mubr.bf16.mxu0 %v1104
      %5304 = vmatmul.mubr.bf16.gmra.mrb[0].mxu0 %v1103
      %v5305 = vpop.f32.mrb[0].mxu0
      %v5306 = vadd.f32 %v5233, %v5305
      %v5307 = vpop.f32.mrb[0].mxu0
      %v5308 = vadd.f32 %v5235, %v5307
      %v5309 = vpop.f32.mrb[0].mxu0
      %v5310 = vadd.f32 %v5237, %v5309
      %v5311 = vpop.f32.mrb[0].mxu0
      %v5312 = vadd.f32 %v5239, %v5311
      %5313 = vmatprep.mubr.bf16.mxu0 %v1140
      %5314 = vmatmul.mubr.bf16.gmra.mrb[0].mxu0 %v1139
      %v5315 = vpop.f32.mrb[0].mxu0
      %v5316 = vadd.f32 %v5243, %v5315
      %v5317 = vpop.f32.mrb[0].mxu0
      %v5318 = vadd.f32 %v5245, %v5317
      %v5319 = vpop.f32.mrb[0].mxu0
      %v5320 = vadd.f32 %v5247, %v5319
      %v5321 = vpop.f32.mrb[0].mxu0
      %v5322 = vadd.f32 %v5249, %v5321
      %5323 = vmatprep.mubr.bf16.mxu0 %v1176
      %5324 = vmatmul.mubr.bf16.gmra.mrb[0].mxu0 %v1175
      %v5325 = vpop.f32.mrb[0].mxu0
      %v5326 = vadd.f32 %v5253, %v5325
      %v5327 = vpop.f32.mrb[0].mxu0
      %v5328 = vadd.f32 %v5255, %v5327
      %v5329 = vpop.f32.mrb[0].mxu0
      %v5330 = vadd.f32 %v5257, %v5329
      %v5331 = vpop.f32.mrb[0].mxu0
      %v5332 = vadd.f32 %v5259, %v5331
      %5333 = vmatprep.mubr.bf16.mxu0 %v1212
      %5334 = vmatmul.mubr.bf16.gmra.mrb[0].mxu0 %v1211
      %v5335 = vpop.f32.mrb[0].mxu0
      %v5336 = vadd.f32 %v5263, %v5335
      %v5337 = vpop.f32.mrb[0].mxu0
      %v5338 = vadd.f32 %v5265, %v5337
      %v5339 = vpop.f32.mrb[0].mxu0
      %v5340 = vadd.f32 %v5267, %v5339
      %v5341 = vpop.f32.mrb[0].mxu0
      %v5342 = vadd.f32 %v5269, %v5341
      %5343 = vdwg.mxu0
      %5344 = vmatprep.subr.bf16.mxu0 %v3824
      %5345 = vmatpush1.bf16.msra.mxu0 %v3823
      %5346 = vmatprep.subr.bf16.mxu0 %v3826
      %5347 = vmatpush1.bf16.msra.mxu0 %v3825
      %5348 = vmatprep.subr.bf16.mxu0 %v3828
      %5349 = vmatpush1.bf16.msra.mxu0 %v3827
      %5350 = vmatprep.subr.bf16.mxu0 %v3830
      %5351 = vmatpush1.bf16.msra.mxu0 %v3829
      %5352 = vmatprep.subr.bf16.mxu0 %v3832
      %5353 = vmatpush1.bf16.msra.mxu0 %v3831
      %5354 = vmatprep.subr.bf16.mxu0 %v3834
      %5355 = vmatpush1.bf16.msra.mxu0 %v3833
      %5356 = vmatprep.subr.bf16.mxu0 %v3836
      %5357 = vmatpush1.bf16.msra.mxu0 %v3835
      %5358 = vmatprep.subr.bf16.mxu0 %v3838
      %5359 = vmatpush1.bf16.msra.mxu0 %v3837
      %5360 = vmatprep.subr.bf16.mxu0 %v3840
      %5361 = vmatpush1.bf16.msra.mxu0 %v3839
      %5362 = vmatprep.subr.bf16.mxu0 %v3842
      %5363 = vmatpush1.bf16.msra.mxu0 %v3841
      %5364 = vmatprep.subr.bf16.mxu0 %v3844
      %5365 = vmatpush1.bf16.msra.mxu0 %v3843
      %5366 = vmatprep.subr.bf16.mxu0 %v3846
      %5367 = vmatpush1.bf16.msra.mxu0 %v3845
      %5368 = vmatprep.subr.bf16.mxu0 %v3848
      %5369 = vmatpush1.bf16.msra.mxu0 %v3847
      %5370 = vmatprep.subr.bf16.mxu0 %v3850
      %5371 = vmatpush1.bf16.msra.mxu0 %v3849
      %5372 = vmatprep.subr.bf16.mxu0 %v3852
      %5373 = vmatpush1.bf16.msra.mxu0 %v3851
      %5374 = vmatprep.subr.bf16.mxu0 %v3854
      %5375 = vmatpush1.bf16.msra.mxu0 %v3853
      %5376 = vmatprep.mubr.bf16.mxu0 %v1106
      %5377 = vmatmul.mubr.bf16.gmra.mrb[0].mxu0 %v1105
      %v5378 = vpop.f32.mrb[0].mxu0
      %v5379 = vadd.f32 %v5306, %v5378
      %v5380 = vpop.f32.mrb[0].mxu0
      %v5381 = vadd.f32 %v5308, %v5380
      %v5382 = vpop.f32.mrb[0].mxu0
      %v5383 = vadd.f32 %v5310, %v5382
      %v5384 = vpop.f32.mrb[0].mxu0
      %v5385 = vadd.f32 %v5312, %v5384
      %5386 = vmatprep.mubr.bf16.mxu0 %v1142
      %5387 = vmatmul.mubr.bf16.gmra.mrb[0].mxu0 %v1141
      %v5388 = vpop.f32.mrb[0].mxu0
      %v5389 = vadd.f32 %v5316, %v5388
      %v5390 = vpop.f32.mrb[0].mxu0
      %v5391 = vadd.f32 %v5318, %v5390
      %v5392 = vpop.f32.mrb[0].mxu0
      %v5393 = vadd.f32 %v5320, %v5392
      %v5394 = vpop.f32.mrb[0].mxu0
      %v5395 = vadd.f32 %v5322, %v5394
      %5396 = vmatprep.mubr.bf16.mxu0 %v1178
      %5397 = vmatmul.mubr.bf16.gmra.mrb[0].mxu0 %v1177
      %v5398 = vpop.f32.mrb[0].mxu0
      %v5399 = vadd.f32 %v5326, %v5398
      %v5400 = vpop.f32.mrb[0].mxu0
      %v5401 = vadd.f32 %v5328, %v5400
      %v5402 = vpop.f32.mrb[0].mxu0
      %v5403 = vadd.f32 %v5330, %v5402
      %v5404 = vpop.f32.mrb[0].mxu0
      %v5405 = vadd.f32 %v5332, %v5404
      %5406 = vmatprep.mubr.bf16.mxu0 %v1214
      %5407 = vmatmul.mubr.bf16.gmra.mrb[0].mxu0 %v1213
      %v5408 = vpop.f32.mrb[0].mxu0
      %v5409 = vadd.f32 %v5336, %v5408
      %v5410 = vpop.f32.mrb[0].mxu0
      %v5411 = vadd.f32 %v5338, %v5410
      %v5412 = vpop.f32.mrb[0].mxu0
      %v5413 = vadd.f32 %v5340, %v5412
      %v5414 = vpop.f32.mrb[0].mxu0
      %v5415 = vadd.f32 %v5342, %v5414
      %5416 = vdwg.mxu0
      %5417 = vmatprep.subr.bf16.mxu0 %v3856
      %5418 = vmatpush1.bf16.msra.mxu0 %v3855
      %5419 = vmatprep.subr.bf16.mxu0 %v3858
      %5420 = vmatpush1.bf16.msra.mxu0 %v3857
      %5421 = vmatprep.subr.bf16.mxu0 %v3860
      %5422 = vmatpush1.bf16.msra.mxu0 %v3859
      %5423 = vmatprep.subr.bf16.mxu0 %v3862
      %5424 = vmatpush1.bf16.msra.mxu0 %v3861
      %5425 = vmatprep.subr.bf16.mxu0 %v3864
      %5426 = vmatpush1.bf16.msra.mxu0 %v3863
      %5427 = vmatprep.subr.bf16.mxu0 %v3866
      %5428 = vmatpush1.bf16.msra.mxu0 %v3865
      %5429 = vmatprep.subr.bf16.mxu0 %v3868
      %5430 = vmatpush1.bf16.msra.mxu0 %v3867
      %5431 = vmatprep.subr.bf16.mxu0 %v3870
      %5432 = vmatpush1.bf16.msra.mxu0 %v3869
      %5433 = vmatprep.subr.bf16.mxu0 %v3872
      %5434 = vmatpush1.bf16.msra.mxu0 %v3871
      %5435 = vmatprep.subr.bf16.mxu0 %v3874
      %5436 = vmatpush1.bf16.msra.mxu0 %v3873
      %5437 = vmatprep.subr.bf16.mxu0 %v3876
      %5438 = vmatpush1.bf16.msra.mxu0 %v3875
      %5439 = vmatprep.subr.bf16.mxu0 %v3878
      %5440 = vmatpush1.bf16.msra.mxu0 %v3877
      %5441 = vmatprep.subr.bf16.mxu0 %v3880
      %5442 = vmatpush1.bf16.msra.mxu0 %v3879
      %5443 = vmatprep.subr.bf16.mxu0 %v3882
      %5444 = vmatpush1.bf16.msra.mxu0 %v3881
      %5445 = vmatprep.subr.bf16.mxu0 %v3884
      %5446 = vmatpush1.bf16.msra.mxu0 %v3883
      %5447 = vmatprep.subr.bf16.mxu0 %v3886
      %5448 = vmatpush1.bf16.msra.mxu0 %v3885
      %5449 = vmatprep.mubr.bf16.mxu0 %v1108
      %5450 = vmatmul.mubr.bf16.gmra.mrb[0].mxu0 %v1107
      %v5451 = vpop.f32.mrb[0].mxu0
      %v5452 = vadd.f32 %v5379, %v5451
      %v5453 = vpop.f32.mrb[0].mxu0
      %v5454 = vadd.f32 %v5381, %v5453
      %v5455 = vpop.f32.mrb[0].mxu0
      %v5456 = vadd.f32 %v5383, %v5455
      %v5457 = vpop.f32.mrb[0].mxu0
      %v5458 = vadd.f32 %v5385, %v5457
      %5459 = vmatprep.mubr.bf16.mxu0 %v1144
      %5460 = vmatmul.mubr.bf16.gmra.mrb[0].mxu0 %v1143
      %v5461 = vpop.f32.mrb[0].mxu0
      %v5462 = vadd.f32 %v5389, %v5461
      %v5463 = vpop.f32.mrb[0].mxu0
      %v5464 = vadd.f32 %v5391, %v5463
      %v5465 = vpop.f32.mrb[0].mxu0
      %v5466 = vadd.f32 %v5393, %v5465
      %v5467 = vpop.f32.mrb[0].mxu0
      %v5468 = vadd.f32 %v5395, %v5467
      %5469 = vmatprep.mubr.bf16.mxu0 %v1180
      %5470 = vmatmul.mubr.bf16.gmra.mrb[0].mxu0 %v1179
      %v5471 = vpop.f32.mrb[0].mxu0
      %v5472 = vadd.f32 %v5399, %v5471
      %v5473 = vpop.f32.mrb[0].mxu0
      %v5474 = vadd.f32 %v5401, %v5473
      %v5475 = vpop.f32.mrb[0].mxu0
      %v5476 = vadd.f32 %v5403, %v5475
      %v5477 = vpop.f32.mrb[0].mxu0
      %v5478 = vadd.f32 %v5405, %v5477
      %5479 = vmatprep.mubr.bf16.mxu0 %v1216
      %5480 = vmatmul.mubr.bf16.gmra.mrb[0].mxu0 %v1215
      %v5481 = vpop.f32.mrb[0].mxu0
      %v5482 = vadd.f32 %v5409, %v5481
      %v5483 = vpop.f32.mrb[0].mxu0
      %v5484 = vadd.f32 %v5411, %v5483
      %v5485 = vpop.f32.mrb[0].mxu0
      %v5486 = vadd.f32 %v5413, %v5485
      %v5487 = vpop.f32.mrb[0].mxu0
      %v5488 = vadd.f32 %v5415, %v5487
      %5489 = vdwg.mxu0
      %5490 = vmatprep.subr.bf16.mxu0 %v3888
      %5491 = vmatpush1.bf16.msra.mxu0 %v3887
      %5492 = vmatprep.subr.bf16.mxu0 %v3890
      %5493 = vmatpush1.bf16.msra.mxu0 %v3889
      %5494 = vmatprep.subr.bf16.mxu0 %v3892
      %5495 = vmatpush1.bf16.msra.mxu0 %v3891
      %5496 = vmatprep.subr.bf16.mxu0 %v3894
      %5497 = vmatpush1.bf16.msra.mxu0 %v3893
      %5498 = vmatprep.subr.bf16.mxu0 %v3896
      %5499 = vmatpush1.bf16.msra.mxu0 %v3895
      %5500 = vmatprep.subr.bf16.mxu0 %v3898
      %5501 = vmatpush1.bf16.msra.mxu0 %v3897
      %5502 = vmatprep.subr.bf16.mxu0 %v3900
      %5503 = vmatpush1.bf16.msra.mxu0 %v3899
      %5504 = vmatprep.subr.bf16.mxu0 %v3902
      %5505 = vmatpush1.bf16.msra.mxu0 %v3901
      %5506 = vmatprep.subr.bf16.mxu0 %v3904
      %5507 = vmatpush1.bf16.msra.mxu0 %v3903
      %5508 = vmatprep.subr.bf16.mxu0 %v3906
      %5509 = vmatpush1.bf16.msra.mxu0 %v3905
      %5510 = vmatprep.subr.bf16.mxu0 %v3908
      %5511 = vmatpush1.bf16.msra.mxu0 %v3907
      %5512 = vmatprep.subr.bf16.mxu0 %v3910
      %5513 = vmatpush1.bf16.msra.mxu0 %v3909
      %5514 = vmatprep.subr.bf16.mxu0 %v3912
      %5515 = vmatpush1.bf16.msra.mxu0 %v3911
      %5516 = vmatprep.subr.bf16.mxu0 %v3914
      %5517 = vmatpush1.bf16.msra.mxu0 %v3913
      %5518 = vmatprep.subr.bf16.mxu0 %v3916
      %5519 = vmatpush1.bf16.msra.mxu0 %v3915
      %5520 = vmatprep.subr.bf16.mxu0 %v3918
      %5521 = vmatpush1.bf16.msra.mxu0 %v3917
      %5522 = vmatprep.mubr.bf16.mxu0 %v1110
      %5523 = vmatmul.mubr.bf16.gmra.mrb[0].mxu0 %v1109
      %v5524 = vpop.f32.mrb[0].mxu0
      %v5525 = vadd.f32 %v5452, %v5524
      %v5526 = vpop.f32.mrb[0].mxu0
      %v5527 = vadd.f32 %v5454, %v5526
      %v5528 = vpop.f32.mrb[0].mxu0
      %v5529 = vadd.f32 %v5456, %v5528
      %v5530 = vpop.f32.mrb[0].mxu0
      %v5531 = vadd.f32 %v5458, %v5530
      %5532 = vmatprep.mubr.bf16.mxu0 %v1146
      %5533 = vmatmul.mubr.bf16.gmra.mrb[0].mxu0 %v1145
      %v5534 = vpop.f32.mrb[0].mxu0
      %v5535 = vadd.f32 %v5462, %v5534
      %v5536 = vpop.f32.mrb[0].mxu0
      %v5537 = vadd.f32 %v5464, %v5536
      %v5538 = vpop.f32.mrb[0].mxu0
      %v5539 = vadd.f32 %v5466, %v5538
      %v5540 = vpop.f32.mrb[0].mxu0
      %v5541 = vadd.f32 %v5468, %v5540
      %5542 = vmatprep.mubr.bf16.mxu0 %v1182
      %5543 = vmatmul.mubr.bf16.gmra.mrb[0].mxu0 %v1181
      %v5544 = vpop.f32.mrb[0].mxu0
      %v5545 = vadd.f32 %v5472, %v5544
      %v5546 = vpop.f32.mrb[0].mxu0
      %v5547 = vadd.f32 %v5474, %v5546
      %v5548 = vpop.f32.mrb[0].mxu0
      %v5549 = vadd.f32 %v5476, %v5548
      %v5550 = vpop.f32.mrb[0].mxu0
      %v5551 = vadd.f32 %v5478, %v5550
      %5552 = vmatprep.mubr.bf16.mxu0 %v1218
      %5553 = vmatmul.mubr.bf16.gmra.mrb[0].mxu0 %v1217
      %v5554 = vpop.f32.mrb[0].mxu0
      %v5555 = vadd.f32 %v5482, %v5554
      %v5556 = vpop.f32.mrb[0].mxu0
      %v5557 = vadd.f32 %v5484, %v5556
      %v5558 = vpop.f32.mrb[0].mxu0
      %v5559 = vadd.f32 %v5486, %v5558
      %v5560 = vpop.f32.mrb[0].mxu0
      %v5561 = vadd.f32 %v5488, %v5560
      %5562 = vdwg.mxu0
      %5563 = vmatprep.subr.bf16.mxu0 %v3920
      %5564 = vmatpush1.bf16.msra.mxu0 %v3919
      %5565 = vmatprep.subr.bf16.mxu0 %v3922
      %5566 = vmatpush1.bf16.msra.mxu0 %v3921
      %5567 = vmatprep.subr.bf16.mxu0 %v3924
      %5568 = vmatpush1.bf16.msra.mxu0 %v3923
      %5569 = vmatprep.subr.bf16.mxu0 %v3926
      %5570 = vmatpush1.bf16.msra.mxu0 %v3925
      %5571 = vmatprep.subr.bf16.mxu0 %v3928
      %5572 = vmatpush1.bf16.msra.mxu0 %v3927
      %5573 = vmatprep.subr.bf16.mxu0 %v3930
      %5574 = vmatpush1.bf16.msra.mxu0 %v3929
      %5575 = vmatprep.subr.bf16.mxu0 %v3932
      %5576 = vmatpush1.bf16.msra.mxu0 %v3931
      %5577 = vmatprep.subr.bf16.mxu0 %v3934
      %5578 = vmatpush1.bf16.msra.mxu0 %v3933
      %5579 = vmatprep.subr.bf16.mxu0 %v3936
      %5580 = vmatpush1.bf16.msra.mxu0 %v3935
      %5581 = vmatprep.subr.bf16.mxu0 %v3938
      %5582 = vmatpush1.bf16.msra.mxu0 %v3937
      %5583 = vmatprep.subr.bf16.mxu0 %v3940
      %5584 = vmatpush1.bf16.msra.mxu0 %v3939
      %5585 = vmatprep.subr.bf16.mxu0 %v3942
      %5586 = vmatpush1.bf16.msra.mxu0 %v3941
      %5587 = vmatprep.subr.bf16.mxu0 %v3944
      %5588 = vmatpush1.bf16.msra.mxu0 %v3943
      %5589 = vmatprep.subr.bf16.mxu0 %v3946
      %5590 = vmatpush1.bf16.msra.mxu0 %v3945
      %5591 = vmatprep.subr.bf16.mxu0 %v3948
      %5592 = vmatpush1.bf16.msra.mxu0 %v3947
      %5593 = vmatprep.subr.bf16.mxu0 %v3950
      %5594 = vmatpush1.bf16.msra.mxu0 %v3949
      %5595 = vmatprep.mubr.bf16.mxu0 %v1112
      %5596 = vmatmul.mubr.bf16.gmra.mrb[0].mxu0 %v1111
      %v5597 = vpop.f32.mrb[0].mxu0
      %v5598 = vadd.f32 %v5525, %v5597
      %v5599 = vpop.f32.mrb[0].mxu0
      %v5600 = vadd.f32 %v5527, %v5599
      %v5601 = vpop.f32.mrb[0].mxu0
      %v5602 = vadd.f32 %v5529, %v5601
      %v5603 = vpop.f32.mrb[0].mxu0
      %v5604 = vadd.f32 %v5531, %v5603
      %5605 = vmatprep.mubr.bf16.mxu0 %v1148
      %5606 = vmatmul.mubr.bf16.gmra.mrb[0].mxu0 %v1147
      %v5607 = vpop.f32.mrb[0].mxu0
      %v5608 = vadd.f32 %v5535, %v5607
      %v5609 = vpop.f32.mrb[0].mxu0
      %v5610 = vadd.f32 %v5537, %v5609
      %v5611 = vpop.f32.mrb[0].mxu0
      %v5612 = vadd.f32 %v5539, %v5611
      %v5613 = vpop.f32.mrb[0].mxu0
      %v5614 = vadd.f32 %v5541, %v5613
      %5615 = vmatprep.mubr.bf16.mxu0 %v1184
      %5616 = vmatmul.mubr.bf16.gmra.mrb[0].mxu0 %v1183
      %v5617 = vpop.f32.mrb[0].mxu0
      %v5618 = vadd.f32 %v5545, %v5617
      %v5619 = vpop.f32.mrb[0].mxu0
      %v5620 = vadd.f32 %v5547, %v5619
      %v5621 = vpop.f32.mrb[0].mxu0
      %v5622 = vadd.f32 %v5549, %v5621
      %v5623 = vpop.f32.mrb[0].mxu0
      %v5624 = vadd.f32 %v5551, %v5623
      %5625 = vmatprep.mubr.bf16.mxu0 %v1220
      %5626 = vmatmul.mubr.bf16.gmra.mrb[0].mxu0 %v1219
      %v5627 = vpop.f32.mrb[0].mxu0
      %v5628 = vadd.f32 %v5555, %v5627
      %v5629 = vpop.f32.mrb[0].mxu0
      %v5630 = vadd.f32 %v5557, %v5629
      %v5631 = vpop.f32.mrb[0].mxu0
      %v5632 = vadd.f32 %v5559, %v5631
      %v5633 = vpop.f32.mrb[0].mxu0
      %v5634 = vadd.f32 %v5561, %v5633
      %5635 = vdwg.mxu0
      %5636 = vmatprep.subr.bf16.mxu0 %v3952
      %5637 = vmatpush1.bf16.msra.mxu0 %v3951
      %5638 = vmatprep.subr.bf16.mxu0 %v3954
      %5639 = vmatpush1.bf16.msra.mxu0 %v3953
      %5640 = vmatprep.subr.bf16.mxu0 %v3956
      %5641 = vmatpush1.bf16.msra.mxu0 %v3955
      %5642 = vmatprep.subr.bf16.mxu0 %v3958
      %5643 = vmatpush1.bf16.msra.mxu0 %v3957
      %5644 = vmatprep.subr.bf16.mxu0 %v3960
      %5645 = vmatpush1.bf16.msra.mxu0 %v3959
      %5646 = vmatprep.subr.bf16.mxu0 %v3962
      %5647 = vmatpush1.bf16.msra.mxu0 %v3961
      %5648 = vmatprep.subr.bf16.mxu0 %v3964
      %5649 = vmatpush1.bf16.msra.mxu0 %v3963
      %5650 = vmatprep.subr.bf16.mxu0 %v3966
      %5651 = vmatpush1.bf16.msra.mxu0 %v3965
      %5652 = vmatprep.subr.bf16.mxu0 %v3968
      %5653 = vmatpush1.bf16.msra.mxu0 %v3967
      %5654 = vmatprep.subr.bf16.mxu0 %v3970
      %5655 = vmatpush1.bf16.msra.mxu0 %v3969
      %5656 = vmatprep.subr.bf16.mxu0 %v3972
      %5657 = vmatpush1.bf16.msra.mxu0 %v3971
      %5658 = vmatprep.subr.bf16.mxu0 %v3974
      %5659 = vmatpush1.bf16.msra.mxu0 %v3973
      %5660 = vmatprep.subr.bf16.mxu0 %v3976
      %5661 = vmatpush1.bf16.msra.mxu0 %v3975
      %5662 = vmatprep.subr.bf16.mxu0 %v3978
      %5663 = vmatpush1.bf16.msra.mxu0 %v3977
      %5664 = vmatprep.subr.bf16.mxu0 %v3980
      %5665 = vmatpush1.bf16.msra.mxu0 %v3979
      %5666 = vmatprep.subr.bf16.mxu0 %v3982
      %5667 = vmatpush1.bf16.msra.mxu0 %v3981
      %5668 = vmatprep.mubr.bf16.mxu0 %v1114
      %5669 = vmatmul.mubr.bf16.gmra.mrb[0].mxu0 %v1113
      %v5670 = vpop.f32.mrb[0].mxu0
      %v5671 = vadd.f32 %v5598, %v5670
      %v5672 = vpop.f32.mrb[0].mxu0
      %v5673 = vadd.f32 %v5600, %v5672
      %v5674 = vpop.f32.mrb[0].mxu0
      %v5675 = vadd.f32 %v5602, %v5674
      %v5676 = vpop.f32.mrb[0].mxu0
      %v5677 = vadd.f32 %v5604, %v5676
      %5678 = vmatprep.mubr.bf16.mxu0 %v1150
      %5679 = vmatmul.mubr.bf16.gmra.mrb[0].mxu0 %v1149
      %v5680 = vpop.f32.mrb[0].mxu0
      %v5681 = vadd.f32 %v5608, %v5680
      %v5682 = vpop.f32.mrb[0].mxu0
      %v5683 = vadd.f32 %v5610, %v5682
      %v5684 = vpop.f32.mrb[0].mxu0
      %v5685 = vadd.f32 %v5612, %v5684
      %v5686 = vpop.f32.mrb[0].mxu0
      %v5687 = vadd.f32 %v5614, %v5686
      %5688 = vmatprep.mubr.bf16.mxu0 %v1186
      %5689 = vmatmul.mubr.bf16.gmra.mrb[0].mxu0 %v1185
      %v5690 = vpop.f32.mrb[0].mxu0
      %v5691 = vadd.f32 %v5618, %v5690
      %v5692 = vpop.f32.mrb[0].mxu0
      %v5693 = vadd.f32 %v5620, %v5692
      %v5694 = vpop.f32.mrb[0].mxu0
      %v5695 = vadd.f32 %v5622, %v5694
      %v5696 = vpop.f32.mrb[0].mxu0
      %v5697 = vadd.f32 %v5624, %v5696
      %5698 = vmatprep.mubr.bf16.mxu0 %v1222
      %5699 = vmatmul.mubr.bf16.gmra.mrb[0].mxu0 %v1221
      %v5700 = vpop.f32.mrb[0].mxu0
      %v5701 = vadd.f32 %v5628, %v5700
      %v5702 = vpop.f32.mrb[0].mxu0
      %v5703 = vadd.f32 %v5630, %v5702
      %v5704 = vpop.f32.mrb[0].mxu0
      %v5705 = vadd.f32 %v5632, %v5704
      %v5706 = vpop.f32.mrb[0].mxu0
      %v5707 = vadd.f32 %v5634, %v5706
      %5708 = vdwg.mxu0
      %5709 = vmatprep.subr.bf16.mxu0 %v3984
      %5710 = vmatpush1.bf16.msra.mxu0 %v3983
      %5711 = vmatprep.subr.bf16.mxu0 %v3986
      %5712 = vmatpush1.bf16.msra.mxu0 %v3985
      %5713 = vmatprep.subr.bf16.mxu0 %v3988
      %5714 = vmatpush1.bf16.msra.mxu0 %v3987
      %5715 = vmatprep.subr.bf16.mxu0 %v3990
      %5716 = vmatpush1.bf16.msra.mxu0 %v3989
      %5717 = vmatprep.subr.bf16.mxu0 %v3992
      %5718 = vmatpush1.bf16.msra.mxu0 %v3991
      %5719 = vmatprep.subr.bf16.mxu0 %v3994
      %5720 = vmatpush1.bf16.msra.mxu0 %v3993
      %5721 = vmatprep.subr.bf16.mxu0 %v3996
      %5722 = vmatpush1.bf16.msra.mxu0 %v3995
      %5723 = vmatprep.subr.bf16.mxu0 %v3998
      %5724 = vmatpush1.bf16.msra.mxu0 %v3997
      %5725 = vmatprep.subr.bf16.mxu0 %v4000
      %5726 = vmatpush1.bf16.msra.mxu0 %v3999
      %5727 = vmatprep.subr.bf16.mxu0 %v4002
      %5728 = vmatpush1.bf16.msra.mxu0 %v4001
      %5729 = vmatprep.subr.bf16.mxu0 %v4004
      %5730 = vmatpush1.bf16.msra.mxu0 %v4003
      %5731 = vmatprep.subr.bf16.mxu0 %v4006
      %5732 = vmatpush1.bf16.msra.mxu0 %v4005
      %5733 = vmatprep.subr.bf16.mxu0 %v4008
      %5734 = vmatpush1.bf16.msra.mxu0 %v4007
      %5735 = vmatprep.subr.bf16.mxu0 %v4010
      %5736 = vmatpush1.bf16.msra.mxu0 %v4009
      %5737 = vmatprep.subr.bf16.mxu0 %v4012
      %5738 = vmatpush1.bf16.msra.mxu0 %v4011
      %5739 = vmatprep.subr.bf16.mxu0 %v4014
      %5740 = vmatpush1.bf16.msra.mxu0 %v4013
      %5741 = vmatprep.mubr.bf16.mxu0 %v1116
      %5742 = vmatmul.mubr.bf16.gmra.mrb[0].mxu0 %v1115
      %v5743 = vpop.f32.mrb[0].mxu0
      %v5744 = vadd.f32 %v5671, %v5743
      %v5745 = vpop.f32.mrb[0].mxu0
      %v5746 = vadd.f32 %v5673, %v5745
      %v5747 = vpop.f32.mrb[0].mxu0
      %v5748 = vadd.f32 %v5675, %v5747
      %v5749 = vpop.f32.mrb[0].mxu0
      %v5750 = vadd.f32 %v5677, %v5749
      %5751 = vmatprep.mubr.bf16.mxu0 %v1152
      %5752 = vmatmul.mubr.bf16.gmra.mrb[0].mxu0 %v1151
      %v5753 = vpop.f32.mrb[0].mxu0
      %v5754 = vadd.f32 %v5681, %v5753
      %v5755 = vpop.f32.mrb[0].mxu0
      %v5756 = vadd.f32 %v5683, %v5755
      %v5757 = vpop.f32.mrb[0].mxu0
      %v5758 = vadd.f32 %v5685, %v5757
      %v5759 = vpop.f32.mrb[0].mxu0
      %v5760 = vadd.f32 %v5687, %v5759
      %5761 = vmatprep.mubr.bf16.mxu0 %v1188
      %5762 = vmatmul.mubr.bf16.gmra.mrb[0].mxu0 %v1187
      %v5763 = vpop.f32.mrb[0].mxu0
      %v5764 = vadd.f32 %v5691, %v5763
      %v5765 = vpop.f32.mrb[0].mxu0
      %v5766 = vadd.f32 %v5693, %v5765
      %v5767 = vpop.f32.mrb[0].mxu0
      %v5768 = vadd.f32 %v5695, %v5767
      %v5769 = vpop.f32.mrb[0].mxu0
      %v5770 = vadd.f32 %v5697, %v5769
      %5771 = vmatprep.mubr.bf16.mxu0 %v1224
      %5772 = vmatmul.mubr.bf16.gmra.mrb[0].mxu0 %v1223
      %v5773 = vpop.f32.mrb[0].mxu0
      %v5774 = vadd.f32 %v5701, %v5773
      %v5775 = vpop.f32.mrb[0].mxu0
      %v5776 = vadd.f32 %v5703, %v5775
      %v5777 = vpop.f32.mrb[0].mxu0
      %v5778 = vadd.f32 %v5705, %v5777
      %v5779 = vpop.f32.mrb[0].mxu0
      %v5780 = vadd.f32 %v5707, %v5779
      %5781 = vdwg.mxu0
      %5782 = vmatprep.subr.bf16.mxu0 %v4016
      %5783 = vmatpush1.bf16.msra.mxu0 %v4015
      %5784 = vmatprep.subr.bf16.mxu0 %v4018
      %5785 = vmatpush1.bf16.msra.mxu0 %v4017
      %5786 = vmatprep.subr.bf16.mxu0 %v4020
      %5787 = vmatpush1.bf16.msra.mxu0 %v4019
      %5788 = vmatprep.subr.bf16.mxu0 %v4022
      %5789 = vmatpush1.bf16.msra.mxu0 %v4021
      %5790 = vmatprep.subr.bf16.mxu0 %v4024
      %5791 = vmatpush1.bf16.msra.mxu0 %v4023
      %5792 = vmatprep.subr.bf16.mxu0 %v4026
      %5793 = vmatpush1.bf16.msra.mxu0 %v4025
      %5794 = vmatprep.subr.bf16.mxu0 %v4028
      %5795 = vmatpush1.bf16.msra.mxu0 %v4027
      %5796 = vmatprep.subr.bf16.mxu0 %v4030
      %5797 = vmatpush1.bf16.msra.mxu0 %v4029
      %5798 = vmatprep.subr.bf16.mxu0 %v4032
      %5799 = vmatpush1.bf16.msra.mxu0 %v4031
      %5800 = vmatprep.subr.bf16.mxu0 %v4034
      %5801 = vmatpush1.bf16.msra.mxu0 %v4033
      %5802 = vmatprep.subr.bf16.mxu0 %v4036
      %5803 = vmatpush1.bf16.msra.mxu0 %v4035
      %5804 = vmatprep.subr.bf16.mxu0 %v4038
      %5805 = vmatpush1.bf16.msra.mxu0 %v4037
      %5806 = vmatprep.subr.bf16.mxu0 %v4040
      %5807 = vmatpush1.bf16.msra.mxu0 %v4039
      %5808 = vmatprep.subr.bf16.mxu0 %v4042
      %5809 = vmatpush1.bf16.msra.mxu0 %v4041
      %5810 = vmatprep.subr.bf16.mxu0 %v4044
      %5811 = vmatpush1.bf16.msra.mxu0 %v4043
      %5812 = vmatprep.subr.bf16.mxu0 %v4046
      %5813 = vmatpush1.bf16.msra.mxu0 %v4045
      %5814 = vmatprep.mubr.bf16.mxu0 %v1118
      %5815 = vmatmul.mubr.bf16.gmra.mrb[0].mxu0 %v1117
      %v5816 = vpop.f32.mrb[0].mxu0
      %v5817 = vadd.f32 %v5744, %v5816
      %v5818 = vpop.f32.mrb[0].mxu0
      %v5819 = vadd.f32 %v5746, %v5818
      %v5820 = vpop.f32.mrb[0].mxu0
      %v5821 = vadd.f32 %v5748, %v5820
      %v5822 = vpop.f32.mrb[0].mxu0
      %v5823 = vadd.f32 %v5750, %v5822
      %5824 = vmatprep.mubr.bf16.mxu0 %v1154
      %5825 = vmatmul.mubr.bf16.gmra.mrb[0].mxu0 %v1153
      %v5826 = vpop.f32.mrb[0].mxu0
      %v5827 = vadd.f32 %v5754, %v5826
      %v5828 = vpop.f32.mrb[0].mxu0
      %v5829 = vadd.f32 %v5756, %v5828
      %v5830 = vpop.f32.mrb[0].mxu0
      %v5831 = vadd.f32 %v5758, %v5830
      %v5832 = vpop.f32.mrb[0].mxu0
      %v5833 = vadd.f32 %v5760, %v5832
      %5834 = vmatprep.mubr.bf16.mxu0 %v1190
      %5835 = vmatmul.mubr.bf16.gmra.mrb[0].mxu0 %v1189
      %v5836 = vpop.f32.mrb[0].mxu0
      %v5837 = vadd.f32 %v5764, %v5836
      %v5838 = vpop.f32.mrb[0].mxu0
      %v5839 = vadd.f32 %v5766, %v5838
      %v5840 = vpop.f32.mrb[0].mxu0
      %v5841 = vadd.f32 %v5768, %v5840
      %v5842 = vpop.f32.mrb[0].mxu0
      %v5843 = vadd.f32 %v5770, %v5842
      %5844 = vmatprep.mubr.bf16.mxu0 %v1226
      %5845 = vmatmul.mubr.bf16.gmra.mrb[0].mxu0 %v1225
      %v5846 = vpop.f32.mrb[0].mxu0
      %v5847 = vadd.f32 %v5774, %v5846
      %v5848 = vpop.f32.mrb[0].mxu0
      %v5849 = vadd.f32 %v5776, %v5848
      %v5850 = vpop.f32.mrb[0].mxu0
      %v5851 = vadd.f32 %v5778, %v5850
      %v5852 = vpop.f32.mrb[0].mxu0
      %v5853 = vadd.f32 %v5780, %v5852
      %5854 = vdwg.mxu0
      %5855 = vmatprep.subr.bf16.mxu0 %v4048
      %5856 = vmatpush1.bf16.msra.mxu0 %v4047
      %5857 = vmatprep.subr.bf16.mxu0 %v4050
      %5858 = vmatpush1.bf16.msra.mxu0 %v4049
      %5859 = vmatprep.subr.bf16.mxu0 %v4052
      %5860 = vmatpush1.bf16.msra.mxu0 %v4051
      %5861 = vmatprep.subr.bf16.mxu0 %v4054
      %5862 = vmatpush1.bf16.msra.mxu0 %v4053
      %5863 = vmatprep.subr.bf16.mxu0 %v4056
      %5864 = vmatpush1.bf16.msra.mxu0 %v4055
      %5865 = vmatprep.subr.bf16.mxu0 %v4058
      %5866 = vmatpush1.bf16.msra.mxu0 %v4057
      %5867 = vmatprep.subr.bf16.mxu0 %v4060
      %5868 = vmatpush1.bf16.msra.mxu0 %v4059
      %5869 = vmatprep.subr.bf16.mxu0 %v4062
      %5870 = vmatpush1.bf16.msra.mxu0 %v4061
      %5871 = vmatprep.subr.bf16.mxu0 %v4064
      %5872 = vmatpush1.bf16.msra.mxu0 %v4063
      %5873 = vmatprep.subr.bf16.mxu0 %v4066
      %5874 = vmatpush1.bf16.msra.mxu0 %v4065
      %5875 = vmatprep.subr.bf16.mxu0 %v4068
      %5876 = vmatpush1.bf16.msra.mxu0 %v4067
      %5877 = vmatprep.subr.bf16.mxu0 %v4070
      %5878 = vmatpush1.bf16.msra.mxu0 %v4069
      %5879 = vmatprep.subr.bf16.mxu0 %v4072
      %5880 = vmatpush1.bf16.msra.mxu0 %v4071
      %5881 = vmatprep.subr.bf16.mxu0 %v4074
      %5882 = vmatpush1.bf16.msra.mxu0 %v4073
      %5883 = vmatprep.subr.bf16.mxu0 %v4076
      %5884 = vmatpush1.bf16.msra.mxu0 %v4075
      %5885 = vmatprep.subr.bf16.mxu0 %v4078
      %5886 = vmatpush1.bf16.msra.mxu0 %v4077
      %5887 = vmatprep.mubr.bf16.mxu0 %v1120
      %5888 = vmatmul.mubr.bf16.gmra.mrb[0].mxu0 %v1119
      %v5889 = vpop.f32.mrb[0].mxu0
      %v5890 = vadd.f32 %v5817, %v5889
      %v5891 = vpop.f32.mrb[0].mxu0
      %v5892 = vadd.f32 %v5819, %v5891
      %v5893 = vpop.f32.mrb[0].mxu0
      %v5894 = vadd.f32 %v5821, %v5893
      %v5895 = vpop.f32.mrb[0].mxu0
      %v5896 = vadd.f32 %v5823, %v5895
      %5897 = vmatprep.mubr.bf16.mxu0 %v1156
      %5898 = vmatmul.mubr.bf16.gmra.mrb[0].mxu0 %v1155
      %v5899 = vpop.f32.mrb[0].mxu0
      %v5900 = vadd.f32 %v5827, %v5899
      %v5901 = vpop.f32.mrb[0].mxu0
      %v5902 = vadd.f32 %v5829, %v5901
      %v5903 = vpop.f32.mrb[0].mxu0
      %v5904 = vadd.f32 %v5831, %v5903
      %v5905 = vpop.f32.mrb[0].mxu0
      %v5906 = vadd.f32 %v5833, %v5905
      %5907 = vmatprep.mubr.bf16.mxu0 %v1192
      %5908 = vmatmul.mubr.bf16.gmra.mrb[0].mxu0 %v1191
      %v5909 = vpop.f32.mrb[0].mxu0
      %v5910 = vadd.f32 %v5837, %v5909
      %v5911 = vpop.f32.mrb[0].mxu0
      %v5912 = vadd.f32 %v5839, %v5911
      %v5913 = vpop.f32.mrb[0].mxu0
      %v5914 = vadd.f32 %v5841, %v5913
      %v5915 = vpop.f32.mrb[0].mxu0
      %v5916 = vadd.f32 %v5843, %v5915
      %5917 = vmatprep.mubr.bf16.mxu0 %v1228
      %5918 = vmatmul.mubr.bf16.gmra.mrb[0].mxu0 %v1227
      %v5919 = vpop.f32.mrb[0].mxu0
      %v5920 = vadd.f32 %v5847, %v5919
      %v5921 = vpop.f32.mrb[0].mxu0
      %v5922 = vadd.f32 %v5849, %v5921
      %v5923 = vpop.f32.mrb[0].mxu0
      %v5924 = vadd.f32 %v5851, %v5923
      %v5925 = vpop.f32.mrb[0].mxu0
      %v5926 = vadd.f32 %v5853, %v5925
      %5927 = vdwg.mxu0
      %5928 = vmatprep.subr.bf16.mxu0 %v4080
      %5929 = vmatpush1.bf16.msra.mxu0 %v4079
      %5930 = vmatprep.subr.bf16.mxu0 %v4082
      %5931 = vmatpush1.bf16.msra.mxu0 %v4081
      %5932 = vmatprep.subr.bf16.mxu0 %v4084
      %5933 = vmatpush1.bf16.msra.mxu0 %v4083
      %5934 = vmatprep.subr.bf16.mxu0 %v4086
      %5935 = vmatpush1.bf16.msra.mxu0 %v4085
      %5936 = vmatprep.subr.bf16.mxu0 %v4088
      %5937 = vmatpush1.bf16.msra.mxu0 %v4087
      %5938 = vmatprep.subr.bf16.mxu0 %v4090
      %5939 = vmatpush1.bf16.msra.mxu0 %v4089
      %5940 = vmatprep.subr.bf16.mxu0 %v4092
      %5941 = vmatpush1.bf16.msra.mxu0 %v4091
      %5942 = vmatprep.subr.bf16.mxu0 %v4094
      %5943 = vmatpush1.bf16.msra.mxu0 %v4093
      %5944 = vmatprep.subr.bf16.mxu0 %v4096
      %5945 = vmatpush1.bf16.msra.mxu0 %v4095
      %5946 = vmatprep.subr.bf16.mxu0 %v4098
      %5947 = vmatpush1.bf16.msra.mxu0 %v4097
      %5948 = vmatprep.subr.bf16.mxu0 %v4100
      %5949 = vmatpush1.bf16.msra.mxu0 %v4099
      %5950 = vmatprep.subr.bf16.mxu0 %v4102
      %5951 = vmatpush1.bf16.msra.mxu0 %v4101
      %5952 = vmatprep.subr.bf16.mxu0 %v4104
      %5953 = vmatpush1.bf16.msra.mxu0 %v4103
      %5954 = vmatprep.subr.bf16.mxu0 %v4106
      %5955 = vmatpush1.bf16.msra.mxu0 %v4105
      %5956 = vmatprep.subr.bf16.mxu0 %v4108
      %5957 = vmatpush1.bf16.msra.mxu0 %v4107
      %5958 = vmatprep.subr.bf16.mxu0 %v4110
      %5959 = vmatpush1.bf16.msra.mxu0 %v4109
      %5960 = vmatprep.mubr.bf16.mxu0 %v1122
      %5961 = vmatmul.mubr.bf16.gmra.mrb[0].mxu0 %v1121
      %v5962 = vpop.f32.mrb[0].mxu0
      %v5963 = vadd.f32 %v5890, %v5962
      %v5964 = vpop.f32.mrb[0].mxu0
      %v5965 = vadd.f32 %v5892, %v5964
      %v5966 = vpop.f32.mrb[0].mxu0
      %v5967 = vadd.f32 %v5894, %v5966
      %v5968 = vpop.f32.mrb[0].mxu0
      %v5969 = vadd.f32 %v5896, %v5968
      %5970 = vmatprep.mubr.bf16.mxu0 %v1158
      %5971 = vmatmul.mubr.bf16.gmra.mrb[0].mxu0 %v1157
      %v5972 = vpop.f32.mrb[0].mxu0
      %v5973 = vadd.f32 %v5900, %v5972
      %v5974 = vpop.f32.mrb[0].mxu0
      %v5975 = vadd.f32 %v5902, %v5974
      %v5976 = vpop.f32.mrb[0].mxu0
      %v5977 = vadd.f32 %v5904, %v5976
      %v5978 = vpop.f32.mrb[0].mxu0
      %v5979 = vadd.f32 %v5906, %v5978
      %5980 = vmatprep.mubr.bf16.mxu0 %v1194
      %5981 = vmatmul.mubr.bf16.gmra.mrb[0].mxu0 %v1193
      %v5982 = vpop.f32.mrb[0].mxu0
      %v5983 = vadd.f32 %v5910, %v5982
      %v5984 = vpop.f32.mrb[0].mxu0
      %v5985 = vadd.f32 %v5912, %v5984
      %v5986 = vpop.f32.mrb[0].mxu0
      %v5987 = vadd.f32 %v5914, %v5986
      %v5988 = vpop.f32.mrb[0].mxu0
      %v5989 = vadd.f32 %v5916, %v5988
      %5990 = vmatprep.mubr.bf16.mxu0 %v1230
      %5991 = vmatmul.mubr.bf16.gmra.mrb[0].mxu0 %v1229
      %v5992 = vpop.f32.mrb[0].mxu0
      %v5993 = vadd.f32 %v5920, %v5992
      %v5994 = vpop.f32.mrb[0].mxu0
      %v5995 = vadd.f32 %v5922, %v5994
      %v5996 = vpop.f32.mrb[0].mxu0
      %v5997 = vadd.f32 %v5924, %v5996
      %v5998 = vpop.f32.mrb[0].mxu0
      %v5999 = vadd.f32 %v5926, %v5998
      %6000 = vdwg.mxu0
      %v6001 = vld [vmem:[%s2] sm:$0x3]
      %v6003 = vlaneseq
      %v6004 = vshrl.u32 %v6003, 7
      %v6005 = vsub.s32 0, %v6004
      %v6006 = vrot.slane %v6001, %v6005
      %v6007 = vlaneseq
      %v6008 = vshrl.u32 %v6007, 7
      %v6009 = vsub.s32 1, %v6008
      %v6010 = vrot.slane %v6001, %v6009
      %v6013 = vmul.f32 %v5963, %v6006
      %v6014 = vmul.f32 %v5965, %v6010
      %v6015 = vmul.f32 %v5967, %v6006
      %v6016 = vmul.f32 %v5969, %v6010
      %v6017 = vmul.f32 %v5973, %v6006
      %v6018 = vmul.f32 %v5975, %v6010
      %v6019 = vmul.f32 %v5977, %v6006
      %v6020 = vmul.f32 %v5979, %v6010
      %v6021 = vmul.f32 %v5983, %v6006
      %v6022 = vmul.f32 %v5985, %v6010
      %v6023 = vmul.f32 %v5987, %v6006
      %v6024 = vmul.f32 %v5989, %v6010
      %v6025 = vmul.f32 %v5993, %v6006
      %v6026 = vmul.f32 %v5995, %v6010
      %v6027 = vmul.f32 %v5997, %v6006
      %v6028 = vmul.f32 %v5999, %v6010
      %v6029 = vld [vmem:[%s3] sm:$0x3]
      %v6031 = vlaneseq
      %v6032 = vshrl.u32 %v6031, 7
      %v6033 = vsub.s32 0, %v6032
      %v6034 = vrot.slane %v6029, %v6033
      %v6035 = vlaneseq
      %v6036 = vshrl.u32 %v6035, 7
      %v6037 = vsub.s32 1, %v6036
      %v6038 = vrot.slane %v6029, %v6037
      %v6041 = vadd.f32 %v6013, %v6034
      %v6042 = vadd.f32 %v6014, %v6038
      %v6043 = vadd.f32 %v6015, %v6034
      %v6044 = vadd.f32 %v6016, %v6038
      %v6045 = vadd.f32 %v6017, %v6034
      %v6046 = vadd.f32 %v6018, %v6038
      %v6047 = vadd.f32 %v6019, %v6034
      %v6048 = vadd.f32 %v6020, %v6038
      %v6049 = vadd.f32 %v6021, %v6034
      %v6050 = vadd.f32 %v6022, %v6038
      %v6051 = vadd.f32 %v6023, %v6034
      %v6052 = vadd.f32 %v6024, %v6038
      %v6053 = vadd.f32 %v6025, %v6034
      %v6054 = vadd.f32 %v6026, %v6038
      %v6055 = vadd.f32 %v6027, %v6034
      %v6056 = vadd.f32 %v6028, %v6038
      %v6057 = vmax.f32 %v6041, 0.0
      %v6058 = vmax.f32 %v6042, 0.0
      %v6059 = vmax.f32 %v6043, 0.0
      %v6060 = vmax.f32 %v6044, 0.0
      %v6061 = vmax.f32 %v6045, 0.0
      %v6062 = vmax.f32 %v6046, 0.0
      %v6063 = vmax.f32 %v6047, 0.0
      %v6064 = vmax.f32 %v6048, 0.0
      %v6065 = vmax.f32 %v6049, 0.0
      %v6066 = vmax.f32 %v6050, 0.0
      %v6067 = vmax.f32 %v6051, 0.0
      %v6068 = vmax.f32 %v6052, 0.0
      %v6069 = vmax.f32 %v6053, 0.0
      %v6070 = vmax.f32 %v6054, 0.0
      %v6071 = vmax.f32 %v6055, 0.0
      %v6072 = vmax.f32 %v6056, 0.0
      %v6073 = vpack.c.bf16 %v6059, %v6057
      %v6074 = vpack.c.bf16 %v6060, %v6058
      %v6075 = vpack.c.bf16 %v6063, %v6061
      %v6076 = vpack.c.bf16 %v6064, %v6062
      %v6077 = vpack.c.bf16 %v6067, %v6065
      %v6078 = vpack.c.bf16 %v6068, %v6066
      %v6079 = vpack.c.bf16 %v6071, %v6069
      %v6080 = vpack.c.bf16 %v6072, %v6070
      %v6089 = vunpack.c.l.b16 %v6073
      %v6090 = vunpack.c.l.b16 %v6074
      %v6091 = vunpack.c.h.b16 %v6073
      %v6092 = vunpack.c.h.b16 %v6074
      %v6093 = vunpack.c.l.b16 %v6075
      %v6094 = vunpack.c.l.b16 %v6076
      %v6095 = vunpack.c.h.b16 %v6075
      %v6096 = vunpack.c.h.b16 %v6076
      %v6097 = vunpack.c.l.b16 %v6077
      %v6098 = vunpack.c.l.b16 %v6078
      %v6099 = vunpack.c.h.b16 %v6077
      %v6100 = vunpack.c.h.b16 %v6078
      %v6101 = vunpack.c.l.b16 %v6079
      %v6102 = vunpack.c.l.b16 %v6080
      %v6103 = vunpack.c.h.b16 %v6079
      %v6104 = vunpack.c.h.b16 %v6080
      %v6105 = vpack.c.b16 %v6090, %v6089
      %v6106 = vpack.c.b16 %v6092, %v6091
      %v6107 = vpack.c.b16 %v6094, %v6093
      %v6108 = vpack.c.b16 %v6096, %v6095
      %v6109 = vpack.c.b16 %v6098, %v6097
      %v6110 = vpack.c.b16 %v6100, %v6099
      %v6111 = vpack.c.b16 %v6102, %v6101
      %v6112 = vpack.c.b16 %v6104, %v6103
      %6121 = vst [vmem:[%s197] sm:$0xff] %v6105
      %6122 = vst [vmem:[%s197 + $0x8] sm:$0xff] %v6106
      %6123 = vst [vmem:[%s197 + $0x10] sm:$0xff] %v6107
      %6124 = vst [vmem:[%s197 + $0x18] sm:$0xff] %v6108
      %6125 = vst [vmem:[%s197 + $0x20] sm:$0xff] %v6109
      %6126 = vst [vmem:[%s197 + $0x28] sm:$0xff] %v6110
      %6127 = vst [vmem:[%s197 + $0x30] sm:$0xff] %v6111
      %6128 = vst [vmem:[%s197 + $0x38] sm:$0xff] %v6112
      %p6129 = scmp.lt.s32.totalorder %s15, 1
      %s6130 = scalar_select %p6129, %s15, 1
      %s6131 = smul.addr %s6130, 16
      %s6132 = smul.addr %s6131, 4
      %s6133 = scalar_lea.vmem %s4, %s6132
      // Predicated region
      $region37: #{self_attention_aspp_forward.4} parent=35 // pred_check
        %p6134 = pneg %p122
      $region38: #{self_attention_aspp_forward.4} parent=35 // pred_check_branch
        %6136 = sbr.rel (%p6134) target = $region40
      $region39: #{self_attention_aspp_forward.4} parent=35 // pred_region
        _
      $region40: #{self_attention_aspp_forward.4} parent=35 // pred_fallthru
        _
    $region36: #{self_attention_aspp_forward.4} parent=5 // pred_fallthru
      _
    %p6137 = scmp.le.s32.totalorder 2, %s10
    // Predicated region
    $region41: #{self_attention_aspp_forward.4} parent=5 // pred_check
      %p6138 = pneg %p6137
    $region42: #{self_attention_aspp_forward.4} parent=5 // pred_check_branch
      %6140 = sbr.rel (%p6138) target = $region44
    $region43: #{self_attention_aspp_forward.4} parent=5 // pred_region
      %s6141 = ssub.s32 %s10, 2
      // Predicated region
      $region45: #{self_attention_aspp_forward.4} parent=43 // pred_check
        %p6142 = pneg %p128
      $region46: #{self_attention_aspp_forward.4} parent=43 // pred_check_branch
        %6144 = sbr.rel (%p6142) target = $region48
      $region47: #{self_attention_aspp_forward.4} parent=43 // pred_region
        %p6145 = scmp.lt.s32.totalorder %s16, 1
        %s6146 = scalar_select %p6145, %s16, 1
        %s6147 = smul.addr %s6146, 16
        %s6148 = smul.addr %s6147, 4
        %s6149 = scalar_lea.vmem %s4, %s6148
      $region48: #{self_attention_aspp_forward.4} parent=43 // pred_fallthru
        _
    $region44: #{self_attention_aspp_forward.4} parent=5 // pred_fallthru
      _
  $region6: #{self_attention_aspp_forward.4} parent=0 // loop_footer
    %s14 = sadd.s32 1, %s10
  $region7: #{self_attention_aspp_forward.4} parent=0 // loop_footer_branch
    %9 = sbr.rel target = $region3
  $region8: #{self_attention_aspp_forward.4} parent=0 // loop_exit
    _

</llo_original>
